<compile_context>
chip_gen: v7x
topology: tpu7x:2x2x1
jax: 0.10.0
libtpu: 0.0.40
codegen_flags: <defaults>
</compile_context>

<pallas_src>
import jax
import jax.numpy as jnp
from jax.experimental import pallas as pl
from jax.experimental.pallas import tpu as pltpu

Z_DIM = 64
IMG_DIM = 784  # e.g. 28*28 MNIST-style output
HIDDEN = (256, 512, 1024)


def _round_up(n, m):
    return ((n + m - 1) // m) * m


def _leaky_relu(x, slope=0.1):
    # max(x, slope*x) == LeakyReLU(slope) for 0 < slope < 1 (mul + max on VPU).
    return jnp.maximum(x, slope * x)


def generator_kernel(x_ref,
                     w1_ref, b1_ref,
                     w2_ref, b2_ref,
                     w3_ref, b3_ref,
                     w4_ref, b4_ref,
                     out_ref):
    """One fused grid step: [tile_b, z] through all four layers -> [tile_b, img_pad]."""

    def layer(h, w_ref, b_ref):
        # bf16 x bf16 on the MXU, fp32 accumulation; bias add in fp32.
        return (
            jnp.dot(h.astype(w_ref.dtype), w_ref[...],
                    preferred_element_type=jnp.float32)
            + b_ref[...]
        )

    h = x_ref[...].astype(jnp.float32)
    h = _leaky_relu(layer(h, w1_ref, b1_ref))
    h = _leaky_relu(layer(h, w2_ref, b2_ref))
    h = _leaky_relu(layer(h, w3_ref, b3_ref))
    out_ref[...] = jnp.tanh(layer(h, w4_ref, b4_ref)).astype(out_ref.dtype)


def generator_forward(x, params, *, batch_tile=256, param_dtype=jnp.bfloat16):
    """x: [B, z_dim] float32. params: list of (W, b) with W in PyTorch [out, in] layout."""
    B, z_dim = x.shape
    (w1, b1), (w2, b2), (w3, b3), (w4, b4) = params
    img_dim = w4.shape[0]

    # Lane-dense output: pad img_dim to a multiple of 128 (784 -> 896).
    img_pad = _round_up(img_dim, 128)

    # Glue: weights -> [in, out] bf16, biases -> [1, out] f32; pad last layer.
    def prep(w, b, pad_to=None):
        wt = w.T.astype(param_dtype)
        br = b.reshape(1, -1).astype(jnp.float32)
        if pad_to is not None and pad_to != wt.shape[1]:
            wt = jnp.pad(wt, ((0, 0), (0, pad_to - wt.shape[1])))
            br = jnp.pad(br, ((0, 0), (0, pad_to - br.shape[1])))
        return wt, br

    w1t, b1r = prep(w1, b1)
    w2t, b2r = prep(w2, b2)
    w3t, b3r = prep(w3, b3)
    w4t, b4r = prep(w4, b4, pad_to=img_pad)

    # Batch tiling: large tiles to fill the MXU; tiny batches collapse to one
    # padded tile.  For v7x megacore, batches >= 2*batch_tile give a grid of
    # >= 2 "parallel" steps (one per TensorCore).
    tile_b = min(batch_tile, _round_up(B, 8))
    padded_B = _round_up(B, tile_b)
    x_p = x if padded_B == B else jnp.pad(x, ((0, padded_B - B), (0, 0)))
    grid = (padded_B // tile_b,)

    def run(single_buffer_params):
        def param_spec(shape):
            kwargs = {}
            if single_buffer_params:
                # Constant index_map -> params resident in VMEM; 1 buffer suffices.
                kwargs["pipeline_mode"] = pl.Buffered(1)
            return pl.BlockSpec(shape, lambda i: (0, 0), **kwargs)

        return pl.pallas_call(
            generator_kernel,
            out_shape=jax.ShapeDtypeStruct((padded_B, img_pad), x.dtype),
            grid_spec=pltpu.PrefetchScalarGridSpec(
                num_scalar_prefetch=0,
                grid=grid,
                in_specs=[
                    pl.BlockSpec((tile_b, z_dim), lambda i: (i, 0)),
                    param_spec(w1t.shape), param_spec(b1r.shape),
                    param_spec(w2t.shape), param_spec(b2r.shape),
                    param_spec(w3t.shape), param_spec(b3r.shape),
                    param_spec(w4t.shape), param_spec(b4r.shape),
                ],
                out_specs=pl.BlockSpec((tile_b, img_pad), lambda i: (i, 0)),
            ),
            compiler_params=pltpu.CompilerParams(
                dimension_semantics=("parallel",),
                vmem_limit_bytes=32 << 20,  # footprint ~8-10 MiB; v7x VMEM is 64 MiB
            ),
        )(x_p, w1t, b1r, w2t, b2r, w3t, b3r, w4t, b4r)

    try:
        out = run(single_buffer_params=True)
    except Exception:
        # pl.Buffered(1) not supported by this JAX build -> default double-buffering.
        out = run(single_buffer_params=False)

    return out[:B, :img_dim]


def init_params(key, z_dim, img_dim):
    """Deterministic PyTorch-style init: W,b ~ U(-1/sqrt(fan_in), 1/sqrt(fan_in))."""
    dims = [z_dim, *HIDDEN, img_dim]
    params = []
    for i in range(len(dims) - 1):
        fan_in, fan_out = dims[i], dims[i + 1]
        key, kw, kb = jax.random.split(key, 3)
        bound = 1.0 / jnp.sqrt(fan_in)
        w = jax.random.uniform(kw, (fan_out, fan_in), jnp.float32, -bound, bound)
        b = jax.random.uniform(kb, (fan_out,), jnp.float32, -bound, bound)
        params.append((w, b))
    return params


def reference_forward(x, params, compute_dtype=jnp.bfloat16):
    """Pure-JAX reference matching the kernel's bf16-input / fp32-accumulate matmuls."""
    h = x
    for i, (w, b) in enumerate(params):
        h = jnp.dot(h.astype(compute_dtype), w.T.astype(compute_dtype),
                    preferred_element_type=jnp.float32) + b
        h = _leaky_relu(h) if i < len(params) - 1 else jnp.tanh(h)
    return h


if __name__ == "__main__":
    key = jax.random.PRNGKey(0)
    kx, kp = jax.random.split(key)

    batch = 8
    x = jax.random.normal(kx, (batch, Z_DIM), jnp.float32)
    params = init_params(kp, Z_DIM, IMG_DIM)

    out = jax.block_until_ready(generator_forward(x, params))
    ref = reference_forward(x, params)

    assert out.shape == (batch, IMG_DIM)
    assert jnp.allclose(out, ref, atol=2e-2, rtol=2e-2), "mismatch vs JAX reference"

    print("KERNEL_OK")
</pallas_src>

<mosaic_0001>
module attributes {stable_mosaic.version = 11 : i64} {
  func.func @generator_kernel(%arg0: i32, %arg1: memref<8x64xf32, #tpu.memory_space<vmem>>, %arg2: memref<64x256xbf16, #tpu.memory_space<vmem>>, %arg3: memref<1x256xf32, #tpu.memory_space<vmem>>, %arg4: memref<256x512xbf16, #tpu.memory_space<vmem>>, %arg5: memref<1x512xf32, #tpu.memory_space<vmem>>, %arg6: memref<512x1024xbf16, #tpu.memory_space<vmem>>, %arg7: memref<1x1024xf32, #tpu.memory_space<vmem>>, %arg8: memref<1024x896xbf16, #tpu.memory_space<vmem>>, %arg9: memref<1x896xf32, #tpu.memory_space<vmem>>, %arg10: memref<8x896xf32, #tpu.memory_space<vmem>>) attributes {dimension_semantics = [#tpu.dimension_semantics<parallel>], iteration_bounds = array<i64: 1>, scalar_prefetch = 0 : i64, scratch_operands = 0 : i64, tpu.core_type = #tpu.core_type<tc>, window_params = [{transform_indices = @transform_0, window_bounds = array<i64: 8, 64>}, {pipeline_mode = #tpu.pipeline_mode<synchronous>, transform_indices = @transform_1, window_bounds = array<i64: 64, 256>}, {pipeline_mode = #tpu.pipeline_mode<synchronous>, transform_indices = @transform_2, window_bounds = array<i64: 1, 256>}, {pipeline_mode = #tpu.pipeline_mode<synchronous>, transform_indices = @transform_3, window_bounds = array<i64: 256, 512>}, {pipeline_mode = #tpu.pipeline_mode<synchronous>, transform_indices = @transform_4, window_bounds = array<i64: 1, 512>}, {pipeline_mode = #tpu.pipeline_mode<synchronous>, transform_indices = @transform_5, window_bounds = array<i64: 512, 1024>}, {pipeline_mode = #tpu.pipeline_mode<synchronous>, transform_indices = @transform_6, window_bounds = array<i64: 1, 1024>}, {pipeline_mode = #tpu.pipeline_mode<synchronous>, transform_indices = @transform_7, window_bounds = array<i64: 1024, 896>}, {pipeline_mode = #tpu.pipeline_mode<synchronous>, transform_indices = @transform_8, window_bounds = array<i64: 1, 896>}, {transform_indices = @transform_9, window_bounds = array<i64: 8, 896>}]} {
    %c0 = arith.constant 0 : index
    %c0_0 = arith.constant 0 : index
    %0 = vector.load %arg1[%c0, %c0_0] : memref<8x64xf32, #tpu.memory_space<vmem>>, vector<8x64xf32>
    %1 = arith.truncf %0 : vector<8x64xf32> to vector<8x64xbf16>
    %c0_1 = arith.constant 0 : index
    %c0_2 = arith.constant 0 : index
    %2 = vector.load %arg2[%c0_1, %c0_2] : memref<64x256xbf16, #tpu.memory_space<vmem>>, vector<64x256xbf16>
    %cst = arith.constant dense<0.000000e+00> : vector<8x256xf32>
    %3 = tpu.matmul %1, %2, %cst {dimension_numbers = #tpu.dot_dimension_numbers<[1], [0], [0], [1], [0, 0, 1, 1], [], []>} : vector<8x64xbf16>, vector<64x256xbf16>, vector<8x256xf32> -> vector<8x256xf32>
    %c0_3 = arith.constant 0 : index
    %c0_4 = arith.constant 0 : index
    %4 = vector.load %arg3[%c0_3, %c0_4] : memref<1x256xf32, #tpu.memory_space<vmem>>, vector<1x256xf32>
    %5 = vector.broadcast %4 : vector<1x256xf32> to vector<8x256xf32>
    %6 = arith.addf %3, %5 : vector<8x256xf32>
    %cst_5 = arith.constant 1.000000e-01 : f32
    %7 = vector.broadcast %cst_5 : f32 to vector<8x256xf32>
    %8 = arith.mulf %7, %6 : vector<8x256xf32>
    %9 = arith.maximumf %6, %8 : vector<8x256xf32>
    %10 = arith.truncf %9 : vector<8x256xf32> to vector<8x256xbf16>
    %c0_6 = arith.constant 0 : index
    %c0_7 = arith.constant 0 : index
    %11 = vector.load %arg4[%c0_6, %c0_7] : memref<256x512xbf16, #tpu.memory_space<vmem>>, vector<256x512xbf16>
    %cst_8 = arith.constant dense<0.000000e+00> : vector<8x512xf32>
    %12 = tpu.matmul %10, %11, %cst_8 {dimension_numbers = #tpu.dot_dimension_numbers<[1], [0], [0], [1], [0, 0, 1, 1], [], []>} : vector<8x256xbf16>, vector<256x512xbf16>, vector<8x512xf32> -> vector<8x512xf32>
    %c0_9 = arith.constant 0 : index
    %c0_10 = arith.constant 0 : index
    %13 = vector.load %arg5[%c0_9, %c0_10] : memref<1x512xf32, #tpu.memory_space<vmem>>, vector<1x512xf32>
    %14 = vector.broadcast %13 : vector<1x512xf32> to vector<8x512xf32>
    %15 = arith.addf %12, %14 : vector<8x512xf32>
    %cst_11 = arith.constant 1.000000e-01 : f32
    %16 = vector.broadcast %cst_11 : f32 to vector<8x512xf32>
    %17 = arith.mulf %16, %15 : vector<8x512xf32>
    %18 = arith.maximumf %15, %17 : vector<8x512xf32>
    %19 = arith.truncf %18 : vector<8x512xf32> to vector<8x512xbf16>
    %c0_12 = arith.constant 0 : index
    %c0_13 = arith.constant 0 : index
    %20 = vector.load %arg6[%c0_12, %c0_13] : memref<512x1024xbf16, #tpu.memory_space<vmem>>, vector<512x1024xbf16>
    %cst_14 = arith.constant dense<0.000000e+00> : vector<8x1024xf32>
    %21 = tpu.matmul %19, %20, %cst_14 {dimension_numbers = #tpu.dot_dimension_numbers<[1], [0], [0], [1], [0, 0, 1, 1], [], []>} : vector<8x512xbf16>, vector<512x1024xbf16>, vector<8x1024xf32> -> vector<8x1024xf32>
    %c0_15 = arith.constant 0 : index
    %c0_16 = arith.constant 0 : index
    %22 = vector.load %arg7[%c0_15, %c0_16] : memref<1x1024xf32, #tpu.memory_space<vmem>>, vector<1x1024xf32>
    %23 = vector.broadcast %22 : vector<1x1024xf32> to vector<8x1024xf32>
    %24 = arith.addf %21, %23 : vector<8x1024xf32>
    %cst_17 = arith.constant 1.000000e-01 : f32
    %25 = vector.broadcast %cst_17 : f32 to vector<8x1024xf32>
    %26 = arith.mulf %25, %24 : vector<8x1024xf32>
    %27 = arith.maximumf %24, %26 : vector<8x1024xf32>
    %28 = arith.truncf %27 : vector<8x1024xf32> to vector<8x1024xbf16>
    %c0_18 = arith.constant 0 : index
    %c0_19 = arith.constant 0 : index
    %29 = vector.load %arg8[%c0_18, %c0_19] : memref<1024x896xbf16, #tpu.memory_space<vmem>>, vector<1024x896xbf16>
    %cst_20 = arith.constant dense<0.000000e+00> : vector<8x896xf32>
    %30 = tpu.matmul %28, %29, %cst_20 {dimension_numbers = #tpu.dot_dimension_numbers<[1], [0], [0], [1], [0, 0, 1, 1], [], []>} : vector<8x1024xbf16>, vector<1024x896xbf16>, vector<8x896xf32> -> vector<8x896xf32>
    %c0_21 = arith.constant 0 : index
    %c0_22 = arith.constant 0 : index
    %31 = vector.load %arg9[%c0_21, %c0_22] : memref<1x896xf32, #tpu.memory_space<vmem>>, vector<1x896xf32>
    %32 = vector.broadcast %31 : vector<1x896xf32> to vector<8x896xf32>
    %33 = arith.addf %30, %32 : vector<8x896xf32>
    %34 = math.tanh %33 : vector<8x896xf32>
    %c0_23 = arith.constant 0 : index
    %c0_24 = arith.constant 0 : index
    %35 = vector.load %arg10[%c0_23, %c0_24] : memref<8x896xf32, #tpu.memory_space<vmem>>, vector<8x896xf32>
    tpu.vector_store %arg10[%c0_23, %c0_24], %34 {strides = array<i32>} : memref<8x896xf32, #tpu.memory_space<vmem>>, vector<8x896xf32>,
    return
  }
  func.func @transform_0(%arg0: i32) -> (i32, i32) {
    %c0_i32 = arith.constant 0 : i32
    %c0_i32_0 = arith.constant 0 : i32
    return %arg0, %c0_i32 : i32, i32
  }
  func.func @transform_1(%arg0: i32) -> (i32, i32) {
    %c0_i32 = arith.constant 0 : i32
    %c0_i32_0 = arith.constant 0 : i32
    %c0_i32_1 = arith.constant 0 : i32
    return %c0_i32, %c0_i32_0 : i32, i32
  }
  func.func @transform_2(%arg0: i32) -> (i32, i32) {
    %c0_i32 = arith.constant 0 : i32
    %c0_i32_0 = arith.constant 0 : i32
    %c0_i32_1 = arith.constant 0 : i32
    return %c0_i32, %c0_i32_0 : i32, i32
  }
  func.func @transform_3(%arg0: i32) -> (i32, i32) {
    %c0_i32 = arith.constant 0 : i32
    %c0_i32_0 = arith.constant 0 : i32
    %c0_i32_1 = arith.constant 0 : i32
    return %c0_i32, %c0_i32_0 : i32, i32
  }
  func.func @transform_4(%arg0: i32) -> (i32, i32) {
    %c0_i32 = arith.constant 0 : i32
    %c0_i32_0 = arith.constant 0 : i32
    %c0_i32_1 = arith.constant 0 : i32
    return %c0_i32, %c0_i32_0 : i32, i32
  }
  func.func @transform_5(%arg0: i32) -> (i32, i32) {
    %c0_i32 = arith.constant 0 : i32
    %c0_i32_0 = arith.constant 0 : i32
    %c0_i32_1 = arith.constant 0 : i32
    return %c0_i32, %c0_i32_0 : i32, i32
  }
  func.func @transform_6(%arg0: i32) -> (i32, i32) {
    %c0_i32 = arith.constant 0 : i32
    %c0_i32_0 = arith.constant 0 : i32
    %c0_i32_1 = arith.constant 0 : i32
    return %c0_i32, %c0_i32_0 : i32, i32
  }
  func.func @transform_7(%arg0: i32) -> (i32, i32) {
    %c0_i32 = arith.constant 0 : i32
    %c0_i32_0 = arith.constant 0 : i32
    %c0_i32_1 = arith.constant 0 : i32
    return %c0_i32, %c0_i32_0 : i32, i32
  }
  func.func @transform_8(%arg0: i32) -> (i32, i32) {
    %c0_i32 = arith.constant 0 : i32
    %c0_i32_0 = arith.constant 0 : i32
    %c0_i32_1 = arith.constant 0 : i32
    return %c0_i32, %c0_i32_0 : i32, i32
  }
  func.func @transform_9(%arg0: i32) -> (i32, i32) {
    %c0_i32 = arith.constant 0 : i32
    %c0_i32_0 = arith.constant 0 : i32
    return %arg0, %c0_i32 : i32, i32
  }
}

module attributes {stable_mosaic.version = 11 : i64} {
  func.func @generator_kernel(%arg0: i32, %arg1: memref<8x64xf32, #tpu.memory_space<vmem>>, %arg2: memref<64x256xbf16, #tpu.memory_space<vmem>>, %arg3: memref<1x256xf32, #tpu.memory_space<vmem>>, %arg4: memref<256x512xbf16, #tpu.memory_space<vmem>>, %arg5: memref<1x512xf32, #tpu.memory_space<vmem>>, %arg6: memref<512x1024xbf16, #tpu.memory_space<vmem>>, %arg7: memref<1x1024xf32, #tpu.memory_space<vmem>>, %arg8: memref<1024x896xbf16, #tpu.memory_space<vmem>>, %arg9: memref<1x896xf32, #tpu.memory_space<vmem>>, %arg10: memref<8x896xf32, #tpu.memory_space<vmem>>) attributes {dimension_semantics = [#tpu.dimension_semantics<parallel>], iteration_bounds = array<i64: 1>, scalar_prefetch = 0 : i64, scratch_operands = 0 : i64, tpu.core_type = #tpu.core_type<tc>, window_params = [{transform_indices = @transform_0, window_bounds = array<i64: 8, 64>}, {pipeline_mode = #tpu.pipeline_mode<synchronous>, transform_indices = @transform_1, window_bounds = array<i64: 64, 256>}, {pipeline_mode = #tpu.pipeline_mode<synchronous>, transform_indices = @transform_2, window_bounds = array<i64: 1, 256>}, {pipeline_mode = #tpu.pipeline_mode<synchronous>, transform_indices = @transform_3, window_bounds = array<i64: 256, 512>}, {pipeline_mode = #tpu.pipeline_mode<synchronous>, transform_indices = @transform_4, window_bounds = array<i64: 1, 512>}, {pipeline_mode = #tpu.pipeline_mode<synchronous>, transform_indices = @transform_5, window_bounds = array<i64: 512, 1024>}, {pipeline_mode = #tpu.pipeline_mode<synchronous>, transform_indices = @transform_6, window_bounds = array<i64: 1, 1024>}, {pipeline_mode = #tpu.pipeline_mode<synchronous>, transform_indices = @transform_7, window_bounds = array<i64: 1024, 896>}, {pipeline_mode = #tpu.pipeline_mode<synchronous>, transform_indices = @transform_8, window_bounds = array<i64: 1, 896>}, {transform_indices = @transform_9, window_bounds = array<i64: 8, 896>}]} {
    %c0 = arith.constant 0 : index
    %c0_0 = arith.constant 0 : index
    %0 = vector.load %arg1[%c0, %c0_0] : memref<8x64xf32, #tpu.memory_space<vmem>>, vector<8x64xf32>
    %1 = arith.truncf %0 : vector<8x64xf32> to vector<8x64xbf16>
    %c0_1 = arith.constant 0 : index
    %c0_2 = arith.constant 0 : index
    %2 = vector.load %arg2[%c0_1, %c0_2] : memref<64x256xbf16, #tpu.memory_space<vmem>>, vector<64x256xbf16>
    %cst = arith.constant dense<0.000000e+00> : vector<8x256xf32>
    %3 = tpu.matmul %1, %2, %cst {dimension_numbers = #tpu.dot_dimension_numbers<[1], [0], [0], [1], [0, 0, 1, 1], [], []>} : vector<8x64xbf16>, vector<64x256xbf16>, vector<8x256xf32> -> vector<8x256xf32>
    %c0_3 = arith.constant 0 : index
    %c0_4 = arith.constant 0 : index
    %4 = vector.load %arg3[%c0_3, %c0_4] : memref<1x256xf32, #tpu.memory_space<vmem>>, vector<1x256xf32>
    %5 = vector.broadcast %4 : vector<1x256xf32> to vector<8x256xf32>
    %6 = arith.addf %3, %5 : vector<8x256xf32>
    %cst_5 = arith.constant 1.000000e-01 : f32
    %7 = vector.broadcast %cst_5 : f32 to vector<8x256xf32>
    %8 = arith.mulf %7, %6 : vector<8x256xf32>
    %9 = arith.maximumf %6, %8 : vector<8x256xf32>
    %10 = arith.truncf %9 : vector<8x256xf32> to vector<8x256xbf16>
    %c0_6 = arith.constant 0 : index
    %c0_7 = arith.constant 0 : index
    %11 = vector.load %arg4[%c0_6, %c0_7] : memref<256x512xbf16, #tpu.memory_space<vmem>>, vector<256x512xbf16>
    %cst_8 = arith.constant dense<0.000000e+00> : vector<8x512xf32>
    %12 = tpu.matmul %10, %11, %cst_8 {dimension_numbers = #tpu.dot_dimension_numbers<[1], [0], [0], [1], [0, 0, 1, 1], [], []>} : vector<8x256xbf16>, vector<256x512xbf16>, vector<8x512xf32> -> vector<8x512xf32>
    %c0_9 = arith.constant 0 : index
    %c0_10 = arith.constant 0 : index
    %13 = vector.load %arg5[%c0_9, %c0_10] : memref<1x512xf32, #tpu.memory_space<vmem>>, vector<1x512xf32>
    %14 = vector.broadcast %13 : vector<1x512xf32> to vector<8x512xf32>
    %15 = arith.addf %12, %14 : vector<8x512xf32>
    %cst_11 = arith.constant 1.000000e-01 : f32
    %16 = vector.broadcast %cst_11 : f32 to vector<8x512xf32>
    %17 = arith.mulf %16, %15 : vector<8x512xf32>
    %18 = arith.maximumf %15, %17 : vector<8x512xf32>
    %19 = arith.truncf %18 : vector<8x512xf32> to vector<8x512xbf16>
    %c0_12 = arith.constant 0 : index
    %c0_13 = arith.constant 0 : index
    %20 = vector.load %arg6[%c0_12, %c0_13] : memref<512x1024xbf16, #tpu.memory_space<vmem>>, vector<512x1024xbf16>
    %cst_14 = arith.constant dense<0.000000e+00> : vector<8x1024xf32>
    %21 = tpu.matmul %19, %20, %cst_14 {dimension_numbers = #tpu.dot_dimension_numbers<[1], [0], [0], [1], [0, 0, 1, 1], [], []>} : vector<8x512xbf16>, vector<512x1024xbf16>, vector<8x1024xf32> -> vector<8x1024xf32>
    %c0_15 = arith.constant 0 : index
    %c0_16 = arith.constant 0 : index
    %22 = vector.load %arg7[%c0_15, %c0_16] : memref<1x1024xf32, #tpu.memory_space<vmem>>, vector<1x1024xf32>
    %23 = vector.broadcast %22 : vector<1x1024xf32> to vector<8x1024xf32>
    %24 = arith.addf %21, %23 : vector<8x1024xf32>
    %cst_17 = arith.constant 1.000000e-01 : f32
    %25 = vector.broadcast %cst_17 : f32 to vector<8x1024xf32>
    %26 = arith.mulf %25, %24 : vector<8x1024xf32>
    %27 = arith.maximumf %24, %26 : vector<8x1024xf32>
    %28 = arith.truncf %27 : vector<8x1024xf32> to vector<8x1024xbf16>
    %c0_18 = arith.constant 0 : index
    %c0_19 = arith.constant 0 : index
    %29 = vector.load %arg8[%c0_18, %c0_19] : memref<1024x896xbf16, #tpu.memory_space<vmem>>, vector<1024x896xbf16>
    %cst_20 = arith.constant dense<0.000000e+00> : vector<8x896xf32>
    %30 = tpu.matmul %28, %29, %cst_20 {dimension_numbers = #tpu.dot_dimension_numbers<[1], [0], [0], [1], [0, 0, 1, 1], [], []>} : vector<8x1024xbf16>, vector<1024x896xbf16>, vector<8x896xf32> -> vector<8x896xf32>
    %c0_21 = arith.constant 0 : index
    %c0_22 = arith.constant 0 : index
    %31 = vector.load %arg9[%c0_21, %c0_22] : memref<1x896xf32, #tpu.memory_space<vmem>>, vector<1x896xf32>
    %32 = vector.broadcast %31 : vector<1x896xf32> to vector<8x896xf32>
    %33 = arith.addf %30, %32 : vector<8x896xf32>
    %34 = math.tanh %33 : vector<8x896xf32>
    %c0_23 = arith.constant 0 : index
    %c0_24 = arith.constant 0 : index
    %35 = vector.load %arg10[%c0_23, %c0_24] : memref<8x896xf32, #tpu.memory_space<vmem>>, vector<8x896xf32>
    tpu.vector_store %arg10[%c0_23, %c0_24], %34 {strides = array<i32>} : memref<8x896xf32, #tpu.memory_space<vmem>>, vector<8x896xf32>,
    return
  }
  func.func @transform_0(%arg0: i32) -> (i32, i32) {
    %c0_i32 = arith.constant 0 : i32
    %c0_i32_0 = arith.constant 0 : i32
    return %arg0, %c0_i32 : i32, i32
  }
  func.func @transform_1(%arg0: i32) -> (i32, i32) {
    %c0_i32 = arith.constant 0 : i32
    %c0_i32_0 = arith.constant 0 : i32
    %c0_i32_1 = arith.constant 0 : i32
    return %c0_i32, %c0_i32_0 : i32, i32
  }
  func.func @transform_2(%arg0: i32) -> (i32, i32) {
    %c0_i32 = arith.constant 0 : i32
    %c0_i32_0 = arith.constant 0 : i32
    %c0_i32_1 = arith.constant 0 : i32
    return %c0_i32, %c0_i32_0 : i32, i32
  }
  func.func @transform_3(%arg0: i32) -> (i32, i32) {
    %c0_i32 = arith.constant 0 : i32
    %c0_i32_0 = arith.constant 0 : i32
    %c0_i32_1 = arith.constant 0 : i32
    return %c0_i32, %c0_i32_0 : i32, i32
  }
  func.func @transform_4(%arg0: i32) -> (i32, i32) {
    %c0_i32 = arith.constant 0 : i32
    %c0_i32_0 = arith.constant 0 : i32
    %c0_i32_1 = arith.constant 0 : i32
    return %c0_i32, %c0_i32_0 : i32, i32
  }
  func.func @transform_5(%arg0: i32) -> (i32, i32) {
    %c0_i32 = arith.constant 0 : i32
    %c0_i32_0 = arith.constant 0 : i32
    %c0_i32_1 = arith.constant 0 : i32
    return %c0_i32, %c0_i32_0 : i32, i32
  }
  func.func @transform_6(%arg0: i32) -> (i32, i32) {
    %c0_i32 = arith.constant 0 : i32
    %c0_i32_0 = arith.constant 0 : i32
    %c0_i32_1 = arith.constant 0 : i32
    return %c0_i32, %c0_i32_0 : i32, i32
  }
  func.func @transform_7(%arg0: i32) -> (i32, i32) {
    %c0_i32 = arith.constant 0 : i32
    %c0_i32_0 = arith.constant 0 : i32
    %c0_i32_1 = arith.constant 0 : i32
    return %c0_i32, %c0_i32_0 : i32, i32
  }
  func.func @transform_8(%arg0: i32) -> (i32, i32) {
    %c0_i32 = arith.constant 0 : i32
    %c0_i32_0 = arith.constant 0 : i32
    %c0_i32_1 = arith.constant 0 : i32
    return %c0_i32, %c0_i32_0 : i32, i32
  }
  func.func @transform_9(%arg0: i32) -> (i32, i32) {
    %c0_i32 = arith.constant 0 : i32
    %c0_i32_0 = arith.constant 0 : i32
    return %arg0, %c0_i32 : i32, i32
  }
}

</mosaic_0001>

<llo_original>
// kernel: tpu_custom_call.1
$region0: #{tpu_custom_call.1}
  #allocation0 [shape = 'u32[]', space=smem, size = 0x4, offset = 0x4, fixed_abs, tag = 'smem constant byte address 0x4 - core index']
  #allocation1 [shape = 'u32[144,128]{1,0:T(1,128)}', space=vmem, size = 0x12000, scoped, tag = 'internal scratch']
  %s0 = inlined_call_operand.hbm [shape: f32[8,64], index: 0, kind: input, shape index: {}]
  %s1 = inlined_call_operand.hbm [shape: bf16[64,256], index: 1, kind: input, shape index: {}]
  %s2 = inlined_call_operand.hbm [shape: f32[1,256], index: 2, kind: input, shape index: {}]
  %s3 = inlined_call_operand.hbm [shape: bf16[256,512], index: 3, kind: input, shape index: {}]
  %s4 = inlined_call_operand.hbm [shape: f32[1,512], index: 4, kind: input, shape index: {}]
  %s5 = inlined_call_operand.hbm [shape: bf16[512,1024], index: 5, kind: input, shape index: {}]
  %s6 = inlined_call_operand.hbm [shape: f32[1,1024], index: 6, kind: input, shape index: {}]
  %s7 = inlined_call_operand.hbm [shape: bf16[1024,896], index: 7, kind: input, shape index: {}]
  %s8 = inlined_call_operand.hbm [shape: f32[1,896], index: 8, kind: input, shape index: {}]
  %s9 = inlined_call_operand.hbm [shape: f32[8,896], index: 9, kind: output, shape index: {}]
  %s10 = sld [smem:[#allocation0]]
  $region82: #{tpu_custom_call.1} parent=0
    _
  %s12 = ssub.s32 1, %s10
  %s13 = scalar_select 0, %s12, %s10
  $region1: #{tpu_custom_call.1} parent=0
    #allocation2 [shape = 'u8[4096]{0}', space=vmem, size = 0x1000, scoped, tag = 'input window, operand 0, single buffered']
    #allocation3 [shape = 's32[1]{0}', space=sflag, size = 0x4, scoped, tag = 'scoped memory for tpu_custom_call.1']
    #allocation4 [shape = 's32[1]{0}', space=sflag, size = 0x4, scoped, tag = 'scoped memory for tpu_custom_call.1']
    #allocation5 [shape = 'u8[32768]{0}', space=vmem, size = 0x8000, scoped, tag = 'input window, operand 1, single buffered']
    #allocation6 [shape = 's32[1]{0}', space=sflag, size = 0x4, scoped, tag = 'scoped memory for tpu_custom_call.1']
    #allocation7 [shape = 'u8[1024]{0}', space=vmem, size = 0x400, scoped, tag = 'input window, operand 2, single buffered']
    #allocation8 [shape = 'u8[262144]{0}', space=vmem, size = 0x40000, scoped, tag = 'input window, operand 3, single buffered']
    #allocation9 [shape = 's32[1]{0}', space=sflag, size = 0x4, scoped, tag = 'scoped memory for tpu_custom_call.1']
    #allocation10 [shape = 'u8[2048]{0}', space=vmem, size = 0x800, scoped, tag = 'input window, operand 4, single buffered']
    #allocation11 [shape = 'u8[1048576]{0}', space=vmem, size = 0x100000, scoped, tag = 'input window, operand 5, single buffered']
    #allocation12 [shape = 's32[1]{0}', space=sflag, size = 0x4, scoped, tag = 'scoped memory for tpu_custom_call.1']
    #allocation13 [shape = 'u8[4096]{0}', space=vmem, size = 0x1000, scoped, tag = 'input window, operand 6, single buffered']
    #allocation14 [shape = 'u8[1835008]{0}', space=vmem, size = 0x1c0000, scoped, tag = 'input window, operand 7, single buffered']
    #allocation15 [shape = 's32[1]{0}', space=sflag, size = 0x4, scoped, tag = 'scoped memory for tpu_custom_call.1']
    #allocation16 [shape = 'u8[3584]{0}', space=vmem, size = 0x1000, scoped, tag = 'input window, operand 8, single buffered']
    #allocation17 [shape = 'u8[28672]{0}', space=vmem, size = 0x7000, scoped, tag = 'output window, operand 0, single buffered']
    %14 = vsyncpa [#allocation3], 0
    %15 = vsyncpa [#allocation6], 0
    %16 = vsyncpa [#allocation9], 0
    %17 = vsyncpa [#allocation12], 0
    %18 = vsyncpa [#allocation15], 0
    %19 = vsyncpa [#allocation4], 0
    // Predicated region
    $region2: #{tpu_custom_call.1} parent=1 // pred_check
      _
    $region3: #{tpu_custom_call.1} parent=1 // pred_check_branch
      %21 = sbr.rel (0) target = $region5
    $region4: #{tpu_custom_call.1} parent=1 // pred_region
      %s23 = ssub.s32 128, 128
      %24 = vsyncadd [#allocation3], %s23
      %s26 = sshll.u32 [#allocation2], 4
      %s27 = int_to_ptr.vmem [resolvable:$true] %s26
      %29 = dma.hbm_to_vmem [thread:$0]  %s0, 128, %s27, [#allocation3]
    $region5: #{tpu_custom_call.1} parent=1 // pred_fallthru
      _
    // Predicated region
    $region6: #{tpu_custom_call.1} parent=1 // pred_check
      _
    $region7: #{tpu_custom_call.1} parent=1 // pred_check_branch
      %31 = sbr.rel (0) target = $region9
    $region8: #{tpu_custom_call.1} parent=1 // pred_region
      %s33 = ssub.s32 1024, 1024
      %34 = vsyncadd [#allocation6], %s33
      %s35 = sshll.u32 [#allocation5], 4
      %s36 = int_to_ptr.vmem [resolvable:$true] %s35
      %41 = dma.hbm_to_vmem [thread:$0]  %s1, 1024, %s36, [#allocation6], 128, 128, 8
    $region9: #{tpu_custom_call.1} parent=1 // pred_fallthru
      _
    // Predicated region
    $region10: #{tpu_custom_call.1} parent=1 // pred_check
      _
    $region11: #{tpu_custom_call.1} parent=1 // pred_check_branch
      %43 = sbr.rel (0) target = $region13
    $region12: #{tpu_custom_call.1} parent=1 // pred_region
      %s45 = ssub.s32 32, 32
      %46 = vsyncadd [#allocation6], %s45
      %s48 = sshll.u32 [#allocation7], 4
      %s49 = int_to_ptr.vmem [resolvable:$true] %s48
      %51 = dma.hbm_to_vmem [thread:$0]  %s2, 32, %s49, [#allocation6]
    $region13: #{tpu_custom_call.1} parent=1 // pred_fallthru
      _
    // Predicated region
    $region14: #{tpu_custom_call.1} parent=1 // pred_check
      _
    $region15: #{tpu_custom_call.1} parent=1 // pred_check_branch
      %53 = sbr.rel (0) target = $region17
    $region16: #{tpu_custom_call.1} parent=1 // pred_region
      %s55 = ssub.s32 8192, 8192
      %56 = vsyncadd [#allocation9], %s55
      %s57 = sshll.u32 [#allocation8], 4
      %s58 = int_to_ptr.vmem [resolvable:$true] %s57
      %63 = dma.hbm_to_vmem [thread:$0]  %s3, 8192, %s58, [#allocation9], 256, 256, 16
    $region17: #{tpu_custom_call.1} parent=1 // pred_fallthru
      _
    // Predicated region
    $region18: #{tpu_custom_call.1} parent=1 // pred_check
      _
    $region19: #{tpu_custom_call.1} parent=1 // pred_check_branch
      %65 = sbr.rel (0) target = $region21
    $region20: #{tpu_custom_call.1} parent=1 // pred_region
      %s67 = ssub.s32 64, 64
      %68 = vsyncadd [#allocation9], %s67
      %s70 = sshll.u32 [#allocation10], 4
      %s71 = int_to_ptr.vmem [resolvable:$true] %s70
      %73 = dma.hbm_to_vmem [thread:$0]  %s4, 64, %s71, [#allocation9]
    $region21: #{tpu_custom_call.1} parent=1 // pred_fallthru
      _
    // Predicated region
    $region22: #{tpu_custom_call.1} parent=1 // pred_check
      _
    $region23: #{tpu_custom_call.1} parent=1 // pred_check_branch
      %75 = sbr.rel (0) target = $region25
    $region24: #{tpu_custom_call.1} parent=1 // pred_region
      %s77 = ssub.s32 32768, 32768
      %78 = vsyncadd [#allocation12], %s77
      %s79 = sshll.u32 [#allocation11], 4
      %s80 = int_to_ptr.vmem [resolvable:$true] %s79
      %85 = dma.hbm_to_vmem [thread:$0]  %s5, 32768, %s80, [#allocation12], 512, 512, 32
    $region25: #{tpu_custom_call.1} parent=1 // pred_fallthru
      _
    // Predicated region
    $region26: #{tpu_custom_call.1} parent=1 // pred_check
      _
    $region27: #{tpu_custom_call.1} parent=1 // pred_check_branch
      %87 = sbr.rel (0) target = $region29
    $region28: #{tpu_custom_call.1} parent=1 // pred_region
      %s89 = ssub.s32 128, 128
      %90 = vsyncadd [#allocation12], %s89
      %s92 = sshll.u32 [#allocation13], 4
      %s93 = int_to_ptr.vmem [resolvable:$true] %s92
      %95 = dma.hbm_to_vmem [thread:$0]  %s6, 128, %s93, [#allocation12]
    $region29: #{tpu_custom_call.1} parent=1 // pred_fallthru
      _
    // Predicated region
    $region30: #{tpu_custom_call.1} parent=1 // pred_check
      _
    $region31: #{tpu_custom_call.1} parent=1 // pred_check_branch
      %97 = sbr.rel (0) target = $region33
    $region32: #{tpu_custom_call.1} parent=1 // pred_region
      %s99 = ssub.s32 57344, 57344
      %100 = vsyncadd [#allocation15], %s99
      %s101 = sshll.u32 [#allocation14], 4
      %s102 = int_to_ptr.vmem [resolvable:$true] %s101
      %107 = dma.hbm_to_vmem [thread:$0]  %s7, 57344, %s102, [#allocation15], 448, 448, 28
    $region33: #{tpu_custom_call.1} parent=1 // pred_fallthru
      _
    // Predicated region
    $region34: #{tpu_custom_call.1} parent=1 // pred_check
      _
    $region35: #{tpu_custom_call.1} parent=1 // pred_check_branch
      %109 = sbr.rel (0) target = $region37
    $region36: #{tpu_custom_call.1} parent=1 // pred_region
      %s111 = ssub.s32 112, 112
      %112 = vsyncadd [#allocation15], %s111
      %s114 = sshll.u32 [#allocation16], 4
      %s115 = int_to_ptr.vmem [resolvable:$true] %s114
      %117 = dma.hbm_to_vmem [thread:$0]  %s8, 112, %s115, [#allocation15]
    $region37: #{tpu_custom_call.1} parent=1 // pred_fallthru
      _
    // Predicated region
    $region38: #{tpu_custom_call.1} parent=1 // pred_check
      _
    $region39: #{tpu_custom_call.1} parent=1 // pred_check_branch
      %119 = sbr.rel (0) target = $region41
    $region40: #{tpu_custom_call.1} parent=1 // pred_region
      %120 = dma.done [#allocation3], 128
    $region41: #{tpu_custom_call.1} parent=1 // pred_fallthru
      _
    // Predicated region
    $region42: #{tpu_custom_call.1} parent=1 // pred_check
      _
    $region43: #{tpu_custom_call.1} parent=1 // pred_check_branch
      %122 = sbr.rel (0) target = $region45
    $region44: #{tpu_custom_call.1} parent=1 // pred_region
      %123 = dma.done [#allocation6], 1024
    $region45: #{tpu_custom_call.1} parent=1 // pred_fallthru
      _
    // Predicated region
    $region46: #{tpu_custom_call.1} parent=1 // pred_check
      _
    $region47: #{tpu_custom_call.1} parent=1 // pred_check_branch
      %125 = sbr.rel (0) target = $region49
    $region48: #{tpu_custom_call.1} parent=1 // pred_region
      %126 = dma.done [#allocation6], 32
    $region49: #{tpu_custom_call.1} parent=1 // pred_fallthru
      _
    // Predicated region
    $region50: #{tpu_custom_call.1} parent=1 // pred_check
      _
    $region51: #{tpu_custom_call.1} parent=1 // pred_check_branch
      %128 = sbr.rel (0) target = $region53
    $region52: #{tpu_custom_call.1} parent=1 // pred_region
      %129 = dma.done [#allocation9], 8192
    $region53: #{tpu_custom_call.1} parent=1 // pred_fallthru
      _
    // Predicated region
    $region54: #{tpu_custom_call.1} parent=1 // pred_check
      _
    $region55: #{tpu_custom_call.1} parent=1 // pred_check_branch
      %131 = sbr.rel (0) target = $region57
    $region56: #{tpu_custom_call.1} parent=1 // pred_region
      %132 = dma.done [#allocation9], 64
    $region57: #{tpu_custom_call.1} parent=1 // pred_fallthru
      _
    // Predicated region
    $region58: #{tpu_custom_call.1} parent=1 // pred_check
      _
    $region59: #{tpu_custom_call.1} parent=1 // pred_check_branch
      %134 = sbr.rel (0) target = $region61
    $region60: #{tpu_custom_call.1} parent=1 // pred_region
      %135 = dma.done [#allocation12], 32768
    $region61: #{tpu_custom_call.1} parent=1 // pred_fallthru
      _
    // Predicated region
    $region62: #{tpu_custom_call.1} parent=1 // pred_check
      _
    $region63: #{tpu_custom_call.1} parent=1 // pred_check_branch
      %137 = sbr.rel (0) target = $region65
    $region64: #{tpu_custom_call.1} parent=1 // pred_region
      %138 = dma.done [#allocation12], 128
    $region65: #{tpu_custom_call.1} parent=1 // pred_fallthru
      _
    // Predicated region
    $region66: #{tpu_custom_call.1} parent=1 // pred_check
      _
    $region67: #{tpu_custom_call.1} parent=1 // pred_check_branch
      %140 = sbr.rel (0) target = $region69
    $region68: #{tpu_custom_call.1} parent=1 // pred_region
      %141 = dma.done [#allocation15], 57344
    $region69: #{tpu_custom_call.1} parent=1 // pred_fallthru
      _
    // Predicated region
    $region70: #{tpu_custom_call.1} parent=1 // pred_check
      _
    $region71: #{tpu_custom_call.1} parent=1 // pred_check_branch
      %143 = sbr.rel (0) target = $region73
    $region72: #{tpu_custom_call.1} parent=1 // pred_region
      %144 = dma.done [#allocation15], 112
    $region73: #{tpu_custom_call.1} parent=1 // pred_fallthru
      _
    %v146 = vld [vmem:[#allocation2] sm:$0xff]
    %v147 = vpack.c.bf16 %v146, %v146
    %v148 = vld [vmem:[#allocation5] sm:$0xff]
    %v149 = vld [vmem:[#allocation5 + $0x8] sm:$0xff]
    %v150 = vld [vmem:[#allocation5 + $0x10] sm:$0xff]
    %v151 = vld [vmem:[#allocation5 + $0x18] sm:$0xff]
    %v152 = vld [vmem:[#allocation5 + $0x20] sm:$0xff]
    %v153 = vld [vmem:[#allocation5 + $0x28] sm:$0xff]
    %v154 = vld [vmem:[#allocation5 + $0x30] sm:$0xff]
    %v155 = vld [vmem:[#allocation5 + $0x38] sm:$0xff]
    %v156 = vld [vmem:[#allocation7] sm:$0x3]
    %v158 = vlaneseq
    %v159 = vshrl.u32 %v158, 7
    %v160 = vsub.s32 0, %v159
    %v161 = vrot.slane %v156, %v160
    %v162 = vlaneseq
    %v163 = vshrl.u32 %v162, 7
    %v164 = vsub.s32 1, %v163
    %v165 = vrot.slane %v156, %v164
    %v176 = vunpack.c.l.b16 %v148
    %v177 = vunpack.c.h.b16 %v148
    %v178 = vunpack.c.l.b16 %v149
    %v179 = vunpack.c.h.b16 %v149
    %v180 = vunpack.c.l.b16 %v150
    %v181 = vunpack.c.h.b16 %v150
    %v182 = vunpack.c.l.b16 %v151
    %v183 = vunpack.c.h.b16 %v151
    %v184 = vunpack.c.l.b16 %v152
    %v185 = vunpack.c.h.b16 %v152
    %v186 = vunpack.c.l.b16 %v153
    %v187 = vunpack.c.h.b16 %v153
    %v188 = vunpack.c.l.b16 %v154
    %v189 = vunpack.c.h.b16 %v154
    %v190 = vunpack.c.l.b16 %v155
    %v191 = vunpack.c.h.b16 %v155
    %v192 = vpack.c.b16 %v178, %v176
    %v193 = vpack.c.b16 %v179, %v177
    %v194 = vpack.c.b16 %v182, %v180
    %v195 = vpack.c.b16 %v183, %v181
    %v196 = vpack.c.b16 %v186, %v184
    %v197 = vpack.c.b16 %v187, %v185
    %v198 = vpack.c.b16 %v190, %v188
    %v199 = vpack.c.b16 %v191, %v189
    %vm208 = vcmask 523264
    %v210 = vsel %vm208, %v147, 0
    %212 = vmatprep.subr.bf16.mxu0 %v193
    %213 = vmatpush1.bf16.msra.mxu0 %v192
    %214 = vmatprep.subr.bf16.mxu0 %v195
    %215 = vmatpush1.bf16.msra.mxu0 %v194
    %216 = vmatprep.subr.bf16.mxu0 %v197
    %217 = vmatpush1.bf16.msra.mxu0 %v196
    %218 = vmatprep.subr.bf16.mxu0 %v199
    %219 = vmatpush1.bf16.msra.mxu0 %v198
    %220 = vmatprep.subr.bf16.mxu0 0
    %221 = vmatpush1.bf16.msra.mxu0 0
    %222 = vmatprep.subr.bf16.mxu0 0
    %223 = vmatpush1.bf16.msra.mxu0 0
    %224 = vmatprep.subr.bf16.mxu0 0
    %225 = vmatpush1.bf16.msra.mxu0 0
    %226 = vmatprep.subr.bf16.mxu0 0
    %227 = vmatpush1.bf16.msra.mxu0 0
    %228 = vmatprep.subr.bf16.mxu0 0
    %229 = vmatpush1.bf16.msra.mxu0 0
    %230 = vmatprep.subr.bf16.mxu0 0
    %231 = vmatpush1.bf16.msra.mxu0 0
    %232 = vmatprep.subr.bf16.mxu0 0
    %233 = vmatpush1.bf16.msra.mxu0 0
    %234 = vmatprep.subr.bf16.mxu0 0
    %235 = vmatpush1.bf16.msra.mxu0 0
    %236 = vmatprep.subr.bf16.mxu0 0
    %237 = vmatpush1.bf16.msra.mxu0 0
    %238 = vmatprep.subr.bf16.mxu0 0
    %239 = vmatpush1.bf16.msra.mxu0 0
    %240 = vmatprep.subr.bf16.mxu0 0
    %241 = vmatpush1.bf16.msra.mxu0 0
    %242 = vmatprep.subr.bf16.mxu0 0
    %243 = vmatpush1.bf16.msra.mxu0 0
    %244 = vmatprep.mubr.bf16.mxu0 0
    %245 = vmatmul.mubr.bf16.gmra.mrb[0].mxu0 %v210
    %v246 = vpop.f32.mrb[0].mxu0
    %v247 = vadd.f32 %v161, %v246
    %v248 = vpop.f32.mrb[0].mxu0
    %v249 = vadd.f32 %v165, %v248
    %v250 = vpop.f32.mrb[0].mxu0
    %v251 = vpop.f32.mrb[0].mxu0
    %252 = vdwg.mxu0
    %v253 = vmul.f32 %v247, 0.1
    %v254 = vmul.f32 %v249, 0.1
    %v255 = vmax.f32 %v247, %v253
    %v256 = vmax.f32 %v249, %v254
    %v257 = vpack.c.bf16 %v255, %v255
    %v258 = vpack.c.bf16 %v256, %v256
    %v259 = vld [vmem:[#allocation8] sm:$0xff]
    %v260 = vld [vmem:[#allocation8 + $0x8] sm:$0xff]
    %v261 = vld [vmem:[#allocation8 + $0x10] sm:$0xff]
    %v262 = vld [vmem:[#allocation8 + $0x18] sm:$0xff]
    %v263 = vld [vmem:[#allocation8 + $0x20] sm:$0xff]
    %v264 = vld [vmem:[#allocation8 + $0x28] sm:$0xff]
    %v265 = vld [vmem:[#allocation8 + $0x30] sm:$0xff]
    %v266 = vld [vmem:[#allocation8 + $0x38] sm:$0xff]
    %v267 = vld [vmem:[#allocation8 + $0x40] sm:$0xff]
    %v268 = vld [vmem:[#allocation8 + $0x48] sm:$0xff]
    %v269 = vld [vmem:[#allocation8 + $0x50] sm:$0xff]
    %v270 = vld [vmem:[#allocation8 + $0x58] sm:$0xff]
    %v271 = vld [vmem:[#allocation8 + $0x60] sm:$0xff]
    %v272 = vld [vmem:[#allocation8 + $0x68] sm:$0xff]
    %v273 = vld [vmem:[#allocation8 + $0x70] sm:$0xff]
    %v274 = vld [vmem:[#allocation8 + $0x78] sm:$0xff]
    %v275 = vld [vmem:[#allocation8 + $0x80] sm:$0xff]
    %v276 = vld [vmem:[#allocation8 + $0x88] sm:$0xff]
    %v277 = vld [vmem:[#allocation8 + $0x90] sm:$0xff]
    %v278 = vld [vmem:[#allocation8 + $0x98] sm:$0xff]
    %v279 = vld [vmem:[#allocation8 + $0xa0] sm:$0xff]
    %v280 = vld [vmem:[#allocation8 + $0xa8] sm:$0xff]
    %v281 = vld [vmem:[#allocation8 + $0xb0] sm:$0xff]
    %v282 = vld [vmem:[#allocation8 + $0xb8] sm:$0xff]
    %v283 = vld [vmem:[#allocation8 + $0xc0] sm:$0xff]
    %v284 = vld [vmem:[#allocation8 + $0xc8] sm:$0xff]
    %v285 = vld [vmem:[#allocation8 + $0xd0] sm:$0xff]
    %v286 = vld [vmem:[#allocation8 + $0xd8] sm:$0xff]
    %v287 = vld [vmem:[#allocation8 + $0xe0] sm:$0xff]
    %v288 = vld [vmem:[#allocation8 + $0xe8] sm:$0xff]
    %v289 = vld [vmem:[#allocation8 + $0xf0] sm:$0xff]
    %v290 = vld [vmem:[#allocation8 + $0xf8] sm:$0xff]
    %v291 = vld [vmem:[#allocation8 + $0x100] sm:$0xff]
    %v292 = vld [vmem:[#allocation8 + $0x108] sm:$0xff]
    %v293 = vld [vmem:[#allocation8 + $0x110] sm:$0xff]
    %v294 = vld [vmem:[#allocation8 + $0x118] sm:$0xff]
    %v295 = vld [vmem:[#allocation8 + $0x120] sm:$0xff]
    %v296 = vld [vmem:[#allocation8 + $0x128] sm:$0xff]
    %v297 = vld [vmem:[#allocation8 + $0x130] sm:$0xff]
    %v298 = vld [vmem:[#allocation8 + $0x138] sm:$0xff]
    %v299 = vld [vmem:[#allocation8 + $0x140] sm:$0xff]
    %v300 = vld [vmem:[#allocation8 + $0x148] sm:$0xff]
    %v301 = vld [vmem:[#allocation8 + $0x150] sm:$0xff]
    %v302 = vld [vmem:[#allocation8 + $0x158] sm:$0xff]
    %v303 = vld [vmem:[#allocation8 + $0x160] sm:$0xff]
    %v304 = vld [vmem:[#allocation8 + $0x168] sm:$0xff]
    %v305 = vld [vmem:[#allocation8 + $0x170] sm:$0xff]
    %v306 = vld [vmem:[#allocation8 + $0x178] sm:$0xff]
    %v307 = vld [vmem:[#allocation8 + $0x180] sm:$0xff]
    %v308 = vld [vmem:[#allocation8 + $0x188] sm:$0xff]
    %v309 = vld [vmem:[#allocation8 + $0x190] sm:$0xff]
    %v310 = vld [vmem:[#allocation8 + $0x198] sm:$0xff]
    %v311 = vld [vmem:[#allocation8 + $0x1a0] sm:$0xff]
    %v312 = vld [vmem:[#allocation8 + $0x1a8] sm:$0xff]
    %v313 = vld [vmem:[#allocation8 + $0x1b0] sm:$0xff]
    %v314 = vld [vmem:[#allocation8 + $0x1b8] sm:$0xff]
    %v315 = vld [vmem:[#allocation8 + $0x1c0] sm:$0xff]
    %v316 = vld [vmem:[#allocation8 + $0x1c8] sm:$0xff]
    %v317 = vld [vmem:[#allocation8 + $0x1d0] sm:$0xff]
    %v318 = vld [vmem:[#allocation8 + $0x1d8] sm:$0xff]
    %v319 = vld [vmem:[#allocation8 + $0x1e0] sm:$0xff]
    %v320 = vld [vmem:[#allocation8 + $0x1e8] sm:$0xff]
    %v321 = vld [vmem:[#allocation8 + $0x1f0] sm:$0xff]
    %v322 = vld [vmem:[#allocation8 + $0x1f8] sm:$0xff]
    %v323 = vld [vmem:[#allocation10] sm:$0xf]
    %v325 = vlaneseq
    %v326 = vshrl.u32 %v325, 7
    %v327 = vsub.s32 0, %v326
    %v328 = vrot.slane %v323, %v327
    %v329 = vlaneseq
    %v330 = vshrl.u32 %v329, 7
    %v331 = vsub.s32 1, %v330
    %v332 = vrot.slane %v323, %v331
    %v333 = vlaneseq
    %v334 = vshrl.u32 %v333, 7
    %v335 = vsub.s32 2, %v334
    %v336 = vrot.slane %v323, %v335
    %v337 = vlaneseq
    %v338 = vshrl.u32 %v337, 7
    %v339 = vsub.s32 3, %v338
    %v340 = vrot.slane %v323, %v339
    %v409 = vunpack.c.l.b16 %v259
    %v410 = vunpack.c.h.b16 %v259
    %v411 = vunpack.c.l.b16 %v260
    %v412 = vunpack.c.h.b16 %v260
    %v413 = vunpack.c.l.b16 %v261
    %v414 = vunpack.c.h.b16 %v261
    %v415 = vunpack.c.l.b16 %v262
    %v416 = vunpack.c.h.b16 %v262
    %v417 = vunpack.c.l.b16 %v263
    %v418 = vunpack.c.h.b16 %v263
    %v419 = vunpack.c.l.b16 %v264
    %v420 = vunpack.c.h.b16 %v264
    %v421 = vunpack.c.l.b16 %v265
    %v422 = vunpack.c.h.b16 %v265
    %v423 = vunpack.c.l.b16 %v266
    %v424 = vunpack.c.h.b16 %v266
    %v425 = vunpack.c.l.b16 %v267
    %v426 = vunpack.c.h.b16 %v267
    %v427 = vunpack.c.l.b16 %v268
    %v428 = vunpack.c.h.b16 %v268
    %v429 = vunpack.c.l.b16 %v269
    %v430 = vunpack.c.h.b16 %v269
    %v431 = vunpack.c.l.b16 %v270
    %v432 = vunpack.c.h.b16 %v270
    %v433 = vunpack.c.l.b16 %v271
    %v434 = vunpack.c.h.b16 %v271
    %v435 = vunpack.c.l.b16 %v272
    %v436 = vunpack.c.h.b16 %v272
    %v437 = vunpack.c.l.b16 %v273
    %v438 = vunpack.c.h.b16 %v273
    %v439 = vunpack.c.l.b16 %v274
    %v440 = vunpack.c.h.b16 %v274
    %v441 = vunpack.c.l.b16 %v275
    %v442 = vunpack.c.h.b16 %v275
    %v443 = vunpack.c.l.b16 %v276
    %v444 = vunpack.c.h.b16 %v276
    %v445 = vunpack.c.l.b16 %v277
    %v446 = vunpack.c.h.b16 %v277
    %v447 = vunpack.c.l.b16 %v278
    %v448 = vunpack.c.h.b16 %v278
    %v449 = vunpack.c.l.b16 %v279
    %v450 = vunpack.c.h.b16 %v279
    %v451 = vunpack.c.l.b16 %v280
    %v452 = vunpack.c.h.b16 %v280
    %v453 = vunpack.c.l.b16 %v281
    %v454 = vunpack.c.h.b16 %v281
    %v455 = vunpack.c.l.b16 %v282
    %v456 = vunpack.c.h.b16 %v282
    %v457 = vunpack.c.l.b16 %v283
    %v458 = vunpack.c.h.b16 %v283
    %v459 = vunpack.c.l.b16 %v284
    %v460 = vunpack.c.h.b16 %v284
    %v461 = vunpack.c.l.b16 %v285
    %v462 = vunpack.c.h.b16 %v285
    %v463 = vunpack.c.l.b16 %v286
    %v464 = vunpack.c.h.b16 %v286
    %v465 = vunpack.c.l.b16 %v287
    %v466 = vunpack.c.h.b16 %v287
    %v467 = vunpack.c.l.b16 %v288
    %v468 = vunpack.c.h.b16 %v288
    %v469 = vunpack.c.l.b16 %v289
    %v470 = vunpack.c.h.b16 %v289
    %v471 = vunpack.c.l.b16 %v290
    %v472 = vunpack.c.h.b16 %v290
    %v473 = vunpack.c.l.b16 %v291
    %v474 = vunpack.c.h.b16 %v291
    %v475 = vunpack.c.l.b16 %v292
    %v476 = vunpack.c.h.b16 %v292
    %v477 = vunpack.c.l.b16 %v293
    %v478 = vunpack.c.h.b16 %v293
    %v479 = vunpack.c.l.b16 %v294
    %v480 = vunpack.c.h.b16 %v294
    %v481 = vunpack.c.l.b16 %v295
    %v482 = vunpack.c.h.b16 %v295
    %v483 = vunpack.c.l.b16 %v296
    %v484 = vunpack.c.h.b16 %v296
    %v485 = vunpack.c.l.b16 %v297
    %v486 = vunpack.c.h.b16 %v297
    %v487 = vunpack.c.l.b16 %v298
    %v488 = vunpack.c.h.b16 %v298
    %v489 = vunpack.c.l.b16 %v299
    %v490 = vunpack.c.h.b16 %v299
    %v491 = vunpack.c.l.b16 %v300
    %v492 = vunpack.c.h.b16 %v300
    %v493 = vunpack.c.l.b16 %v301
    %v494 = vunpack.c.h.b16 %v301
    %v495 = vunpack.c.l.b16 %v302
    %v496 = vunpack.c.h.b16 %v302
    %v497 = vunpack.c.l.b16 %v303
    %v498 = vunpack.c.h.b16 %v303
    %v499 = vunpack.c.l.b16 %v304
    %v500 = vunpack.c.h.b16 %v304
    %v501 = vunpack.c.l.b16 %v305
    %v502 = vunpack.c.h.b16 %v305
    %v503 = vunpack.c.l.b16 %v306
    %v504 = vunpack.c.h.b16 %v306
    %v505 = vunpack.c.l.b16 %v307
    %v506 = vunpack.c.h.b16 %v307
    %v507 = vunpack.c.l.b16 %v308
    %v508 = vunpack.c.h.b16 %v308
    %v509 = vunpack.c.l.b16 %v309
    %v510 = vunpack.c.h.b16 %v309
    %v511 = vunpack.c.l.b16 %v310
    %v512 = vunpack.c.h.b16 %v310
    %v513 = vunpack.c.l.b16 %v311
    %v514 = vunpack.c.h.b16 %v311
    %v515 = vunpack.c.l.b16 %v312
    %v516 = vunpack.c.h.b16 %v312
    %v517 = vunpack.c.l.b16 %v313
    %v518 = vunpack.c.h.b16 %v313
    %v519 = vunpack.c.l.b16 %v314
    %v520 = vunpack.c.h.b16 %v314
    %v521 = vunpack.c.l.b16 %v315
    %v522 = vunpack.c.h.b16 %v315
    %v523 = vunpack.c.l.b16 %v316
    %v524 = vunpack.c.h.b16 %v316
    %v525 = vunpack.c.l.b16 %v317
    %v526 = vunpack.c.h.b16 %v317
    %v527 = vunpack.c.l.b16 %v318
    %v528 = vunpack.c.h.b16 %v318
    %v529 = vunpack.c.l.b16 %v319
    %v530 = vunpack.c.h.b16 %v319
    %v531 = vunpack.c.l.b16 %v320
    %v532 = vunpack.c.h.b16 %v320
    %v533 = vunpack.c.l.b16 %v321
    %v534 = vunpack.c.h.b16 %v321
    %v535 = vunpack.c.l.b16 %v322
    %v536 = vunpack.c.h.b16 %v322
    %v537 = vpack.c.b16 %v413, %v409
    %v538 = vpack.c.b16 %v414, %v410
    %v539 = vpack.c.b16 %v415, %v411
    %v540 = vpack.c.b16 %v416, %v412
    %v541 = vpack.c.b16 %v421, %v417
    %v542 = vpack.c.b16 %v422, %v418
    %v543 = vpack.c.b16 %v423, %v419
    %v544 = vpack.c.b16 %v424, %v420
    %v545 = vpack.c.b16 %v429, %v425
    %v546 = vpack.c.b16 %v430, %v426
    %v547 = vpack.c.b16 %v431, %v427
    %v548 = vpack.c.b16 %v432, %v428
    %v549 = vpack.c.b16 %v437, %v433
    %v550 = vpack.c.b16 %v438, %v434
    %v551 = vpack.c.b16 %v439, %v435
    %v552 = vpack.c.b16 %v440, %v436
    %v553 = vpack.c.b16 %v445, %v441
    %v554 = vpack.c.b16 %v446, %v442
    %v555 = vpack.c.b16 %v447, %v443
    %v556 = vpack.c.b16 %v448, %v444
    %v557 = vpack.c.b16 %v453, %v449
    %v558 = vpack.c.b16 %v454, %v450
    %v559 = vpack.c.b16 %v455, %v451
    %v560 = vpack.c.b16 %v456, %v452
    %v561 = vpack.c.b16 %v461, %v457
    %v562 = vpack.c.b16 %v462, %v458
    %v563 = vpack.c.b16 %v463, %v459
    %v564 = vpack.c.b16 %v464, %v460
    %v565 = vpack.c.b16 %v469, %v465
    %v566 = vpack.c.b16 %v470, %v466
    %v567 = vpack.c.b16 %v471, %v467
    %v568 = vpack.c.b16 %v472, %v468
    %v569 = vpack.c.b16 %v477, %v473
    %v570 = vpack.c.b16 %v478, %v474
    %v571 = vpack.c.b16 %v479, %v475
    %v572 = vpack.c.b16 %v480, %v476
    %v573 = vpack.c.b16 %v485, %v481
    %v574 = vpack.c.b16 %v486, %v482
    %v575 = vpack.c.b16 %v487, %v483
    %v576 = vpack.c.b16 %v488, %v484
    %v577 = vpack.c.b16 %v493, %v489
    %v578 = vpack.c.b16 %v494, %v490
    %v579 = vpack.c.b16 %v495, %v491
    %v580 = vpack.c.b16 %v496, %v492
    %v581 = vpack.c.b16 %v501, %v497
    %v582 = vpack.c.b16 %v502, %v498
    %v583 = vpack.c.b16 %v503, %v499
    %v584 = vpack.c.b16 %v504, %v500
    %v585 = vpack.c.b16 %v509, %v505
    %v586 = vpack.c.b16 %v510, %v506
    %v587 = vpack.c.b16 %v511, %v507
    %v588 = vpack.c.b16 %v512, %v508
    %v589 = vpack.c.b16 %v517, %v513
    %v590 = vpack.c.b16 %v518, %v514
    %v591 = vpack.c.b16 %v519, %v515
    %v592 = vpack.c.b16 %v520, %v516
    %v593 = vpack.c.b16 %v525, %v521
    %v594 = vpack.c.b16 %v526, %v522
    %v595 = vpack.c.b16 %v527, %v523
    %v596 = vpack.c.b16 %v528, %v524
    %v597 = vpack.c.b16 %v533, %v529
    %v598 = vpack.c.b16 %v534, %v530
    %v599 = vpack.c.b16 %v535, %v531
    %v600 = vpack.c.b16 %v536, %v532
    %665 = vmatprep.subr.bf16.mxu0 %v538
    %666 = vmatpush1.bf16.msra.mxu0 %v537
    %667 = vmatprep.subr.bf16.mxu0 %v542
    %668 = vmatpush1.bf16.msra.mxu0 %v541
    %669 = vmatprep.subr.bf16.mxu0 %v546
    %670 = vmatpush1.bf16.msra.mxu0 %v545
    %671 = vmatprep.subr.bf16.mxu0 %v550
    %672 = vmatpush1.bf16.msra.mxu0 %v549
    %673 = vmatprep.subr.bf16.mxu0 %v554
    %674 = vmatpush1.bf16.msra.mxu0 %v553
    %675 = vmatprep.subr.bf16.mxu0 %v558
    %676 = vmatpush1.bf16.msra.mxu0 %v557
    %677 = vmatprep.subr.bf16.mxu0 %v562
    %678 = vmatpush1.bf16.msra.mxu0 %v561
    %679 = vmatprep.subr.bf16.mxu0 %v566
    %680 = vmatpush1.bf16.msra.mxu0 %v565
    %681 = vmatprep.subr.bf16.mxu0 %v570
    %682 = vmatpush1.bf16.msra.mxu0 %v569
    %683 = vmatprep.subr.bf16.mxu0 %v574
    %684 = vmatpush1.bf16.msra.mxu0 %v573
    %685 = vmatprep.subr.bf16.mxu0 %v578
    %686 = vmatpush1.bf16.msra.mxu0 %v577
    %687 = vmatprep.subr.bf16.mxu0 %v582
    %688 = vmatpush1.bf16.msra.mxu0 %v581
    %689 = vmatprep.subr.bf16.mxu0 %v586
    %690 = vmatpush1.bf16.msra.mxu0 %v585
    %691 = vmatprep.subr.bf16.mxu0 %v590
    %692 = vmatpush1.bf16.msra.mxu0 %v589
    %693 = vmatprep.subr.bf16.mxu0 %v594
    %694 = vmatpush1.bf16.msra.mxu0 %v593
    %695 = vmatprep.subr.bf16.mxu0 %v598
    %696 = vmatpush1.bf16.msra.mxu0 %v597
    %697 = vmatprep.mubr.bf16.mxu0 %v258
    %698 = vmatmul.mubr.bf16.gmra.mrb[0].mxu0 %v257
    %v699 = vpop.f32.mrb[0].mxu0
    %v700 = vadd.f32 %v328, %v699
    %v701 = vpop.f32.mrb[0].mxu0
    %v702 = vadd.f32 %v332, %v701
    %v703 = vpop.f32.mrb[0].mxu0
    %v704 = vpop.f32.mrb[0].mxu0
    %705 = vdwg.mxu0
    %706 = vmatprep.subr.bf16.mxu0 %v540
    %707 = vmatpush1.bf16.msra.mxu0 %v539
    %708 = vmatprep.subr.bf16.mxu0 %v544
    %709 = vmatpush1.bf16.msra.mxu0 %v543
    %710 = vmatprep.subr.bf16.mxu0 %v548
    %711 = vmatpush1.bf16.msra.mxu0 %v547
    %712 = vmatprep.subr.bf16.mxu0 %v552
    %713 = vmatpush1.bf16.msra.mxu0 %v551
    %714 = vmatprep.subr.bf16.mxu0 %v556
    %715 = vmatpush1.bf16.msra.mxu0 %v555
    %716 = vmatprep.subr.bf16.mxu0 %v560
    %717 = vmatpush1.bf16.msra.mxu0 %v559
    %718 = vmatprep.subr.bf16.mxu0 %v564
    %719 = vmatpush1.bf16.msra.mxu0 %v563
    %720 = vmatprep.subr.bf16.mxu0 %v568
    %721 = vmatpush1.bf16.msra.mxu0 %v567
    %722 = vmatprep.subr.bf16.mxu0 %v572
    %723 = vmatpush1.bf16.msra.mxu0 %v571
    %724 = vmatprep.subr.bf16.mxu0 %v576
    %725 = vmatpush1.bf16.msra.mxu0 %v575
    %726 = vmatprep.subr.bf16.mxu0 %v580
    %727 = vmatpush1.bf16.msra.mxu0 %v579
    %728 = vmatprep.subr.bf16.mxu0 %v584
    %729 = vmatpush1.bf16.msra.mxu0 %v583
    %730 = vmatprep.subr.bf16.mxu0 %v588
    %731 = vmatpush1.bf16.msra.mxu0 %v587
    %732 = vmatprep.subr.bf16.mxu0 %v592
    %733 = vmatpush1.bf16.msra.mxu0 %v591
    %734 = vmatprep.subr.bf16.mxu0 %v596
    %735 = vmatpush1.bf16.msra.mxu0 %v595
    %736 = vmatprep.subr.bf16.mxu0 %v600
    %737 = vmatpush1.bf16.msra.mxu0 %v599
    %738 = vmatprep.mubr.bf16.mxu0 %v258
    %739 = vmatmul.mubr.bf16.gmra.mrb[0].mxu0 %v257
    %v740 = vpop.f32.mrb[0].mxu0
    %v741 = vadd.f32 %v336, %v740
    %v742 = vpop.f32.mrb[0].mxu0
    %v743 = vadd.f32 %v340, %v742
    %v744 = vpop.f32.mrb[0].mxu0
    %v745 = vpop.f32.mrb[0].mxu0
    %746 = vdwg.mxu0
    %v747 = vmul.f32 %v700, 0.1
    %v748 = vmul.f32 %v702, 0.1
    %v749 = vmul.f32 %v741, 0.1
    %v750 = vmul.f32 %v743, 0.1
    %v751 = vmax.f32 %v700, %v747
    %v752 = vmax.f32 %v702, %v748
    %v753 = vmax.f32 %v741, %v749
    %v754 = vmax.f32 %v743, %v750
    %v755 = vpack.c.bf16 %v751, %v751
    %v756 = vpack.c.bf16 %v752, %v752
    %v757 = vpack.c.bf16 %v753, %v753
    %v758 = vpack.c.bf16 %v754, %v754
    %v759 = vld [vmem:[#allocation11] sm:$0xff]
    %v760 = vld [vmem:[#allocation11 + $0x8] sm:$0xff]
    %v761 = vld [vmem:[#allocation11 + $0x10] sm:$0xff]
    %v762 = vld [vmem:[#allocation11 + $0x18] sm:$0xff]
    %v763 = vld [vmem:[#allocation11 + $0x20] sm:$0xff]
    %v764 = vld [vmem:[#allocation11 + $0x28] sm:$0xff]
    %v765 = vld [vmem:[#allocation11 + $0x30] sm:$0xff]
    %v766 = vld [vmem:[#allocation11 + $0x38] sm:$0xff]
    %v767 = vld [vmem:[#allocation11 + $0x40] sm:$0xff]
    %v768 = vld [vmem:[#allocation11 + $0x48] sm:$0xff]
    %v769 = vld [vmem:[#allocation11 + $0x50] sm:$0xff]
    %v770 = vld [vmem:[#allocation11 + $0x58] sm:$0xff]
    %v771 = vld [vmem:[#allocation11 + $0x60] sm:$0xff]
    %v772 = vld [vmem:[#allocation11 + $0x68] sm:$0xff]
    %v773 = vld [vmem:[#allocation11 + $0x70] sm:$0xff]
    %v774 = vld [vmem:[#allocation11 + $0x78] sm:$0xff]
    %v775 = vld [vmem:[#allocation11 + $0x80] sm:$0xff]
    %v776 = vld [vmem:[#allocation11 + $0x88] sm:$0xff]
    %v777 = vld [vmem:[#allocation11 + $0x90] sm:$0xff]
    %v778 = vld [vmem:[#allocation11 + $0x98] sm:$0xff]
    %v779 = vld [vmem:[#allocation11 + $0xa0] sm:$0xff]
    %v780 = vld [vmem:[#allocation11 + $0xa8] sm:$0xff]
    %v781 = vld [vmem:[#allocation11 + $0xb0] sm:$0xff]
    %v782 = vld [vmem:[#allocation11 + $0xb8] sm:$0xff]
    %v783 = vld [vmem:[#allocation11 + $0xc0] sm:$0xff]
    %v784 = vld [vmem:[#allocation11 + $0xc8] sm:$0xff]
    %v785 = vld [vmem:[#allocation11 + $0xd0] sm:$0xff]
    %v786 = vld [vmem:[#allocation11 + $0xd8] sm:$0xff]
    %v787 = vld [vmem:[#allocation11 + $0xe0] sm:$0xff]
    %v788 = vld [vmem:[#allocation11 + $0xe8] sm:$0xff]
    %v789 = vld [vmem:[#allocation11 + $0xf0] sm:$0xff]
    %v790 = vld [vmem:[#allocation11 + $0xf8] sm:$0xff]
    %v791 = vld [vmem:[#allocation11 + $0x100] sm:$0xff]
    %v792 = vld [vmem:[#allocation11 + $0x108] sm:$0xff]
    %v793 = vld [vmem:[#allocation11 + $0x110] sm:$0xff]
    %v794 = vld [vmem:[#allocation11 + $0x118] sm:$0xff]
    %v795 = vld [vmem:[#allocation11 + $0x120] sm:$0xff]
    %v796 = vld [vmem:[#allocation11 + $0x128] sm:$0xff]
    %v797 = vld [vmem:[#allocation11 + $0x130] sm:$0xff]
    %v798 = vld [vmem:[#allocation11 + $0x138] sm:$0xff]
    %v799 = vld [vmem:[#allocation11 + $0x140] sm:$0xff]
    %v800 = vld [vmem:[#allocation11 + $0x148] sm:$0xff]
    %v801 = vld [vmem:[#allocation11 + $0x150] sm:$0xff]
    %v802 = vld [vmem:[#allocation11 + $0x158] sm:$0xff]
    %v803 = vld [vmem:[#allocation11 + $0x160] sm:$0xff]
    %v804 = vld [vmem:[#allocation11 + $0x168] sm:$0xff]
    %v805 = vld [vmem:[#allocation11 + $0x170] sm:$0xff]
    %v806 = vld [vmem:[#allocation11 + $0x178] sm:$0xff]
    %v807 = vld [vmem:[#allocation11 + $0x180] sm:$0xff]
    %v808 = vld [vmem:[#allocation11 + $0x188] sm:$0xff]
    %v809 = vld [vmem:[#allocation11 + $0x190] sm:$0xff]
    %v810 = vld [vmem:[#allocation11 + $0x198] sm:$0xff]
    %v811 = vld [vmem:[#allocation11 + $0x1a0] sm:$0xff]
    %v812 = vld [vmem:[#allocation11 + $0x1a8] sm:$0xff]
    %v813 = vld [vmem:[#allocation11 + $0x1b0] sm:$0xff]
    %v814 = vld [vmem:[#allocation11 + $0x1b8] sm:$0xff]
    %v815 = vld [vmem:[#allocation11 + $0x1c0] sm:$0xff]
    %v816 = vld [vmem:[#allocation11 + $0x1c8] sm:$0xff]
    %v817 = vld [vmem:[#allocation11 + $0x1d0] sm:$0xff]
    %v818 = vld [vmem:[#allocation11 + $0x1d8] sm:$0xff]
    %v819 = vld [vmem:[#allocation11 + $0x1e0] sm:$0xff]
    %v820 = vld [vmem:[#allocation11 + $0x1e8] sm:$0xff]
    %v821 = vld [vmem:[#allocation11 + $0x1f0] sm:$0xff]
    %v822 = vld [vmem:[#allocation11 + $0x1f8] sm:$0xff]
    %v823 = vld [vmem:[#allocation11 + $0x200] sm:$0xff]
    %v824 = vld [vmem:[#allocation11 + $0x208] sm:$0xff]
    %v825 = vld [vmem:[#allocation11 + $0x210] sm:$0xff]
    %v826 = vld [vmem:[#allocation11 + $0x218] sm:$0xff]
    %v827 = vld [vmem:[#allocation11 + $0x220] sm:$0xff]
    %v828 = vld [vmem:[#allocation11 + $0x228] sm:$0xff]
    %v829 = vld [vmem:[#allocation11 + $0x230] sm:$0xff]
    %v830 = vld [vmem:[#allocation11 + $0x238] sm:$0xff]
    %v831 = vld [vmem:[#allocation11 + $0x240] sm:$0xff]
    %v832 = vld [vmem:[#allocation11 + $0x248] sm:$0xff]
    %v833 = vld [vmem:[#allocation11 + $0x250] sm:$0xff]
    %v834 = vld [vmem:[#allocation11 + $0x258] sm:$0xff]
    %v835 = vld [vmem:[#allocation11 + $0x260] sm:$0xff]
    %v836 = vld [vmem:[#allocation11 + $0x268] sm:$0xff]
    %v837 = vld [vmem:[#allocation11 + $0x270] sm:$0xff]
    %v838 = vld [vmem:[#allocation11 + $0x278] sm:$0xff]
    %v839 = vld [vmem:[#allocation11 + $0x280] sm:$0xff]
    %v840 = vld [vmem:[#allocation11 + $0x288] sm:$0xff]
    %v841 = vld [vmem:[#allocation11 + $0x290] sm:$0xff]
    %v842 = vld [vmem:[#allocation11 + $0x298] sm:$0xff]
    %v843 = vld [vmem:[#allocation11 + $0x2a0] sm:$0xff]
    %v844 = vld [vmem:[#allocation11 + $0x2a8] sm:$0xff]
    %v845 = vld [vmem:[#allocation11 + $0x2b0] sm:$0xff]
    %v846 = vld [vmem:[#allocation11 + $0x2b8] sm:$0xff]
    %v847 = vld [vmem:[#allocation11 + $0x2c0] sm:$0xff]
    %v848 = vld [vmem:[#allocation11 + $0x2c8] sm:$0xff]
    %v849 = vld [vmem:[#allocation11 + $0x2d0] sm:$0xff]
    %v850 = vld [vmem:[#allocation11 + $0x2d8] sm:$0xff]
    %v851 = vld [vmem:[#allocation11 + $0x2e0] sm:$0xff]
    %v852 = vld [vmem:[#allocation11 + $0x2e8] sm:$0xff]
    %v853 = vld [vmem:[#allocation11 + $0x2f0] sm:$0xff]
    %v854 = vld [vmem:[#allocation11 + $0x2f8] sm:$0xff]
    %v855 = vld [vmem:[#allocation11 + $0x300] sm:$0xff]
    %v856 = vld [vmem:[#allocation11 + $0x308] sm:$0xff]
    %v857 = vld [vmem:[#allocation11 + $0x310] sm:$0xff]
    %v858 = vld [vmem:[#allocation11 + $0x318] sm:$0xff]
    %v859 = vld [vmem:[#allocation11 + $0x320] sm:$0xff]
    %v860 = vld [vmem:[#allocation11 + $0x328] sm:$0xff]
    %v861 = vld [vmem:[#allocation11 + $0x330] sm:$0xff]
    %v862 = vld [vmem:[#allocation11 + $0x338] sm:$0xff]
    %v863 = vld [vmem:[#allocation11 + $0x340] sm:$0xff]
    %v864 = vld [vmem:[#allocation11 + $0x348] sm:$0xff]
    %v865 = vld [vmem:[#allocation11 + $0x350] sm:$0xff]
    %v866 = vld [vmem:[#allocation11 + $0x358] sm:$0xff]
    %v867 = vld [vmem:[#allocation11 + $0x360] sm:$0xff]
    %v868 = vld [vmem:[#allocation11 + $0x368] sm:$0xff]
    %v869 = vld [vmem:[#allocation11 + $0x370] sm:$0xff]
    %v870 = vld [vmem:[#allocation11 + $0x378] sm:$0xff]
    %v871 = vld [vmem:[#allocation11 + $0x380] sm:$0xff]
    %v872 = vld [vmem:[#allocation11 + $0x388] sm:$0xff]
    %v873 = vld [vmem:[#allocation11 + $0x390] sm:$0xff]
    %v874 = vld [vmem:[#allocation11 + $0x398] sm:$0xff]
    %v875 = vld [vmem:[#allocation11 + $0x3a0] sm:$0xff]
    %v876 = vld [vmem:[#allocation11 + $0x3a8] sm:$0xff]
    %v877 = vld [vmem:[#allocation11 + $0x3b0] sm:$0xff]
    %v878 = vld [vmem:[#allocation11 + $0x3b8] sm:$0xff]
    %v879 = vld [vmem:[#allocation11 + $0x3c0] sm:$0xff]
    %v880 = vld [vmem:[#allocation11 + $0x3c8] sm:$0xff]
    %v881 = vld [vmem:[#allocation11 + $0x3d0] sm:$0xff]
    %v882 = vld [vmem:[#allocation11 + $0x3d8] sm:$0xff]
    %v883 = vld [vmem:[#allocation11 + $0x3e0] sm:$0xff]
    %v884 = vld [vmem:[#allocation11 + $0x3e8] sm:$0xff]
    %v885 = vld [vmem:[#allocation11 + $0x3f0] sm:$0xff]
    %v886 = vld [vmem:[#allocation11 + $0x3f8] sm:$0xff]
    %v887 = vld [vmem:[#allocation11 + $0x400] sm:$0xff]
    %v888 = vld [vmem:[#allocation11 + $0x408] sm:$0xff]
    %v889 = vld [vmem:[#allocation11 + $0x410] sm:$0xff]
    %v890 = vld [vmem:[#allocation11 + $0x418] sm:$0xff]
    %v891 = vld [vmem:[#allocation11 + $0x420] sm:$0xff]
    %v892 = vld [vmem:[#allocation11 + $0x428] sm:$0xff]
    %v893 = vld [vmem:[#allocation11 + $0x430] sm:$0xff]
    %v894 = vld [vmem:[#allocation11 + $0x438] sm:$0xff]
    %v895 = vld [vmem:[#allocation11 + $0x440] sm:$0xff]
    %v896 = vld [vmem:[#allocation11 + $0x448] sm:$0xff]
    %v897 = vld [vmem:[#allocation11 + $0x450] sm:$0xff]
    %v898 = vld [vmem:[#allocation11 + $0x458] sm:$0xff]
    %v899 = vld [vmem:[#allocation11 + $0x460] sm:$0xff]
    %v900 = vld [vmem:[#allocation11 + $0x468] sm:$0xff]
    %v901 = vld [vmem:[#allocation11 + $0x470] sm:$0xff]
    %v902 = vld [vmem:[#allocation11 + $0x478] sm:$0xff]
    %v903 = vld [vmem:[#allocation11 + $0x480] sm:$0xff]
    %v904 = vld [vmem:[#allocation11 + $0x488] sm:$0xff]
    %v905 = vld [vmem:[#allocation11 + $0x490] sm:$0xff]
    %v906 = vld [vmem:[#allocation11 + $0x498] sm:$0xff]
    %v907 = vld [vmem:[#allocation11 + $0x4a0] sm:$0xff]
    %v908 = vld [vmem:[#allocation11 + $0x4a8] sm:$0xff]
    %v909 = vld [vmem:[#allocation11 + $0x4b0] sm:$0xff]
    %v910 = vld [vmem:[#allocation11 + $0x4b8] sm:$0xff]
    %v911 = vld [vmem:[#allocation11 + $0x4c0] sm:$0xff]
    %v912 = vld [vmem:[#allocation11 + $0x4c8] sm:$0xff]
    %v913 = vld [vmem:[#allocation11 + $0x4d0] sm:$0xff]
    %v914 = vld [vmem:[#allocation11 + $0x4d8] sm:$0xff]
    %v915 = vld [vmem:[#allocation11 + $0x4e0] sm:$0xff]
    %v916 = vld [vmem:[#allocation11 + $0x4e8] sm:$0xff]
    %v917 = vld [vmem:[#allocation11 + $0x4f0] sm:$0xff]
    %v918 = vld [vmem:[#allocation11 + $0x4f8] sm:$0xff]
    %v919 = vld [vmem:[#allocation11 + $0x500] sm:$0xff]
    %v920 = vld [vmem:[#allocation11 + $0x508] sm:$0xff]
    %v921 = vld [vmem:[#allocation11 + $0x510] sm:$0xff]
    %v922 = vld [vmem:[#allocation11 + $0x518] sm:$0xff]
    %v923 = vld [vmem:[#allocation11 + $0x520] sm:$0xff]
    %v924 = vld [vmem:[#allocation11 + $0x528] sm:$0xff]
    %v925 = vld [vmem:[#allocation11 + $0x530] sm:$0xff]
    %v926 = vld [vmem:[#allocation11 + $0x538] sm:$0xff]
    %v927 = vld [vmem:[#allocation11 + $0x540] sm:$0xff]
    %v928 = vld [vmem:[#allocation11 + $0x548] sm:$0xff]
    %v929 = vld [vmem:[#allocation11 + $0x550] sm:$0xff]
    %v930 = vld [vmem:[#allocation11 + $0x558] sm:$0xff]
    %v931 = vld [vmem:[#allocation11 + $0x560] sm:$0xff]
    %v932 = vld [vmem:[#allocation11 + $0x568] sm:$0xff]
    %v933 = vld [vmem:[#allocation11 + $0x570] sm:$0xff]
    %v934 = vld [vmem:[#allocation11 + $0x578] sm:$0xff]
    %v935 = vld [vmem:[#allocation11 + $0x580] sm:$0xff]
    %v936 = vld [vmem:[#allocation11 + $0x588] sm:$0xff]
    %v937 = vld [vmem:[#allocation11 + $0x590] sm:$0xff]
    %v938 = vld [vmem:[#allocation11 + $0x598] sm:$0xff]
    %v939 = vld [vmem:[#allocation11 + $0x5a0] sm:$0xff]
    %v940 = vld [vmem:[#allocation11 + $0x5a8] sm:$0xff]
    %v941 = vld [vmem:[#allocation11 + $0x5b0] sm:$0xff]
    %v942 = vld [vmem:[#allocation11 + $0x5b8] sm:$0xff]
    %v943 = vld [vmem:[#allocation11 + $0x5c0] sm:$0xff]
    %v944 = vld [vmem:[#allocation11 + $0x5c8] sm:$0xff]
    %v945 = vld [vmem:[#allocation11 + $0x5d0] sm:$0xff]
    %v946 = vld [vmem:[#allocation11 + $0x5d8] sm:$0xff]
    %v947 = vld [vmem:[#allocation11 + $0x5e0] sm:$0xff]
    %v948 = vld [vmem:[#allocation11 + $0x5e8] sm:$0xff]
    %v949 = vld [vmem:[#allocation11 + $0x5f0] sm:$0xff]
    %v950 = vld [vmem:[#allocation11 + $0x5f8] sm:$0xff]
    %v951 = vld [vmem:[#allocation11 + $0x600] sm:$0xff]
    %v952 = vld [vmem:[#allocation11 + $0x608] sm:$0xff]
    %v953 = vld [vmem:[#allocation11 + $0x610] sm:$0xff]
    %v954 = vld [vmem:[#allocation11 + $0x618] sm:$0xff]
    %v955 = vld [vmem:[#allocation11 + $0x620] sm:$0xff]
    %v956 = vld [vmem:[#allocation11 + $0x628] sm:$0xff]
    %v957 = vld [vmem:[#allocation11 + $0x630] sm:$0xff]
    %v958 = vld [vmem:[#allocation11 + $0x638] sm:$0xff]
    %v959 = vld [vmem:[#allocation11 + $0x640] sm:$0xff]
    %v960 = vld [vmem:[#allocation11 + $0x648] sm:$0xff]
    %v961 = vld [vmem:[#allocation11 + $0x650] sm:$0xff]
    %v962 = vld [vmem:[#allocation11 + $0x658] sm:$0xff]
    %v963 = vld [vmem:[#allocation11 + $0x660] sm:$0xff]
    %v964 = vld [vmem:[#allocation11 + $0x668] sm:$0xff]
    %v965 = vld [vmem:[#allocation11 + $0x670] sm:$0xff]
    %v966 = vld [vmem:[#allocation11 + $0x678] sm:$0xff]
    %v967 = vld [vmem:[#allocation11 + $0x680] sm:$0xff]
    %v968 = vld [vmem:[#allocation11 + $0x688] sm:$0xff]
    %v969 = vld [vmem:[#allocation11 + $0x690] sm:$0xff]
    %v970 = vld [vmem:[#allocation11 + $0x698] sm:$0xff]
    %v971 = vld [vmem:[#allocation11 + $0x6a0] sm:$0xff]
    %v972 = vld [vmem:[#allocation11 + $0x6a8] sm:$0xff]
    %v973 = vld [vmem:[#allocation11 + $0x6b0] sm:$0xff]
    %v974 = vld [vmem:[#allocation11 + $0x6b8] sm:$0xff]
    %v975 = vld [vmem:[#allocation11 + $0x6c0] sm:$0xff]
    %v976 = vld [vmem:[#allocation11 + $0x6c8] sm:$0xff]
    %v977 = vld [vmem:[#allocation11 + $0x6d0] sm:$0xff]
    %v978 = vld [vmem:[#allocation11 + $0x6d8] sm:$0xff]
    %v979 = vld [vmem:[#allocation11 + $0x6e0] sm:$0xff]
    %v980 = vld [vmem:[#allocation11 + $0x6e8] sm:$0xff]
    %v981 = vld [vmem:[#allocation11 + $0x6f0] sm:$0xff]
    %v982 = vld [vmem:[#allocation11 + $0x6f8] sm:$0xff]
    %v983 = vld [vmem:[#allocation11 + $0x700] sm:$0xff]
    %v984 = vld [vmem:[#allocation11 + $0x708] sm:$0xff]
    %v985 = vld [vmem:[#allocation11 + $0x710] sm:$0xff]
    %v986 = vld [vmem:[#allocation11 + $0x718] sm:$0xff]
    %v987 = vld [vmem:[#allocation11 + $0x720] sm:$0xff]
    %v988 = vld [vmem:[#allocation11 + $0x728] sm:$0xff]
    %v989 = vld [vmem:[#allocation11 + $0x730] sm:$0xff]
    %v990 = vld [vmem:[#allocation11 + $0x738] sm:$0xff]
    %v991 = vld [vmem:[#allocation11 + $0x740] sm:$0xff]
    %v992 = vld [vmem:[#allocation11 + $0x748] sm:$0xff]
    %v993 = vld [vmem:[#allocation11 + $0x750] sm:$0xff]
    %v994 = vld [vmem:[#allocation11 + $0x758] sm:$0xff]
    %v995 = vld [vmem:[#allocation11 + $0x760] sm:$0xff]
    %v996 = vld [vmem:[#allocation11 + $0x768] sm:$0xff]
    %v997 = vld [vmem:[#allocation11 + $0x770] sm:$0xff]
    %v998 = vld [vmem:[#allocation11 + $0x778] sm:$0xff]
    %v999 = vld [vmem:[#allocation11 + $0x780] sm:$0xff]
    %v1000 = vld [vmem:[#allocation11 + $0x788] sm:$0xff]
    %v1001 = vld [vmem:[#allocation11 + $0x790] sm:$0xff]
    %v1002 = vld [vmem:[#allocation11 + $0x798] sm:$0xff]
    %v1003 = vld [vmem:[#allocation11 + $0x7a0] sm:$0xff]
    %v1004 = vld [vmem:[#allocation11 + $0x7a8] sm:$0xff]
    %v1005 = vld [vmem:[#allocation11 + $0x7b0] sm:$0xff]
    %v1006 = vld [vmem:[#allocation11 + $0x7b8] sm:$0xff]
    %v1007 = vld [vmem:[#allocation11 + $0x7c0] sm:$0xff]
    %v1008 = vld [vmem:[#allocation11 + $0x7c8] sm:$0xff]
    %v1009 = vld [vmem:[#allocation11 + $0x7d0] sm:$0xff]
    %v1010 = vld [vmem:[#allocation11 + $0x7d8] sm:$0xff]
    %v1011 = vld [vmem:[#allocation11 + $0x7e0] sm:$0xff]
    %v1012 = vld [vmem:[#allocation11 + $0x7e8] sm:$0xff]
    %v1013 = vld [vmem:[#allocation11 + $0x7f0] sm:$0xff]
    %v1014 = vld [vmem:[#allocation11 + $0x7f8] sm:$0xff]
    %v1015 = vld [vmem:[#allocation13] sm:$0xff]
    %v1017 = vlaneseq
    %v1018 = vshrl.u32 %v1017, 7
    %v1019 = vsub.s32 0, %v1018
    %v1020 = vrot.slane %v1015, %v1019
    %v1021 = vlaneseq
    %v1022 = vshrl.u32 %v1021, 7
    %v1023 = vsub.s32 1, %v1022
    %v1024 = vrot.slane %v1015, %v1023
    %v1025 = vlaneseq
    %v1026 = vshrl.u32 %v1025, 7
    %v1027 = vsub.s32 2, %v1026
    %v1028 = vrot.slane %v1015, %v1027
    %v1029 = vlaneseq
    %v1030 = vshrl.u32 %v1029, 7
    %v1031 = vsub.s32 3, %v1030
    %v1032 = vrot.slane %v1015, %v1031
    %v1033 = vlaneseq
    %v1034 = vshrl.u32 %v1033, 7
    %v1035 = vsub.s32 4, %v1034
    %v1036 = vrot.slane %v1015, %v1035
    %v1037 = vlaneseq
    %v1038 = vshrl.u32 %v1037, 7
    %v1039 = vsub.s32 5, %v1038
    %v1040 = vrot.slane %v1015, %v1039
    %v1041 = vlaneseq
    %v1042 = vshrl.u32 %v1041, 7
    %v1043 = vsub.s32 6, %v1042
    %v1044 = vrot.slane %v1015, %v1043
    %v1045 = vlaneseq
    %v1046 = vshrl.u32 %v1045, 7
    %v1047 = vsub.s32 7, %v1046
    %v1048 = vrot.slane %v1015, %v1047
    %v1313 = vunpack.c.l.b16 %v759
    %v1314 = vunpack.c.h.b16 %v759
    %v1315 = vunpack.c.l.b16 %v760
    %v1316 = vunpack.c.h.b16 %v760
    %v1317 = vunpack.c.l.b16 %v761
    %v1318 = vunpack.c.h.b16 %v761
    %v1319 = vunpack.c.l.b16 %v762
    %v1320 = vunpack.c.h.b16 %v762
    %v1321 = vunpack.c.l.b16 %v763
    %v1322 = vunpack.c.h.b16 %v763
    %v1323 = vunpack.c.l.b16 %v764
    %v1324 = vunpack.c.h.b16 %v764
    %v1325 = vunpack.c.l.b16 %v765
    %v1326 = vunpack.c.h.b16 %v765
    %v1327 = vunpack.c.l.b16 %v766
    %v1328 = vunpack.c.h.b16 %v766
    %v1329 = vunpack.c.l.b16 %v767
    %v1330 = vunpack.c.h.b16 %v767
    %v1331 = vunpack.c.l.b16 %v768
    %v1332 = vunpack.c.h.b16 %v768
    %v1333 = vunpack.c.l.b16 %v769
    %v1334 = vunpack.c.h.b16 %v769
    %v1335 = vunpack.c.l.b16 %v770
    %v1336 = vunpack.c.h.b16 %v770
    %v1337 = vunpack.c.l.b16 %v771
    %v1338 = vunpack.c.h.b16 %v771
    %v1339 = vunpack.c.l.b16 %v772
    %v1340 = vunpack.c.h.b16 %v772
    %v1341 = vunpack.c.l.b16 %v773
    %v1342 = vunpack.c.h.b16 %v773
    %v1343 = vunpack.c.l.b16 %v774
    %v1344 = vunpack.c.h.b16 %v774
    %v1345 = vunpack.c.l.b16 %v775
    %v1346 = vunpack.c.h.b16 %v775
    %v1347 = vunpack.c.l.b16 %v776
    %v1348 = vunpack.c.h.b16 %v776
    %v1349 = vunpack.c.l.b16 %v777
    %v1350 = vunpack.c.h.b16 %v777
    %v1351 = vunpack.c.l.b16 %v778
    %v1352 = vunpack.c.h.b16 %v778
    %v1353 = vunpack.c.l.b16 %v779
    %v1354 = vunpack.c.h.b16 %v779
    %v1355 = vunpack.c.l.b16 %v780
    %v1356 = vunpack.c.h.b16 %v780
    %v1357 = vunpack.c.l.b16 %v781
    %v1358 = vunpack.c.h.b16 %v781
    %v1359 = vunpack.c.l.b16 %v782
    %v1360 = vunpack.c.h.b16 %v782
    %v1361 = vunpack.c.l.b16 %v783
    %v1362 = vunpack.c.h.b16 %v783
    %v1363 = vunpack.c.l.b16 %v784
    %v1364 = vunpack.c.h.b16 %v784
    %v1365 = vunpack.c.l.b16 %v785
    %v1366 = vunpack.c.h.b16 %v785
    %v1367 = vunpack.c.l.b16 %v786
    %v1368 = vunpack.c.h.b16 %v786
    %v1369 = vunpack.c.l.b16 %v787
    %v1370 = vunpack.c.h.b16 %v787
    %v1371 = vunpack.c.l.b16 %v788
    %v1372 = vunpack.c.h.b16 %v788
    %v1373 = vunpack.c.l.b16 %v789
    %v1374 = vunpack.c.h.b16 %v789
    %v1375 = vunpack.c.l.b16 %v790
    %v1376 = vunpack.c.h.b16 %v790
    %v1377 = vunpack.c.l.b16 %v791
    %v1378 = vunpack.c.h.b16 %v791
    %v1379 = vunpack.c.l.b16 %v792
    %v1380 = vunpack.c.h.b16 %v792
    %v1381 = vunpack.c.l.b16 %v793
    %v1382 = vunpack.c.h.b16 %v793
    %v1383 = vunpack.c.l.b16 %v794
    %v1384 = vunpack.c.h.b16 %v794
    %v1385 = vunpack.c.l.b16 %v795
    %v1386 = vunpack.c.h.b16 %v795
    %v1387 = vunpack.c.l.b16 %v796
    %v1388 = vunpack.c.h.b16 %v796
    %v1389 = vunpack.c.l.b16 %v797
    %v1390 = vunpack.c.h.b16 %v797
    %v1391 = vunpack.c.l.b16 %v798
    %v1392 = vunpack.c.h.b16 %v798
    %v1393 = vunpack.c.l.b16 %v799
    %v1394 = vunpack.c.h.b16 %v799
    %v1395 = vunpack.c.l.b16 %v800
    %v1396 = vunpack.c.h.b16 %v800
    %v1397 = vunpack.c.l.b16 %v801
    %v1398 = vunpack.c.h.b16 %v801
    %v1399 = vunpack.c.l.b16 %v802
    %v1400 = vunpack.c.h.b16 %v802
    %v1401 = vunpack.c.l.b16 %v803
    %v1402 = vunpack.c.h.b16 %v803
    %v1403 = vunpack.c.l.b16 %v804
    %v1404 = vunpack.c.h.b16 %v804
    %v1405 = vunpack.c.l.b16 %v805
    %v1406 = vunpack.c.h.b16 %v805
    %v1407 = vunpack.c.l.b16 %v806
    %v1408 = vunpack.c.h.b16 %v806
    %v1409 = vunpack.c.l.b16 %v807
    %v1410 = vunpack.c.h.b16 %v807
    %v1411 = vunpack.c.l.b16 %v808
    %v1412 = vunpack.c.h.b16 %v808
    %v1413 = vunpack.c.l.b16 %v809
    %v1414 = vunpack.c.h.b16 %v809
    %v1415 = vunpack.c.l.b16 %v810
    %v1416 = vunpack.c.h.b16 %v810
    %v1417 = vunpack.c.l.b16 %v811
    %v1418 = vunpack.c.h.b16 %v811
    %v1419 = vunpack.c.l.b16 %v812
    %v1420 = vunpack.c.h.b16 %v812
    %v1421 = vunpack.c.l.b16 %v813
    %v1422 = vunpack.c.h.b16 %v813
    %v1423 = vunpack.c.l.b16 %v814
    %v1424 = vunpack.c.h.b16 %v814
    %v1425 = vunpack.c.l.b16 %v815
    %v1426 = vunpack.c.h.b16 %v815
    %v1427 = vunpack.c.l.b16 %v816
    %v1428 = vunpack.c.h.b16 %v816
    %v1429 = vunpack.c.l.b16 %v817
    %v1430 = vunpack.c.h.b16 %v817
    %v1431 = vunpack.c.l.b16 %v818
    %v1432 = vunpack.c.h.b16 %v818
    %v1433 = vunpack.c.l.b16 %v819
    %v1434 = vunpack.c.h.b16 %v819
    %v1435 = vunpack.c.l.b16 %v820
    %v1436 = vunpack.c.h.b16 %v820
    %v1437 = vunpack.c.l.b16 %v821
    %v1438 = vunpack.c.h.b16 %v821
    %v1439 = vunpack.c.l.b16 %v822
    %v1440 = vunpack.c.h.b16 %v822
    %v1441 = vunpack.c.l.b16 %v823
    %v1442 = vunpack.c.h.b16 %v823
    %v1443 = vunpack.c.l.b16 %v824
    %v1444 = vunpack.c.h.b16 %v824
    %v1445 = vunpack.c.l.b16 %v825
    %v1446 = vunpack.c.h.b16 %v825
    %v1447 = vunpack.c.l.b16 %v826
    %v1448 = vunpack.c.h.b16 %v826
    %v1449 = vunpack.c.l.b16 %v827
    %v1450 = vunpack.c.h.b16 %v827
    %v1451 = vunpack.c.l.b16 %v828
    %v1452 = vunpack.c.h.b16 %v828
    %v1453 = vunpack.c.l.b16 %v829
    %v1454 = vunpack.c.h.b16 %v829
    %v1455 = vunpack.c.l.b16 %v830
    %v1456 = vunpack.c.h.b16 %v830
    %v1457 = vunpack.c.l.b16 %v831
    %v1458 = vunpack.c.h.b16 %v831
    %v1459 = vunpack.c.l.b16 %v832
    %v1460 = vunpack.c.h.b16 %v832
    %v1461 = vunpack.c.l.b16 %v833
    %v1462 = vunpack.c.h.b16 %v833
    %v1463 = vunpack.c.l.b16 %v834
    %v1464 = vunpack.c.h.b16 %v834
    %v1465 = vunpack.c.l.b16 %v835
    %v1466 = vunpack.c.h.b16 %v835
    %v1467 = vunpack.c.l.b16 %v836
    %v1468 = vunpack.c.h.b16 %v836
    %v1469 = vunpack.c.l.b16 %v837
    %v1470 = vunpack.c.h.b16 %v837
    %v1471 = vunpack.c.l.b16 %v838
    %v1472 = vunpack.c.h.b16 %v838
    %v1473 = vunpack.c.l.b16 %v839
    %v1474 = vunpack.c.h.b16 %v839
    %v1475 = vunpack.c.l.b16 %v840
    %v1476 = vunpack.c.h.b16 %v840
    %v1477 = vunpack.c.l.b16 %v841
    %v1478 = vunpack.c.h.b16 %v841
    %v1479 = vunpack.c.l.b16 %v842
    %v1480 = vunpack.c.h.b16 %v842
    %v1481 = vunpack.c.l.b16 %v843
    %v1482 = vunpack.c.h.b16 %v843
    %v1483 = vunpack.c.l.b16 %v844
    %v1484 = vunpack.c.h.b16 %v844
    %v1485 = vunpack.c.l.b16 %v845
    %v1486 = vunpack.c.h.b16 %v845
    %v1487 = vunpack.c.l.b16 %v846
    %v1488 = vunpack.c.h.b16 %v846
    %v1489 = vunpack.c.l.b16 %v847
    %v1490 = vunpack.c.h.b16 %v847
    %v1491 = vunpack.c.l.b16 %v848
    %v1492 = vunpack.c.h.b16 %v848
    %v1493 = vunpack.c.l.b16 %v849
    %v1494 = vunpack.c.h.b16 %v849
    %v1495 = vunpack.c.l.b16 %v850
    %v1496 = vunpack.c.h.b16 %v850
    %v1497 = vunpack.c.l.b16 %v851
    %v1498 = vunpack.c.h.b16 %v851
    %v1499 = vunpack.c.l.b16 %v852
    %v1500 = vunpack.c.h.b16 %v852
    %v1501 = vunpack.c.l.b16 %v853
    %v1502 = vunpack.c.h.b16 %v853
    %v1503 = vunpack.c.l.b16 %v854
    %v1504 = vunpack.c.h.b16 %v854
    %v1505 = vunpack.c.l.b16 %v855
    %v1506 = vunpack.c.h.b16 %v855
    %v1507 = vunpack.c.l.b16 %v856
    %v1508 = vunpack.c.h.b16 %v856
    %v1509 = vunpack.c.l.b16 %v857
    %v1510 = vunpack.c.h.b16 %v857
    %v1511 = vunpack.c.l.b16 %v858
    %v1512 = vunpack.c.h.b16 %v858
    %v1513 = vunpack.c.l.b16 %v859
    %v1514 = vunpack.c.h.b16 %v859
    %v1515 = vunpack.c.l.b16 %v860
    %v1516 = vunpack.c.h.b16 %v860
    %v1517 = vunpack.c.l.b16 %v861
    %v1518 = vunpack.c.h.b16 %v861
    %v1519 = vunpack.c.l.b16 %v862
    %v1520 = vunpack.c.h.b16 %v862
    %v1521 = vunpack.c.l.b16 %v863
    %v1522 = vunpack.c.h.b16 %v863
    %v1523 = vunpack.c.l.b16 %v864
    %v1524 = vunpack.c.h.b16 %v864
    %v1525 = vunpack.c.l.b16 %v865
    %v1526 = vunpack.c.h.b16 %v865
    %v1527 = vunpack.c.l.b16 %v866
    %v1528 = vunpack.c.h.b16 %v866
    %v1529 = vunpack.c.l.b16 %v867
    %v1530 = vunpack.c.h.b16 %v867
    %v1531 = vunpack.c.l.b16 %v868
    %v1532 = vunpack.c.h.b16 %v868
    %v1533 = vunpack.c.l.b16 %v869
    %v1534 = vunpack.c.h.b16 %v869
    %v1535 = vunpack.c.l.b16 %v870
    %v1536 = vunpack.c.h.b16 %v870
    %v1537 = vunpack.c.l.b16 %v871
    %v1538 = vunpack.c.h.b16 %v871
    %v1539 = vunpack.c.l.b16 %v872
    %v1540 = vunpack.c.h.b16 %v872
    %v1541 = vunpack.c.l.b16 %v873
    %v1542 = vunpack.c.h.b16 %v873
    %v1543 = vunpack.c.l.b16 %v874
    %v1544 = vunpack.c.h.b16 %v874
    %v1545 = vunpack.c.l.b16 %v875
    %v1546 = vunpack.c.h.b16 %v875
    %v1547 = vunpack.c.l.b16 %v876
    %v1548 = vunpack.c.h.b16 %v876
    %v1549 = vunpack.c.l.b16 %v877
    %v1550 = vunpack.c.h.b16 %v877
    %v1551 = vunpack.c.l.b16 %v878
    %v1552 = vunpack.c.h.b16 %v878
    %v1553 = vunpack.c.l.b16 %v879
    %v1554 = vunpack.c.h.b16 %v879
    %v1555 = vunpack.c.l.b16 %v880
    %v1556 = vunpack.c.h.b16 %v880
    %v1557 = vunpack.c.l.b16 %v881
    %v1558 = vunpack.c.h.b16 %v881
    %v1559 = vunpack.c.l.b16 %v882
    %v1560 = vunpack.c.h.b16 %v882
    %v1561 = vunpack.c.l.b16 %v883
    %v1562 = vunpack.c.h.b16 %v883
    %v1563 = vunpack.c.l.b16 %v884
    %v1564 = vunpack.c.h.b16 %v884
    %v1565 = vunpack.c.l.b16 %v885
    %v1566 = vunpack.c.h.b16 %v885
    %v1567 = vunpack.c.l.b16 %v886
    %v1568 = vunpack.c.h.b16 %v886
    %v1569 = vunpack.c.l.b16 %v887
    %v1570 = vunpack.c.h.b16 %v887
    %v1571 = vunpack.c.l.b16 %v888
    %v1572 = vunpack.c.h.b16 %v888
    %v1573 = vunpack.c.l.b16 %v889
    %v1574 = vunpack.c.h.b16 %v889
    %v1575 = vunpack.c.l.b16 %v890
    %v1576 = vunpack.c.h.b16 %v890
    %v1577 = vunpack.c.l.b16 %v891
    %v1578 = vunpack.c.h.b16 %v891
    %v1579 = vunpack.c.l.b16 %v892
    %v1580 = vunpack.c.h.b16 %v892
    %v1581 = vunpack.c.l.b16 %v893
    %v1582 = vunpack.c.h.b16 %v893
    %v1583 = vunpack.c.l.b16 %v894
    %v1584 = vunpack.c.h.b16 %v894
    %v1585 = vunpack.c.l.b16 %v895
    %v1586 = vunpack.c.h.b16 %v895
    %v1587 = vunpack.c.l.b16 %v896
    %v1588 = vunpack.c.h.b16 %v896
    %v1589 = vunpack.c.l.b16 %v897
    %v1590 = vunpack.c.h.b16 %v897
    %v1591 = vunpack.c.l.b16 %v898
    %v1592 = vunpack.c.h.b16 %v898
    %v1593 = vunpack.c.l.b16 %v899
    %v1594 = vunpack.c.h.b16 %v899
    %v1595 = vunpack.c.l.b16 %v900
    %v1596 = vunpack.c.h.b16 %v900
    %v1597 = vunpack.c.l.b16 %v901
    %v1598 = vunpack.c.h.b16 %v901
    %v1599 = vunpack.c.l.b16 %v902
    %v1600 = vunpack.c.h.b16 %v902
    %v1601 = vunpack.c.l.b16 %v903
    %v1602 = vunpack.c.h.b16 %v903
    %v1603 = vunpack.c.l.b16 %v904
    %v1604 = vunpack.c.h.b16 %v904
    %v1605 = vunpack.c.l.b16 %v905
    %v1606 = vunpack.c.h.b16 %v905
    %v1607 = vunpack.c.l.b16 %v906
    %v1608 = vunpack.c.h.b16 %v906
    %v1609 = vunpack.c.l.b16 %v907
    %v1610 = vunpack.c.h.b16 %v907
    %v1611 = vunpack.c.l.b16 %v908
    %v1612 = vunpack.c.h.b16 %v908
    %v1613 = vunpack.c.l.b16 %v909
    %v1614 = vunpack.c.h.b16 %v909
    %v1615 = vunpack.c.l.b16 %v910
    %v1616 = vunpack.c.h.b16 %v910
    %v1617 = vunpack.c.l.b16 %v911
    %v1618 = vunpack.c.h.b16 %v911
    %v1619 = vunpack.c.l.b16 %v912
    %v1620 = vunpack.c.h.b16 %v912
    %v1621 = vunpack.c.l.b16 %v913
    %v1622 = vunpack.c.h.b16 %v913
    %v1623 = vunpack.c.l.b16 %v914
    %v1624 = vunpack.c.h.b16 %v914
    %v1625 = vunpack.c.l.b16 %v915
    %v1626 = vunpack.c.h.b16 %v915
    %v1627 = vunpack.c.l.b16 %v916
    %v1628 = vunpack.c.h.b16 %v916
    %v1629 = vunpack.c.l.b16 %v917
    %v1630 = vunpack.c.h.b16 %v917
    %v1631 = vunpack.c.l.b16 %v918
    %v1632 = vunpack.c.h.b16 %v918
    %v1633 = vunpack.c.l.b16 %v919
    %v1634 = vunpack.c.h.b16 %v919
    %v1635 = vunpack.c.l.b16 %v920
    %v1636 = vunpack.c.h.b16 %v920
    %v1637 = vunpack.c.l.b16 %v921
    %v1638 = vunpack.c.h.b16 %v921
    %v1639 = vunpack.c.l.b16 %v922
    %v1640 = vunpack.c.h.b16 %v922
    %v1641 = vunpack.c.l.b16 %v923
    %v1642 = vunpack.c.h.b16 %v923
    %v1643 = vunpack.c.l.b16 %v924
    %v1644 = vunpack.c.h.b16 %v924
    %v1645 = vunpack.c.l.b16 %v925
    %v1646 = vunpack.c.h.b16 %v925
    %v1647 = vunpack.c.l.b16 %v926
    %v1648 = vunpack.c.h.b16 %v926
    %v1649 = vunpack.c.l.b16 %v927
    %v1650 = vunpack.c.h.b16 %v927
    %v1651 = vunpack.c.l.b16 %v928
    %v1652 = vunpack.c.h.b16 %v928
    %v1653 = vunpack.c.l.b16 %v929
    %v1654 = vunpack.c.h.b16 %v929
    %v1655 = vunpack.c.l.b16 %v930
    %v1656 = vunpack.c.h.b16 %v930
    %v1657 = vunpack.c.l.b16 %v931
    %v1658 = vunpack.c.h.b16 %v931
    %v1659 = vunpack.c.l.b16 %v932
    %v1660 = vunpack.c.h.b16 %v932
    %v1661 = vunpack.c.l.b16 %v933
    %v1662 = vunpack.c.h.b16 %v933
    %v1663 = vunpack.c.l.b16 %v934
    %v1664 = vunpack.c.h.b16 %v934
    %v1665 = vunpack.c.l.b16 %v935
    %v1666 = vunpack.c.h.b16 %v935
    %v1667 = vunpack.c.l.b16 %v936
    %v1668 = vunpack.c.h.b16 %v936
    %v1669 = vunpack.c.l.b16 %v937
    %v1670 = vunpack.c.h.b16 %v937
    %v1671 = vunpack.c.l.b16 %v938
    %v1672 = vunpack.c.h.b16 %v938
    %v1673 = vunpack.c.l.b16 %v939
    %v1674 = vunpack.c.h.b16 %v939
    %v1675 = vunpack.c.l.b16 %v940
    %v1676 = vunpack.c.h.b16 %v940
    %v1677 = vunpack.c.l.b16 %v941
    %v1678 = vunpack.c.h.b16 %v941
    %v1679 = vunpack.c.l.b16 %v942
    %v1680 = vunpack.c.h.b16 %v942
    %v1681 = vunpack.c.l.b16 %v943
    %v1682 = vunpack.c.h.b16 %v943
    %v1683 = vunpack.c.l.b16 %v944
    %v1684 = vunpack.c.h.b16 %v944
    %v1685 = vunpack.c.l.b16 %v945
    %v1686 = vunpack.c.h.b16 %v945
    %v1687 = vunpack.c.l.b16 %v946
    %v1688 = vunpack.c.h.b16 %v946
    %v1689 = vunpack.c.l.b16 %v947
    %v1690 = vunpack.c.h.b16 %v947
    %v1691 = vunpack.c.l.b16 %v948
    %v1692 = vunpack.c.h.b16 %v948
    %v1693 = vunpack.c.l.b16 %v949
    %v1694 = vunpack.c.h.b16 %v949
    %v1695 = vunpack.c.l.b16 %v950
    %v1696 = vunpack.c.h.b16 %v950
    %v1697 = vunpack.c.l.b16 %v951
    %v1698 = vunpack.c.h.b16 %v951
    %v1699 = vunpack.c.l.b16 %v952
    %v1700 = vunpack.c.h.b16 %v952
    %v1701 = vunpack.c.l.b16 %v953
    %v1702 = vunpack.c.h.b16 %v953
    %v1703 = vunpack.c.l.b16 %v954
    %v1704 = vunpack.c.h.b16 %v954
    %v1705 = vunpack.c.l.b16 %v955
    %v1706 = vunpack.c.h.b16 %v955
    %v1707 = vunpack.c.l.b16 %v956
    %v1708 = vunpack.c.h.b16 %v956
    %v1709 = vunpack.c.l.b16 %v957
    %v1710 = vunpack.c.h.b16 %v957
    %v1711 = vunpack.c.l.b16 %v958
    %v1712 = vunpack.c.h.b16 %v958
    %v1713 = vunpack.c.l.b16 %v959
    %v1714 = vunpack.c.h.b16 %v959
    %v1715 = vunpack.c.l.b16 %v960
    %v1716 = vunpack.c.h.b16 %v960
    %v1717 = vunpack.c.l.b16 %v961
    %v1718 = vunpack.c.h.b16 %v961
    %v1719 = vunpack.c.l.b16 %v962
    %v1720 = vunpack.c.h.b16 %v962
    %v1721 = vunpack.c.l.b16 %v963
    %v1722 = vunpack.c.h.b16 %v963
    %v1723 = vunpack.c.l.b16 %v964
    %v1724 = vunpack.c.h.b16 %v964
    %v1725 = vunpack.c.l.b16 %v965
    %v1726 = vunpack.c.h.b16 %v965
    %v1727 = vunpack.c.l.b16 %v966
    %v1728 = vunpack.c.h.b16 %v966
    %v1729 = vunpack.c.l.b16 %v967
    %v1730 = vunpack.c.h.b16 %v967
    %v1731 = vunpack.c.l.b16 %v968
    %v1732 = vunpack.c.h.b16 %v968
    %v1733 = vunpack.c.l.b16 %v969
    %v1734 = vunpack.c.h.b16 %v969
    %v1735 = vunpack.c.l.b16 %v970
    %v1736 = vunpack.c.h.b16 %v970
    %v1737 = vunpack.c.l.b16 %v971
    %v1738 = vunpack.c.h.b16 %v971
    %v1739 = vunpack.c.l.b16 %v972
    %v1740 = vunpack.c.h.b16 %v972
    %v1741 = vunpack.c.l.b16 %v973
    %v1742 = vunpack.c.h.b16 %v973
    %v1743 = vunpack.c.l.b16 %v974
    %v1744 = vunpack.c.h.b16 %v974
    %v1745 = vunpack.c.l.b16 %v975
    %v1746 = vunpack.c.h.b16 %v975
    %v1747 = vunpack.c.l.b16 %v976
    %v1748 = vunpack.c.h.b16 %v976
    %v1749 = vunpack.c.l.b16 %v977
    %v1750 = vunpack.c.h.b16 %v977
    %v1751 = vunpack.c.l.b16 %v978
    %v1752 = vunpack.c.h.b16 %v978
    %v1753 = vunpack.c.l.b16 %v979
    %v1754 = vunpack.c.h.b16 %v979
    %v1755 = vunpack.c.l.b16 %v980
    %v1756 = vunpack.c.h.b16 %v980
    %v1757 = vunpack.c.l.b16 %v981
    %v1758 = vunpack.c.h.b16 %v981
    %v1759 = vunpack.c.l.b16 %v982
    %v1760 = vunpack.c.h.b16 %v982
    %v1761 = vunpack.c.l.b16 %v983
    %v1762 = vunpack.c.h.b16 %v983
    %v1763 = vunpack.c.l.b16 %v984
    %v1764 = vunpack.c.h.b16 %v984
    %v1765 = vunpack.c.l.b16 %v985
    %v1766 = vunpack.c.h.b16 %v985
    %v1767 = vunpack.c.l.b16 %v986
    %v1768 = vunpack.c.h.b16 %v986
    %v1769 = vunpack.c.l.b16 %v987
    %v1770 = vunpack.c.h.b16 %v987
    %v1771 = vunpack.c.l.b16 %v988
    %v1772 = vunpack.c.h.b16 %v988
    %v1773 = vunpack.c.l.b16 %v989
    %v1774 = vunpack.c.h.b16 %v989
    %v1775 = vunpack.c.l.b16 %v990
    %v1776 = vunpack.c.h.b16 %v990
    %v1777 = vunpack.c.l.b16 %v991
    %v1778 = vunpack.c.h.b16 %v991
    %v1779 = vunpack.c.l.b16 %v992
    %v1780 = vunpack.c.h.b16 %v992
    %v1781 = vunpack.c.l.b16 %v993
    %v1782 = vunpack.c.h.b16 %v993
    %v1783 = vunpack.c.l.b16 %v994
    %v1784 = vunpack.c.h.b16 %v994
    %v1785 = vunpack.c.l.b16 %v995
    %v1786 = vunpack.c.h.b16 %v995
    %v1787 = vunpack.c.l.b16 %v996
    %v1788 = vunpack.c.h.b16 %v996
    %v1789 = vunpack.c.l.b16 %v997
    %v1790 = vunpack.c.h.b16 %v997
    %v1791 = vunpack.c.l.b16 %v998
    %v1792 = vunpack.c.h.b16 %v998
    %v1793 = vunpack.c.l.b16 %v999
    %v1794 = vunpack.c.h.b16 %v999
    %v1795 = vunpack.c.l.b16 %v1000
    %v1796 = vunpack.c.h.b16 %v1000
    %v1797 = vunpack.c.l.b16 %v1001
    %v1798 = vunpack.c.h.b16 %v1001
    %v1799 = vunpack.c.l.b16 %v1002
    %v1800 = vunpack.c.h.b16 %v1002
    %v1801 = vunpack.c.l.b16 %v1003
    %v1802 = vunpack.c.h.b16 %v1003
    %v1803 = vunpack.c.l.b16 %v1004
    %v1804 = vunpack.c.h.b16 %v1004
    %v1805 = vunpack.c.l.b16 %v1005
    %v1806 = vunpack.c.h.b16 %v1005
    %v1807 = vunpack.c.l.b16 %v1006
    %v1808 = vunpack.c.h.b16 %v1006
    %v1809 = vunpack.c.l.b16 %v1007
    %v1810 = vunpack.c.h.b16 %v1007
    %v1811 = vunpack.c.l.b16 %v1008
    %v1812 = vunpack.c.h.b16 %v1008
    %v1813 = vunpack.c.l.b16 %v1009
    %v1814 = vunpack.c.h.b16 %v1009
    %v1815 = vunpack.c.l.b16 %v1010
    %v1816 = vunpack.c.h.b16 %v1010
    %v1817 = vunpack.c.l.b16 %v1011
    %v1818 = vunpack.c.h.b16 %v1011
    %v1819 = vunpack.c.l.b16 %v1012
    %v1820 = vunpack.c.h.b16 %v1012
    %v1821 = vunpack.c.l.b16 %v1013
    %v1822 = vunpack.c.h.b16 %v1013
    %v1823 = vunpack.c.l.b16 %v1014
    %v1824 = vunpack.c.h.b16 %v1014
    %v1825 = vpack.c.b16 %v1321, %v1313
    %v1826 = vpack.c.b16 %v1322, %v1314
    %v1827 = vpack.c.b16 %v1323, %v1315
    %v1828 = vpack.c.b16 %v1324, %v1316
    %v1829 = vpack.c.b16 %v1325, %v1317
    %v1830 = vpack.c.b16 %v1326, %v1318
    %v1831 = vpack.c.b16 %v1327, %v1319
    %v1832 = vpack.c.b16 %v1328, %v1320
    %v1833 = vpack.c.b16 %v1337, %v1329
    %v1834 = vpack.c.b16 %v1338, %v1330
    %v1835 = vpack.c.b16 %v1339, %v1331
    %v1836 = vpack.c.b16 %v1340, %v1332
    %v1837 = vpack.c.b16 %v1341, %v1333
    %v1838 = vpack.c.b16 %v1342, %v1334
    %v1839 = vpack.c.b16 %v1343, %v1335
    %v1840 = vpack.c.b16 %v1344, %v1336
    %v1841 = vpack.c.b16 %v1353, %v1345
    %v1842 = vpack.c.b16 %v1354, %v1346
    %v1843 = vpack.c.b16 %v1355, %v1347
    %v1844 = vpack.c.b16 %v1356, %v1348
    %v1845 = vpack.c.b16 %v1357, %v1349
    %v1846 = vpack.c.b16 %v1358, %v1350
    %v1847 = vpack.c.b16 %v1359, %v1351
    %v1848 = vpack.c.b16 %v1360, %v1352
    %v1849 = vpack.c.b16 %v1369, %v1361
    %v1850 = vpack.c.b16 %v1370, %v1362
    %v1851 = vpack.c.b16 %v1371, %v1363
    %v1852 = vpack.c.b16 %v1372, %v1364
    %v1853 = vpack.c.b16 %v1373, %v1365
    %v1854 = vpack.c.b16 %v1374, %v1366
    %v1855 = vpack.c.b16 %v1375, %v1367
    %v1856 = vpack.c.b16 %v1376, %v1368
    %v1857 = vpack.c.b16 %v1385, %v1377
    %v1858 = vpack.c.b16 %v1386, %v1378
    %v1859 = vpack.c.b16 %v1387, %v1379
    %v1860 = vpack.c.b16 %v1388, %v1380
    %v1861 = vpack.c.b16 %v1389, %v1381
    %v1862 = vpack.c.b16 %v1390, %v1382
    %v1863 = vpack.c.b16 %v1391, %v1383
    %v1864 = vpack.c.b16 %v1392, %v1384
    %v1865 = vpack.c.b16 %v1401, %v1393
    %v1866 = vpack.c.b16 %v1402, %v1394
    %v1867 = vpack.c.b16 %v1403, %v1395
    %v1868 = vpack.c.b16 %v1404, %v1396
    %v1869 = vpack.c.b16 %v1405, %v1397
    %v1870 = vpack.c.b16 %v1406, %v1398
    %v1871 = vpack.c.b16 %v1407, %v1399
    %v1872 = vpack.c.b16 %v1408, %v1400
    %v1873 = vpack.c.b16 %v1417, %v1409
    %v1874 = vpack.c.b16 %v1418, %v1410
    %v1875 = vpack.c.b16 %v1419, %v1411
    %v1876 = vpack.c.b16 %v1420, %v1412
    %v1877 = vpack.c.b16 %v1421, %v1413
    %v1878 = vpack.c.b16 %v1422, %v1414
    %v1879 = vpack.c.b16 %v1423, %v1415
    %v1880 = vpack.c.b16 %v1424, %v1416
    %v1881 = vpack.c.b16 %v1433, %v1425
    %v1882 = vpack.c.b16 %v1434, %v1426
    %v1883 = vpack.c.b16 %v1435, %v1427
    %v1884 = vpack.c.b16 %v1436, %v1428
    %v1885 = vpack.c.b16 %v1437, %v1429
    %v1886 = vpack.c.b16 %v1438, %v1430
    %v1887 = vpack.c.b16 %v1439, %v1431
    %v1888 = vpack.c.b16 %v1440, %v1432
    %v1889 = vpack.c.b16 %v1449, %v1441
    %v1890 = vpack.c.b16 %v1450, %v1442
    %v1891 = vpack.c.b16 %v1451, %v1443
    %v1892 = vpack.c.b16 %v1452, %v1444
    %v1893 = vpack.c.b16 %v1453, %v1445
    %v1894 = vpack.c.b16 %v1454, %v1446
    %v1895 = vpack.c.b16 %v1455, %v1447
    %v1896 = vpack.c.b16 %v1456, %v1448
    %v1897 = vpack.c.b16 %v1465, %v1457
    %v1898 = vpack.c.b16 %v1466, %v1458
    %v1899 = vpack.c.b16 %v1467, %v1459
    %v1900 = vpack.c.b16 %v1468, %v1460
    %v1901 = vpack.c.b16 %v1469, %v1461
    %v1902 = vpack.c.b16 %v1470, %v1462
    %v1903 = vpack.c.b16 %v1471, %v1463
    %v1904 = vpack.c.b16 %v1472, %v1464
    %v1905 = vpack.c.b16 %v1481, %v1473
    %v1906 = vpack.c.b16 %v1482, %v1474
    %v1907 = vpack.c.b16 %v1483, %v1475
    %v1908 = vpack.c.b16 %v1484, %v1476
    %v1909 = vpack.c.b16 %v1485, %v1477
    %v1910 = vpack.c.b16 %v1486, %v1478
    %v1911 = vpack.c.b16 %v1487, %v1479
    %v1912 = vpack.c.b16 %v1488, %v1480
    %v1913 = vpack.c.b16 %v1497, %v1489
    %v1914 = vpack.c.b16 %v1498, %v1490
    %v1915 = vpack.c.b16 %v1499, %v1491
    %v1916 = vpack.c.b16 %v1500, %v1492
    %v1917 = vpack.c.b16 %v1501, %v1493
    %v1918 = vpack.c.b16 %v1502, %v1494
    %v1919 = vpack.c.b16 %v1503, %v1495
    %v1920 = vpack.c.b16 %v1504, %v1496
    %v1921 = vpack.c.b16 %v1513, %v1505
    %v1922 = vpack.c.b16 %v1514, %v1506
    %v1923 = vpack.c.b16 %v1515, %v1507
    %v1924 = vpack.c.b16 %v1516, %v1508
    %v1925 = vpack.c.b16 %v1517, %v1509
    %v1926 = vpack.c.b16 %v1518, %v1510
    %v1927 = vpack.c.b16 %v1519, %v1511
    %v1928 = vpack.c.b16 %v1520, %v1512
    %v1929 = vpack.c.b16 %v1529, %v1521
    %v1930 = vpack.c.b16 %v1530, %v1522
    %v1931 = vpack.c.b16 %v1531, %v1523
    %v1932 = vpack.c.b16 %v1532, %v1524
    %v1933 = vpack.c.b16 %v1533, %v1525
    %v1934 = vpack.c.b16 %v1534, %v1526
    %v1935 = vpack.c.b16 %v1535, %v1527
    %v1936 = vpack.c.b16 %v1536, %v1528
    %v1937 = vpack.c.b16 %v1545, %v1537
    %v1938 = vpack.c.b16 %v1546, %v1538
    %v1939 = vpack.c.b16 %v1547, %v1539
    %v1940 = vpack.c.b16 %v1548, %v1540
    %v1941 = vpack.c.b16 %v1549, %v1541
    %v1942 = vpack.c.b16 %v1550, %v1542
    %v1943 = vpack.c.b16 %v1551, %v1543
    %v1944 = vpack.c.b16 %v1552, %v1544
    %v1945 = vpack.c.b16 %v1561, %v1553
    %v1946 = vpack.c.b16 %v1562, %v1554
    %v1947 = vpack.c.b16 %v1563, %v1555
    %v1948 = vpack.c.b16 %v1564, %v1556
    %v1949 = vpack.c.b16 %v1565, %v1557
    %v1950 = vpack.c.b16 %v1566, %v1558
    %v1951 = vpack.c.b16 %v1567, %v1559
    %v1952 = vpack.c.b16 %v1568, %v1560
    %v1953 = vpack.c.b16 %v1577, %v1569
    %v1954 = vpack.c.b16 %v1578, %v1570
    %v1955 = vpack.c.b16 %v1579, %v1571
    %v1956 = vpack.c.b16 %v1580, %v1572
    %v1957 = vpack.c.b16 %v1581, %v1573
    %v1958 = vpack.c.b16 %v1582, %v1574
    %v1959 = vpack.c.b16 %v1583, %v1575
    %v1960 = vpack.c.b16 %v1584, %v1576
    %v1961 = vpack.c.b16 %v1593, %v1585
    %v1962 = vpack.c.b16 %v1594, %v1586
    %v1963 = vpack.c.b16 %v1595, %v1587
    %v1964 = vpack.c.b16 %v1596, %v1588
    %v1965 = vpack.c.b16 %v1597, %v1589
    %v1966 = vpack.c.b16 %v1598, %v1590
    %v1967 = vpack.c.b16 %v1599, %v1591
    %v1968 = vpack.c.b16 %v1600, %v1592
    %v1969 = vpack.c.b16 %v1609, %v1601
    %v1970 = vpack.c.b16 %v1610, %v1602
    %v1971 = vpack.c.b16 %v1611, %v1603
    %v1972 = vpack.c.b16 %v1612, %v1604
    %v1973 = vpack.c.b16 %v1613, %v1605
    %v1974 = vpack.c.b16 %v1614, %v1606
    %v1975 = vpack.c.b16 %v1615, %v1607
    %v1976 = vpack.c.b16 %v1616, %v1608
    %v1977 = vpack.c.b16 %v1625, %v1617
    %v1978 = vpack.c.b16 %v1626, %v1618
    %v1979 = vpack.c.b16 %v1627, %v1619
    %v1980 = vpack.c.b16 %v1628, %v1620
    %v1981 = vpack.c.b16 %v1629, %v1621
    %v1982 = vpack.c.b16 %v1630, %v1622
    %v1983 = vpack.c.b16 %v1631, %v1623
    %v1984 = vpack.c.b16 %v1632, %v1624
    %v1985 = vpack.c.b16 %v1641, %v1633
    %v1986 = vpack.c.b16 %v1642, %v1634
    %v1987 = vpack.c.b16 %v1643, %v1635
    %v1988 = vpack.c.b16 %v1644, %v1636
    %v1989 = vpack.c.b16 %v1645, %v1637
    %v1990 = vpack.c.b16 %v1646, %v1638
    %v1991 = vpack.c.b16 %v1647, %v1639
    %v1992 = vpack.c.b16 %v1648, %v1640
    %v1993 = vpack.c.b16 %v1657, %v1649
    %v1994 = vpack.c.b16 %v1658, %v1650
    %v1995 = vpack.c.b16 %v1659, %v1651
    %v1996 = vpack.c.b16 %v1660, %v1652
    %v1997 = vpack.c.b16 %v1661, %v1653
    %v1998 = vpack.c.b16 %v1662, %v1654
    %v1999 = vpack.c.b16 %v1663, %v1655
    %v2000 = vpack.c.b16 %v1664, %v1656
    %v2001 = vpack.c.b16 %v1673, %v1665
    %v2002 = vpack.c.b16 %v1674, %v1666
    %v2003 = vpack.c.b16 %v1675, %v1667
    %v2004 = vpack.c.b16 %v1676, %v1668
    %v2005 = vpack.c.b16 %v1677, %v1669
    %v2006 = vpack.c.b16 %v1678, %v1670
    %v2007 = vpack.c.b16 %v1679, %v1671
    %v2008 = vpack.c.b16 %v1680, %v1672
    %v2009 = vpack.c.b16 %v1689, %v1681
    %v2010 = vpack.c.b16 %v1690, %v1682
    %v2011 = vpack.c.b16 %v1691, %v1683
    %v2012 = vpack.c.b16 %v1692, %v1684
    %v2013 = vpack.c.b16 %v1693, %v1685
    %v2014 = vpack.c.b16 %v1694, %v1686
    %v2015 = vpack.c.b16 %v1695, %v1687
    %v2016 = vpack.c.b16 %v1696, %v1688
    %v2017 = vpack.c.b16 %v1705, %v1697
    %v2018 = vpack.c.b16 %v1706, %v1698
    %v2019 = vpack.c.b16 %v1707, %v1699
    %v2020 = vpack.c.b16 %v1708, %v1700
    %v2021 = vpack.c.b16 %v1709, %v1701
    %v2022 = vpack.c.b16 %v1710, %v1702
    %v2023 = vpack.c.b16 %v1711, %v1703
    %v2024 = vpack.c.b16 %v1712, %v1704
    %v2025 = vpack.c.b16 %v1721, %v1713
    %v2026 = vpack.c.b16 %v1722, %v1714
    %v2027 = vpack.c.b16 %v1723, %v1715
    %v2028 = vpack.c.b16 %v1724, %v1716
    %v2029 = vpack.c.b16 %v1725, %v1717
    %v2030 = vpack.c.b16 %v1726, %v1718
    %v2031 = vpack.c.b16 %v1727, %v1719
    %v2032 = vpack.c.b16 %v1728, %v1720
    %v2033 = vpack.c.b16 %v1737, %v1729
    %v2034 = vpack.c.b16 %v1738, %v1730
    %v2035 = vpack.c.b16 %v1739, %v1731
    %v2036 = vpack.c.b16 %v1740, %v1732
    %v2037 = vpack.c.b16 %v1741, %v1733
    %v2038 = vpack.c.b16 %v1742, %v1734
    %v2039 = vpack.c.b16 %v1743, %v1735
    %v2040 = vpack.c.b16 %v1744, %v1736
    %v2041 = vpack.c.b16 %v1753, %v1745
    %v2042 = vpack.c.b16 %v1754, %v1746
    %v2043 = vpack.c.b16 %v1755, %v1747
    %v2044 = vpack.c.b16 %v1756, %v1748
    %v2045 = vpack.c.b16 %v1757, %v1749
    %v2046 = vpack.c.b16 %v1758, %v1750
    %v2047 = vpack.c.b16 %v1759, %v1751
    %v2048 = vpack.c.b16 %v1760, %v1752
    %v2049 = vpack.c.b16 %v1769, %v1761
    %v2050 = vpack.c.b16 %v1770, %v1762
    %v2051 = vpack.c.b16 %v1771, %v1763
    %v2052 = vpack.c.b16 %v1772, %v1764
    %v2053 = vpack.c.b16 %v1773, %v1765
    %v2054 = vpack.c.b16 %v1774, %v1766
    %v2055 = vpack.c.b16 %v1775, %v1767
    %v2056 = vpack.c.b16 %v1776, %v1768
    %v2057 = vpack.c.b16 %v1785, %v1777
    %v2058 = vpack.c.b16 %v1786, %v1778
    %v2059 = vpack.c.b16 %v1787, %v1779
    %v2060 = vpack.c.b16 %v1788, %v1780
    %v2061 = vpack.c.b16 %v1789, %v1781
    %v2062 = vpack.c.b16 %v1790, %v1782
    %v2063 = vpack.c.b16 %v1791, %v1783
    %v2064 = vpack.c.b16 %v1792, %v1784
    %v2065 = vpack.c.b16 %v1801, %v1793
    %v2066 = vpack.c.b16 %v1802, %v1794
    %v2067 = vpack.c.b16 %v1803, %v1795
    %v2068 = vpack.c.b16 %v1804, %v1796
    %v2069 = vpack.c.b16 %v1805, %v1797
    %v2070 = vpack.c.b16 %v1806, %v1798
    %v2071 = vpack.c.b16 %v1807, %v1799
    %v2072 = vpack.c.b16 %v1808, %v1800
    %v2073 = vpack.c.b16 %v1817, %v1809
    %v2074 = vpack.c.b16 %v1818, %v1810
    %v2075 = vpack.c.b16 %v1819, %v1811
    %v2076 = vpack.c.b16 %v1820, %v1812
    %v2077 = vpack.c.b16 %v1821, %v1813
    %v2078 = vpack.c.b16 %v1822, %v1814
    %v2079 = vpack.c.b16 %v1823, %v1815
    %v2080 = vpack.c.b16 %v1824, %v1816
    %2337 = vmatprep.subr.bf16.mxu0 %v1826
    %2338 = vmatpush1.bf16.msra.mxu0 %v1825
    %2339 = vmatprep.subr.bf16.mxu0 %v1834
    %2340 = vmatpush1.bf16.msra.mxu0 %v1833
    %2341 = vmatprep.subr.bf16.mxu0 %v1842
    %2342 = vmatpush1.bf16.msra.mxu0 %v1841
    %2343 = vmatprep.subr.bf16.mxu0 %v1850
    %2344 = vmatpush1.bf16.msra.mxu0 %v1849
    %2345 = vmatprep.subr.bf16.mxu0 %v1858
    %2346 = vmatpush1.bf16.msra.mxu0 %v1857
    %2347 = vmatprep.subr.bf16.mxu0 %v1866
    %2348 = vmatpush1.bf16.msra.mxu0 %v1865
    %2349 = vmatprep.subr.bf16.mxu0 %v1874
    %2350 = vmatpush1.bf16.msra.mxu0 %v1873
    %2351 = vmatprep.subr.bf16.mxu0 %v1882
    %2352 = vmatpush1.bf16.msra.mxu0 %v1881
    %2353 = vmatprep.subr.bf16.mxu0 %v1890
    %2354 = vmatpush1.bf16.msra.mxu0 %v1889
    %2355 = vmatprep.subr.bf16.mxu0 %v1898
    %2356 = vmatpush1.bf16.msra.mxu0 %v1897
    %2357 = vmatprep.subr.bf16.mxu0 %v1906
    %2358 = vmatpush1.bf16.msra.mxu0 %v1905
    %2359 = vmatprep.subr.bf16.mxu0 %v1914
    %2360 = vmatpush1.bf16.msra.mxu0 %v1913
    %2361 = vmatprep.subr.bf16.mxu0 %v1922
    %2362 = vmatpush1.bf16.msra.mxu0 %v1921
    %2363 = vmatprep.subr.bf16.mxu0 %v1930
    %2364 = vmatpush1.bf16.msra.mxu0 %v1929
    %2365 = vmatprep.subr.bf16.mxu0 %v1938
    %2366 = vmatpush1.bf16.msra.mxu0 %v1937
    %2367 = vmatprep.subr.bf16.mxu0 %v1946
    %2368 = vmatpush1.bf16.msra.mxu0 %v1945
    %2369 = vmatprep.mubr.bf16.mxu0 %v756
    %2370 = vmatmul.mubr.bf16.gmra.mrb[0].mxu0 %v755
    %v2371 = vpop.f32.mrb[0].mxu0
    %v2372 = vadd.f32 %v1020, %v2371
    %v2373 = vpop.f32.mrb[0].mxu0
    %v2374 = vadd.f32 %v1024, %v2373
    %v2375 = vpop.f32.mrb[0].mxu0
    %v2376 = vpop.f32.mrb[0].mxu0
    %2377 = vdwg.mxu0
    %2378 = vmatprep.subr.bf16.mxu0 %v1954
    %2379 = vmatpush1.bf16.msra.mxu0 %v1953
    %2380 = vmatprep.subr.bf16.mxu0 %v1962
    %2381 = vmatpush1.bf16.msra.mxu0 %v1961
    %2382 = vmatprep.subr.bf16.mxu0 %v1970
    %2383 = vmatpush1.bf16.msra.mxu0 %v1969
    %2384 = vmatprep.subr.bf16.mxu0 %v1978
    %2385 = vmatpush1.bf16.msra.mxu0 %v1977
    %2386 = vmatprep.subr.bf16.mxu0 %v1986
    %2387 = vmatpush1.bf16.msra.mxu0 %v1985
    %2388 = vmatprep.subr.bf16.mxu0 %v1994
    %2389 = vmatpush1.bf16.msra.mxu0 %v1993
    %2390 = vmatprep.subr.bf16.mxu0 %v2002
    %2391 = vmatpush1.bf16.msra.mxu0 %v2001
    %2392 = vmatprep.subr.bf16.mxu0 %v2010
    %2393 = vmatpush1.bf16.msra.mxu0 %v2009
    %2394 = vmatprep.subr.bf16.mxu0 %v2018
    %2395 = vmatpush1.bf16.msra.mxu0 %v2017
    %2396 = vmatprep.subr.bf16.mxu0 %v2026
    %2397 = vmatpush1.bf16.msra.mxu0 %v2025
    %2398 = vmatprep.subr.bf16.mxu0 %v2034
    %2399 = vmatpush1.bf16.msra.mxu0 %v2033
    %2400 = vmatprep.subr.bf16.mxu0 %v2042
    %2401 = vmatpush1.bf16.msra.mxu0 %v2041
    %2402 = vmatprep.subr.bf16.mxu0 %v2050
    %2403 = vmatpush1.bf16.msra.mxu0 %v2049
    %2404 = vmatprep.subr.bf16.mxu0 %v2058
    %2405 = vmatpush1.bf16.msra.mxu0 %v2057
    %2406 = vmatprep.subr.bf16.mxu0 %v2066
    %2407 = vmatpush1.bf16.msra.mxu0 %v2065
    %2408 = vmatprep.subr.bf16.mxu0 %v2074
    %2409 = vmatpush1.bf16.msra.mxu0 %v2073
    %2410 = vmatprep.mubr.bf16.mxu0 %v758
    %2411 = vmatmul.mubr.bf16.gmra.mrb[0].mxu0 %v757
    %v2412 = vpop.f32.mrb[0].mxu0
    %v2413 = vadd.f32 %v2372, %v2412
    %v2414 = vpop.f32.mrb[0].mxu0
    %v2415 = vadd.f32 %v2374, %v2414
    %v2416 = vpop.f32.mrb[0].mxu0
    %v2417 = vpop.f32.mrb[0].mxu0
    %2418 = vdwg.mxu0
    %2419 = vmatprep.subr.bf16.mxu0 %v1828
    %2420 = vmatpush1.bf16.msra.mxu0 %v1827
    %2421 = vmatprep.subr.bf16.mxu0 %v1836
    %2422 = vmatpush1.bf16.msra.mxu0 %v1835
    %2423 = vmatprep.subr.bf16.mxu0 %v1844
    %2424 = vmatpush1.bf16.msra.mxu0 %v1843
    %2425 = vmatprep.subr.bf16.mxu0 %v1852
    %2426 = vmatpush1.bf16.msra.mxu0 %v1851
    %2427 = vmatprep.subr.bf16.mxu0 %v1860
    %2428 = vmatpush1.bf16.msra.mxu0 %v1859
    %2429 = vmatprep.subr.bf16.mxu0 %v1868
    %2430 = vmatpush1.bf16.msra.mxu0 %v1867
    %2431 = vmatprep.subr.bf16.mxu0 %v1876
    %2432 = vmatpush1.bf16.msra.mxu0 %v1875
    %2433 = vmatprep.subr.bf16.mxu0 %v1884
    %2434 = vmatpush1.bf16.msra.mxu0 %v1883
    %2435 = vmatprep.subr.bf16.mxu0 %v1892
    %2436 = vmatpush1.bf16.msra.mxu0 %v1891
    %2437 = vmatprep.subr.bf16.mxu0 %v1900
    %2438 = vmatpush1.bf16.msra.mxu0 %v1899
    %2439 = vmatprep.subr.bf16.mxu0 %v1908
    %2440 = vmatpush1.bf16.msra.mxu0 %v1907
    %2441 = vmatprep.subr.bf16.mxu0 %v1916
    %2442 = vmatpush1.bf16.msra.mxu0 %v1915
    %2443 = vmatprep.subr.bf16.mxu0 %v1924
    %2444 = vmatpush1.bf16.msra.mxu0 %v1923
    %2445 = vmatprep.subr.bf16.mxu0 %v1932
    %2446 = vmatpush1.bf16.msra.mxu0 %v1931
    %2447 = vmatprep.subr.bf16.mxu0 %v1940
    %2448 = vmatpush1.bf16.msra.mxu0 %v1939
    %2449 = vmatprep.subr.bf16.mxu0 %v1948
    %2450 = vmatpush1.bf16.msra.mxu0 %v1947
    %2451 = vmatprep.mubr.bf16.mxu0 %v756
    %2452 = vmatmul.mubr.bf16.gmra.mrb[0].mxu0 %v755
    %v2453 = vpop.f32.mrb[0].mxu0
    %v2454 = vadd.f32 %v1028, %v2453
    %v2455 = vpop.f32.mrb[0].mxu0
    %v2456 = vadd.f32 %v1032, %v2455
    %v2457 = vpop.f32.mrb[0].mxu0
    %v2458 = vpop.f32.mrb[0].mxu0
    %2459 = vdwg.mxu0
    %2460 = vmatprep.subr.bf16.mxu0 %v1956
    %2461 = vmatpush1.bf16.msra.mxu0 %v1955
    %2462 = vmatprep.subr.bf16.mxu0 %v1964
    %2463 = vmatpush1.bf16.msra.mxu0 %v1963
    %2464 = vmatprep.subr.bf16.mxu0 %v1972
    %2465 = vmatpush1.bf16.msra.mxu0 %v1971
    %2466 = vmatprep.subr.bf16.mxu0 %v1980
    %2467 = vmatpush1.bf16.msra.mxu0 %v1979
    %2468 = vmatprep.subr.bf16.mxu0 %v1988
    %2469 = vmatpush1.bf16.msra.mxu0 %v1987
    %2470 = vmatprep.subr.bf16.mxu0 %v1996
    %2471 = vmatpush1.bf16.msra.mxu0 %v1995
    %2472 = vmatprep.subr.bf16.mxu0 %v2004
    %2473 = vmatpush1.bf16.msra.mxu0 %v2003
    %2474 = vmatprep.subr.bf16.mxu0 %v2012
    %2475 = vmatpush1.bf16.msra.mxu0 %v2011
    %2476 = vmatprep.subr.bf16.mxu0 %v2020
    %2477 = vmatpush1.bf16.msra.mxu0 %v2019
    %2478 = vmatprep.subr.bf16.mxu0 %v2028
    %2479 = vmatpush1.bf16.msra.mxu0 %v2027
    %2480 = vmatprep.subr.bf16.mxu0 %v2036
    %2481 = vmatpush1.bf16.msra.mxu0 %v2035
    %2482 = vmatprep.subr.bf16.mxu0 %v2044
    %2483 = vmatpush1.bf16.msra.mxu0 %v2043
    %2484 = vmatprep.subr.bf16.mxu0 %v2052
    %2485 = vmatpush1.bf16.msra.mxu0 %v2051
    %2486 = vmatprep.subr.bf16.mxu0 %v2060
    %2487 = vmatpush1.bf16.msra.mxu0 %v2059
    %2488 = vmatprep.subr.bf16.mxu0 %v2068
    %2489 = vmatpush1.bf16.msra.mxu0 %v2067
    %2490 = vmatprep.subr.bf16.mxu0 %v2076
    %2491 = vmatpush1.bf16.msra.mxu0 %v2075
    %2492 = vmatprep.mubr.bf16.mxu0 %v758
    %2493 = vmatmul.mubr.bf16.gmra.mrb[0].mxu0 %v757
    %v2494 = vpop.f32.mrb[0].mxu0
    %v2495 = vadd.f32 %v2454, %v2494
    %v2496 = vpop.f32.mrb[0].mxu0
    %v2497 = vadd.f32 %v2456, %v2496
    %v2498 = vpop.f32.mrb[0].mxu0
    %v2499 = vpop.f32.mrb[0].mxu0
    %2500 = vdwg.mxu0
    %2501 = vmatprep.subr.bf16.mxu0 %v1830
    %2502 = vmatpush1.bf16.msra.mxu0 %v1829
    %2503 = vmatprep.subr.bf16.mxu0 %v1838
    %2504 = vmatpush1.bf16.msra.mxu0 %v1837
    %2505 = vmatprep.subr.bf16.mxu0 %v1846
    %2506 = vmatpush1.bf16.msra.mxu0 %v1845
    %2507 = vmatprep.subr.bf16.mxu0 %v1854
    %2508 = vmatpush1.bf16.msra.mxu0 %v1853
    %2509 = vmatprep.subr.bf16.mxu0 %v1862
    %2510 = vmatpush1.bf16.msra.mxu0 %v1861
    %2511 = vmatprep.subr.bf16.mxu0 %v1870
    %2512 = vmatpush1.bf16.msra.mxu0 %v1869
    %2513 = vmatprep.subr.bf16.mxu0 %v1878
    %2514 = vmatpush1.bf16.msra.mxu0 %v1877
    %2515 = vmatprep.subr.bf16.mxu0 %v1886
    %2516 = vmatpush1.bf16.msra.mxu0 %v1885
    %2517 = vmatprep.subr.bf16.mxu0 %v1894
    %2518 = vmatpush1.bf16.msra.mxu0 %v1893
    %2519 = vmatprep.subr.bf16.mxu0 %v1902
    %2520 = vmatpush1.bf16.msra.mxu0 %v1901
    %2521 = vmatprep.subr.bf16.mxu0 %v1910
    %2522 = vmatpush1.bf16.msra.mxu0 %v1909
    %2523 = vmatprep.subr.bf16.mxu0 %v1918
    %2524 = vmatpush1.bf16.msra.mxu0 %v1917
    %2525 = vmatprep.subr.bf16.mxu0 %v1926
    %2526 = vmatpush1.bf16.msra.mxu0 %v1925
    %2527 = vmatprep.subr.bf16.mxu0 %v1934
    %2528 = vmatpush1.bf16.msra.mxu0 %v1933
    %2529 = vmatprep.subr.bf16.mxu0 %v1942
    %2530 = vmatpush1.bf16.msra.mxu0 %v1941
    %2531 = vmatprep.subr.bf16.mxu0 %v1950
    %2532 = vmatpush1.bf16.msra.mxu0 %v1949
    %2533 = vmatprep.mubr.bf16.mxu0 %v756
    %2534 = vmatmul.mubr.bf16.gmra.mrb[0].mxu0 %v755
    %v2535 = vpop.f32.mrb[0].mxu0
    %v2536 = vadd.f32 %v1036, %v2535
    %v2537 = vpop.f32.mrb[0].mxu0
    %v2538 = vadd.f32 %v1040, %v2537
    %v2539 = vpop.f32.mrb[0].mxu0
    %v2540 = vpop.f32.mrb[0].mxu0
    %2541 = vdwg.mxu0
    %2542 = vmatprep.subr.bf16.mxu0 %v1958
    %2543 = vmatpush1.bf16.msra.mxu0 %v1957
    %2544 = vmatprep.subr.bf16.mxu0 %v1966
    %2545 = vmatpush1.bf16.msra.mxu0 %v1965
    %2546 = vmatprep.subr.bf16.mxu0 %v1974
    %2547 = vmatpush1.bf16.msra.mxu0 %v1973
    %2548 = vmatprep.subr.bf16.mxu0 %v1982
    %2549 = vmatpush1.bf16.msra.mxu0 %v1981
    %2550 = vmatprep.subr.bf16.mxu0 %v1990
    %2551 = vmatpush1.bf16.msra.mxu0 %v1989
    %2552 = vmatprep.subr.bf16.mxu0 %v1998
    %2553 = vmatpush1.bf16.msra.mxu0 %v1997
    %2554 = vmatprep.subr.bf16.mxu0 %v2006
    %2555 = vmatpush1.bf16.msra.mxu0 %v2005
    %2556 = vmatprep.subr.bf16.mxu0 %v2014
    %2557 = vmatpush1.bf16.msra.mxu0 %v2013
    %2558 = vmatprep.subr.bf16.mxu0 %v2022
    %2559 = vmatpush1.bf16.msra.mxu0 %v2021
    %2560 = vmatprep.subr.bf16.mxu0 %v2030
    %2561 = vmatpush1.bf16.msra.mxu0 %v2029
    %2562 = vmatprep.subr.bf16.mxu0 %v2038
    %2563 = vmatpush1.bf16.msra.mxu0 %v2037
    %2564 = vmatprep.subr.bf16.mxu0 %v2046
    %2565 = vmatpush1.bf16.msra.mxu0 %v2045
    %2566 = vmatprep.subr.bf16.mxu0 %v2054
    %2567 = vmatpush1.bf16.msra.mxu0 %v2053
    %2568 = vmatprep.subr.bf16.mxu0 %v2062
    %2569 = vmatpush1.bf16.msra.mxu0 %v2061
    %2570 = vmatprep.subr.bf16.mxu0 %v2070
    %2571 = vmatpush1.bf16.msra.mxu0 %v2069
    %2572 = vmatprep.subr.bf16.mxu0 %v2078
    %2573 = vmatpush1.bf16.msra.mxu0 %v2077
    %2574 = vmatprep.mubr.bf16.mxu0 %v758
    %2575 = vmatmul.mubr.bf16.gmra.mrb[0].mxu0 %v757
    %v2576 = vpop.f32.mrb[0].mxu0
    %v2577 = vadd.f32 %v2536, %v2576
    %v2578 = vpop.f32.mrb[0].mxu0
    %v2579 = vadd.f32 %v2538, %v2578
    %v2580 = vpop.f32.mrb[0].mxu0
    %v2581 = vpop.f32.mrb[0].mxu0
    %2582 = vdwg.mxu0
    %2583 = vmatprep.subr.bf16.mxu0 %v1832
    %2584 = vmatpush1.bf16.msra.mxu0 %v1831
    %2585 = vmatprep.subr.bf16.mxu0 %v1840
    %2586 = vmatpush1.bf16.msra.mxu0 %v1839
    %2587 = vmatprep.subr.bf16.mxu0 %v1848
    %2588 = vmatpush1.bf16.msra.mxu0 %v1847
    %2589 = vmatprep.subr.bf16.mxu0 %v1856
    %2590 = vmatpush1.bf16.msra.mxu0 %v1855
    %2591 = vmatprep.subr.bf16.mxu0 %v1864
    %2592 = vmatpush1.bf16.msra.mxu0 %v1863
    %2593 = vmatprep.subr.bf16.mxu0 %v1872
    %2594 = vmatpush1.bf16.msra.mxu0 %v1871
    %2595 = vmatprep.subr.bf16.mxu0 %v1880
    %2596 = vmatpush1.bf16.msra.mxu0 %v1879
    %2597 = vmatprep.subr.bf16.mxu0 %v1888
    %2598 = vmatpush1.bf16.msra.mxu0 %v1887
    %2599 = vmatprep.subr.bf16.mxu0 %v1896
    %2600 = vmatpush1.bf16.msra.mxu0 %v1895
    %2601 = vmatprep.subr.bf16.mxu0 %v1904
    %2602 = vmatpush1.bf16.msra.mxu0 %v1903
    %2603 = vmatprep.subr.bf16.mxu0 %v1912
    %2604 = vmatpush1.bf16.msra.mxu0 %v1911
    %2605 = vmatprep.subr.bf16.mxu0 %v1920
    %2606 = vmatpush1.bf16.msra.mxu0 %v1919
    %2607 = vmatprep.subr.bf16.mxu0 %v1928
    %2608 = vmatpush1.bf16.msra.mxu0 %v1927
    %2609 = vmatprep.subr.bf16.mxu0 %v1936
    %2610 = vmatpush1.bf16.msra.mxu0 %v1935
    %2611 = vmatprep.subr.bf16.mxu0 %v1944
    %2612 = vmatpush1.bf16.msra.mxu0 %v1943
    %2613 = vmatprep.subr.bf16.mxu0 %v1952
    %2614 = vmatpush1.bf16.msra.mxu0 %v1951
    %2615 = vmatprep.mubr.bf16.mxu0 %v756
    %2616 = vmatmul.mubr.bf16.gmra.mrb[0].mxu0 %v755
    %v2617 = vpop.f32.mrb[0].mxu0
    %v2618 = vadd.f32 %v1044, %v2617
    %v2619 = vpop.f32.mrb[0].mxu0
    %v2620 = vadd.f32 %v1048, %v2619
    %v2621 = vpop.f32.mrb[0].mxu0
    %v2622 = vpop.f32.mrb[0].mxu0
    %2623 = vdwg.mxu0
    %2624 = vmatprep.subr.bf16.mxu0 %v1960
    %2625 = vmatpush1.bf16.msra.mxu0 %v1959
    %2626 = vmatprep.subr.bf16.mxu0 %v1968
    %2627 = vmatpush1.bf16.msra.mxu0 %v1967
    %2628 = vmatprep.subr.bf16.mxu0 %v1976
    %2629 = vmatpush1.bf16.msra.mxu0 %v1975
    %2630 = vmatprep.subr.bf16.mxu0 %v1984
    %2631 = vmatpush1.bf16.msra.mxu0 %v1983
    %2632 = vmatprep.subr.bf16.mxu0 %v1992
    %2633 = vmatpush1.bf16.msra.mxu0 %v1991
    %2634 = vmatprep.subr.bf16.mxu0 %v2000
    %2635 = vmatpush1.bf16.msra.mxu0 %v1999
    %2636 = vmatprep.subr.bf16.mxu0 %v2008
    %2637 = vmatpush1.bf16.msra.mxu0 %v2007
    %2638 = vmatprep.subr.bf16.mxu0 %v2016
    %2639 = vmatpush1.bf16.msra.mxu0 %v2015
    %2640 = vmatprep.subr.bf16.mxu0 %v2024
    %2641 = vmatpush1.bf16.msra.mxu0 %v2023
    %2642 = vmatprep.subr.bf16.mxu0 %v2032
    %2643 = vmatpush1.bf16.msra.mxu0 %v2031
    %2644 = vmatprep.subr.bf16.mxu0 %v2040
    %2645 = vmatpush1.bf16.msra.mxu0 %v2039
    %2646 = vmatprep.subr.bf16.mxu0 %v2048
    %2647 = vmatpush1.bf16.msra.mxu0 %v2047
    %2648 = vmatprep.subr.bf16.mxu0 %v2056
    %2649 = vmatpush1.bf16.msra.mxu0 %v2055
    %2650 = vmatprep.subr.bf16.mxu0 %v2064
    %2651 = vmatpush1.bf16.msra.mxu0 %v2063
    %2652 = vmatprep.subr.bf16.mxu0 %v2072
    %2653 = vmatpush1.bf16.msra.mxu0 %v2071
    %2654 = vmatprep.subr.bf16.mxu0 %v2080
    %2655 = vmatpush1.bf16.msra.mxu0 %v2079
    %2656 = vmatprep.mubr.bf16.mxu0 %v758
    %2657 = vmatmul.mubr.bf16.gmra.mrb[0].mxu0 %v757
    %v2658 = vpop.f32.mrb[0].mxu0
    %v2659 = vadd.f32 %v2618, %v2658
    %v2660 = vpop.f32.mrb[0].mxu0
    %v2661 = vadd.f32 %v2620, %v2660
    %v2662 = vpop.f32.mrb[0].mxu0
    %v2663 = vpop.f32.mrb[0].mxu0
    %2664 = vdwg.mxu0
    %v2665 = vmul.f32 %v2413, 0.1
    %v2666 = vmul.f32 %v2415, 0.1
    %v2667 = vmul.f32 %v2495, 0.1
    %v2668 = vmul.f32 %v2497, 0.1
    %v2669 = vmul.f32 %v2577, 0.1
    %v2670 = vmul.f32 %v2579, 0.1
    %v2671 = vmul.f32 %v2659, 0.1
    %v2672 = vmul.f32 %v2661, 0.1
    %v2673 = vmax.f32 %v2413, %v2665
    %v2674 = vmax.f32 %v2415, %v2666
    %v2675 = vmax.f32 %v2495, %v2667
    %v2676 = vmax.f32 %v2497, %v2668
    %v2677 = vmax.f32 %v2577, %v2669
    %v2678 = vmax.f32 %v2579, %v2670
    %v2679 = vmax.f32 %v2659, %v2671
    %v2680 = vmax.f32 %v2661, %v2672
    %v2681 = vpack.c.bf16 %v2673, %v2673
    %v2682 = vpack.c.bf16 %v2674, %v2674
    %v2683 = vpack.c.bf16 %v2675, %v2675
    %v2684 = vpack.c.bf16 %v2676, %v2676
    %v2685 = vpack.c.bf16 %v2677, %v2677
    %v2686 = vpack.c.bf16 %v2678, %v2678
    %v2687 = vpack.c.bf16 %v2679, %v2679
    %v2688 = vpack.c.bf16 %v2680, %v2680
    %v2689 = vld [vmem:[#allocation14] sm:$0xff]
    %v2690 = vld [vmem:[#allocation14 + $0x8] sm:$0xff]
    %v2691 = vld [vmem:[#allocation14 + $0x10] sm:$0xff]
    %v2692 = vld [vmem:[#allocation14 + $0x18] sm:$0xf]
    %v2693 = vld [vmem:[#allocation14 + $0x1c] sm:$0xff]
    %v2694 = vld [vmem:[#allocation14 + $0x24] sm:$0xff]
    %v2695 = vld [vmem:[#allocation14 + $0x2c] sm:$0xff]
    %v2696 = vld [vmem:[#allocation14 + $0x34] sm:$0xf]
    %v2697 = vld [vmem:[#allocation14 + $0x38] sm:$0xff]
    %v2698 = vld [vmem:[#allocation14 + $0x40] sm:$0xff]
    %v2699 = vld [vmem:[#allocation14 + $0x48] sm:$0xff]
    %v2700 = vld [vmem:[#allocation14 + $0x50] sm:$0xf]
    %v2701 = vld [vmem:[#allocation14 + $0x54] sm:$0xff]
    %v2702 = vld [vmem:[#allocation14 + $0x5c] sm:$0xff]
    %v2703 = vld [vmem:[#allocation14 + $0x64] sm:$0xff]
    %v2704 = vld [vmem:[#allocation14 + $0x6c] sm:$0xf]
    %v2705 = vld [vmem:[#allocation14 + $0x70] sm:$0xff]
    %v2706 = vld [vmem:[#allocation14 + $0x78] sm:$0xff]
    %v2707 = vld [vmem:[#allocation14 + $0x80] sm:$0xff]
    %v2708 = vld [vmem:[#allocation14 + $0x88] sm:$0xf]
    %v2709 = vld [vmem:[#allocation14 + $0x8c] sm:$0xff]
    %v2710 = vld [vmem:[#allocation14 + $0x94] sm:$0xff]
    %v2711 = vld [vmem:[#allocation14 + $0x9c] sm:$0xff]
    %v2712 = vld [vmem:[#allocation14 + $0xa4] sm:$0xf]
    %v2713 = vld [vmem:[#allocation14 + $0xa8] sm:$0xff]
    %v2714 = vld [vmem:[#allocation14 + $0xb0] sm:$0xff]
    %v2715 = vld [vmem:[#allocation14 + $0xb8] sm:$0xff]
    %v2716 = vld [vmem:[#allocation14 + $0xc0] sm:$0xf]
    %v2717 = vld [vmem:[#allocation14 + $0xc4] sm:$0xff]
    %v2718 = vld [vmem:[#allocation14 + $0xcc] sm:$0xff]
    %v2719 = vld [vmem:[#allocation14 + $0xd4] sm:$0xff]
    %v2720 = vld [vmem:[#allocation14 + $0xdc] sm:$0xf]
    %v2721 = vld [vmem:[#allocation14 + $0xe0] sm:$0xff]
    %v2722 = vld [vmem:[#allocation14 + $0xe8] sm:$0xff]
    %v2723 = vld [vmem:[#allocation14 + $0xf0] sm:$0xff]
    %v2724 = vld [vmem:[#allocation14 + $0xf8] sm:$0xf]
    %v2725 = vld [vmem:[#allocation14 + $0xfc] sm:$0xff]
    %v2726 = vld [vmem:[#allocation14 + $0x104] sm:$0xff]
    %v2727 = vld [vmem:[#allocation14 + $0x10c] sm:$0xff]
    %v2728 = vld [vmem:[#allocation14 + $0x114] sm:$0xf]
    %v2729 = vld [vmem:[#allocation14 + $0x118] sm:$0xff]
    %v2730 = vld [vmem:[#allocation14 + $0x120] sm:$0xff]
    %v2731 = vld [vmem:[#allocation14 + $0x128] sm:$0xff]
    %v2732 = vld [vmem:[#allocation14 + $0x130] sm:$0xf]
    %v2733 = vld [vmem:[#allocation14 + $0x134] sm:$0xff]
    %v2734 = vld [vmem:[#allocation14 + $0x13c] sm:$0xff]
    %v2735 = vld [vmem:[#allocation14 + $0x144] sm:$0xff]
    %v2736 = vld [vmem:[#allocation14 + $0x14c] sm:$0xf]
    %v2737 = vld [vmem:[#allocation14 + $0x150] sm:$0xff]
    %v2738 = vld [vmem:[#allocation14 + $0x158] sm:$0xff]
    %v2739 = vld [vmem:[#allocation14 + $0x160] sm:$0xff]
    %v2740 = vld [vmem:[#allocation14 + $0x168] sm:$0xf]
    %v2741 = vld [vmem:[#allocation14 + $0x16c] sm:$0xff]
    %v2742 = vld [vmem:[#allocation14 + $0x174] sm:$0xff]
    %v2743 = vld [vmem:[#allocation14 + $0x17c] sm:$0xff]
    %v2744 = vld [vmem:[#allocation14 + $0x184] sm:$0xf]
    %v2745 = vld [vmem:[#allocation14 + $0x188] sm:$0xff]
    %v2746 = vld [vmem:[#allocation14 + $0x190] sm:$0xff]
    %v2747 = vld [vmem:[#allocation14 + $0x198] sm:$0xff]
    %v2748 = vld [vmem:[#allocation14 + $0x1a0] sm:$0xf]
    %v2749 = vld [vmem:[#allocation14 + $0x1a4] sm:$0xff]
    %v2750 = vld [vmem:[#allocation14 + $0x1ac] sm:$0xff]
    %v2751 = vld [vmem:[#allocation14 + $0x1b4] sm:$0xff]
    %v2752 = vld [vmem:[#allocation14 + $0x1bc] sm:$0xf]
    %v2753 = vld [vmem:[#allocation14 + $0x1c0] sm:$0xff]
    %v2754 = vld [vmem:[#allocation14 + $0x1c8] sm:$0xff]
    %v2755 = vld [vmem:[#allocation14 + $0x1d0] sm:$0xff]
    %v2756 = vld [vmem:[#allocation14 + $0x1d8] sm:$0xf]
    %v2757 = vld [vmem:[#allocation14 + $0x1dc] sm:$0xff]
    %v2758 = vld [vmem:[#allocation14 + $0x1e4] sm:$0xff]
    %v2759 = vld [vmem:[#allocation14 + $0x1ec] sm:$0xff]
    %v2760 = vld [vmem:[#allocation14 + $0x1f4] sm:$0xf]
    %v2761 = vld [vmem:[#allocation14 + $0x1f8] sm:$0xff]
    %v2762 = vld [vmem:[#allocation14 + $0x200] sm:$0xff]
    %v2763 = vld [vmem:[#allocation14 + $0x208] sm:$0xff]
    %v2764 = vld [vmem:[#allocation14 + $0x210] sm:$0xf]
    %v2765 = vld [vmem:[#allocation14 + $0x214] sm:$0xff]
    %v2766 = vld [vmem:[#allocation14 + $0x21c] sm:$0xff]
    %v2767 = vld [vmem:[#allocation14 + $0x224] sm:$0xff]
    %v2768 = vld [vmem:[#allocation14 + $0x22c] sm:$0xf]
    %v2769 = vld [vmem:[#allocation14 + $0x230] sm:$0xff]
    %v2770 = vld [vmem:[#allocation14 + $0x238] sm:$0xff]
    %v2771 = vld [vmem:[#allocation14 + $0x240] sm:$0xff]
    %v2772 = vld [vmem:[#allocation14 + $0x248] sm:$0xf]
    %v2773 = vld [vmem:[#allocation14 + $0x24c] sm:$0xff]
    %v2774 = vld [vmem:[#allocation14 + $0x254] sm:$0xff]
    %v2775 = vld [vmem:[#allocation14 + $0x25c] sm:$0xff]
    %v2776 = vld [vmem:[#allocation14 + $0x264] sm:$0xf]
    %v2777 = vld [vmem:[#allocation14 + $0x268] sm:$0xff]
    %v2778 = vld [vmem:[#allocation14 + $0x270] sm:$0xff]
    %v2779 = vld [vmem:[#allocation14 + $0x278] sm:$0xff]
    %v2780 = vld [vmem:[#allocation14 + $0x280] sm:$0xf]
    %v2781 = vld [vmem:[#allocation14 + $0x284] sm:$0xff]
    %v2782 = vld [vmem:[#allocation14 + $0x28c] sm:$0xff]
    %v2783 = vld [vmem:[#allocation14 + $0x294] sm:$0xff]
    %v2784 = vld [vmem:[#allocation14 + $0x29c] sm:$0xf]
    %v2785 = vld [vmem:[#allocation14 + $0x2a0] sm:$0xff]
    %v2786 = vld [vmem:[#allocation14 + $0x2a8] sm:$0xff]
    %v2787 = vld [vmem:[#allocation14 + $0x2b0] sm:$0xff]
    %v2788 = vld [vmem:[#allocation14 + $0x2b8] sm:$0xf]
    %v2789 = vld [vmem:[#allocation14 + $0x2bc] sm:$0xff]
    %v2790 = vld [vmem:[#allocation14 + $0x2c4] sm:$0xff]
    %v2791 = vld [vmem:[#allocation14 + $0x2cc] sm:$0xff]
    %v2792 = vld [vmem:[#allocation14 + $0x2d4] sm:$0xf]
    %v2793 = vld [vmem:[#allocation14 + $0x2d8] sm:$0xff]
    %v2794 = vld [vmem:[#allocation14 + $0x2e0] sm:$0xff]
    %v2795 = vld [vmem:[#allocation14 + $0x2e8] sm:$0xff]
    %v2796 = vld [vmem:[#allocation14 + $0x2f0] sm:$0xf]
    %v2797 = vld [vmem:[#allocation14 + $0x2f4] sm:$0xff]
    %v2798 = vld [vmem:[#allocation14 + $0x2fc] sm:$0xff]
    %v2799 = vld [vmem:[#allocation14 + $0x304] sm:$0xff]
    %v2800 = vld [vmem:[#allocation14 + $0x30c] sm:$0xf]
    %v2801 = vld [vmem:[#allocation14 + $0x310] sm:$0xff]
    %v2802 = vld [vmem:[#allocation14 + $0x318] sm:$0xff]
    %v2803 = vld [vmem:[#allocation14 + $0x320] sm:$0xff]
    %v2804 = vld [vmem:[#allocation14 + $0x328] sm:$0xf]
    %v2805 = vld [vmem:[#allocation14 + $0x32c] sm:$0xff]
    %v2806 = vld [vmem:[#allocation14 + $0x334] sm:$0xff]
    %v2807 = vld [vmem:[#allocation14 + $0x33c] sm:$0xff]
    %v2808 = vld [vmem:[#allocation14 + $0x344] sm:$0xf]
    %v2809 = vld [vmem:[#allocation14 + $0x348] sm:$0xff]
    %v2810 = vld [vmem:[#allocation14 + $0x350] sm:$0xff]
    %v2811 = vld [vmem:[#allocation14 + $0x358] sm:$0xff]
    %v2812 = vld [vmem:[#allocation14 + $0x360] sm:$0xf]
    %v2813 = vld [vmem:[#allocation14 + $0x364] sm:$0xff]
    %v2814 = vld [vmem:[#allocation14 + $0x36c] sm:$0xff]
    %v2815 = vld [vmem:[#allocation14 + $0x374] sm:$0xff]
    %v2816 = vld [vmem:[#allocation14 + $0x37c] sm:$0xf]
    %v2817 = vld [vmem:[#allocation14 + $0x380] sm:$0xff]
    %v2818 = vld [vmem:[#allocation14 + $0x388] sm:$0xff]
    %v2819 = vld [vmem:[#allocation14 + $0x390] sm:$0xff]
    %v2820 = vld [vmem:[#allocation14 + $0x398] sm:$0xf]
    %v2821 = vld [vmem:[#allocation14 + $0x39c] sm:$0xff]
    %v2822 = vld [vmem:[#allocation14 + $0x3a4] sm:$0xff]
    %v2823 = vld [vmem:[#allocation14 + $0x3ac] sm:$0xff]
    %v2824 = vld [vmem:[#allocation14 + $0x3b4] sm:$0xf]
    %v2825 = vld [vmem:[#allocation14 + $0x3b8] sm:$0xff]
    %v2826 = vld [vmem:[#allocation14 + $0x3c0] sm:$0xff]
    %v2827 = vld [vmem:[#allocation14 + $0x3c8] sm:$0xff]
    %v2828 = vld [vmem:[#allocation14 + $0x3d0] sm:$0xf]
    %v2829 = vld [vmem:[#allocation14 + $0x3d4] sm:$0xff]
    %v2830 = vld [vmem:[#allocation14 + $0x3dc] sm:$0xff]
    %v2831 = vld [vmem:[#allocation14 + $0x3e4] sm:$0xff]
    %v2832 = vld [vmem:[#allocation14 + $0x3ec] sm:$0xf]
    %v2833 = vld [vmem:[#allocation14 + $0x3f0] sm:$0xff]
    %v2834 = vld [vmem:[#allocation14 + $0x3f8] sm:$0xff]
    %v2835 = vld [vmem:[#allocation14 + $0x400] sm:$0xff]
    %v2836 = vld [vmem:[#allocation14 + $0x408] sm:$0xf]
    %v2837 = vld [vmem:[#allocation14 + $0x40c] sm:$0xff]
    %v2838 = vld [vmem:[#allocation14 + $0x414] sm:$0xff]
    %v2839 = vld [vmem:[#allocation14 + $0x41c] sm:$0xff]
    %v2840 = vld [vmem:[#allocation14 + $0x424] sm:$0xf]
    %v2841 = vld [vmem:[#allocation14 + $0x428] sm:$0xff]
    %v2842 = vld [vmem:[#allocation14 + $0x430] sm:$0xff]
    %v2843 = vld [vmem:[#allocation14 + $0x438] sm:$0xff]
    %v2844 = vld [vmem:[#allocation14 + $0x440] sm:$0xf]
    %v2845 = vld [vmem:[#allocation14 + $0x444] sm:$0xff]
    %v2846 = vld [vmem:[#allocation14 + $0x44c] sm:$0xff]
    %v2847 = vld [vmem:[#allocation14 + $0x454] sm:$0xff]
    %v2848 = vld [vmem:[#allocation14 + $0x45c] sm:$0xf]
    %v2849 = vld [vmem:[#allocation14 + $0x460] sm:$0xff]
    %v2850 = vld [vmem:[#allocation14 + $0x468] sm:$0xff]
    %v2851 = vld [vmem:[#allocation14 + $0x470] sm:$0xff]
    %v2852 = vld [vmem:[#allocation14 + $0x478] sm:$0xf]
    %v2853 = vld [vmem:[#allocation14 + $0x47c] sm:$0xff]
    %v2854 = vld [vmem:[#allocation14 + $0x484] sm:$0xff]
    %v2855 = vld [vmem:[#allocation14 + $0x48c] sm:$0xff]
    %v2856 = vld [vmem:[#allocation14 + $0x494] sm:$0xf]
    %v2857 = vld [vmem:[#allocation14 + $0x498] sm:$0xff]
    %v2858 = vld [vmem:[#allocation14 + $0x4a0] sm:$0xff]
    %v2859 = vld [vmem:[#allocation14 + $0x4a8] sm:$0xff]
    %v2860 = vld [vmem:[#allocation14 + $0x4b0] sm:$0xf]
    %v2861 = vld [vmem:[#allocation14 + $0x4b4] sm:$0xff]
    %v2862 = vld [vmem:[#allocation14 + $0x4bc] sm:$0xff]
    %v2863 = vld [vmem:[#allocation14 + $0x4c4] sm:$0xff]
    %v2864 = vld [vmem:[#allocation14 + $0x4cc] sm:$0xf]
    %v2865 = vld [vmem:[#allocation14 + $0x4d0] sm:$0xff]
    %v2866 = vld [vmem:[#allocation14 + $0x4d8] sm:$0xff]
    %v2867 = vld [vmem:[#allocation14 + $0x4e0] sm:$0xff]
    %v2868 = vld [vmem:[#allocation14 + $0x4e8] sm:$0xf]
    %v2869 = vld [vmem:[#allocation14 + $0x4ec] sm:$0xff]
    %v2870 = vld [vmem:[#allocation14 + $0x4f4] sm:$0xff]
    %v2871 = vld [vmem:[#allocation14 + $0x4fc] sm:$0xff]
    %v2872 = vld [vmem:[#allocation14 + $0x504] sm:$0xf]
    %v2873 = vld [vmem:[#allocation14 + $0x508] sm:$0xff]
    %v2874 = vld [vmem:[#allocation14 + $0x510] sm:$0xff]
    %v2875 = vld [vmem:[#allocation14 + $0x518] sm:$0xff]
    %v2876 = vld [vmem:[#allocation14 + $0x520] sm:$0xf]
    %v2877 = vld [vmem:[#allocation14 + $0x524] sm:$0xff]
    %v2878 = vld [vmem:[#allocation14 + $0x52c] sm:$0xff]
    %v2879 = vld [vmem:[#allocation14 + $0x534] sm:$0xff]
    %v2880 = vld [vmem:[#allocation14 + $0x53c] sm:$0xf]
    %v2881 = vld [vmem:[#allocation14 + $0x540] sm:$0xff]
    %v2882 = vld [vmem:[#allocation14 + $0x548] sm:$0xff]
    %v2883 = vld [vmem:[#allocation14 + $0x550] sm:$0xff]
    %v2884 = vld [vmem:[#allocation14 + $0x558] sm:$0xf]
    %v2885 = vld [vmem:[#allocation14 + $0x55c] sm:$0xff]
    %v2886 = vld [vmem:[#allocation14 + $0x564] sm:$0xff]
    %v2887 = vld [vmem:[#allocation14 + $0x56c] sm:$0xff]
    %v2888 = vld [vmem:[#allocation14 + $0x574] sm:$0xf]
    %v2889 = vld [vmem:[#allocation14 + $0x578] sm:$0xff]
    %v2890 = vld [vmem:[#allocation14 + $0x580] sm:$0xff]
    %v2891 = vld [vmem:[#allocation14 + $0x588] sm:$0xff]
    %v2892 = vld [vmem:[#allocation14 + $0x590] sm:$0xf]
    %v2893 = vld [vmem:[#allocation14 + $0x594] sm:$0xff]
    %v2894 = vld [vmem:[#allocation14 + $0x59c] sm:$0xff]
    %v2895 = vld [vmem:[#allocation14 + $0x5a4] sm:$0xff]
    %v2896 = vld [vmem:[#allocation14 + $0x5ac] sm:$0xf]
    %v2897 = vld [vmem:[#allocation14 + $0x5b0] sm:$0xff]
    %v2898 = vld [vmem:[#allocation14 + $0x5b8] sm:$0xff]
    %v2899 = vld [vmem:[#allocation14 + $0x5c0] sm:$0xff]
    %v2900 = vld [vmem:[#allocation14 + $0x5c8] sm:$0xf]
    %v2901 = vld [vmem:[#allocation14 + $0x5cc] sm:$0xff]
    %v2902 = vld [vmem:[#allocation14 + $0x5d4] sm:$0xff]
    %v2903 = vld [vmem:[#allocation14 + $0x5dc] sm:$0xff]
    %v2904 = vld [vmem:[#allocation14 + $0x5e4] sm:$0xf]
    %v2905 = vld [vmem:[#allocation14 + $0x5e8] sm:$0xff]
    %v2906 = vld [vmem:[#allocation14 + $0x5f0] sm:$0xff]
    %v2907 = vld [vmem:[#allocation14 + $0x5f8] sm:$0xff]
    %v2908 = vld [vmem:[#allocation14 + $0x600] sm:$0xf]
    %v2909 = vld [vmem:[#allocation14 + $0x604] sm:$0xff]
    %v2910 = vld [vmem:[#allocation14 + $0x60c] sm:$0xff]
    %v2911 = vld [vmem:[#allocation14 + $0x614] sm:$0xff]
    %v2912 = vld [vmem:[#allocation14 + $0x61c] sm:$0xf]
    %v2913 = vld [vmem:[#allocation14 + $0x620] sm:$0xff]
    %v2914 = vld [vmem:[#allocation14 + $0x628] sm:$0xff]
    %v2915 = vld [vmem:[#allocation14 + $0x630] sm:$0xff]
    %v2916 = vld [vmem:[#allocation14 + $0x638] sm:$0xf]
    %v2917 = vld [vmem:[#allocation14 + $0x63c] sm:$0xff]
    %v2918 = vld [vmem:[#allocation14 + $0x644] sm:$0xff]
    %v2919 = vld [vmem:[#allocation14 + $0x64c] sm:$0xff]
    %v2920 = vld [vmem:[#allocation14 + $0x654] sm:$0xf]
    %v2921 = vld [vmem:[#allocation14 + $0x658] sm:$0xff]
    %v2922 = vld [vmem:[#allocation14 + $0x660] sm:$0xff]
    %v2923 = vld [vmem:[#allocation14 + $0x668] sm:$0xff]
    %v2924 = vld [vmem:[#allocation14 + $0x670] sm:$0xf]
    %v2925 = vld [vmem:[#allocation14 + $0x674] sm:$0xff]
    %v2926 = vld [vmem:[#allocation14 + $0x67c] sm:$0xff]
    %v2927 = vld [vmem:[#allocation14 + $0x684] sm:$0xff]
    %v2928 = vld [vmem:[#allocation14 + $0x68c] sm:$0xf]
    %v2929 = vld [vmem:[#allocation14 + $0x690] sm:$0xff]
    %v2930 = vld [vmem:[#allocation14 + $0x698] sm:$0xff]
    %v2931 = vld [vmem:[#allocation14 + $0x6a0] sm:$0xff]
    %v2932 = vld [vmem:[#allocation14 + $0x6a8] sm:$0xf]
    %v2933 = vld [vmem:[#allocation14 + $0x6ac] sm:$0xff]
    %v2934 = vld [vmem:[#allocation14 + $0x6b4] sm:$0xff]
    %v2935 = vld [vmem:[#allocation14 + $0x6bc] sm:$0xff]
    %v2936 = vld [vmem:[#allocation14 + $0x6c4] sm:$0xf]
    %v2937 = vld [vmem:[#allocation14 + $0x6c8] sm:$0xff]
    %v2938 = vld [vmem:[#allocation14 + $0x6d0] sm:$0xff]
    %v2939 = vld [vmem:[#allocation14 + $0x6d8] sm:$0xff]
    %v2940 = vld [vmem:[#allocation14 + $0x6e0] sm:$0xf]
    %v2941 = vld [vmem:[#allocation14 + $0x6e4] sm:$0xff]
    %v2942 = vld [vmem:[#allocation14 + $0x6ec] sm:$0xff]
    %v2943 = vld [vmem:[#allocation14 + $0x6f4] sm:$0xff]
    %v2944 = vld [vmem:[#allocation14 + $0x6fc] sm:$0xf]
    %v2945 = vld [vmem:[#allocation14 + $0x700] sm:$0xff]
    %v2946 = vld [vmem:[#allocation14 + $0x708] sm:$0xff]
    %v2947 = vld [vmem:[#allocation14 + $0x710] sm:$0xff]
    %v2948 = vld [vmem:[#allocation14 + $0x718] sm:$0xf]
    %v2949 = vld [vmem:[#allocation14 + $0x71c] sm:$0xff]
    %v2950 = vld [vmem:[#allocation14 + $0x724] sm:$0xff]
    %v2951 = vld [vmem:[#allocation14 + $0x72c] sm:$0xff]
    %v2952 = vld [vmem:[#allocation14 + $0x734] sm:$0xf]
    %v2953 = vld [vmem:[#allocation14 + $0x738] sm:$0xff]
    %v2954 = vld [vmem:[#allocation14 + $0x740] sm:$0xff]
    %v2955 = vld [vmem:[#allocation14 + $0x748] sm:$0xff]
    %v2956 = vld [vmem:[#allocation14 + $0x750] sm:$0xf]
    %v2957 = vld [vmem:[#allocation14 + $0x754] sm:$0xff]
    %v2958 = vld [vmem:[#allocation14 + $0x75c] sm:$0xff]
    %v2959 = vld [vmem:[#allocation14 + $0x764] sm:$0xff]
    %v2960 = vld [vmem:[#allocation14 + $0x76c] sm:$0xf]
    %v2961 = vld [vmem:[#allocation14 + $0x770] sm:$0xff]
    %v2962 = vld [vmem:[#allocation14 + $0x778] sm:$0xff]
    %v2963 = vld [vmem:[#allocation14 + $0x780] sm:$0xff]
    %v2964 = vld [vmem:[#allocation14 + $0x788] sm:$0xf]
    %v2965 = vld [vmem:[#allocation14 + $0x78c] sm:$0xff]
    %v2966 = vld [vmem:[#allocation14 + $0x794] sm:$0xff]
    %v2967 = vld [vmem:[#allocation14 + $0x79c] sm:$0xff]
    %v2968 = vld [vmem:[#allocation14 + $0x7a4] sm:$0xf]
    %v2969 = vld [vmem:[#allocation14 + $0x7a8] sm:$0xff]
    %v2970 = vld [vmem:[#allocation14 + $0x7b0] sm:$0xff]
    %v2971 = vld [vmem:[#allocation14 + $0x7b8] sm:$0xff]
    %v2972 = vld [vmem:[#allocation14 + $0x7c0] sm:$0xf]
    %v2973 = vld [vmem:[#allocation14 + $0x7c4] sm:$0xff]
    %v2974 = vld [vmem:[#allocation14 + $0x7cc] sm:$0xff]
    %v2975 = vld [vmem:[#allocation14 + $0x7d4] sm:$0xff]
    %v2976 = vld [vmem:[#allocation14 + $0x7dc] sm:$0xf]
    %v2977 = vld [vmem:[#allocation14 + $0x7e0] sm:$0xff]
    %v2978 = vld [vmem:[#allocation14 + $0x7e8] sm:$0xff]
    %v2979 = vld [vmem:[#allocation14 + $0x7f0] sm:$0xff]
    %v2980 = vld [vmem:[#allocation14 + $0x7f8] sm:$0xf]
    %v2981 = vld [vmem:[#allocation14 + $0x7fc] sm:$0xff]
    %v2982 = vld [vmem:[#allocation14 + $0x804] sm:$0xff]
    %v2983 = vld [vmem:[#allocation14 + $0x80c] sm:$0xff]
    %v2984 = vld [vmem:[#allocation14 + $0x814] sm:$0xf]
    %v2985 = vld [vmem:[#allocation14 + $0x818] sm:$0xff]
    %v2986 = vld [vmem:[#allocation14 + $0x820] sm:$0xff]
    %v2987 = vld [vmem:[#allocation14 + $0x828] sm:$0xff]
    %v2988 = vld [vmem:[#allocation14 + $0x830] sm:$0xf]
    %v2989 = vld [vmem:[#allocation14 + $0x834] sm:$0xff]
    %v2990 = vld [vmem:[#allocation14 + $0x83c] sm:$0xff]
    %v2991 = vld [vmem:[#allocation14 + $0x844] sm:$0xff]
    %v2992 = vld [vmem:[#allocation14 + $0x84c] sm:$0xf]
    %v2993 = vld [vmem:[#allocation14 + $0x850] sm:$0xff]
    %v2994 = vld [vmem:[#allocation14 + $0x858] sm:$0xff]
    %v2995 = vld [vmem:[#allocation14 + $0x860] sm:$0xff]
    %v2996 = vld [vmem:[#allocation14 + $0x868] sm:$0xf]
    %v2997 = vld [vmem:[#allocation14 + $0x86c] sm:$0xff]
    %v2998 = vld [vmem:[#allocation14 + $0x874] sm:$0xff]
    %v2999 = vld [vmem:[#allocation14 + $0x87c] sm:$0xff]
    %v3000 = vld [vmem:[#allocation14 + $0x884] sm:$0xf]
    %v3001 = vld [vmem:[#allocation14 + $0x888] sm:$0xff]
    %v3002 = vld [vmem:[#allocation14 + $0x890] sm:$0xff]
    %v3003 = vld [vmem:[#allocation14 + $0x898] sm:$0xff]
    %v3004 = vld [vmem:[#allocation14 + $0x8a0] sm:$0xf]
    %v3005 = vld [vmem:[#allocation14 + $0x8a4] sm:$0xff]
    %v3006 = vld [vmem:[#allocation14 + $0x8ac] sm:$0xff]
    %v3007 = vld [vmem:[#allocation14 + $0x8b4] sm:$0xff]
    %v3008 = vld [vmem:[#allocation14 + $0x8bc] sm:$0xf]
    %v3009 = vld [vmem:[#allocation14 + $0x8c0] sm:$0xff]
    %v3010 = vld [vmem:[#allocation14 + $0x8c8] sm:$0xff]
    %v3011 = vld [vmem:[#allocation14 + $0x8d0] sm:$0xff]
    %v3012 = vld [vmem:[#allocation14 + $0x8d8] sm:$0xf]
    %v3013 = vld [vmem:[#allocation14 + $0x8dc] sm:$0xff]
    %v3014 = vld [vmem:[#allocation14 + $0x8e4] sm:$0xff]
    %v3015 = vld [vmem:[#allocation14 + $0x8ec] sm:$0xff]
    %v3016 = vld [vmem:[#allocation14 + $0x8f4] sm:$0xf]
    %v3017 = vld [vmem:[#allocation14 + $0x8f8] sm:$0xff]
    %v3018 = vld [vmem:[#allocation14 + $0x900] sm:$0xff]
    %v3019 = vld [vmem:[#allocation14 + $0x908] sm:$0xff]
    %v3020 = vld [vmem:[#allocation14 + $0x910] sm:$0xf]
    %v3021 = vld [vmem:[#allocation14 + $0x914] sm:$0xff]
    %v3022 = vld [vmem:[#allocation14 + $0x91c] sm:$0xff]
    %v3023 = vld [vmem:[#allocation14 + $0x924] sm:$0xff]
    %v3024 = vld [vmem:[#allocation14 + $0x92c] sm:$0xf]
    %v3025 = vld [vmem:[#allocation14 + $0x930] sm:$0xff]
    %v3026 = vld [vmem:[#allocation14 + $0x938] sm:$0xff]
    %v3027 = vld [vmem:[#allocation14 + $0x940] sm:$0xff]
    %v3028 = vld [vmem:[#allocation14 + $0x948] sm:$0xf]
    %v3029 = vld [vmem:[#allocation14 + $0x94c] sm:$0xff]
    %v3030 = vld [vmem:[#allocation14 + $0x954] sm:$0xff]
    %v3031 = vld [vmem:[#allocation14 + $0x95c] sm:$0xff]
    %v3032 = vld [vmem:[#allocation14 + $0x964] sm:$0xf]
    %v3033 = vld [vmem:[#allocation14 + $0x968] sm:$0xff]
    %v3034 = vld [vmem:[#allocation14 + $0x970] sm:$0xff]
    %v3035 = vld [vmem:[#allocation14 + $0x978] sm:$0xff]
    %v3036 = vld [vmem:[#allocation14 + $0x980] sm:$0xf]
    %v3037 = vld [vmem:[#allocation14 + $0x984] sm:$0xff]
    %v3038 = vld [vmem:[#allocation14 + $0x98c] sm:$0xff]
    %v3039 = vld [vmem:[#allocation14 + $0x994] sm:$0xff]
    %v3040 = vld [vmem:[#allocation14 + $0x99c] sm:$0xf]
    %v3041 = vld [vmem:[#allocation14 + $0x9a0] sm:$0xff]
    %v3042 = vld [vmem:[#allocation14 + $0x9a8] sm:$0xff]
    %v3043 = vld [vmem:[#allocation14 + $0x9b0] sm:$0xff]
    %v3044 = vld [vmem:[#allocation14 + $0x9b8] sm:$0xf]
    %v3045 = vld [vmem:[#allocation14 + $0x9bc] sm:$0xff]
    %v3046 = vld [vmem:[#allocation14 + $0x9c4] sm:$0xff]
    %v3047 = vld [vmem:[#allocation14 + $0x9cc] sm:$0xff]
    %v3048 = vld [vmem:[#allocation14 + $0x9d4] sm:$0xf]
    %v3049 = vld [vmem:[#allocation14 + $0x9d8] sm:$0xff]
    %v3050 = vld [vmem:[#allocation14 + $0x9e0] sm:$0xff]
    %v3051 = vld [vmem:[#allocation14 + $0x9e8] sm:$0xff]
    %v3052 = vld [vmem:[#allocation14 + $0x9f0] sm:$0xf]
    %v3053 = vld [vmem:[#allocation14 + $0x9f4] sm:$0xff]
    %v3054 = vld [vmem:[#allocation14 + $0x9fc] sm:$0xff]
    %v3055 = vld [vmem:[#allocation14 + $0xa04] sm:$0xff]
    %v3056 = vld [vmem:[#allocation14 + $0xa0c] sm:$0xf]
    %v3057 = vld [vmem:[#allocation14 + $0xa10] sm:$0xff]
    %v3058 = vld [vmem:[#allocation14 + $0xa18] sm:$0xff]
    %v3059 = vld [vmem:[#allocation14 + $0xa20] sm:$0xff]
    %v3060 = vld [vmem:[#allocation14 + $0xa28] sm:$0xf]
    %v3061 = vld [vmem:[#allocation14 + $0xa2c] sm:$0xff]
    %v3062 = vld [vmem:[#allocation14 + $0xa34] sm:$0xff]
    %v3063 = vld [vmem:[#allocation14 + $0xa3c] sm:$0xff]
    %v3064 = vld [vmem:[#allocation14 + $0xa44] sm:$0xf]
    %v3065 = vld [vmem:[#allocation14 + $0xa48] sm:$0xff]
    %v3066 = vld [vmem:[#allocation14 + $0xa50] sm:$0xff]
    %v3067 = vld [vmem:[#allocation14 + $0xa58] sm:$0xff]
    %v3068 = vld [vmem:[#allocation14 + $0xa60] sm:$0xf]
    %v3069 = vld [vmem:[#allocation14 + $0xa64] sm:$0xff]
    %v3070 = vld [vmem:[#allocation14 + $0xa6c] sm:$0xff]
    %v3071 = vld [vmem:[#allocation14 + $0xa74] sm:$0xff]
    %v3072 = vld [vmem:[#allocation14 + $0xa7c] sm:$0xf]
    %v3073 = vld [vmem:[#allocation14 + $0xa80] sm:$0xff]
    %v3074 = vld [vmem:[#allocation14 + $0xa88] sm:$0xff]
    %v3075 = vld [vmem:[#allocation14 + $0xa90] sm:$0xff]
    %v3076 = vld [vmem:[#allocation14 + $0xa98] sm:$0xf]
    %v3077 = vld [vmem:[#allocation14 + $0xa9c] sm:$0xff]
    %v3078 = vld [vmem:[#allocation14 + $0xaa4] sm:$0xff]
    %v3079 = vld [vmem:[#allocation14 + $0xaac] sm:$0xff]
    %v3080 = vld [vmem:[#allocation14 + $0xab4] sm:$0xf]
    %v3081 = vld [vmem:[#allocation14 + $0xab8] sm:$0xff]
    %v3082 = vld [vmem:[#allocation14 + $0xac0] sm:$0xff]
    %v3083 = vld [vmem:[#allocation14 + $0xac8] sm:$0xff]
    %v3084 = vld [vmem:[#allocation14 + $0xad0] sm:$0xf]
    %v3085 = vld [vmem:[#allocation14 + $0xad4] sm:$0xff]
    %v3086 = vld [vmem:[#allocation14 + $0xadc] sm:$0xff]
    %v3087 = vld [vmem:[#allocation14 + $0xae4] sm:$0xff]
    %v3088 = vld [vmem:[#allocation14 + $0xaec] sm:$0xf]
    %v3089 = vld [vmem:[#allocation14 + $0xaf0] sm:$0xff]
    %v3090 = vld [vmem:[#allocation14 + $0xaf8] sm:$0xff]
    %v3091 = vld [vmem:[#allocation14 + $0xb00] sm:$0xff]
    %v3092 = vld [vmem:[#allocation14 + $0xb08] sm:$0xf]
    %v3093 = vld [vmem:[#allocation14 + $0xb0c] sm:$0xff]
    %v3094 = vld [vmem:[#allocation14 + $0xb14] sm:$0xff]
    %v3095 = vld [vmem:[#allocation14 + $0xb1c] sm:$0xff]
    %v3096 = vld [vmem:[#allocation14 + $0xb24] sm:$0xf]
    %v3097 = vld [vmem:[#allocation14 + $0xb28] sm:$0xff]
    %v3098 = vld [vmem:[#allocation14 + $0xb30] sm:$0xff]
    %v3099 = vld [vmem:[#allocation14 + $0xb38] sm:$0xff]
    %v3100 = vld [vmem:[#allocation14 + $0xb40] sm:$0xf]
    %v3101 = vld [vmem:[#allocation14 + $0xb44] sm:$0xff]
    %v3102 = vld [vmem:[#allocation14 + $0xb4c] sm:$0xff]
    %v3103 = vld [vmem:[#allocation14 + $0xb54] sm:$0xff]
    %v3104 = vld [vmem:[#allocation14 + $0xb5c] sm:$0xf]
    %v3105 = vld [vmem:[#allocation14 + $0xb60] sm:$0xff]
    %v3106 = vld [vmem:[#allocation14 + $0xb68] sm:$0xff]
    %v3107 = vld [vmem:[#allocation14 + $0xb70] sm:$0xff]
    %v3108 = vld [vmem:[#allocation14 + $0xb78] sm:$0xf]
    %v3109 = vld [vmem:[#allocation14 + $0xb7c] sm:$0xff]
    %v3110 = vld [vmem:[#allocation14 + $0xb84] sm:$0xff]
    %v3111 = vld [vmem:[#allocation14 + $0xb8c] sm:$0xff]
    %v3112 = vld [vmem:[#allocation14 + $0xb94] sm:$0xf]
    %v3113 = vld [vmem:[#allocation14 + $0xb98] sm:$0xff]
    %v3114 = vld [vmem:[#allocation14 + $0xba0] sm:$0xff]
    %v3115 = vld [vmem:[#allocation14 + $0xba8] sm:$0xff]
    %v3116 = vld [vmem:[#allocation14 + $0xbb0] sm:$0xf]
    %v3117 = vld [vmem:[#allocation14 + $0xbb4] sm:$0xff]
    %v3118 = vld [vmem:[#allocation14 + $0xbbc] sm:$0xff]
    %v3119 = vld [vmem:[#allocation14 + $0xbc4] sm:$0xff]
    %v3120 = vld [vmem:[#allocation14 + $0xbcc] sm:$0xf]
    %v3121 = vld [vmem:[#allocation14 + $0xbd0] sm:$0xff]
    %v3122 = vld [vmem:[#allocation14 + $0xbd8] sm:$0xff]
    %v3123 = vld [vmem:[#allocation14 + $0xbe0] sm:$0xff]
    %v3124 = vld [vmem:[#allocation14 + $0xbe8] sm:$0xf]
    %v3125 = vld [vmem:[#allocation14 + $0xbec] sm:$0xff]
    %v3126 = vld [vmem:[#allocation14 + $0xbf4] sm:$0xff]
    %v3127 = vld [vmem:[#allocation14 + $0xbfc] sm:$0xff]
    %v3128 = vld [vmem:[#allocation14 + $0xc04] sm:$0xf]
    %v3129 = vld [vmem:[#allocation14 + $0xc08] sm:$0xff]
    %v3130 = vld [vmem:[#allocation14 + $0xc10] sm:$0xff]
    %v3131 = vld [vmem:[#allocation14 + $0xc18] sm:$0xff]
    %v3132 = vld [vmem:[#allocation14 + $0xc20] sm:$0xf]
    %v3133 = vld [vmem:[#allocation14 + $0xc24] sm:$0xff]
    %v3134 = vld [vmem:[#allocation14 + $0xc2c] sm:$0xff]
    %v3135 = vld [vmem:[#allocation14 + $0xc34] sm:$0xff]
    %v3136 = vld [vmem:[#allocation14 + $0xc3c] sm:$0xf]
    %v3137 = vld [vmem:[#allocation14 + $0xc40] sm:$0xff]
    %v3138 = vld [vmem:[#allocation14 + $0xc48] sm:$0xff]
    %v3139 = vld [vmem:[#allocation14 + $0xc50] sm:$0xff]
    %v3140 = vld [vmem:[#allocation14 + $0xc58] sm:$0xf]
    %v3141 = vld [vmem:[#allocation14 + $0xc5c] sm:$0xff]
    %v3142 = vld [vmem:[#allocation14 + $0xc64] sm:$0xff]
    %v3143 = vld [vmem:[#allocation14 + $0xc6c] sm:$0xff]
    %v3144 = vld [vmem:[#allocation14 + $0xc74] sm:$0xf]
    %v3145 = vld [vmem:[#allocation14 + $0xc78] sm:$0xff]
    %v3146 = vld [vmem:[#allocation14 + $0xc80] sm:$0xff]
    %v3147 = vld [vmem:[#allocation14 + $0xc88] sm:$0xff]
    %v3148 = vld [vmem:[#allocation14 + $0xc90] sm:$0xf]
    %v3149 = vld [vmem:[#allocation14 + $0xc94] sm:$0xff]
    %v3150 = vld [vmem:[#allocation14 + $0xc9c] sm:$0xff]
    %v3151 = vld [vmem:[#allocation14 + $0xca4] sm:$0xff]
    %v3152 = vld [vmem:[#allocation14 + $0xcac] sm:$0xf]
    %v3153 = vld [vmem:[#allocation14 + $0xcb0] sm:$0xff]
    %v3154 = vld [vmem:[#allocation14 + $0xcb8] sm:$0xff]
    %v3155 = vld [vmem:[#allocation14 + $0xcc0] sm:$0xff]
    %v3156 = vld [vmem:[#allocation14 + $0xcc8] sm:$0xf]
    %v3157 = vld [vmem:[#allocation14 + $0xccc] sm:$0xff]
    %v3158 = vld [vmem:[#allocation14 + $0xcd4] sm:$0xff]
    %v3159 = vld [vmem:[#allocation14 + $0xcdc] sm:$0xff]
    %v3160 = vld [vmem:[#allocation14 + $0xce4] sm:$0xf]
    %v3161 = vld [vmem:[#allocation14 + $0xce8] sm:$0xff]
    %v3162 = vld [vmem:[#allocation14 + $0xcf0] sm:$0xff]
    %v3163 = vld [vmem:[#allocation14 + $0xcf8] sm:$0xff]
    %v3164 = vld [vmem:[#allocation14 + $0xd00] sm:$0xf]
    %v3165 = vld [vmem:[#allocation14 + $0xd04] sm:$0xff]
    %v3166 = vld [vmem:[#allocation14 + $0xd0c] sm:$0xff]
    %v3167 = vld [vmem:[#allocation14 + $0xd14] sm:$0xff]
    %v3168 = vld [vmem:[#allocation14 + $0xd1c] sm:$0xf]
    %v3169 = vld [vmem:[#allocation14 + $0xd20] sm:$0xff]
    %v3170 = vld [vmem:[#allocation14 + $0xd28] sm:$0xff]
    %v3171 = vld [vmem:[#allocation14 + $0xd30] sm:$0xff]
    %v3172 = vld [vmem:[#allocation14 + $0xd38] sm:$0xf]
    %v3173 = vld [vmem:[#allocation14 + $0xd3c] sm:$0xff]
    %v3174 = vld [vmem:[#allocation14 + $0xd44] sm:$0xff]
    %v3175 = vld [vmem:[#allocation14 + $0xd4c] sm:$0xff]
    %v3176 = vld [vmem:[#allocation14 + $0xd54] sm:$0xf]
    %v3177 = vld [vmem:[#allocation14 + $0xd58] sm:$0xff]
    %v3178 = vld [vmem:[#allocation14 + $0xd60] sm:$0xff]
    %v3179 = vld [vmem:[#allocation14 + $0xd68] sm:$0xff]
    %v3180 = vld [vmem:[#allocation14 + $0xd70] sm:$0xf]
    %v3181 = vld [vmem:[#allocation14 + $0xd74] sm:$0xff]
    %v3182 = vld [vmem:[#allocation14 + $0xd7c] sm:$0xff]
    %v3183 = vld [vmem:[#allocation14 + $0xd84] sm:$0xff]
    %v3184 = vld [vmem:[#allocation14 + $0xd8c] sm:$0xf]
    %v3185 = vld [vmem:[#allocation14 + $0xd90] sm:$0xff]
    %v3186 = vld [vmem:[#allocation14 + $0xd98] sm:$0xff]
    %v3187 = vld [vmem:[#allocation14 + $0xda0] sm:$0xff]
    %v3188 = vld [vmem:[#allocation14 + $0xda8] sm:$0xf]
    %v3189 = vld [vmem:[#allocation14 + $0xdac] sm:$0xff]
    %v3190 = vld [vmem:[#allocation14 + $0xdb4] sm:$0xff]
    %v3191 = vld [vmem:[#allocation14 + $0xdbc] sm:$0xff]
    %v3192 = vld [vmem:[#allocation14 + $0xdc4] sm:$0xf]
    %v3193 = vld [vmem:[#allocation14 + $0xdc8] sm:$0xff]
    %v3194 = vld [vmem:[#allocation14 + $0xdd0] sm:$0xff]
    %v3195 = vld [vmem:[#allocation14 + $0xdd8] sm:$0xff]
    %v3196 = vld [vmem:[#allocation14 + $0xde0] sm:$0xf]
    %v3197 = vld [vmem:[#allocation14 + $0xde4] sm:$0xff]
    %v3198 = vld [vmem:[#allocation14 + $0xdec] sm:$0xff]
    %v3199 = vld [vmem:[#allocation14 + $0xdf4] sm:$0xff]
    %v3200 = vld [vmem:[#allocation14 + $0xdfc] sm:$0xf]
    %v3201 = vld [vmem:[#allocation16] sm:$0xff]
    %v3203 = vlaneseq
    %v3204 = vshrl.u32 %v3203, 7
    %v3205 = vsub.s32 0, %v3204
    %v3206 = vrot.slane %v3201, %v3205
    %v3207 = vlaneseq
    %v3208 = vshrl.u32 %v3207, 7
    %v3209 = vsub.s32 1, %v3208
    %v3210 = vrot.slane %v3201, %v3209
    %v3211 = vlaneseq
    %v3212 = vshrl.u32 %v3211, 7
    %v3213 = vsub.s32 2, %v3212
    %v3214 = vrot.slane %v3201, %v3213
    %v3215 = vlaneseq
    %v3216 = vshrl.u32 %v3215, 7
    %v3217 = vsub.s32 3, %v3216
    %v3218 = vrot.slane %v3201, %v3217
    %v3219 = vlaneseq
    %v3220 = vshrl.u32 %v3219, 7
    %v3221 = vsub.s32 4, %v3220
    %v3222 = vrot.slane %v3201, %v3221
    %v3223 = vlaneseq
    %v3224 = vshrl.u32 %v3223, 7
    %v3225 = vsub.s32 5, %v3224
    %v3226 = vrot.slane %v3201, %v3225
    %v3227 = vlaneseq
    %v3228 = vshrl.u32 %v3227, 7
    %v3229 = vsub.s32 6, %v3228
    %v3230 = vrot.slane %v3201, %v3229
    %v3750 = vunpack.c.l.b16 %v2689
    %v3751 = vunpack.c.h.b16 %v2689
    %v3752 = vunpack.c.l.b16 %v2690
    %v3753 = vunpack.c.h.b16 %v2690
    %v3754 = vunpack.c.l.b16 %v2691
    %v3755 = vunpack.c.h.b16 %v2691
    %v3756 = vunpack.c.l.b16 %v2692
    %v3757 = vunpack.c.l.b16 %v2693
    %v3758 = vunpack.c.h.b16 %v2693
    %v3759 = vunpack.c.l.b16 %v2694
    %v3760 = vunpack.c.h.b16 %v2694
    %v3761 = vunpack.c.l.b16 %v2695
    %v3762 = vunpack.c.h.b16 %v2695
    %v3763 = vunpack.c.l.b16 %v2696
    %v3764 = vunpack.c.l.b16 %v2697
    %v3765 = vunpack.c.h.b16 %v2697
    %v3766 = vunpack.c.l.b16 %v2698
    %v3767 = vunpack.c.h.b16 %v2698
    %v3768 = vunpack.c.l.b16 %v2699
    %v3769 = vunpack.c.h.b16 %v2699
    %v3770 = vunpack.c.l.b16 %v2700
    %v3771 = vunpack.c.l.b16 %v2701
    %v3772 = vunpack.c.h.b16 %v2701
    %v3773 = vunpack.c.l.b16 %v2702
    %v3774 = vunpack.c.h.b16 %v2702
    %v3775 = vunpack.c.l.b16 %v2703
    %v3776 = vunpack.c.h.b16 %v2703
    %v3777 = vunpack.c.l.b16 %v2704
    %v3778 = vunpack.c.l.b16 %v2705
    %v3779 = vunpack.c.h.b16 %v2705
    %v3780 = vunpack.c.l.b16 %v2706
    %v3781 = vunpack.c.h.b16 %v2706
    %v3782 = vunpack.c.l.b16 %v2707
    %v3783 = vunpack.c.h.b16 %v2707
    %v3784 = vunpack.c.l.b16 %v2708
    %v3785 = vunpack.c.l.b16 %v2709
    %v3786 = vunpack.c.h.b16 %v2709
    %v3787 = vunpack.c.l.b16 %v2710
    %v3788 = vunpack.c.h.b16 %v2710
    %v3789 = vunpack.c.l.b16 %v2711
    %v3790 = vunpack.c.h.b16 %v2711
    %v3791 = vunpack.c.l.b16 %v2712
    %v3792 = vunpack.c.l.b16 %v2713
    %v3793 = vunpack.c.h.b16 %v2713
    %v3794 = vunpack.c.l.b16 %v2714
    %v3795 = vunpack.c.h.b16 %v2714
    %v3796 = vunpack.c.l.b16 %v2715
    %v3797 = vunpack.c.h.b16 %v2715
    %v3798 = vunpack.c.l.b16 %v2716
    %v3799 = vunpack.c.l.b16 %v2717
    %v3800 = vunpack.c.h.b16 %v2717
    %v3801 = vunpack.c.l.b16 %v2718
    %v3802 = vunpack.c.h.b16 %v2718
    %v3803 = vunpack.c.l.b16 %v2719
    %v3804 = vunpack.c.h.b16 %v2719
    %v3805 = vunpack.c.l.b16 %v2720
    %v3806 = vunpack.c.l.b16 %v2721
    %v3807 = vunpack.c.h.b16 %v2721
    %v3808 = vunpack.c.l.b16 %v2722
    %v3809 = vunpack.c.h.b16 %v2722
    %v3810 = vunpack.c.l.b16 %v2723
    %v3811 = vunpack.c.h.b16 %v2723
    %v3812 = vunpack.c.l.b16 %v2724
    %v3813 = vunpack.c.l.b16 %v2725
    %v3814 = vunpack.c.h.b16 %v2725
    %v3815 = vunpack.c.l.b16 %v2726
    %v3816 = vunpack.c.h.b16 %v2726
    %v3817 = vunpack.c.l.b16 %v2727
    %v3818 = vunpack.c.h.b16 %v2727
    %v3819 = vunpack.c.l.b16 %v2728
    %v3820 = vunpack.c.l.b16 %v2729
    %v3821 = vunpack.c.h.b16 %v2729
    %v3822 = vunpack.c.l.b16 %v2730
    %v3823 = vunpack.c.h.b16 %v2730
    %v3824 = vunpack.c.l.b16 %v2731
    %v3825 = vunpack.c.h.b16 %v2731
    %v3826 = vunpack.c.l.b16 %v2732
    %v3827 = vunpack.c.l.b16 %v2733
    %v3828 = vunpack.c.h.b16 %v2733
    %v3829 = vunpack.c.l.b16 %v2734
    %v3830 = vunpack.c.h.b16 %v2734
    %v3831 = vunpack.c.l.b16 %v2735
    %v3832 = vunpack.c.h.b16 %v2735
    %v3833 = vunpack.c.l.b16 %v2736
    %v3834 = vunpack.c.l.b16 %v2737
    %v3835 = vunpack.c.h.b16 %v2737
    %v3836 = vunpack.c.l.b16 %v2738
    %v3837 = vunpack.c.h.b16 %v2738
    %v3838 = vunpack.c.l.b16 %v2739
    %v3839 = vunpack.c.h.b16 %v2739
    %v3840 = vunpack.c.l.b16 %v2740
    %v3841 = vunpack.c.l.b16 %v2741
    %v3842 = vunpack.c.h.b16 %v2741
    %v3843 = vunpack.c.l.b16 %v2742
    %v3844 = vunpack.c.h.b16 %v2742
    %v3845 = vunpack.c.l.b16 %v2743
    %v3846 = vunpack.c.h.b16 %v2743
    %v3847 = vunpack.c.l.b16 %v2744
    %v3848 = vunpack.c.l.b16 %v2745
    %v3849 = vunpack.c.h.b16 %v2745
    %v3850 = vunpack.c.l.b16 %v2746
    %v3851 = vunpack.c.h.b16 %v2746
    %v3852 = vunpack.c.l.b16 %v2747
    %v3853 = vunpack.c.h.b16 %v2747
    %v3854 = vunpack.c.l.b16 %v2748
    %v3855 = vunpack.c.l.b16 %v2749
    %v3856 = vunpack.c.h.b16 %v2749
    %v3857 = vunpack.c.l.b16 %v2750
    %v3858 = vunpack.c.h.b16 %v2750
    %v3859 = vunpack.c.l.b16 %v2751
    %v3860 = vunpack.c.h.b16 %v2751
    %v3861 = vunpack.c.l.b16 %v2752
    %v3862 = vunpack.c.l.b16 %v2753
    %v3863 = vunpack.c.h.b16 %v2753
    %v3864 = vunpack.c.l.b16 %v2754
    %v3865 = vunpack.c.h.b16 %v2754
    %v3866 = vunpack.c.l.b16 %v2755
    %v3867 = vunpack.c.h.b16 %v2755
    %v3868 = vunpack.c.l.b16 %v2756
    %v3869 = vunpack.c.l.b16 %v2757
    %v3870 = vunpack.c.h.b16 %v2757
    %v3871 = vunpack.c.l.b16 %v2758
    %v3872 = vunpack.c.h.b16 %v2758
    %v3873 = vunpack.c.l.b16 %v2759
    %v3874 = vunpack.c.h.b16 %v2759
    %v3875 = vunpack.c.l.b16 %v2760
    %v3876 = vunpack.c.l.b16 %v2761
    %v3877 = vunpack.c.h.b16 %v2761
    %v3878 = vunpack.c.l.b16 %v2762
    %v3879 = vunpack.c.h.b16 %v2762
    %v3880 = vunpack.c.l.b16 %v2763
    %v3881 = vunpack.c.h.b16 %v2763
    %v3882 = vunpack.c.l.b16 %v2764
    %v3883 = vunpack.c.l.b16 %v2765
    %v3884 = vunpack.c.h.b16 %v2765
    %v3885 = vunpack.c.l.b16 %v2766
    %v3886 = vunpack.c.h.b16 %v2766
    %v3887 = vunpack.c.l.b16 %v2767
    %v3888 = vunpack.c.h.b16 %v2767
    %v3889 = vunpack.c.l.b16 %v2768
    %v3890 = vunpack.c.l.b16 %v2769
    %v3891 = vunpack.c.h.b16 %v2769
    %v3892 = vunpack.c.l.b16 %v2770
    %v3893 = vunpack.c.h.b16 %v2770
    %v3894 = vunpack.c.l.b16 %v2771
    %v3895 = vunpack.c.h.b16 %v2771
    %v3896 = vunpack.c.l.b16 %v2772
    %v3897 = vunpack.c.l.b16 %v2773
    %v3898 = vunpack.c.h.b16 %v2773
    %v3899 = vunpack.c.l.b16 %v2774
    %v3900 = vunpack.c.h.b16 %v2774
    %v3901 = vunpack.c.l.b16 %v2775
    %v3902 = vunpack.c.h.b16 %v2775
    %v3903 = vunpack.c.l.b16 %v2776
    %v3904 = vunpack.c.l.b16 %v2777
    %v3905 = vunpack.c.h.b16 %v2777
    %v3906 = vunpack.c.l.b16 %v2778
    %v3907 = vunpack.c.h.b16 %v2778
    %v3908 = vunpack.c.l.b16 %v2779
    %v3909 = vunpack.c.h.b16 %v2779
    %v3910 = vunpack.c.l.b16 %v2780
    %v3911 = vunpack.c.l.b16 %v2781
    %v3912 = vunpack.c.h.b16 %v2781
    %v3913 = vunpack.c.l.b16 %v2782
    %v3914 = vunpack.c.h.b16 %v2782
    %v3915 = vunpack.c.l.b16 %v2783
    %v3916 = vunpack.c.h.b16 %v2783
    %v3917 = vunpack.c.l.b16 %v2784
    %v3918 = vunpack.c.l.b16 %v2785
    %v3919 = vunpack.c.h.b16 %v2785
    %v3920 = vunpack.c.l.b16 %v2786
    %v3921 = vunpack.c.h.b16 %v2786
    %v3922 = vunpack.c.l.b16 %v2787
    %v3923 = vunpack.c.h.b16 %v2787
    %v3924 = vunpack.c.l.b16 %v2788
    %v3925 = vunpack.c.l.b16 %v2789
    %v3926 = vunpack.c.h.b16 %v2789
    %v3927 = vunpack.c.l.b16 %v2790
    %v3928 = vunpack.c.h.b16 %v2790
    %v3929 = vunpack.c.l.b16 %v2791
    %v3930 = vunpack.c.h.b16 %v2791
    %v3931 = vunpack.c.l.b16 %v2792
    %v3932 = vunpack.c.l.b16 %v2793
    %v3933 = vunpack.c.h.b16 %v2793
    %v3934 = vunpack.c.l.b16 %v2794
    %v3935 = vunpack.c.h.b16 %v2794
    %v3936 = vunpack.c.l.b16 %v2795
    %v3937 = vunpack.c.h.b16 %v2795
    %v3938 = vunpack.c.l.b16 %v2796
    %v3939 = vunpack.c.l.b16 %v2797
    %v3940 = vunpack.c.h.b16 %v2797
    %v3941 = vunpack.c.l.b16 %v2798
    %v3942 = vunpack.c.h.b16 %v2798
    %v3943 = vunpack.c.l.b16 %v2799
    %v3944 = vunpack.c.h.b16 %v2799
    %v3945 = vunpack.c.l.b16 %v2800
    %v3946 = vunpack.c.l.b16 %v2801
    %v3947 = vunpack.c.h.b16 %v2801
    %v3948 = vunpack.c.l.b16 %v2802
    %v3949 = vunpack.c.h.b16 %v2802
    %v3950 = vunpack.c.l.b16 %v2803
    %v3951 = vunpack.c.h.b16 %v2803
    %v3952 = vunpack.c.l.b16 %v2804
    %v3953 = vunpack.c.l.b16 %v2805
    %v3954 = vunpack.c.h.b16 %v2805
    %v3955 = vunpack.c.l.b16 %v2806
    %v3956 = vunpack.c.h.b16 %v2806
    %v3957 = vunpack.c.l.b16 %v2807
    %v3958 = vunpack.c.h.b16 %v2807
    %v3959 = vunpack.c.l.b16 %v2808
    %v3960 = vunpack.c.l.b16 %v2809
    %v3961 = vunpack.c.h.b16 %v2809
    %v3962 = vunpack.c.l.b16 %v2810
    %v3963 = vunpack.c.h.b16 %v2810
    %v3964 = vunpack.c.l.b16 %v2811
    %v3965 = vunpack.c.h.b16 %v2811
    %v3966 = vunpack.c.l.b16 %v2812
    %v3967 = vunpack.c.l.b16 %v2813
    %v3968 = vunpack.c.h.b16 %v2813
    %v3969 = vunpack.c.l.b16 %v2814
    %v3970 = vunpack.c.h.b16 %v2814
    %v3971 = vunpack.c.l.b16 %v2815
    %v3972 = vunpack.c.h.b16 %v2815
    %v3973 = vunpack.c.l.b16 %v2816
    %v3974 = vunpack.c.l.b16 %v2817
    %v3975 = vunpack.c.h.b16 %v2817
    %v3976 = vunpack.c.l.b16 %v2818
    %v3977 = vunpack.c.h.b16 %v2818
    %v3978 = vunpack.c.l.b16 %v2819
    %v3979 = vunpack.c.h.b16 %v2819
    %v3980 = vunpack.c.l.b16 %v2820
    %v3981 = vunpack.c.l.b16 %v2821
    %v3982 = vunpack.c.h.b16 %v2821
    %v3983 = vunpack.c.l.b16 %v2822
    %v3984 = vunpack.c.h.b16 %v2822
    %v3985 = vunpack.c.l.b16 %v2823
    %v3986 = vunpack.c.h.b16 %v2823
    %v3987 = vunpack.c.l.b16 %v2824
    %v3988 = vunpack.c.l.b16 %v2825
    %v3989 = vunpack.c.h.b16 %v2825
    %v3990 = vunpack.c.l.b16 %v2826
    %v3991 = vunpack.c.h.b16 %v2826
    %v3992 = vunpack.c.l.b16 %v2827
    %v3993 = vunpack.c.h.b16 %v2827
    %v3994 = vunpack.c.l.b16 %v2828
    %v3995 = vunpack.c.l.b16 %v2829
    %v3996 = vunpack.c.h.b16 %v2829
    %v3997 = vunpack.c.l.b16 %v2830
    %v3998 = vunpack.c.h.b16 %v2830
    %v3999 = vunpack.c.l.b16 %v2831
    %v4000 = vunpack.c.h.b16 %v2831
    %v4001 = vunpack.c.l.b16 %v2832
    %v4002 = vunpack.c.l.b16 %v2833
    %v4003 = vunpack.c.h.b16 %v2833
    %v4004 = vunpack.c.l.b16 %v2834
    %v4005 = vunpack.c.h.b16 %v2834
    %v4006 = vunpack.c.l.b16 %v2835
    %v4007 = vunpack.c.h.b16 %v2835
    %v4008 = vunpack.c.l.b16 %v2836
    %v4009 = vunpack.c.l.b16 %v2837
    %v4010 = vunpack.c.h.b16 %v2837
    %v4011 = vunpack.c.l.b16 %v2838
    %v4012 = vunpack.c.h.b16 %v2838
    %v4013 = vunpack.c.l.b16 %v2839
    %v4014 = vunpack.c.h.b16 %v2839
    %v4015 = vunpack.c.l.b16 %v2840
    %v4016 = vunpack.c.l.b16 %v2841
    %v4017 = vunpack.c.h.b16 %v2841
    %v4018 = vunpack.c.l.b16 %v2842
    %v4019 = vunpack.c.h.b16 %v2842
    %v4020 = vunpack.c.l.b16 %v2843
    %v4021 = vunpack.c.h.b16 %v2843
    %v4022 = vunpack.c.l.b16 %v2844
    %v4023 = vunpack.c.l.b16 %v2845
    %v4024 = vunpack.c.h.b16 %v2845
    %v4025 = vunpack.c.l.b16 %v2846
    %v4026 = vunpack.c.h.b16 %v2846
    %v4027 = vunpack.c.l.b16 %v2847
    %v4028 = vunpack.c.h.b16 %v2847
    %v4029 = vunpack.c.l.b16 %v2848
    %v4030 = vunpack.c.l.b16 %v2849
    %v4031 = vunpack.c.h.b16 %v2849
    %v4032 = vunpack.c.l.b16 %v2850
    %v4033 = vunpack.c.h.b16 %v2850
    %v4034 = vunpack.c.l.b16 %v2851
    %v4035 = vunpack.c.h.b16 %v2851
    %v4036 = vunpack.c.l.b16 %v2852
    %v4037 = vunpack.c.l.b16 %v2853
    %v4038 = vunpack.c.h.b16 %v2853
    %v4039 = vunpack.c.l.b16 %v2854
    %v4040 = vunpack.c.h.b16 %v2854
    %v4041 = vunpack.c.l.b16 %v2855
    %v4042 = vunpack.c.h.b16 %v2855
    %v4043 = vunpack.c.l.b16 %v2856
    %v4044 = vunpack.c.l.b16 %v2857
    %v4045 = vunpack.c.h.b16 %v2857
    %v4046 = vunpack.c.l.b16 %v2858
    %v4047 = vunpack.c.h.b16 %v2858
    %v4048 = vunpack.c.l.b16 %v2859
    %v4049 = vunpack.c.h.b16 %v2859
    %v4050 = vunpack.c.l.b16 %v2860
    %v4051 = vunpack.c.l.b16 %v2861
    %v4052 = vunpack.c.h.b16 %v2861
    %v4053 = vunpack.c.l.b16 %v2862
    %v4054 = vunpack.c.h.b16 %v2862
    %v4055 = vunpack.c.l.b16 %v2863
    %v4056 = vunpack.c.h.b16 %v2863
    %v4057 = vunpack.c.l.b16 %v2864
    %v4058 = vunpack.c.l.b16 %v2865
    %v4059 = vunpack.c.h.b16 %v2865
    %v4060 = vunpack.c.l.b16 %v2866
    %v4061 = vunpack.c.h.b16 %v2866
    %v4062 = vunpack.c.l.b16 %v2867
    %v4063 = vunpack.c.h.b16 %v2867
    %v4064 = vunpack.c.l.b16 %v2868
    %v4065 = vunpack.c.l.b16 %v2869
    %v4066 = vunpack.c.h.b16 %v2869
    %v4067 = vunpack.c.l.b16 %v2870
    %v4068 = vunpack.c.h.b16 %v2870
    %v4069 = vunpack.c.l.b16 %v2871
    %v4070 = vunpack.c.h.b16 %v2871
    %v4071 = vunpack.c.l.b16 %v2872
    %v4072 = vunpack.c.l.b16 %v2873
    %v4073 = vunpack.c.h.b16 %v2873
    %v4074 = vunpack.c.l.b16 %v2874
    %v4075 = vunpack.c.h.b16 %v2874
    %v4076 = vunpack.c.l.b16 %v2875
    %v4077 = vunpack.c.h.b16 %v2875
    %v4078 = vunpack.c.l.b16 %v2876
    %v4079 = vunpack.c.l.b16 %v2877
    %v4080 = vunpack.c.h.b16 %v2877
    %v4081 = vunpack.c.l.b16 %v2878
    %v4082 = vunpack.c.h.b16 %v2878
    %v4083 = vunpack.c.l.b16 %v2879
    %v4084 = vunpack.c.h.b16 %v2879
    %v4085 = vunpack.c.l.b16 %v2880
    %v4086 = vunpack.c.l.b16 %v2881
    %v4087 = vunpack.c.h.b16 %v2881
    %v4088 = vunpack.c.l.b16 %v2882
    %v4089 = vunpack.c.h.b16 %v2882
    %v4090 = vunpack.c.l.b16 %v2883
    %v4091 = vunpack.c.h.b16 %v2883
    %v4092 = vunpack.c.l.b16 %v2884
    %v4093 = vunpack.c.l.b16 %v2885
    %v4094 = vunpack.c.h.b16 %v2885
    %v4095 = vunpack.c.l.b16 %v2886
    %v4096 = vunpack.c.h.b16 %v2886
    %v4097 = vunpack.c.l.b16 %v2887
    %v4098 = vunpack.c.h.b16 %v2887
    %v4099 = vunpack.c.l.b16 %v2888
    %v4100 = vunpack.c.l.b16 %v2889
    %v4101 = vunpack.c.h.b16 %v2889
    %v4102 = vunpack.c.l.b16 %v2890
    %v4103 = vunpack.c.h.b16 %v2890
    %v4104 = vunpack.c.l.b16 %v2891
    %v4105 = vunpack.c.h.b16 %v2891
    %v4106 = vunpack.c.l.b16 %v2892
    %v4107 = vunpack.c.l.b16 %v2893
    %v4108 = vunpack.c.h.b16 %v2893
    %v4109 = vunpack.c.l.b16 %v2894
    %v4110 = vunpack.c.h.b16 %v2894
    %v4111 = vunpack.c.l.b16 %v2895
    %v4112 = vunpack.c.h.b16 %v2895
    %v4113 = vunpack.c.l.b16 %v2896
    %v4114 = vunpack.c.l.b16 %v2897
    %v4115 = vunpack.c.h.b16 %v2897
    %v4116 = vunpack.c.l.b16 %v2898
    %v4117 = vunpack.c.h.b16 %v2898
    %v4118 = vunpack.c.l.b16 %v2899
    %v4119 = vunpack.c.h.b16 %v2899
    %v4120 = vunpack.c.l.b16 %v2900
    %v4121 = vunpack.c.l.b16 %v2901
    %v4122 = vunpack.c.h.b16 %v2901
    %v4123 = vunpack.c.l.b16 %v2902
    %v4124 = vunpack.c.h.b16 %v2902
    %v4125 = vunpack.c.l.b16 %v2903
    %v4126 = vunpack.c.h.b16 %v2903
    %v4127 = vunpack.c.l.b16 %v2904
    %v4128 = vunpack.c.l.b16 %v2905
    %v4129 = vunpack.c.h.b16 %v2905
    %v4130 = vunpack.c.l.b16 %v2906
    %v4131 = vunpack.c.h.b16 %v2906
    %v4132 = vunpack.c.l.b16 %v2907
    %v4133 = vunpack.c.h.b16 %v2907
    %v4134 = vunpack.c.l.b16 %v2908
    %v4135 = vunpack.c.l.b16 %v2909
    %v4136 = vunpack.c.h.b16 %v2909
    %v4137 = vunpack.c.l.b16 %v2910
    %v4138 = vunpack.c.h.b16 %v2910
    %v4139 = vunpack.c.l.b16 %v2911
    %v4140 = vunpack.c.h.b16 %v2911
    %v4141 = vunpack.c.l.b16 %v2912
    %v4142 = vunpack.c.l.b16 %v2913
    %v4143 = vunpack.c.h.b16 %v2913
    %v4144 = vunpack.c.l.b16 %v2914
    %v4145 = vunpack.c.h.b16 %v2914
    %v4146 = vunpack.c.l.b16 %v2915
    %v4147 = vunpack.c.h.b16 %v2915
    %v4148 = vunpack.c.l.b16 %v2916
    %v4149 = vunpack.c.l.b16 %v2917
    %v4150 = vunpack.c.h.b16 %v2917
    %v4151 = vunpack.c.l.b16 %v2918
    %v4152 = vunpack.c.h.b16 %v2918
    %v4153 = vunpack.c.l.b16 %v2919
    %v4154 = vunpack.c.h.b16 %v2919
    %v4155 = vunpack.c.l.b16 %v2920
    %v4156 = vunpack.c.l.b16 %v2921
    %v4157 = vunpack.c.h.b16 %v2921
    %v4158 = vunpack.c.l.b16 %v2922
    %v4159 = vunpack.c.h.b16 %v2922
    %v4160 = vunpack.c.l.b16 %v2923
    %v4161 = vunpack.c.h.b16 %v2923
    %v4162 = vunpack.c.l.b16 %v2924
    %v4163 = vunpack.c.l.b16 %v2925
    %v4164 = vunpack.c.h.b16 %v2925
    %v4165 = vunpack.c.l.b16 %v2926
    %v4166 = vunpack.c.h.b16 %v2926
    %v4167 = vunpack.c.l.b16 %v2927
    %v4168 = vunpack.c.h.b16 %v2927
    %v4169 = vunpack.c.l.b16 %v2928
    %v4170 = vunpack.c.l.b16 %v2929
    %v4171 = vunpack.c.h.b16 %v2929
    %v4172 = vunpack.c.l.b16 %v2930
    %v4173 = vunpack.c.h.b16 %v2930
    %v4174 = vunpack.c.l.b16 %v2931
    %v4175 = vunpack.c.h.b16 %v2931
    %v4176 = vunpack.c.l.b16 %v2932
    %v4177 = vunpack.c.l.b16 %v2933
    %v4178 = vunpack.c.h.b16 %v2933
    %v4179 = vunpack.c.l.b16 %v2934
    %v4180 = vunpack.c.h.b16 %v2934
    %v4181 = vunpack.c.l.b16 %v2935
    %v4182 = vunpack.c.h.b16 %v2935
    %v4183 = vunpack.c.l.b16 %v2936
    %v4184 = vunpack.c.l.b16 %v2937
    %v4185 = vunpack.c.h.b16 %v2937
    %v4186 = vunpack.c.l.b16 %v2938
    %v4187 = vunpack.c.h.b16 %v2938
    %v4188 = vunpack.c.l.b16 %v2939
    %v4189 = vunpack.c.h.b16 %v2939
    %v4190 = vunpack.c.l.b16 %v2940
    %v4191 = vunpack.c.l.b16 %v2941
    %v4192 = vunpack.c.h.b16 %v2941
    %v4193 = vunpack.c.l.b16 %v2942
    %v4194 = vunpack.c.h.b16 %v2942
    %v4195 = vunpack.c.l.b16 %v2943
    %v4196 = vunpack.c.h.b16 %v2943
    %v4197 = vunpack.c.l.b16 %v2944
    %v4198 = vunpack.c.l.b16 %v2945
    %v4199 = vunpack.c.h.b16 %v2945
    %v4200 = vunpack.c.l.b16 %v2946
    %v4201 = vunpack.c.h.b16 %v2946
    %v4202 = vunpack.c.l.b16 %v2947
    %v4203 = vunpack.c.h.b16 %v2947
    %v4204 = vunpack.c.l.b16 %v2948
    %v4205 = vunpack.c.l.b16 %v2949
    %v4206 = vunpack.c.h.b16 %v2949
    %v4207 = vunpack.c.l.b16 %v2950
    %v4208 = vunpack.c.h.b16 %v2950
    %v4209 = vunpack.c.l.b16 %v2951
    %v4210 = vunpack.c.h.b16 %v2951
    %v4211 = vunpack.c.l.b16 %v2952
    %v4212 = vunpack.c.l.b16 %v2953
    %v4213 = vunpack.c.h.b16 %v2953
    %v4214 = vunpack.c.l.b16 %v2954
    %v4215 = vunpack.c.h.b16 %v2954
    %v4216 = vunpack.c.l.b16 %v2955
    %v4217 = vunpack.c.h.b16 %v2955
    %v4218 = vunpack.c.l.b16 %v2956
    %v4219 = vunpack.c.l.b16 %v2957
    %v4220 = vunpack.c.h.b16 %v2957
    %v4221 = vunpack.c.l.b16 %v2958
    %v4222 = vunpack.c.h.b16 %v2958
    %v4223 = vunpack.c.l.b16 %v2959
    %v4224 = vunpack.c.h.b16 %v2959
    %v4225 = vunpack.c.l.b16 %v2960
    %v4226 = vunpack.c.l.b16 %v2961
    %v4227 = vunpack.c.h.b16 %v2961
    %v4228 = vunpack.c.l.b16 %v2962
    %v4229 = vunpack.c.h.b16 %v2962
    %v4230 = vunpack.c.l.b16 %v2963
    %v4231 = vunpack.c.h.b16 %v2963
    %v4232 = vunpack.c.l.b16 %v2964
    %v4233 = vunpack.c.l.b16 %v2965
    %v4234 = vunpack.c.h.b16 %v2965
    %v4235 = vunpack.c.l.b16 %v2966
    %v4236 = vunpack.c.h.b16 %v2966
    %v4237 = vunpack.c.l.b16 %v2967
    %v4238 = vunpack.c.h.b16 %v2967
    %v4239 = vunpack.c.l.b16 %v2968
    %v4240 = vunpack.c.l.b16 %v2969
    %v4241 = vunpack.c.h.b16 %v2969
    %v4242 = vunpack.c.l.b16 %v2970
    %v4243 = vunpack.c.h.b16 %v2970
    %v4244 = vunpack.c.l.b16 %v2971
    %v4245 = vunpack.c.h.b16 %v2971
    %v4246 = vunpack.c.l.b16 %v2972
    %v4247 = vunpack.c.l.b16 %v2973
    %v4248 = vunpack.c.h.b16 %v2973
    %v4249 = vunpack.c.l.b16 %v2974
    %v4250 = vunpack.c.h.b16 %v2974
    %v4251 = vunpack.c.l.b16 %v2975
    %v4252 = vunpack.c.h.b16 %v2975
    %v4253 = vunpack.c.l.b16 %v2976
    %v4254 = vunpack.c.l.b16 %v2977
    %v4255 = vunpack.c.h.b16 %v2977
    %v4256 = vunpack.c.l.b16 %v2978
    %v4257 = vunpack.c.h.b16 %v2978
    %v4258 = vunpack.c.l.b16 %v2979
    %v4259 = vunpack.c.h.b16 %v2979
    %v4260 = vunpack.c.l.b16 %v2980
    %v4261 = vunpack.c.l.b16 %v2981
    %v4262 = vunpack.c.h.b16 %v2981
    %v4263 = vunpack.c.l.b16 %v2982
    %v4264 = vunpack.c.h.b16 %v2982
    %v4265 = vunpack.c.l.b16 %v2983
    %v4266 = vunpack.c.h.b16 %v2983
    %v4267 = vunpack.c.l.b16 %v2984
    %v4268 = vunpack.c.l.b16 %v2985
    %v4269 = vunpack.c.h.b16 %v2985
    %v4270 = vunpack.c.l.b16 %v2986
    %v4271 = vunpack.c.h.b16 %v2986
    %v4272 = vunpack.c.l.b16 %v2987
    %v4273 = vunpack.c.h.b16 %v2987
    %v4274 = vunpack.c.l.b16 %v2988
    %v4275 = vunpack.c.l.b16 %v2989
    %v4276 = vunpack.c.h.b16 %v2989
    %v4277 = vunpack.c.l.b16 %v2990
    %v4278 = vunpack.c.h.b16 %v2990
    %v4279 = vunpack.c.l.b16 %v2991
    %v4280 = vunpack.c.h.b16 %v2991
    %v4281 = vunpack.c.l.b16 %v2992
    %v4282 = vunpack.c.l.b16 %v2993
    %v4283 = vunpack.c.h.b16 %v2993
    %v4284 = vunpack.c.l.b16 %v2994
    %v4285 = vunpack.c.h.b16 %v2994
    %v4286 = vunpack.c.l.b16 %v2995
    %v4287 = vunpack.c.h.b16 %v2995
    %v4288 = vunpack.c.l.b16 %v2996
    %v4289 = vunpack.c.l.b16 %v2997
    %v4290 = vunpack.c.h.b16 %v2997
    %v4291 = vunpack.c.l.b16 %v2998
    %v4292 = vunpack.c.h.b16 %v2998
    %v4293 = vunpack.c.l.b16 %v2999
    %v4294 = vunpack.c.h.b16 %v2999
    %v4295 = vunpack.c.l.b16 %v3000
    %v4296 = vunpack.c.l.b16 %v3001
    %v4297 = vunpack.c.h.b16 %v3001
    %v4298 = vunpack.c.l.b16 %v3002
    %v4299 = vunpack.c.h.b16 %v3002
    %v4300 = vunpack.c.l.b16 %v3003
    %v4301 = vunpack.c.h.b16 %v3003
    %v4302 = vunpack.c.l.b16 %v3004
    %v4303 = vunpack.c.l.b16 %v3005
    %v4304 = vunpack.c.h.b16 %v3005
    %v4305 = vunpack.c.l.b16 %v3006
    %v4306 = vunpack.c.h.b16 %v3006
    %v4307 = vunpack.c.l.b16 %v3007
    %v4308 = vunpack.c.h.b16 %v3007
    %v4309 = vunpack.c.l.b16 %v3008
    %v4310 = vunpack.c.l.b16 %v3009
    %v4311 = vunpack.c.h.b16 %v3009
    %v4312 = vunpack.c.l.b16 %v3010
    %v4313 = vunpack.c.h.b16 %v3010
    %v4314 = vunpack.c.l.b16 %v3011
    %v4315 = vunpack.c.h.b16 %v3011
    %v4316 = vunpack.c.l.b16 %v3012
    %v4317 = vunpack.c.l.b16 %v3013
    %v4318 = vunpack.c.h.b16 %v3013
    %v4319 = vunpack.c.l.b16 %v3014
    %v4320 = vunpack.c.h.b16 %v3014
    %v4321 = vunpack.c.l.b16 %v3015
    %v4322 = vunpack.c.h.b16 %v3015
    %v4323 = vunpack.c.l.b16 %v3016
    %v4324 = vunpack.c.l.b16 %v3017
    %v4325 = vunpack.c.h.b16 %v3017
    %v4326 = vunpack.c.l.b16 %v3018
    %v4327 = vunpack.c.h.b16 %v3018
    %v4328 = vunpack.c.l.b16 %v3019
    %v4329 = vunpack.c.h.b16 %v3019
    %v4330 = vunpack.c.l.b16 %v3020
    %v4331 = vunpack.c.l.b16 %v3021
    %v4332 = vunpack.c.h.b16 %v3021
    %v4333 = vunpack.c.l.b16 %v3022
    %v4334 = vunpack.c.h.b16 %v3022
    %v4335 = vunpack.c.l.b16 %v3023
    %v4336 = vunpack.c.h.b16 %v3023
    %v4337 = vunpack.c.l.b16 %v3024
    %v4338 = vunpack.c.l.b16 %v3025
    %v4339 = vunpack.c.h.b16 %v3025
    %v4340 = vunpack.c.l.b16 %v3026
    %v4341 = vunpack.c.h.b16 %v3026
    %v4342 = vunpack.c.l.b16 %v3027
    %v4343 = vunpack.c.h.b16 %v3027
    %v4344 = vunpack.c.l.b16 %v3028
    %v4345 = vunpack.c.l.b16 %v3029
    %v4346 = vunpack.c.h.b16 %v3029
    %v4347 = vunpack.c.l.b16 %v3030
    %v4348 = vunpack.c.h.b16 %v3030
    %v4349 = vunpack.c.l.b16 %v3031
    %v4350 = vunpack.c.h.b16 %v3031
    %v4351 = vunpack.c.l.b16 %v3032
    %v4352 = vunpack.c.l.b16 %v3033
    %v4353 = vunpack.c.h.b16 %v3033
    %v4354 = vunpack.c.l.b16 %v3034
    %v4355 = vunpack.c.h.b16 %v3034
    %v4356 = vunpack.c.l.b16 %v3035
    %v4357 = vunpack.c.h.b16 %v3035
    %v4358 = vunpack.c.l.b16 %v3036
    %v4359 = vunpack.c.l.b16 %v3037
    %v4360 = vunpack.c.h.b16 %v3037
    %v4361 = vunpack.c.l.b16 %v3038
    %v4362 = vunpack.c.h.b16 %v3038
    %v4363 = vunpack.c.l.b16 %v3039
    %v4364 = vunpack.c.h.b16 %v3039
    %v4365 = vunpack.c.l.b16 %v3040
    %v4366 = vunpack.c.l.b16 %v3041
    %v4367 = vunpack.c.h.b16 %v3041
    %v4368 = vunpack.c.l.b16 %v3042
    %v4369 = vunpack.c.h.b16 %v3042
    %v4370 = vunpack.c.l.b16 %v3043
    %v4371 = vunpack.c.h.b16 %v3043
    %v4372 = vunpack.c.l.b16 %v3044
    %v4373 = vunpack.c.l.b16 %v3045
    %v4374 = vunpack.c.h.b16 %v3045
    %v4375 = vunpack.c.l.b16 %v3046
    %v4376 = vunpack.c.h.b16 %v3046
    %v4377 = vunpack.c.l.b16 %v3047
    %v4378 = vunpack.c.h.b16 %v3047
    %v4379 = vunpack.c.l.b16 %v3048
    %v4380 = vunpack.c.l.b16 %v3049
    %v4381 = vunpack.c.h.b16 %v3049
    %v4382 = vunpack.c.l.b16 %v3050
    %v4383 = vunpack.c.h.b16 %v3050
    %v4384 = vunpack.c.l.b16 %v3051
    %v4385 = vunpack.c.h.b16 %v3051
    %v4386 = vunpack.c.l.b16 %v3052
    %v4387 = vunpack.c.l.b16 %v3053
    %v4388 = vunpack.c.h.b16 %v3053
    %v4389 = vunpack.c.l.b16 %v3054
    %v4390 = vunpack.c.h.b16 %v3054
    %v4391 = vunpack.c.l.b16 %v3055
    %v4392 = vunpack.c.h.b16 %v3055
    %v4393 = vunpack.c.l.b16 %v3056
    %v4394 = vunpack.c.l.b16 %v3057
    %v4395 = vunpack.c.h.b16 %v3057
    %v4396 = vunpack.c.l.b16 %v3058
    %v4397 = vunpack.c.h.b16 %v3058
    %v4398 = vunpack.c.l.b16 %v3059
    %v4399 = vunpack.c.h.b16 %v3059
    %v4400 = vunpack.c.l.b16 %v3060
    %v4401 = vunpack.c.l.b16 %v3061
    %v4402 = vunpack.c.h.b16 %v3061
    %v4403 = vunpack.c.l.b16 %v3062
    %v4404 = vunpack.c.h.b16 %v3062
    %v4405 = vunpack.c.l.b16 %v3063
    %v4406 = vunpack.c.h.b16 %v3063
    %v4407 = vunpack.c.l.b16 %v3064
    %v4408 = vunpack.c.l.b16 %v3065
    %v4409 = vunpack.c.h.b16 %v3065
    %v4410 = vunpack.c.l.b16 %v3066
    %v4411 = vunpack.c.h.b16 %v3066
    %v4412 = vunpack.c.l.b16 %v3067
    %v4413 = vunpack.c.h.b16 %v3067
    %v4414 = vunpack.c.l.b16 %v3068
    %v4415 = vunpack.c.l.b16 %v3069
    %v4416 = vunpack.c.h.b16 %v3069
    %v4417 = vunpack.c.l.b16 %v3070
    %v4418 = vunpack.c.h.b16 %v3070
    %v4419 = vunpack.c.l.b16 %v3071
    %v4420 = vunpack.c.h.b16 %v3071
    %v4421 = vunpack.c.l.b16 %v3072
    %v4422 = vunpack.c.l.b16 %v3073
    %v4423 = vunpack.c.h.b16 %v3073
    %v4424 = vunpack.c.l.b16 %v3074
    %v4425 = vunpack.c.h.b16 %v3074
    %v4426 = vunpack.c.l.b16 %v3075
    %v4427 = vunpack.c.h.b16 %v3075
    %v4428 = vunpack.c.l.b16 %v3076
    %v4429 = vunpack.c.l.b16 %v3077
    %v4430 = vunpack.c.h.b16 %v3077
    %v4431 = vunpack.c.l.b16 %v3078
    %v4432 = vunpack.c.h.b16 %v3078
    %v4433 = vunpack.c.l.b16 %v3079
    %v4434 = vunpack.c.h.b16 %v3079
    %v4435 = vunpack.c.l.b16 %v3080
    %v4436 = vunpack.c.l.b16 %v3081
    %v4437 = vunpack.c.h.b16 %v3081
    %v4438 = vunpack.c.l.b16 %v3082
    %v4439 = vunpack.c.h.b16 %v3082
    %v4440 = vunpack.c.l.b16 %v3083
    %v4441 = vunpack.c.h.b16 %v3083
    %v4442 = vunpack.c.l.b16 %v3084
    %v4443 = vunpack.c.l.b16 %v3085
    %v4444 = vunpack.c.h.b16 %v3085
    %v4445 = vunpack.c.l.b16 %v3086
    %v4446 = vunpack.c.h.b16 %v3086
    %v4447 = vunpack.c.l.b16 %v3087
    %v4448 = vunpack.c.h.b16 %v3087
    %v4449 = vunpack.c.l.b16 %v3088
    %v4450 = vunpack.c.l.b16 %v3089
    %v4451 = vunpack.c.h.b16 %v3089
    %v4452 = vunpack.c.l.b16 %v3090
    %v4453 = vunpack.c.h.b16 %v3090
    %v4454 = vunpack.c.l.b16 %v3091
    %v4455 = vunpack.c.h.b16 %v3091
    %v4456 = vunpack.c.l.b16 %v3092
    %v4457 = vunpack.c.l.b16 %v3093
    %v4458 = vunpack.c.h.b16 %v3093
    %v4459 = vunpack.c.l.b16 %v3094
    %v4460 = vunpack.c.h.b16 %v3094
    %v4461 = vunpack.c.l.b16 %v3095
    %v4462 = vunpack.c.h.b16 %v3095
    %v4463 = vunpack.c.l.b16 %v3096
    %v4464 = vunpack.c.l.b16 %v3097
    %v4465 = vunpack.c.h.b16 %v3097
    %v4466 = vunpack.c.l.b16 %v3098
    %v4467 = vunpack.c.h.b16 %v3098
    %v4468 = vunpack.c.l.b16 %v3099
    %v4469 = vunpack.c.h.b16 %v3099
    %v4470 = vunpack.c.l.b16 %v3100
    %v4471 = vunpack.c.l.b16 %v3101
    %v4472 = vunpack.c.h.b16 %v3101
    %v4473 = vunpack.c.l.b16 %v3102
    %v4474 = vunpack.c.h.b16 %v3102
    %v4475 = vunpack.c.l.b16 %v3103
    %v4476 = vunpack.c.h.b16 %v3103
    %v4477 = vunpack.c.l.b16 %v3104
    %v4478 = vunpack.c.l.b16 %v3105
    %v4479 = vunpack.c.h.b16 %v3105
    %v4480 = vunpack.c.l.b16 %v3106
    %v4481 = vunpack.c.h.b16 %v3106
    %v4482 = vunpack.c.l.b16 %v3107
    %v4483 = vunpack.c.h.b16 %v3107
    %v4484 = vunpack.c.l.b16 %v3108
    %v4485 = vunpack.c.l.b16 %v3109
    %v4486 = vunpack.c.h.b16 %v3109
    %v4487 = vunpack.c.l.b16 %v3110
    %v4488 = vunpack.c.h.b16 %v3110
    %v4489 = vunpack.c.l.b16 %v3111
    %v4490 = vunpack.c.h.b16 %v3111
    %v4491 = vunpack.c.l.b16 %v3112
    %v4492 = vunpack.c.l.b16 %v3113
    %v4493 = vunpack.c.h.b16 %v3113
    %v4494 = vunpack.c.l.b16 %v3114
    %v4495 = vunpack.c.h.b16 %v3114
    %v4496 = vunpack.c.l.b16 %v3115
    %v4497 = vunpack.c.h.b16 %v3115
    %v4498 = vunpack.c.l.b16 %v3116
    %v4499 = vunpack.c.l.b16 %v3117
    %v4500 = vunpack.c.h.b16 %v3117
    %v4501 = vunpack.c.l.b16 %v3118
    %v4502 = vunpack.c.h.b16 %v3118
    %v4503 = vunpack.c.l.b16 %v3119
    %v4504 = vunpack.c.h.b16 %v3119
    %v4505 = vunpack.c.l.b16 %v3120
    %v4506 = vunpack.c.l.b16 %v3121
    %v4507 = vunpack.c.h.b16 %v3121
    %v4508 = vunpack.c.l.b16 %v3122
    %v4509 = vunpack.c.h.b16 %v3122
    %v4510 = vunpack.c.l.b16 %v3123
    %v4511 = vunpack.c.h.b16 %v3123
    %v4512 = vunpack.c.l.b16 %v3124
    %v4513 = vunpack.c.l.b16 %v3125
    %v4514 = vunpack.c.h.b16 %v3125
    %v4515 = vunpack.c.l.b16 %v3126
    %v4516 = vunpack.c.h.b16 %v3126
    %v4517 = vunpack.c.l.b16 %v3127
    %v4518 = vunpack.c.h.b16 %v3127
    %v4519 = vunpack.c.l.b16 %v3128
    %v4520 = vunpack.c.l.b16 %v3129
    %v4521 = vunpack.c.h.b16 %v3129
    %v4522 = vunpack.c.l.b16 %v3130
    %v4523 = vunpack.c.h.b16 %v3130
    %v4524 = vunpack.c.l.b16 %v3131
    %v4525 = vunpack.c.h.b16 %v3131
    %v4526 = vunpack.c.l.b16 %v3132
    %v4527 = vunpack.c.l.b16 %v3133
    %v4528 = vunpack.c.h.b16 %v3133
    %v4529 = vunpack.c.l.b16 %v3134
    %v4530 = vunpack.c.h.b16 %v3134
    %v4531 = vunpack.c.l.b16 %v3135
    %v4532 = vunpack.c.h.b16 %v3135
    %v4533 = vunpack.c.l.b16 %v3136
    %v4534 = vunpack.c.l.b16 %v3137
    %v4535 = vunpack.c.h.b16 %v3137
    %v4536 = vunpack.c.l.b16 %v3138
    %v4537 = vunpack.c.h.b16 %v3138
    %v4538 = vunpack.c.l.b16 %v3139
    %v4539 = vunpack.c.h.b16 %v3139
    %v4540 = vunpack.c.l.b16 %v3140
    %v4541 = vunpack.c.l.b16 %v3141
    %v4542 = vunpack.c.h.b16 %v3141
    %v4543 = vunpack.c.l.b16 %v3142
    %v4544 = vunpack.c.h.b16 %v3142
    %v4545 = vunpack.c.l.b16 %v3143
    %v4546 = vunpack.c.h.b16 %v3143
    %v4547 = vunpack.c.l.b16 %v3144
    %v4548 = vunpack.c.l.b16 %v3145
    %v4549 = vunpack.c.h.b16 %v3145
    %v4550 = vunpack.c.l.b16 %v3146
    %v4551 = vunpack.c.h.b16 %v3146
    %v4552 = vunpack.c.l.b16 %v3147
    %v4553 = vunpack.c.h.b16 %v3147
    %v4554 = vunpack.c.l.b16 %v3148
    %v4555 = vunpack.c.l.b16 %v3149
    %v4556 = vunpack.c.h.b16 %v3149
    %v4557 = vunpack.c.l.b16 %v3150
    %v4558 = vunpack.c.h.b16 %v3150
    %v4559 = vunpack.c.l.b16 %v3151
    %v4560 = vunpack.c.h.b16 %v3151
    %v4561 = vunpack.c.l.b16 %v3152
    %v4562 = vunpack.c.l.b16 %v3153
    %v4563 = vunpack.c.h.b16 %v3153
    %v4564 = vunpack.c.l.b16 %v3154
    %v4565 = vunpack.c.h.b16 %v3154
    %v4566 = vunpack.c.l.b16 %v3155
    %v4567 = vunpack.c.h.b16 %v3155
    %v4568 = vunpack.c.l.b16 %v3156
    %v4569 = vunpack.c.l.b16 %v3157
    %v4570 = vunpack.c.h.b16 %v3157
    %v4571 = vunpack.c.l.b16 %v3158
    %v4572 = vunpack.c.h.b16 %v3158
    %v4573 = vunpack.c.l.b16 %v3159
    %v4574 = vunpack.c.h.b16 %v3159
    %v4575 = vunpack.c.l.b16 %v3160
    %v4576 = vunpack.c.l.b16 %v3161
    %v4577 = vunpack.c.h.b16 %v3161
    %v4578 = vunpack.c.l.b16 %v3162
    %v4579 = vunpack.c.h.b16 %v3162
    %v4580 = vunpack.c.l.b16 %v3163
    %v4581 = vunpack.c.h.b16 %v3163
    %v4582 = vunpack.c.l.b16 %v3164
    %v4583 = vunpack.c.l.b16 %v3165
    %v4584 = vunpack.c.h.b16 %v3165
    %v4585 = vunpack.c.l.b16 %v3166
    %v4586 = vunpack.c.h.b16 %v3166
    %v4587 = vunpack.c.l.b16 %v3167
    %v4588 = vunpack.c.h.b16 %v3167
    %v4589 = vunpack.c.l.b16 %v3168
    %v4590 = vunpack.c.l.b16 %v3169
    %v4591 = vunpack.c.h.b16 %v3169
    %v4592 = vunpack.c.l.b16 %v3170
    %v4593 = vunpack.c.h.b16 %v3170
    %v4594 = vunpack.c.l.b16 %v3171
    %v4595 = vunpack.c.h.b16 %v3171
    %v4596 = vunpack.c.l.b16 %v3172
    %v4597 = vunpack.c.l.b16 %v3173
    %v4598 = vunpack.c.h.b16 %v3173
    %v4599 = vunpack.c.l.b16 %v3174
    %v4600 = vunpack.c.h.b16 %v3174
    %v4601 = vunpack.c.l.b16 %v3175
    %v4602 = vunpack.c.h.b16 %v3175
    %v4603 = vunpack.c.l.b16 %v3176
    %v4604 = vunpack.c.l.b16 %v3177
    %v4605 = vunpack.c.h.b16 %v3177
    %v4606 = vunpack.c.l.b16 %v3178
    %v4607 = vunpack.c.h.b16 %v3178
    %v4608 = vunpack.c.l.b16 %v3179
    %v4609 = vunpack.c.h.b16 %v3179
    %v4610 = vunpack.c.l.b16 %v3180
    %v4611 = vunpack.c.l.b16 %v3181
    %v4612 = vunpack.c.h.b16 %v3181
    %v4613 = vunpack.c.l.b16 %v3182
    %v4614 = vunpack.c.h.b16 %v3182
    %v4615 = vunpack.c.l.b16 %v3183
    %v4616 = vunpack.c.h.b16 %v3183
    %v4617 = vunpack.c.l.b16 %v3184
    %v4618 = vunpack.c.l.b16 %v3185
    %v4619 = vunpack.c.h.b16 %v3185
    %v4620 = vunpack.c.l.b16 %v3186
    %v4621 = vunpack.c.h.b16 %v3186
    %v4622 = vunpack.c.l.b16 %v3187
    %v4623 = vunpack.c.h.b16 %v3187
    %v4624 = vunpack.c.l.b16 %v3188
    %v4625 = vunpack.c.l.b16 %v3189
    %v4626 = vunpack.c.h.b16 %v3189
    %v4627 = vunpack.c.l.b16 %v3190
    %v4628 = vunpack.c.h.b16 %v3190
    %v4629 = vunpack.c.l.b16 %v3191
    %v4630 = vunpack.c.h.b16 %v3191
    %v4631 = vunpack.c.l.b16 %v3192
    %v4632 = vunpack.c.l.b16 %v3193
    %v4633 = vunpack.c.h.b16 %v3193
    %v4634 = vunpack.c.l.b16 %v3194
    %v4635 = vunpack.c.h.b16 %v3194
    %v4636 = vunpack.c.l.b16 %v3195
    %v4637 = vunpack.c.h.b16 %v3195
    %v4638 = vunpack.c.l.b16 %v3196
    %v4639 = vunpack.c.l.b16 %v3197
    %v4640 = vunpack.c.h.b16 %v3197
    %v4641 = vunpack.c.l.b16 %v3198
    %v4642 = vunpack.c.h.b16 %v3198
    %v4643 = vunpack.c.l.b16 %v3199
    %v4644 = vunpack.c.h.b16 %v3199
    %v4645 = vunpack.c.l.b16 %v3200
    %v4646 = vpack.c.b16 %v3757, %v3750
    %v4647 = vpack.c.b16 %v3758, %v3751
    %v4648 = vpack.c.b16 %v3759, %v3752
    %v4649 = vpack.c.b16 %v3760, %v3753
    %v4650 = vpack.c.b16 %v3761, %v3754
    %v4651 = vpack.c.b16 %v3762, %v3755
    %v4652 = vpack.c.b16 %v3763, %v3756
    %v4653 = vpack.c.b16 %v3771, %v3764
    %v4654 = vpack.c.b16 %v3772, %v3765
    %v4655 = vpack.c.b16 %v3773, %v3766
    %v4656 = vpack.c.b16 %v3774, %v3767
    %v4657 = vpack.c.b16 %v3775, %v3768
    %v4658 = vpack.c.b16 %v3776, %v3769
    %v4659 = vpack.c.b16 %v3777, %v3770
    %v4660 = vpack.c.b16 %v3785, %v3778
    %v4661 = vpack.c.b16 %v3786, %v3779
    %v4662 = vpack.c.b16 %v3787, %v3780
    %v4663 = vpack.c.b16 %v3788, %v3781
    %v4664 = vpack.c.b16 %v3789, %v3782
    %v4665 = vpack.c.b16 %v3790, %v3783
    %v4666 = vpack.c.b16 %v3791, %v3784
    %v4667 = vpack.c.b16 %v3799, %v3792
    %v4668 = vpack.c.b16 %v3800, %v3793
    %v4669 = vpack.c.b16 %v3801, %v3794
    %v4670 = vpack.c.b16 %v3802, %v3795
    %v4671 = vpack.c.b16 %v3803, %v3796
    %v4672 = vpack.c.b16 %v3804, %v3797
    %v4673 = vpack.c.b16 %v3805, %v3798
    %v4674 = vpack.c.b16 %v3813, %v3806
    %v4675 = vpack.c.b16 %v3814, %v3807
    %v4676 = vpack.c.b16 %v3815, %v3808
    %v4677 = vpack.c.b16 %v3816, %v3809
    %v4678 = vpack.c.b16 %v3817, %v3810
    %v4679 = vpack.c.b16 %v3818, %v3811
    %v4680 = vpack.c.b16 %v3819, %v3812
    %v4681 = vpack.c.b16 %v3827, %v3820
    %v4682 = vpack.c.b16 %v3828, %v3821
    %v4683 = vpack.c.b16 %v3829, %v3822
    %v4684 = vpack.c.b16 %v3830, %v3823
    %v4685 = vpack.c.b16 %v3831, %v3824
    %v4686 = vpack.c.b16 %v3832, %v3825
    %v4687 = vpack.c.b16 %v3833, %v3826
    %v4688 = vpack.c.b16 %v3841, %v3834
    %v4689 = vpack.c.b16 %v3842, %v3835
    %v4690 = vpack.c.b16 %v3843, %v3836
    %v4691 = vpack.c.b16 %v3844, %v3837
    %v4692 = vpack.c.b16 %v3845, %v3838
    %v4693 = vpack.c.b16 %v3846, %v3839
    %v4694 = vpack.c.b16 %v3847, %v3840
    %v4695 = vpack.c.b16 %v3855, %v3848
    %v4696 = vpack.c.b16 %v3856, %v3849
    %v4697 = vpack.c.b16 %v3857, %v3850
    %v4698 = vpack.c.b16 %v3858, %v3851
    %v4699 = vpack.c.b16 %v3859, %v3852
    %v4700 = vpack.c.b16 %v3860, %v3853
    %v4701 = vpack.c.b16 %v3861, %v3854
    %v4702 = vpack.c.b16 %v3869, %v3862
    %v4703 = vpack.c.b16 %v3870, %v3863
    %v4704 = vpack.c.b16 %v3871, %v3864
    %v4705 = vpack.c.b16 %v3872, %v3865
    %v4706 = vpack.c.b16 %v3873, %v3866
    %v4707 = vpack.c.b16 %v3874, %v3867
    %v4708 = vpack.c.b16 %v3875, %v3868
    %v4709 = vpack.c.b16 %v3883, %v3876
    %v4710 = vpack.c.b16 %v3884, %v3877
    %v4711 = vpack.c.b16 %v3885, %v3878
    %v4712 = vpack.c.b16 %v3886, %v3879
    %v4713 = vpack.c.b16 %v3887, %v3880
    %v4714 = vpack.c.b16 %v3888, %v3881
    %v4715 = vpack.c.b16 %v3889, %v3882
    %v4716 = vpack.c.b16 %v3897, %v3890
    %v4717 = vpack.c.b16 %v3898, %v3891
    %v4718 = vpack.c.b16 %v3899, %v3892
    %v4719 = vpack.c.b16 %v3900, %v3893
    %v4720 = vpack.c.b16 %v3901, %v3894
    %v4721 = vpack.c.b16 %v3902, %v3895
    %v4722 = vpack.c.b16 %v3903, %v3896
    %v4723 = vpack.c.b16 %v3911, %v3904
    %v4724 = vpack.c.b16 %v3912, %v3905
    %v4725 = vpack.c.b16 %v3913, %v3906
    %v4726 = vpack.c.b16 %v3914, %v3907
    %v4727 = vpack.c.b16 %v3915, %v3908
    %v4728 = vpack.c.b16 %v3916, %v3909
    %v4729 = vpack.c.b16 %v3917, %v3910
    %v4730 = vpack.c.b16 %v3925, %v3918
    %v4731 = vpack.c.b16 %v3926, %v3919
    %v4732 = vpack.c.b16 %v3927, %v3920
    %v4733 = vpack.c.b16 %v3928, %v3921
    %v4734 = vpack.c.b16 %v3929, %v3922
    %v4735 = vpack.c.b16 %v3930, %v3923
    %v4736 = vpack.c.b16 %v3931, %v3924
    %v4737 = vpack.c.b16 %v3939, %v3932
    %v4738 = vpack.c.b16 %v3940, %v3933
    %v4739 = vpack.c.b16 %v3941, %v3934
    %v4740 = vpack.c.b16 %v3942, %v3935
    %v4741 = vpack.c.b16 %v3943, %v3936
    %v4742 = vpack.c.b16 %v3944, %v3937
    %v4743 = vpack.c.b16 %v3945, %v3938
    %v4744 = vpack.c.b16 %v3953, %v3946
    %v4745 = vpack.c.b16 %v3954, %v3947
    %v4746 = vpack.c.b16 %v3955, %v3948
    %v4747 = vpack.c.b16 %v3956, %v3949
    %v4748 = vpack.c.b16 %v3957, %v3950
    %v4749 = vpack.c.b16 %v3958, %v3951
    %v4750 = vpack.c.b16 %v3959, %v3952
    %v4751 = vpack.c.b16 %v3967, %v3960
    %v4752 = vpack.c.b16 %v3968, %v3961
    %v4753 = vpack.c.b16 %v3969, %v3962
    %v4754 = vpack.c.b16 %v3970, %v3963
    %v4755 = vpack.c.b16 %v3971, %v3964
    %v4756 = vpack.c.b16 %v3972, %v3965
    %v4757 = vpack.c.b16 %v3973, %v3966
    %v4758 = vpack.c.b16 %v3981, %v3974
    %v4759 = vpack.c.b16 %v3982, %v3975
    %v4760 = vpack.c.b16 %v3983, %v3976
    %v4761 = vpack.c.b16 %v3984, %v3977
    %v4762 = vpack.c.b16 %v3985, %v3978
    %v4763 = vpack.c.b16 %v3986, %v3979
    %v4764 = vpack.c.b16 %v3987, %v3980
    %v4765 = vpack.c.b16 %v3995, %v3988
    %v4766 = vpack.c.b16 %v3996, %v3989
    %v4767 = vpack.c.b16 %v3997, %v3990
    %v4768 = vpack.c.b16 %v3998, %v3991
    %v4769 = vpack.c.b16 %v3999, %v3992
    %v4770 = vpack.c.b16 %v4000, %v3993
    %v4771 = vpack.c.b16 %v4001, %v3994
    %v4772 = vpack.c.b16 %v4009, %v4002
    %v4773 = vpack.c.b16 %v4010, %v4003
    %v4774 = vpack.c.b16 %v4011, %v4004
    %v4775 = vpack.c.b16 %v4012, %v4005
    %v4776 = vpack.c.b16 %v4013, %v4006
    %v4777 = vpack.c.b16 %v4014, %v4007
    %v4778 = vpack.c.b16 %v4015, %v4008
    %v4779 = vpack.c.b16 %v4023, %v4016
    %v4780 = vpack.c.b16 %v4024, %v4017
    %v4781 = vpack.c.b16 %v4025, %v4018
    %v4782 = vpack.c.b16 %v4026, %v4019
    %v4783 = vpack.c.b16 %v4027, %v4020
    %v4784 = vpack.c.b16 %v4028, %v4021
    %v4785 = vpack.c.b16 %v4029, %v4022
    %v4786 = vpack.c.b16 %v4037, %v4030
    %v4787 = vpack.c.b16 %v4038, %v4031
    %v4788 = vpack.c.b16 %v4039, %v4032
    %v4789 = vpack.c.b16 %v4040, %v4033
    %v4790 = vpack.c.b16 %v4041, %v4034
    %v4791 = vpack.c.b16 %v4042, %v4035
    %v4792 = vpack.c.b16 %v4043, %v4036
    %v4793 = vpack.c.b16 %v4051, %v4044
    %v4794 = vpack.c.b16 %v4052, %v4045
    %v4795 = vpack.c.b16 %v4053, %v4046
    %v4796 = vpack.c.b16 %v4054, %v4047
    %v4797 = vpack.c.b16 %v4055, %v4048
    %v4798 = vpack.c.b16 %v4056, %v4049
    %v4799 = vpack.c.b16 %v4057, %v4050
    %v4800 = vpack.c.b16 %v4065, %v4058
    %v4801 = vpack.c.b16 %v4066, %v4059
    %v4802 = vpack.c.b16 %v4067, %v4060
    %v4803 = vpack.c.b16 %v4068, %v4061
    %v4804 = vpack.c.b16 %v4069, %v4062
    %v4805 = vpack.c.b16 %v4070, %v4063
    %v4806 = vpack.c.b16 %v4071, %v4064
    %v4807 = vpack.c.b16 %v4079, %v4072
    %v4808 = vpack.c.b16 %v4080, %v4073
    %v4809 = vpack.c.b16 %v4081, %v4074
    %v4810 = vpack.c.b16 %v4082, %v4075
    %v4811 = vpack.c.b16 %v4083, %v4076
    %v4812 = vpack.c.b16 %v4084, %v4077
    %v4813 = vpack.c.b16 %v4085, %v4078
    %v4814 = vpack.c.b16 %v4093, %v4086
    %v4815 = vpack.c.b16 %v4094, %v4087
    %v4816 = vpack.c.b16 %v4095, %v4088
    %v4817 = vpack.c.b16 %v4096, %v4089
    %v4818 = vpack.c.b16 %v4097, %v4090
    %v4819 = vpack.c.b16 %v4098, %v4091
    %v4820 = vpack.c.b16 %v4099, %v4092
    %v4821 = vpack.c.b16 %v4107, %v4100
    %v4822 = vpack.c.b16 %v4108, %v4101
    %v4823 = vpack.c.b16 %v4109, %v4102
    %v4824 = vpack.c.b16 %v4110, %v4103
    %v4825 = vpack.c.b16 %v4111, %v4104
    %v4826 = vpack.c.b16 %v4112, %v4105
    %v4827 = vpack.c.b16 %v4113, %v4106
    %v4828 = vpack.c.b16 %v4121, %v4114
    %v4829 = vpack.c.b16 %v4122, %v4115
    %v4830 = vpack.c.b16 %v4123, %v4116
    %v4831 = vpack.c.b16 %v4124, %v4117
    %v4832 = vpack.c.b16 %v4125, %v4118
    %v4833 = vpack.c.b16 %v4126, %v4119
    %v4834 = vpack.c.b16 %v4127, %v4120
    %v4835 = vpack.c.b16 %v4135, %v4128
    %v4836 = vpack.c.b16 %v4136, %v4129
    %v4837 = vpack.c.b16 %v4137, %v4130
    %v4838 = vpack.c.b16 %v4138, %v4131
    %v4839 = vpack.c.b16 %v4139, %v4132
    %v4840 = vpack.c.b16 %v4140, %v4133
    %v4841 = vpack.c.b16 %v4141, %v4134
    %v4842 = vpack.c.b16 %v4149, %v4142
    %v4843 = vpack.c.b16 %v4150, %v4143
    %v4844 = vpack.c.b16 %v4151, %v4144
    %v4845 = vpack.c.b16 %v4152, %v4145
    %v4846 = vpack.c.b16 %v4153, %v4146
    %v4847 = vpack.c.b16 %v4154, %v4147
    %v4848 = vpack.c.b16 %v4155, %v4148
    %v4849 = vpack.c.b16 %v4163, %v4156
    %v4850 = vpack.c.b16 %v4164, %v4157
    %v4851 = vpack.c.b16 %v4165, %v4158
    %v4852 = vpack.c.b16 %v4166, %v4159
    %v4853 = vpack.c.b16 %v4167, %v4160
    %v4854 = vpack.c.b16 %v4168, %v4161
    %v4855 = vpack.c.b16 %v4169, %v4162
    %v4856 = vpack.c.b16 %v4177, %v4170
    %v4857 = vpack.c.b16 %v4178, %v4171
    %v4858 = vpack.c.b16 %v4179, %v4172
    %v4859 = vpack.c.b16 %v4180, %v4173
    %v4860 = vpack.c.b16 %v4181, %v4174
    %v4861 = vpack.c.b16 %v4182, %v4175
    %v4862 = vpack.c.b16 %v4183, %v4176
    %v4863 = vpack.c.b16 %v4191, %v4184
    %v4864 = vpack.c.b16 %v4192, %v4185
    %v4865 = vpack.c.b16 %v4193, %v4186
    %v4866 = vpack.c.b16 %v4194, %v4187
    %v4867 = vpack.c.b16 %v4195, %v4188
    %v4868 = vpack.c.b16 %v4196, %v4189
    %v4869 = vpack.c.b16 %v4197, %v4190
    %v4870 = vpack.c.b16 %v4205, %v4198
    %v4871 = vpack.c.b16 %v4206, %v4199
    %v4872 = vpack.c.b16 %v4207, %v4200
    %v4873 = vpack.c.b16 %v4208, %v4201
    %v4874 = vpack.c.b16 %v4209, %v4202
    %v4875 = vpack.c.b16 %v4210, %v4203
    %v4876 = vpack.c.b16 %v4211, %v4204
    %v4877 = vpack.c.b16 %v4219, %v4212
    %v4878 = vpack.c.b16 %v4220, %v4213
    %v4879 = vpack.c.b16 %v4221, %v4214
    %v4880 = vpack.c.b16 %v4222, %v4215
    %v4881 = vpack.c.b16 %v4223, %v4216
    %v4882 = vpack.c.b16 %v4224, %v4217
    %v4883 = vpack.c.b16 %v4225, %v4218
    %v4884 = vpack.c.b16 %v4233, %v4226
    %v4885 = vpack.c.b16 %v4234, %v4227
    %v4886 = vpack.c.b16 %v4235, %v4228
    %v4887 = vpack.c.b16 %v4236, %v4229
    %v4888 = vpack.c.b16 %v4237, %v4230
    %v4889 = vpack.c.b16 %v4238, %v4231
    %v4890 = vpack.c.b16 %v4239, %v4232
    %v4891 = vpack.c.b16 %v4247, %v4240
    %v4892 = vpack.c.b16 %v4248, %v4241
    %v4893 = vpack.c.b16 %v4249, %v4242
    %v4894 = vpack.c.b16 %v4250, %v4243
    %v4895 = vpack.c.b16 %v4251, %v4244
    %v4896 = vpack.c.b16 %v4252, %v4245
    %v4897 = vpack.c.b16 %v4253, %v4246
    %v4898 = vpack.c.b16 %v4261, %v4254
    %v4899 = vpack.c.b16 %v4262, %v4255
    %v4900 = vpack.c.b16 %v4263, %v4256
    %v4901 = vpack.c.b16 %v4264, %v4257
    %v4902 = vpack.c.b16 %v4265, %v4258
    %v4903 = vpack.c.b16 %v4266, %v4259
    %v4904 = vpack.c.b16 %v4267, %v4260
    %v4905 = vpack.c.b16 %v4275, %v4268
    %v4906 = vpack.c.b16 %v4276, %v4269
    %v4907 = vpack.c.b16 %v4277, %v4270
    %v4908 = vpack.c.b16 %v4278, %v4271
    %v4909 = vpack.c.b16 %v4279, %v4272
    %v4910 = vpack.c.b16 %v4280, %v4273
    %v4911 = vpack.c.b16 %v4281, %v4274
    %v4912 = vpack.c.b16 %v4289, %v4282
    %v4913 = vpack.c.b16 %v4290, %v4283
    %v4914 = vpack.c.b16 %v4291, %v4284
    %v4915 = vpack.c.b16 %v4292, %v4285
    %v4916 = vpack.c.b16 %v4293, %v4286
    %v4917 = vpack.c.b16 %v4294, %v4287
    %v4918 = vpack.c.b16 %v4295, %v4288
    %v4919 = vpack.c.b16 %v4303, %v4296
    %v4920 = vpack.c.b16 %v4304, %v4297
    %v4921 = vpack.c.b16 %v4305, %v4298
    %v4922 = vpack.c.b16 %v4306, %v4299
    %v4923 = vpack.c.b16 %v4307, %v4300
    %v4924 = vpack.c.b16 %v4308, %v4301
    %v4925 = vpack.c.b16 %v4309, %v4302
    %v4926 = vpack.c.b16 %v4317, %v4310
    %v4927 = vpack.c.b16 %v4318, %v4311
    %v4928 = vpack.c.b16 %v4319, %v4312
    %v4929 = vpack.c.b16 %v4320, %v4313
    %v4930 = vpack.c.b16 %v4321, %v4314
    %v4931 = vpack.c.b16 %v4322, %v4315
    %v4932 = vpack.c.b16 %v4323, %v4316
    %v4933 = vpack.c.b16 %v4331, %v4324
    %v4934 = vpack.c.b16 %v4332, %v4325
    %v4935 = vpack.c.b16 %v4333, %v4326
    %v4936 = vpack.c.b16 %v4334, %v4327
    %v4937 = vpack.c.b16 %v4335, %v4328
    %v4938 = vpack.c.b16 %v4336, %v4329
    %v4939 = vpack.c.b16 %v4337, %v4330
    %v4940 = vpack.c.b16 %v4345, %v4338
    %v4941 = vpack.c.b16 %v4346, %v4339
    %v4942 = vpack.c.b16 %v4347, %v4340
    %v4943 = vpack.c.b16 %v4348, %v4341
    %v4944 = vpack.c.b16 %v4349, %v4342
    %v4945 = vpack.c.b16 %v4350, %v4343
    %v4946 = vpack.c.b16 %v4351, %v4344
    %v4947 = vpack.c.b16 %v4359, %v4352
    %v4948 = vpack.c.b16 %v4360, %v4353
    %v4949 = vpack.c.b16 %v4361, %v4354
    %v4950 = vpack.c.b16 %v4362, %v4355
    %v4951 = vpack.c.b16 %v4363, %v4356
    %v4952 = vpack.c.b16 %v4364, %v4357
    %v4953 = vpack.c.b16 %v4365, %v4358
    %v4954 = vpack.c.b16 %v4373, %v4366
    %v4955 = vpack.c.b16 %v4374, %v4367
    %v4956 = vpack.c.b16 %v4375, %v4368
    %v4957 = vpack.c.b16 %v4376, %v4369
    %v4958 = vpack.c.b16 %v4377, %v4370
    %v4959 = vpack.c.b16 %v4378, %v4371
    %v4960 = vpack.c.b16 %v4379, %v4372
    %v4961 = vpack.c.b16 %v4387, %v4380
    %v4962 = vpack.c.b16 %v4388, %v4381
    %v4963 = vpack.c.b16 %v4389, %v4382
    %v4964 = vpack.c.b16 %v4390, %v4383
    %v4965 = vpack.c.b16 %v4391, %v4384
    %v4966 = vpack.c.b16 %v4392, %v4385
    %v4967 = vpack.c.b16 %v4393, %v4386
    %v4968 = vpack.c.b16 %v4401, %v4394
    %v4969 = vpack.c.b16 %v4402, %v4395
    %v4970 = vpack.c.b16 %v4403, %v4396
    %v4971 = vpack.c.b16 %v4404, %v4397
    %v4972 = vpack.c.b16 %v4405, %v4398
    %v4973 = vpack.c.b16 %v4406, %v4399
    %v4974 = vpack.c.b16 %v4407, %v4400
    %v4975 = vpack.c.b16 %v4415, %v4408
    %v4976 = vpack.c.b16 %v4416, %v4409
    %v4977 = vpack.c.b16 %v4417, %v4410
    %v4978 = vpack.c.b16 %v4418, %v4411
    %v4979 = vpack.c.b16 %v4419, %v4412
    %v4980 = vpack.c.b16 %v4420, %v4413
    %v4981 = vpack.c.b16 %v4421, %v4414
    %v4982 = vpack.c.b16 %v4429, %v4422
    %v4983 = vpack.c.b16 %v4430, %v4423
    %v4984 = vpack.c.b16 %v4431, %v4424
    %v4985 = vpack.c.b16 %v4432, %v4425
    %v4986 = vpack.c.b16 %v4433, %v4426
    %v4987 = vpack.c.b16 %v4434, %v4427
    %v4988 = vpack.c.b16 %v4435, %v4428
    %v4989 = vpack.c.b16 %v4443, %v4436
    %v4990 = vpack.c.b16 %v4444, %v4437
    %v4991 = vpack.c.b16 %v4445, %v4438
    %v4992 = vpack.c.b16 %v4446, %v4439
    %v4993 = vpack.c.b16 %v4447, %v4440
    %v4994 = vpack.c.b16 %v4448, %v4441
    %v4995 = vpack.c.b16 %v4449, %v4442
    %v4996 = vpack.c.b16 %v4457, %v4450
    %v4997 = vpack.c.b16 %v4458, %v4451
    %v4998 = vpack.c.b16 %v4459, %v4452
    %v4999 = vpack.c.b16 %v4460, %v4453
    %v5000 = vpack.c.b16 %v4461, %v4454
    %v5001 = vpack.c.b16 %v4462, %v4455
    %v5002 = vpack.c.b16 %v4463, %v4456
    %v5003 = vpack.c.b16 %v4471, %v4464
    %v5004 = vpack.c.b16 %v4472, %v4465
    %v5005 = vpack.c.b16 %v4473, %v4466
    %v5006 = vpack.c.b16 %v4474, %v4467
    %v5007 = vpack.c.b16 %v4475, %v4468
    %v5008 = vpack.c.b16 %v4476, %v4469
    %v5009 = vpack.c.b16 %v4477, %v4470
    %v5010 = vpack.c.b16 %v4485, %v4478
    %v5011 = vpack.c.b16 %v4486, %v4479
    %v5012 = vpack.c.b16 %v4487, %v4480
    %v5013 = vpack.c.b16 %v4488, %v4481
    %v5014 = vpack.c.b16 %v4489, %v4482
    %v5015 = vpack.c.b16 %v4490, %v4483
    %v5016 = vpack.c.b16 %v4491, %v4484
    %v5017 = vpack.c.b16 %v4499, %v4492
    %v5018 = vpack.c.b16 %v4500, %v4493
    %v5019 = vpack.c.b16 %v4501, %v4494
    %v5020 = vpack.c.b16 %v4502, %v4495
    %v5021 = vpack.c.b16 %v4503, %v4496
    %v5022 = vpack.c.b16 %v4504, %v4497
    %v5023 = vpack.c.b16 %v4505, %v4498
    %v5024 = vpack.c.b16 %v4513, %v4506
    %v5025 = vpack.c.b16 %v4514, %v4507
    %v5026 = vpack.c.b16 %v4515, %v4508
    %v5027 = vpack.c.b16 %v4516, %v4509
    %v5028 = vpack.c.b16 %v4517, %v4510
    %v5029 = vpack.c.b16 %v4518, %v4511
    %v5030 = vpack.c.b16 %v4519, %v4512
    %v5031 = vpack.c.b16 %v4527, %v4520
    %v5032 = vpack.c.b16 %v4528, %v4521
    %v5033 = vpack.c.b16 %v4529, %v4522
    %v5034 = vpack.c.b16 %v4530, %v4523
    %v5035 = vpack.c.b16 %v4531, %v4524
    %v5036 = vpack.c.b16 %v4532, %v4525
    %v5037 = vpack.c.b16 %v4533, %v4526
    %v5038 = vpack.c.b16 %v4541, %v4534
    %v5039 = vpack.c.b16 %v4542, %v4535
    %v5040 = vpack.c.b16 %v4543, %v4536
    %v5041 = vpack.c.b16 %v4544, %v4537
    %v5042 = vpack.c.b16 %v4545, %v4538
    %v5043 = vpack.c.b16 %v4546, %v4539
    %v5044 = vpack.c.b16 %v4547, %v4540
    %v5045 = vpack.c.b16 %v4555, %v4548
    %v5046 = vpack.c.b16 %v4556, %v4549
    %v5047 = vpack.c.b16 %v4557, %v4550
    %v5048 = vpack.c.b16 %v4558, %v4551
    %v5049 = vpack.c.b16 %v4559, %v4552
    %v5050 = vpack.c.b16 %v4560, %v4553
    %v5051 = vpack.c.b16 %v4561, %v4554
    %v5052 = vpack.c.b16 %v4569, %v4562
    %v5053 = vpack.c.b16 %v4570, %v4563
    %v5054 = vpack.c.b16 %v4571, %v4564
    %v5055 = vpack.c.b16 %v4572, %v4565
    %v5056 = vpack.c.b16 %v4573, %v4566
    %v5057 = vpack.c.b16 %v4574, %v4567
    %v5058 = vpack.c.b16 %v4575, %v4568
    %v5059 = vpack.c.b16 %v4583, %v4576
    %v5060 = vpack.c.b16 %v4584, %v4577
    %v5061 = vpack.c.b16 %v4585, %v4578
    %v5062 = vpack.c.b16 %v4586, %v4579
    %v5063 = vpack.c.b16 %v4587, %v4580
    %v5064 = vpack.c.b16 %v4588, %v4581
    %v5065 = vpack.c.b16 %v4589, %v4582
    %v5066 = vpack.c.b16 %v4597, %v4590
    %v5067 = vpack.c.b16 %v4598, %v4591
    %v5068 = vpack.c.b16 %v4599, %v4592
    %v5069 = vpack.c.b16 %v4600, %v4593
    %v5070 = vpack.c.b16 %v4601, %v4594
    %v5071 = vpack.c.b16 %v4602, %v4595
    %v5072 = vpack.c.b16 %v4603, %v4596
    %v5073 = vpack.c.b16 %v4611, %v4604
    %v5074 = vpack.c.b16 %v4612, %v4605
    %v5075 = vpack.c.b16 %v4613, %v4606
    %v5076 = vpack.c.b16 %v4614, %v4607
    %v5077 = vpack.c.b16 %v4615, %v4608
    %v5078 = vpack.c.b16 %v4616, %v4609
    %v5079 = vpack.c.b16 %v4617, %v4610
    %v5080 = vpack.c.b16 %v4625, %v4618
    %v5081 = vpack.c.b16 %v4626, %v4619
    %v5082 = vpack.c.b16 %v4627, %v4620
    %v5083 = vpack.c.b16 %v4628, %v4621
    %v5084 = vpack.c.b16 %v4629, %v4622
    %v5085 = vpack.c.b16 %v4630, %v4623
    %v5086 = vpack.c.b16 %v4631, %v4624
    %v5087 = vpack.c.b16 %v4639, %v4632
    %v5088 = vpack.c.b16 %v4640, %v4633
    %v5089 = vpack.c.b16 %v4641, %v4634
    %v5090 = vpack.c.b16 %v4642, %v4635
    %v5091 = vpack.c.b16 %v4643, %v4636
    %v5092 = vpack.c.b16 %v4644, %v4637
    %v5093 = vpack.c.b16 %v4645, %v4638
    %5542 = vmatprep.subr.bf16.mxu0 %v4647
    %5543 = vmatpush1.bf16.msra.mxu0 %v4646
    %5544 = vmatprep.subr.bf16.mxu0 %v4654
    %5545 = vmatpush1.bf16.msra.mxu0 %v4653
    %5546 = vmatprep.subr.bf16.mxu0 %v4661
    %5547 = vmatpush1.bf16.msra.mxu0 %v4660
    %5548 = vmatprep.subr.bf16.mxu0 %v4668
    %5549 = vmatpush1.bf16.msra.mxu0 %v4667
    %5550 = vmatprep.subr.bf16.mxu0 %v4675
    %5551 = vmatpush1.bf16.msra.mxu0 %v4674
    %5552 = vmatprep.subr.bf16.mxu0 %v4682
    %5553 = vmatpush1.bf16.msra.mxu0 %v4681
    %5554 = vmatprep.subr.bf16.mxu0 %v4689
    %5555 = vmatpush1.bf16.msra.mxu0 %v4688
    %5556 = vmatprep.subr.bf16.mxu0 %v4696
    %5557 = vmatpush1.bf16.msra.mxu0 %v4695
    %5558 = vmatprep.subr.bf16.mxu0 %v4703
    %5559 = vmatpush1.bf16.msra.mxu0 %v4702
    %5560 = vmatprep.subr.bf16.mxu0 %v4710
    %5561 = vmatpush1.bf16.msra.mxu0 %v4709
    %5562 = vmatprep.subr.bf16.mxu0 %v4717
    %5563 = vmatpush1.bf16.msra.mxu0 %v4716
    %5564 = vmatprep.subr.bf16.mxu0 %v4724
    %5565 = vmatpush1.bf16.msra.mxu0 %v4723
    %5566 = vmatprep.subr.bf16.mxu0 %v4731
    %5567 = vmatpush1.bf16.msra.mxu0 %v4730
    %5568 = vmatprep.subr.bf16.mxu0 %v4738
    %5569 = vmatpush1.bf16.msra.mxu0 %v4737
    %5570 = vmatprep.subr.bf16.mxu0 %v4745
    %5571 = vmatpush1.bf16.msra.mxu0 %v4744
    %5572 = vmatprep.subr.bf16.mxu0 %v4752
    %5573 = vmatpush1.bf16.msra.mxu0 %v4751
    %5574 = vmatprep.mubr.bf16.mxu0 %v2682
    %5575 = vmatmul.mubr.bf16.gmra.mrb[0].mxu0 %v2681
    %v5576 = vpop.f32.mrb[0].mxu0
    %v5577 = vadd.f32 %v3206, %v5576
    %v5578 = vpop.f32.mrb[0].mxu0
    %v5579 = vadd.f32 %v3210, %v5578
    %v5580 = vpop.f32.mrb[0].mxu0
    %v5581 = vpop.f32.mrb[0].mxu0
    %5582 = vdwg.mxu0
    %5583 = vmatprep.subr.bf16.mxu0 %v4759
    %5584 = vmatpush1.bf16.msra.mxu0 %v4758
    %5585 = vmatprep.subr.bf16.mxu0 %v4766
    %5586 = vmatpush1.bf16.msra.mxu0 %v4765
    %5587 = vmatprep.subr.bf16.mxu0 %v4773
    %5588 = vmatpush1.bf16.msra.mxu0 %v4772
    %5589 = vmatprep.subr.bf16.mxu0 %v4780
    %5590 = vmatpush1.bf16.msra.mxu0 %v4779
    %5591 = vmatprep.subr.bf16.mxu0 %v4787
    %5592 = vmatpush1.bf16.msra.mxu0 %v4786
    %5593 = vmatprep.subr.bf16.mxu0 %v4794
    %5594 = vmatpush1.bf16.msra.mxu0 %v4793
    %5595 = vmatprep.subr.bf16.mxu0 %v4801
    %5596 = vmatpush1.bf16.msra.mxu0 %v4800
    %5597 = vmatprep.subr.bf16.mxu0 %v4808
    %5598 = vmatpush1.bf16.msra.mxu0 %v4807
    %5599 = vmatprep.subr.bf16.mxu0 %v4815
    %5600 = vmatpush1.bf16.msra.mxu0 %v4814
    %5601 = vmatprep.subr.bf16.mxu0 %v4822
    %5602 = vmatpush1.bf16.msra.mxu0 %v4821
    %5603 = vmatprep.subr.bf16.mxu0 %v4829
    %5604 = vmatpush1.bf16.msra.mxu0 %v4828
    %5605 = vmatprep.subr.bf16.mxu0 %v4836
    %5606 = vmatpush1.bf16.msra.mxu0 %v4835
    %5607 = vmatprep.subr.bf16.mxu0 %v4843
    %5608 = vmatpush1.bf16.msra.mxu0 %v4842
    %5609 = vmatprep.subr.bf16.mxu0 %v4850
    %5610 = vmatpush1.bf16.msra.mxu0 %v4849
    %5611 = vmatprep.subr.bf16.mxu0 %v4857
    %5612 = vmatpush1.bf16.msra.mxu0 %v4856
    %5613 = vmatprep.subr.bf16.mxu0 %v4864
    %5614 = vmatpush1.bf16.msra.mxu0 %v4863
    %5615 = vmatprep.mubr.bf16.mxu0 %v2684
    %5616 = vmatmul.mubr.bf16.gmra.mrb[0].mxu0 %v2683
    %v5617 = vpop.f32.mrb[0].mxu0
    %v5618 = vadd.f32 %v5577, %v5617
    %v5619 = vpop.f32.mrb[0].mxu0
    %v5620 = vadd.f32 %v5579, %v5619
    %v5621 = vpop.f32.mrb[0].mxu0
    %v5622 = vpop.f32.mrb[0].mxu0
    %5623 = vdwg.mxu0
    %5624 = vmatprep.subr.bf16.mxu0 %v4871
    %5625 = vmatpush1.bf16.msra.mxu0 %v4870
    %5626 = vmatprep.subr.bf16.mxu0 %v4878
    %5627 = vmatpush1.bf16.msra.mxu0 %v4877
    %5628 = vmatprep.subr.bf16.mxu0 %v4885
    %5629 = vmatpush1.bf16.msra.mxu0 %v4884
    %5630 = vmatprep.subr.bf16.mxu0 %v4892
    %5631 = vmatpush1.bf16.msra.mxu0 %v4891
    %5632 = vmatprep.subr.bf16.mxu0 %v4899
    %5633 = vmatpush1.bf16.msra.mxu0 %v4898
    %5634 = vmatprep.subr.bf16.mxu0 %v4906
    %5635 = vmatpush1.bf16.msra.mxu0 %v4905
    %5636 = vmatprep.subr.bf16.mxu0 %v4913
    %5637 = vmatpush1.bf16.msra.mxu0 %v4912
    %5638 = vmatprep.subr.bf16.mxu0 %v4920
    %5639 = vmatpush1.bf16.msra.mxu0 %v4919
    %5640 = vmatprep.subr.bf16.mxu0 %v4927
    %5641 = vmatpush1.bf16.msra.mxu0 %v4926
    %5642 = vmatprep.subr.bf16.mxu0 %v4934
    %5643 = vmatpush1.bf16.msra.mxu0 %v4933
    %5644 = vmatprep.subr.bf16.mxu0 %v4941
    %5645 = vmatpush1.bf16.msra.mxu0 %v4940
    %5646 = vmatprep.subr.bf16.mxu0 %v4948
    %5647 = vmatpush1.bf16.msra.mxu0 %v4947
    %5648 = vmatprep.subr.bf16.mxu0 %v4955
    %5649 = vmatpush1.bf16.msra.mxu0 %v4954
    %5650 = vmatprep.subr.bf16.mxu0 %v4962
    %5651 = vmatpush1.bf16.msra.mxu0 %v4961
    %5652 = vmatprep.subr.bf16.mxu0 %v4969
    %5653 = vmatpush1.bf16.msra.mxu0 %v4968
    %5654 = vmatprep.subr.bf16.mxu0 %v4976
    %5655 = vmatpush1.bf16.msra.mxu0 %v4975
    %5656 = vmatprep.mubr.bf16.mxu0 %v2686
    %5657 = vmatmul.mubr.bf16.gmra.mrb[0].mxu0 %v2685
    %v5658 = vpop.f32.mrb[0].mxu0
    %v5659 = vadd.f32 %v5618, %v5658
    %v5660 = vpop.f32.mrb[0].mxu0
    %v5661 = vadd.f32 %v5620, %v5660
    %v5662 = vpop.f32.mrb[0].mxu0
    %v5663 = vpop.f32.mrb[0].mxu0
    %5664 = vdwg.mxu0
    %5665 = vmatprep.subr.bf16.mxu0 %v4983
    %5666 = vmatpush1.bf16.msra.mxu0 %v4982
    %5667 = vmatprep.subr.bf16.mxu0 %v4990
    %5668 = vmatpush1.bf16.msra.mxu0 %v4989
    %5669 = vmatprep.subr.bf16.mxu0 %v4997
    %5670 = vmatpush1.bf16.msra.mxu0 %v4996
    %5671 = vmatprep.subr.bf16.mxu0 %v5004
    %5672 = vmatpush1.bf16.msra.mxu0 %v5003
    %5673 = vmatprep.subr.bf16.mxu0 %v5011
    %5674 = vmatpush1.bf16.msra.mxu0 %v5010
    %5675 = vmatprep.subr.bf16.mxu0 %v5018
    %5676 = vmatpush1.bf16.msra.mxu0 %v5017
    %5677 = vmatprep.subr.bf16.mxu0 %v5025
    %5678 = vmatpush1.bf16.msra.mxu0 %v5024
    %5679 = vmatprep.subr.bf16.mxu0 %v5032
    %5680 = vmatpush1.bf16.msra.mxu0 %v5031
    %5681 = vmatprep.subr.bf16.mxu0 %v5039
    %5682 = vmatpush1.bf16.msra.mxu0 %v5038
    %5683 = vmatprep.subr.bf16.mxu0 %v5046
    %5684 = vmatpush1.bf16.msra.mxu0 %v5045
    %5685 = vmatprep.subr.bf16.mxu0 %v5053
    %5686 = vmatpush1.bf16.msra.mxu0 %v5052
    %5687 = vmatprep.subr.bf16.mxu0 %v5060
    %5688 = vmatpush1.bf16.msra.mxu0 %v5059
    %5689 = vmatprep.subr.bf16.mxu0 %v5067
    %5690 = vmatpush1.bf16.msra.mxu0 %v5066
    %5691 = vmatprep.subr.bf16.mxu0 %v5074
    %5692 = vmatpush1.bf16.msra.mxu0 %v5073
    %5693 = vmatprep.subr.bf16.mxu0 %v5081
    %5694 = vmatpush1.bf16.msra.mxu0 %v5080
    %5695 = vmatprep.subr.bf16.mxu0 %v5088
    %5696 = vmatpush1.bf16.msra.mxu0 %v5087
    %5697 = vmatprep.mubr.bf16.mxu0 %v2688
    %5698 = vmatmul.mubr.bf16.gmra.mrb[0].mxu0 %v2687
    %v5699 = vpop.f32.mrb[0].mxu0
    %v5700 = vadd.f32 %v5659, %v5699
    %v5701 = vpop.f32.mrb[0].mxu0
    %v5702 = vadd.f32 %v5661, %v5701
    %v5703 = vpop.f32.mrb[0].mxu0
    %v5704 = vpop.f32.mrb[0].mxu0
    %5705 = vdwg.mxu0
    %5706 = vmatprep.subr.bf16.mxu0 %v4649
    %5707 = vmatpush1.bf16.msra.mxu0 %v4648
    %5708 = vmatprep.subr.bf16.mxu0 %v4656
    %5709 = vmatpush1.bf16.msra.mxu0 %v4655
    %5710 = vmatprep.subr.bf16.mxu0 %v4663
    %5711 = vmatpush1.bf16.msra.mxu0 %v4662
    %5712 = vmatprep.subr.bf16.mxu0 %v4670
    %5713 = vmatpush1.bf16.msra.mxu0 %v4669
    %5714 = vmatprep.subr.bf16.mxu0 %v4677
    %5715 = vmatpush1.bf16.msra.mxu0 %v4676
    %5716 = vmatprep.subr.bf16.mxu0 %v4684
    %5717 = vmatpush1.bf16.msra.mxu0 %v4683
    %5718 = vmatprep.subr.bf16.mxu0 %v4691
    %5719 = vmatpush1.bf16.msra.mxu0 %v4690
    %5720 = vmatprep.subr.bf16.mxu0 %v4698
    %5721 = vmatpush1.bf16.msra.mxu0 %v4697
    %5722 = vmatprep.subr.bf16.mxu0 %v4705
    %5723 = vmatpush1.bf16.msra.mxu0 %v4704
    %5724 = vmatprep.subr.bf16.mxu0 %v4712
    %5725 = vmatpush1.bf16.msra.mxu0 %v4711
    %5726 = vmatprep.subr.bf16.mxu0 %v4719
    %5727 = vmatpush1.bf16.msra.mxu0 %v4718
    %5728 = vmatprep.subr.bf16.mxu0 %v4726
    %5729 = vmatpush1.bf16.msra.mxu0 %v4725
    %5730 = vmatprep.subr.bf16.mxu0 %v4733
    %5731 = vmatpush1.bf16.msra.mxu0 %v4732
    %5732 = vmatprep.subr.bf16.mxu0 %v4740
    %5733 = vmatpush1.bf16.msra.mxu0 %v4739
    %5734 = vmatprep.subr.bf16.mxu0 %v4747
    %5735 = vmatpush1.bf16.msra.mxu0 %v4746
    %5736 = vmatprep.subr.bf16.mxu0 %v4754
    %5737 = vmatpush1.bf16.msra.mxu0 %v4753
    %5738 = vmatprep.mubr.bf16.mxu0 %v2682
    %5739 = vmatmul.mubr.bf16.gmra.mrb[0].mxu0 %v2681
    %v5740 = vpop.f32.mrb[0].mxu0
    %v5741 = vadd.f32 %v3214, %v5740
    %v5742 = vpop.f32.mrb[0].mxu0
    %v5743 = vadd.f32 %v3218, %v5742
    %v5744 = vpop.f32.mrb[0].mxu0
    %v5745 = vpop.f32.mrb[0].mxu0
    %5746 = vdwg.mxu0
    %5747 = vmatprep.subr.bf16.mxu0 %v4761
    %5748 = vmatpush1.bf16.msra.mxu0 %v4760
    %5749 = vmatprep.subr.bf16.mxu0 %v4768
    %5750 = vmatpush1.bf16.msra.mxu0 %v4767
    %5751 = vmatprep.subr.bf16.mxu0 %v4775
    %5752 = vmatpush1.bf16.msra.mxu0 %v4774
    %5753 = vmatprep.subr.bf16.mxu0 %v4782
    %5754 = vmatpush1.bf16.msra.mxu0 %v4781
    %5755 = vmatprep.subr.bf16.mxu0 %v4789
    %5756 = vmatpush1.bf16.msra.mxu0 %v4788
    %5757 = vmatprep.subr.bf16.mxu0 %v4796
    %5758 = vmatpush1.bf16.msra.mxu0 %v4795
    %5759 = vmatprep.subr.bf16.mxu0 %v4803
    %5760 = vmatpush1.bf16.msra.mxu0 %v4802
    %5761 = vmatprep.subr.bf16.mxu0 %v4810
    %5762 = vmatpush1.bf16.msra.mxu0 %v4809
    %5763 = vmatprep.subr.bf16.mxu0 %v4817
    %5764 = vmatpush1.bf16.msra.mxu0 %v4816
    %5765 = vmatprep.subr.bf16.mxu0 %v4824
    %5766 = vmatpush1.bf16.msra.mxu0 %v4823
    %5767 = vmatprep.subr.bf16.mxu0 %v4831
    %5768 = vmatpush1.bf16.msra.mxu0 %v4830
    %5769 = vmatprep.subr.bf16.mxu0 %v4838
    %5770 = vmatpush1.bf16.msra.mxu0 %v4837
    %5771 = vmatprep.subr.bf16.mxu0 %v4845
    %5772 = vmatpush1.bf16.msra.mxu0 %v4844
    %5773 = vmatprep.subr.bf16.mxu0 %v4852
    %5774 = vmatpush1.bf16.msra.mxu0 %v4851
    %5775 = vmatprep.subr.bf16.mxu0 %v4859
    %5776 = vmatpush1.bf16.msra.mxu0 %v4858
    %5777 = vmatprep.subr.bf16.mxu0 %v4866
    %5778 = vmatpush1.bf16.msra.mxu0 %v4865
    %5779 = vmatprep.mubr.bf16.mxu0 %v2684
    %5780 = vmatmul.mubr.bf16.gmra.mrb[0].mxu0 %v2683
    %v5781 = vpop.f32.mrb[0].mxu0
    %v5782 = vadd.f32 %v5741, %v5781
    %v5783 = vpop.f32.mrb[0].mxu0
    %v5784 = vadd.f32 %v5743, %v5783
    %v5785 = vpop.f32.mrb[0].mxu0
    %v5786 = vpop.f32.mrb[0].mxu0
    %5787 = vdwg.mxu0
    %5788 = vmatprep.subr.bf16.mxu0 %v4873
    %5789 = vmatpush1.bf16.msra.mxu0 %v4872
    %5790 = vmatprep.subr.bf16.mxu0 %v4880
    %5791 = vmatpush1.bf16.msra.mxu0 %v4879
    %5792 = vmatprep.subr.bf16.mxu0 %v4887
    %5793 = vmatpush1.bf16.msra.mxu0 %v4886
    %5794 = vmatprep.subr.bf16.mxu0 %v4894
    %5795 = vmatpush1.bf16.msra.mxu0 %v4893
    %5796 = vmatprep.subr.bf16.mxu0 %v4901
    %5797 = vmatpush1.bf16.msra.mxu0 %v4900
    %5798 = vmatprep.subr.bf16.mxu0 %v4908
    %5799 = vmatpush1.bf16.msra.mxu0 %v4907
    %5800 = vmatprep.subr.bf16.mxu0 %v4915
    %5801 = vmatpush1.bf16.msra.mxu0 %v4914
    %5802 = vmatprep.subr.bf16.mxu0 %v4922
    %5803 = vmatpush1.bf16.msra.mxu0 %v4921
    %5804 = vmatprep.subr.bf16.mxu0 %v4929
    %5805 = vmatpush1.bf16.msra.mxu0 %v4928
    %5806 = vmatprep.subr.bf16.mxu0 %v4936
    %5807 = vmatpush1.bf16.msra.mxu0 %v4935
    %5808 = vmatprep.subr.bf16.mxu0 %v4943
    %5809 = vmatpush1.bf16.msra.mxu0 %v4942
    %5810 = vmatprep.subr.bf16.mxu0 %v4950
    %5811 = vmatpush1.bf16.msra.mxu0 %v4949
    %5812 = vmatprep.subr.bf16.mxu0 %v4957
    %5813 = vmatpush1.bf16.msra.mxu0 %v4956
    %5814 = vmatprep.subr.bf16.mxu0 %v4964
    %5815 = vmatpush1.bf16.msra.mxu0 %v4963
    %5816 = vmatprep.subr.bf16.mxu0 %v4971
    %5817 = vmatpush1.bf16.msra.mxu0 %v4970
    %5818 = vmatprep.subr.bf16.mxu0 %v4978
    %5819 = vmatpush1.bf16.msra.mxu0 %v4977
    %5820 = vmatprep.mubr.bf16.mxu0 %v2686
    %5821 = vmatmul.mubr.bf16.gmra.mrb[0].mxu0 %v2685
    %v5822 = vpop.f32.mrb[0].mxu0
    %v5823 = vadd.f32 %v5782, %v5822
    %v5824 = vpop.f32.mrb[0].mxu0
    %v5825 = vadd.f32 %v5784, %v5824
    %v5826 = vpop.f32.mrb[0].mxu0
    %v5827 = vpop.f32.mrb[0].mxu0
    %5828 = vdwg.mxu0
    %5829 = vmatprep.subr.bf16.mxu0 %v4985
    %5830 = vmatpush1.bf16.msra.mxu0 %v4984
    %5831 = vmatprep.subr.bf16.mxu0 %v4992
    %5832 = vmatpush1.bf16.msra.mxu0 %v4991
    %5833 = vmatprep.subr.bf16.mxu0 %v4999
    %5834 = vmatpush1.bf16.msra.mxu0 %v4998
    %5835 = vmatprep.subr.bf16.mxu0 %v5006
    %5836 = vmatpush1.bf16.msra.mxu0 %v5005
    %5837 = vmatprep.subr.bf16.mxu0 %v5013
    %5838 = vmatpush1.bf16.msra.mxu0 %v5012
    %5839 = vmatprep.subr.bf16.mxu0 %v5020
    %5840 = vmatpush1.bf16.msra.mxu0 %v5019
    %5841 = vmatprep.subr.bf16.mxu0 %v5027
    %5842 = vmatpush1.bf16.msra.mxu0 %v5026
    %5843 = vmatprep.subr.bf16.mxu0 %v5034
    %5844 = vmatpush1.bf16.msra.mxu0 %v5033
    %5845 = vmatprep.subr.bf16.mxu0 %v5041
    %5846 = vmatpush1.bf16.msra.mxu0 %v5040
    %5847 = vmatprep.subr.bf16.mxu0 %v5048
    %5848 = vmatpush1.bf16.msra.mxu0 %v5047
    %5849 = vmatprep.subr.bf16.mxu0 %v5055
    %5850 = vmatpush1.bf16.msra.mxu0 %v5054
    %5851 = vmatprep.subr.bf16.mxu0 %v5062
    %5852 = vmatpush1.bf16.msra.mxu0 %v5061
    %5853 = vmatprep.subr.bf16.mxu0 %v5069
    %5854 = vmatpush1.bf16.msra.mxu0 %v5068
    %5855 = vmatprep.subr.bf16.mxu0 %v5076
    %5856 = vmatpush1.bf16.msra.mxu0 %v5075
    %5857 = vmatprep.subr.bf16.mxu0 %v5083
    %5858 = vmatpush1.bf16.msra.mxu0 %v5082
    %5859 = vmatprep.subr.bf16.mxu0 %v5090
    %5860 = vmatpush1.bf16.msra.mxu0 %v5089
    %5861 = vmatprep.mubr.bf16.mxu0 %v2688
    %5862 = vmatmul.mubr.bf16.gmra.mrb[0].mxu0 %v2687
    %v5863 = vpop.f32.mrb[0].mxu0
    %v5864 = vadd.f32 %v5823, %v5863
    %v5865 = vpop.f32.mrb[0].mxu0
    %v5866 = vadd.f32 %v5825, %v5865
    %v5867 = vpop.f32.mrb[0].mxu0
    %v5868 = vpop.f32.mrb[0].mxu0
    %5869 = vdwg.mxu0
    %5870 = vmatprep.subr.bf16.mxu0 %v4651
    %5871 = vmatpush1.bf16.msra.mxu0 %v4650
    %5872 = vmatprep.subr.bf16.mxu0 %v4658
    %5873 = vmatpush1.bf16.msra.mxu0 %v4657
    %5874 = vmatprep.subr.bf16.mxu0 %v4665
    %5875 = vmatpush1.bf16.msra.mxu0 %v4664
    %5876 = vmatprep.subr.bf16.mxu0 %v4672
    %5877 = vmatpush1.bf16.msra.mxu0 %v4671
    %5878 = vmatprep.subr.bf16.mxu0 %v4679
    %5879 = vmatpush1.bf16.msra.mxu0 %v4678
    %5880 = vmatprep.subr.bf16.mxu0 %v4686
    %5881 = vmatpush1.bf16.msra.mxu0 %v4685
    %5882 = vmatprep.subr.bf16.mxu0 %v4693
    %5883 = vmatpush1.bf16.msra.mxu0 %v4692
    %5884 = vmatprep.subr.bf16.mxu0 %v4700
    %5885 = vmatpush1.bf16.msra.mxu0 %v4699
    %5886 = vmatprep.subr.bf16.mxu0 %v4707
    %5887 = vmatpush1.bf16.msra.mxu0 %v4706
    %5888 = vmatprep.subr.bf16.mxu0 %v4714
    %5889 = vmatpush1.bf16.msra.mxu0 %v4713
    %5890 = vmatprep.subr.bf16.mxu0 %v4721
    %5891 = vmatpush1.bf16.msra.mxu0 %v4720
    %5892 = vmatprep.subr.bf16.mxu0 %v4728
    %5893 = vmatpush1.bf16.msra.mxu0 %v4727
    %5894 = vmatprep.subr.bf16.mxu0 %v4735
    %5895 = vmatpush1.bf16.msra.mxu0 %v4734
    %5896 = vmatprep.subr.bf16.mxu0 %v4742
    %5897 = vmatpush1.bf16.msra.mxu0 %v4741
    %5898 = vmatprep.subr.bf16.mxu0 %v4749
    %5899 = vmatpush1.bf16.msra.mxu0 %v4748
    %5900 = vmatprep.subr.bf16.mxu0 %v4756
    %5901 = vmatpush1.bf16.msra.mxu0 %v4755
    %5902 = vmatprep.mubr.bf16.mxu0 %v2682
    %5903 = vmatmul.mubr.bf16.gmra.mrb[0].mxu0 %v2681
    %v5904 = vpop.f32.mrb[0].mxu0
    %v5905 = vadd.f32 %v3222, %v5904
    %v5906 = vpop.f32.mrb[0].mxu0
    %v5907 = vadd.f32 %v3226, %v5906
    %v5908 = vpop.f32.mrb[0].mxu0
    %v5909 = vpop.f32.mrb[0].mxu0
    %5910 = vdwg.mxu0
    %5911 = vmatprep.subr.bf16.mxu0 %v4763
    %5912 = vmatpush1.bf16.msra.mxu0 %v4762
    %5913 = vmatprep.subr.bf16.mxu0 %v4770
    %5914 = vmatpush1.bf16.msra.mxu0 %v4769
    %5915 = vmatprep.subr.bf16.mxu0 %v4777
    %5916 = vmatpush1.bf16.msra.mxu0 %v4776
    %5917 = vmatprep.subr.bf16.mxu0 %v4784
    %5918 = vmatpush1.bf16.msra.mxu0 %v4783
    %5919 = vmatprep.subr.bf16.mxu0 %v4791
    %5920 = vmatpush1.bf16.msra.mxu0 %v4790
    %5921 = vmatprep.subr.bf16.mxu0 %v4798
    %5922 = vmatpush1.bf16.msra.mxu0 %v4797
    %5923 = vmatprep.subr.bf16.mxu0 %v4805
    %5924 = vmatpush1.bf16.msra.mxu0 %v4804
    %5925 = vmatprep.subr.bf16.mxu0 %v4812
    %5926 = vmatpush1.bf16.msra.mxu0 %v4811
    %5927 = vmatprep.subr.bf16.mxu0 %v4819
    %5928 = vmatpush1.bf16.msra.mxu0 %v4818
    %5929 = vmatprep.subr.bf16.mxu0 %v4826
    %5930 = vmatpush1.bf16.msra.mxu0 %v4825
    %5931 = vmatprep.subr.bf16.mxu0 %v4833
    %5932 = vmatpush1.bf16.msra.mxu0 %v4832
    %5933 = vmatprep.subr.bf16.mxu0 %v4840
    %5934 = vmatpush1.bf16.msra.mxu0 %v4839
    %5935 = vmatprep.subr.bf16.mxu0 %v4847
    %5936 = vmatpush1.bf16.msra.mxu0 %v4846
    %5937 = vmatprep.subr.bf16.mxu0 %v4854
    %5938 = vmatpush1.bf16.msra.mxu0 %v4853
    %5939 = vmatprep.subr.bf16.mxu0 %v4861
    %5940 = vmatpush1.bf16.msra.mxu0 %v4860
    %5941 = vmatprep.subr.bf16.mxu0 %v4868
    %5942 = vmatpush1.bf16.msra.mxu0 %v4867
    %5943 = vmatprep.mubr.bf16.mxu0 %v2684
    %5944 = vmatmul.mubr.bf16.gmra.mrb[0].mxu0 %v2683
    %v5945 = vpop.f32.mrb[0].mxu0
    %v5946 = vadd.f32 %v5905, %v5945
    %v5947 = vpop.f32.mrb[0].mxu0
    %v5948 = vadd.f32 %v5907, %v5947
    %v5949 = vpop.f32.mrb[0].mxu0
    %v5950 = vpop.f32.mrb[0].mxu0
    %5951 = vdwg.mxu0
    %5952 = vmatprep.subr.bf16.mxu0 %v4875
    %5953 = vmatpush1.bf16.msra.mxu0 %v4874
    %5954 = vmatprep.subr.bf16.mxu0 %v4882
    %5955 = vmatpush1.bf16.msra.mxu0 %v4881
    %5956 = vmatprep.subr.bf16.mxu0 %v4889
    %5957 = vmatpush1.bf16.msra.mxu0 %v4888
    %5958 = vmatprep.subr.bf16.mxu0 %v4896
    %5959 = vmatpush1.bf16.msra.mxu0 %v4895
    %5960 = vmatprep.subr.bf16.mxu0 %v4903
    %5961 = vmatpush1.bf16.msra.mxu0 %v4902
    %5962 = vmatprep.subr.bf16.mxu0 %v4910
    %5963 = vmatpush1.bf16.msra.mxu0 %v4909
    %5964 = vmatprep.subr.bf16.mxu0 %v4917
    %5965 = vmatpush1.bf16.msra.mxu0 %v4916
    %5966 = vmatprep.subr.bf16.mxu0 %v4924
    %5967 = vmatpush1.bf16.msra.mxu0 %v4923
    %5968 = vmatprep.subr.bf16.mxu0 %v4931
    %5969 = vmatpush1.bf16.msra.mxu0 %v4930
    %5970 = vmatprep.subr.bf16.mxu0 %v4938
    %5971 = vmatpush1.bf16.msra.mxu0 %v4937
    %5972 = vmatprep.subr.bf16.mxu0 %v4945
    %5973 = vmatpush1.bf16.msra.mxu0 %v4944
    %5974 = vmatprep.subr.bf16.mxu0 %v4952
    %5975 = vmatpush1.bf16.msra.mxu0 %v4951
    %5976 = vmatprep.subr.bf16.mxu0 %v4959
    %5977 = vmatpush1.bf16.msra.mxu0 %v4958
    %5978 = vmatprep.subr.bf16.mxu0 %v4966
    %5979 = vmatpush1.bf16.msra.mxu0 %v4965
    %5980 = vmatprep.subr.bf16.mxu0 %v4973
    %5981 = vmatpush1.bf16.msra.mxu0 %v4972
    %5982 = vmatprep.subr.bf16.mxu0 %v4980
    %5983 = vmatpush1.bf16.msra.mxu0 %v4979
    %5984 = vmatprep.mubr.bf16.mxu0 %v2686
    %5985 = vmatmul.mubr.bf16.gmra.mrb[0].mxu0 %v2685
    %v5986 = vpop.f32.mrb[0].mxu0
    %v5987 = vadd.f32 %v5946, %v5986
    %v5988 = vpop.f32.mrb[0].mxu0
    %v5989 = vadd.f32 %v5948, %v5988
    %v5990 = vpop.f32.mrb[0].mxu0
    %v5991 = vpop.f32.mrb[0].mxu0
    %5992 = vdwg.mxu0
    %5993 = vmatprep.subr.bf16.mxu0 %v4987
    %5994 = vmatpush1.bf16.msra.mxu0 %v4986
    %5995 = vmatprep.subr.bf16.mxu0 %v4994
    %5996 = vmatpush1.bf16.msra.mxu0 %v4993
    %5997 = vmatprep.subr.bf16.mxu0 %v5001
    %5998 = vmatpush1.bf16.msra.mxu0 %v5000
    %5999 = vmatprep.subr.bf16.mxu0 %v5008
    %6000 = vmatpush1.bf16.msra.mxu0 %v5007
    %6001 = vmatprep.subr.bf16.mxu0 %v5015
    %6002 = vmatpush1.bf16.msra.mxu0 %v5014
    %6003 = vmatprep.subr.bf16.mxu0 %v5022
    %6004 = vmatpush1.bf16.msra.mxu0 %v5021
    %6005 = vmatprep.subr.bf16.mxu0 %v5029
    %6006 = vmatpush1.bf16.msra.mxu0 %v5028
    %6007 = vmatprep.subr.bf16.mxu0 %v5036
    %6008 = vmatpush1.bf16.msra.mxu0 %v5035
    %6009 = vmatprep.subr.bf16.mxu0 %v5043
    %6010 = vmatpush1.bf16.msra.mxu0 %v5042
    %6011 = vmatprep.subr.bf16.mxu0 %v5050
    %6012 = vmatpush1.bf16.msra.mxu0 %v5049
    %6013 = vmatprep.subr.bf16.mxu0 %v5057
    %6014 = vmatpush1.bf16.msra.mxu0 %v5056
    %6015 = vmatprep.subr.bf16.mxu0 %v5064
    %6016 = vmatpush1.bf16.msra.mxu0 %v5063
    %6017 = vmatprep.subr.bf16.mxu0 %v5071
    %6018 = vmatpush1.bf16.msra.mxu0 %v5070
    %6019 = vmatprep.subr.bf16.mxu0 %v5078
    %6020 = vmatpush1.bf16.msra.mxu0 %v5077
    %6021 = vmatprep.subr.bf16.mxu0 %v5085
    %6022 = vmatpush1.bf16.msra.mxu0 %v5084
    %6023 = vmatprep.subr.bf16.mxu0 %v5092
    %6024 = vmatpush1.bf16.msra.mxu0 %v5091
    %6025 = vmatprep.mubr.bf16.mxu0 %v2688
    %6026 = vmatmul.mubr.bf16.gmra.mrb[0].mxu0 %v2687
    %v6027 = vpop.f32.mrb[0].mxu0
    %v6028 = vadd.f32 %v5987, %v6027
    %v6029 = vpop.f32.mrb[0].mxu0
    %v6030 = vadd.f32 %v5989, %v6029
    %v6031 = vpop.f32.mrb[0].mxu0
    %v6032 = vpop.f32.mrb[0].mxu0
    %6033 = vdwg.mxu0
    %6034 = vmatprep.subr.bf16.mxu0 0
    %6035 = vmatpush1.bf16.msra.mxu0 %v4652
    %6036 = vmatprep.subr.bf16.mxu0 0
    %6037 = vmatpush1.bf16.msra.mxu0 %v4659
    %6038 = vmatprep.subr.bf16.mxu0 0
    %6039 = vmatpush1.bf16.msra.mxu0 %v4666
    %6040 = vmatprep.subr.bf16.mxu0 0
    %6041 = vmatpush1.bf16.msra.mxu0 %v4673
    %6042 = vmatprep.subr.bf16.mxu0 0
    %6043 = vmatpush1.bf16.msra.mxu0 %v4680
    %6044 = vmatprep.subr.bf16.mxu0 0
    %6045 = vmatpush1.bf16.msra.mxu0 %v4687
    %6046 = vmatprep.subr.bf16.mxu0 0
    %6047 = vmatpush1.bf16.msra.mxu0 %v4694
    %6048 = vmatprep.subr.bf16.mxu0 0
    %6049 = vmatpush1.bf16.msra.mxu0 %v4701
    %6050 = vmatprep.subr.bf16.mxu0 0
    %6051 = vmatpush1.bf16.msra.mxu0 %v4708
    %6052 = vmatprep.subr.bf16.mxu0 0
    %6053 = vmatpush1.bf16.msra.mxu0 %v4715
    %6054 = vmatprep.subr.bf16.mxu0 0
    %6055 = vmatpush1.bf16.msra.mxu0 %v4722
    %6056 = vmatprep.subr.bf16.mxu0 0
    %6057 = vmatpush1.bf16.msra.mxu0 %v4729
    %6058 = vmatprep.subr.bf16.mxu0 0
    %6059 = vmatpush1.bf16.msra.mxu0 %v4736
    %6060 = vmatprep.subr.bf16.mxu0 0
    %6061 = vmatpush1.bf16.msra.mxu0 %v4743
    %6062 = vmatprep.subr.bf16.mxu0 0
    %6063 = vmatpush1.bf16.msra.mxu0 %v4750
    %6064 = vmatprep.subr.bf16.mxu0 0
    %6065 = vmatpush1.bf16.msra.mxu0 %v4757
    %6066 = vmatprep.mubr.bf16.mxu0 %v2682
    %6067 = vmatmul.mubr.bf16.gmra.mrb[0].mxu0 %v2681
    %v6068 = vpop.f32.mrb[0].mxu0
    %v6069 = vadd.f32 %v3230, %v6068
    %v6070 = vpop.f32.mrb[0].mxu0
    %v6071 = vpop.f32.mrb[0].mxu0
    %v6072 = vpop.f32.mrb[0].mxu0
    %6073 = vdwg.mxu0
    %6074 = vmatprep.subr.bf16.mxu0 0
    %6075 = vmatpush1.bf16.msra.mxu0 %v4764
    %6076 = vmatprep.subr.bf16.mxu0 0
    %6077 = vmatpush1.bf16.msra.mxu0 %v4771
    %6078 = vmatprep.subr.bf16.mxu0 0
    %6079 = vmatpush1.bf16.msra.mxu0 %v4778
    %6080 = vmatprep.subr.bf16.mxu0 0
    %6081 = vmatpush1.bf16.msra.mxu0 %v4785
    %6082 = vmatprep.subr.bf16.mxu0 0
    %6083 = vmatpush1.bf16.msra.mxu0 %v4792
    %6084 = vmatprep.subr.bf16.mxu0 0
    %6085 = vmatpush1.bf16.msra.mxu0 %v4799
    %6086 = vmatprep.subr.bf16.mxu0 0
    %6087 = vmatpush1.bf16.msra.mxu0 %v4806
    %6088 = vmatprep.subr.bf16.mxu0 0
    %6089 = vmatpush1.bf16.msra.mxu0 %v4813
    %6090 = vmatprep.subr.bf16.mxu0 0
    %6091 = vmatpush1.bf16.msra.mxu0 %v4820
    %6092 = vmatprep.subr.bf16.mxu0 0
    %6093 = vmatpush1.bf16.msra.mxu0 %v4827
    %6094 = vmatprep.subr.bf16.mxu0 0
    %6095 = vmatpush1.bf16.msra.mxu0 %v4834
    %6096 = vmatprep.subr.bf16.mxu0 0
    %6097 = vmatpush1.bf16.msra.mxu0 %v4841
    %6098 = vmatprep.subr.bf16.mxu0 0
    %6099 = vmatpush1.bf16.msra.mxu0 %v4848
    %6100 = vmatprep.subr.bf16.mxu0 0
    %6101 = vmatpush1.bf16.msra.mxu0 %v4855
    %6102 = vmatprep.subr.bf16.mxu0 0
    %6103 = vmatpush1.bf16.msra.mxu0 %v4862
    %6104 = vmatprep.subr.bf16.mxu0 0
    %6105 = vmatpush1.bf16.msra.mxu0 %v4869
    %6106 = vmatprep.mubr.bf16.mxu0 %v2684
    %6107 = vmatmul.mubr.bf16.gmra.mrb[0].mxu0 %v2683
    %v6108 = vpop.f32.mrb[0].mxu0
    %v6109 = vadd.f32 %v6069, %v6108
    %v6110 = vpop.f32.mrb[0].mxu0
    %v6111 = vpop.f32.mrb[0].mxu0
    %v6112 = vpop.f32.mrb[0].mxu0
    %6113 = vdwg.mxu0
    %6114 = vmatprep.subr.bf16.mxu0 0
    %6115 = vmatpush1.bf16.msra.mxu0 %v4876
    %6116 = vmatprep.subr.bf16.mxu0 0
    %6117 = vmatpush1.bf16.msra.mxu0 %v4883
    %6118 = vmatprep.subr.bf16.mxu0 0
    %6119 = vmatpush1.bf16.msra.mxu0 %v4890
    %6120 = vmatprep.subr.bf16.mxu0 0
    %6121 = vmatpush1.bf16.msra.mxu0 %v4897
    %6122 = vmatprep.subr.bf16.mxu0 0
    %6123 = vmatpush1.bf16.msra.mxu0 %v4904
    %6124 = vmatprep.subr.bf16.mxu0 0
    %6125 = vmatpush1.bf16.msra.mxu0 %v4911
    %6126 = vmatprep.subr.bf16.mxu0 0
    %6127 = vmatpush1.bf16.msra.mxu0 %v4918
    %6128 = vmatprep.subr.bf16.mxu0 0
    %6129 = vmatpush1.bf16.msra.mxu0 %v4925
    %6130 = vmatprep.subr.bf16.mxu0 0
    %6131 = vmatpush1.bf16.msra.mxu0 %v4932
    %6132 = vmatprep.subr.bf16.mxu0 0
    %6133 = vmatpush1.bf16.msra.mxu0 %v4939
    %6134 = vmatprep.subr.bf16.mxu0 0
    %6135 = vmatpush1.bf16.msra.mxu0 %v4946
    %6136 = vmatprep.subr.bf16.mxu0 0
    %6137 = vmatpush1.bf16.msra.mxu0 %v4953
    %6138 = vmatprep.subr.bf16.mxu0 0
    %6139 = vmatpush1.bf16.msra.mxu0 %v4960
    %6140 = vmatprep.subr.bf16.mxu0 0
    %6141 = vmatpush1.bf16.msra.mxu0 %v4967
    %6142 = vmatprep.subr.bf16.mxu0 0
    %6143 = vmatpush1.bf16.msra.mxu0 %v4974
    %6144 = vmatprep.subr.bf16.mxu0 0
    %6145 = vmatpush1.bf16.msra.mxu0 %v4981
    %6146 = vmatprep.mubr.bf16.mxu0 %v2686
    %6147 = vmatmul.mubr.bf16.gmra.mrb[0].mxu0 %v2685
    %v6148 = vpop.f32.mrb[0].mxu0
    %v6149 = vadd.f32 %v6109, %v6148
    %v6150 = vpop.f32.mrb[0].mxu0
    %v6151 = vpop.f32.mrb[0].mxu0
    %v6152 = vpop.f32.mrb[0].mxu0
    %6153 = vdwg.mxu0
    %6154 = vmatprep.subr.bf16.mxu0 0
    %6155 = vmatpush1.bf16.msra.mxu0 %v4988
    %6156 = vmatprep.subr.bf16.mxu0 0
    %6157 = vmatpush1.bf16.msra.mxu0 %v4995
    %6158 = vmatprep.subr.bf16.mxu0 0
    %6159 = vmatpush1.bf16.msra.mxu0 %v5002
    %6160 = vmatprep.subr.bf16.mxu0 0
    %6161 = vmatpush1.bf16.msra.mxu0 %v5009
    %6162 = vmatprep.subr.bf16.mxu0 0
    %6163 = vmatpush1.bf16.msra.mxu0 %v5016
    %6164 = vmatprep.subr.bf16.mxu0 0
    %6165 = vmatpush1.bf16.msra.mxu0 %v5023
    %6166 = vmatprep.subr.bf16.mxu0 0
    %6167 = vmatpush1.bf16.msra.mxu0 %v5030
    %6168 = vmatprep.subr.bf16.mxu0 0
    %6169 = vmatpush1.bf16.msra.mxu0 %v5037
    %6170 = vmatprep.subr.bf16.mxu0 0
    %6171 = vmatpush1.bf16.msra.mxu0 %v5044
    %6172 = vmatprep.subr.bf16.mxu0 0
    %6173 = vmatpush1.bf16.msra.mxu0 %v5051
    %6174 = vmatprep.subr.bf16.mxu0 0
    %6175 = vmatpush1.bf16.msra.mxu0 %v5058
    %6176 = vmatprep.subr.bf16.mxu0 0
    %6177 = vmatpush1.bf16.msra.mxu0 %v5065
    %6178 = vmatprep.subr.bf16.mxu0 0
    %6179 = vmatpush1.bf16.msra.mxu0 %v5072
    %6180 = vmatprep.subr.bf16.mxu0 0
    %6181 = vmatpush1.bf16.msra.mxu0 %v5079
    %6182 = vmatprep.subr.bf16.mxu0 0
    %6183 = vmatpush1.bf16.msra.mxu0 %v5086
    %6184 = vmatprep.subr.bf16.mxu0 0
    %6185 = vmatpush1.bf16.msra.mxu0 %v5093
    %6186 = vmatprep.mubr.bf16.mxu0 %v2688
    %6187 = vmatmul.mubr.bf16.gmra.mrb[0].mxu0 %v2687
    %v6188 = vpop.f32.mrb[0].mxu0
    %v6189 = vadd.f32 %v6149, %v6188
    %v6190 = vpop.f32.mrb[0].mxu0
    %v6191 = vpop.f32.mrb[0].mxu0
    %v6192 = vpop.f32.mrb[0].mxu0
    %6193 = vdwg.mxu0
    %v6194 = vtanh.pop %v5700
    %v6195 = vtanh.pop %v5702
    %v6196 = vtanh.pop %v5864
    %v6197 = vtanh.pop %v5866
    %v6198 = vtanh.pop %v6028
    %v6199 = vtanh.pop %v6030
    %v6200 = vtanh.pop %v6189
    %6201 = vst [vmem:[#allocation17] sm:$0xff] %v6194
    %6202 = vst [vmem:[#allocation17 + $0x8] sm:$0xff] %v6195
    %6203 = vst [vmem:[#allocation17 + $0x10] sm:$0xff] %v6196
    %6204 = vst [vmem:[#allocation17 + $0x18] sm:$0xff] %v6197
    %6205 = vst [vmem:[#allocation17 + $0x20] sm:$0xff] %v6198
    %6206 = vst [vmem:[#allocation17 + $0x28] sm:$0xff] %v6199
    %6207 = vst [vmem:[#allocation17 + $0x30] sm:$0xff] %v6200
    // Predicated region
    $region74: #{tpu_custom_call.1} parent=1 // pred_check
      _
    $region75: #{tpu_custom_call.1} parent=1 // pred_check_branch
      %6209 = sbr.rel (0) target = $region77
    $region76: #{tpu_custom_call.1} parent=1 // pred_region
      %s6211 = ssub.s32 896, 896
      %6212 = vsyncadd [#allocation4], %s6211
      %s6214 = sshll.u32 [#allocation17], 4
      %s6215 = int_to_ptr.vmem [resolvable:$true] %s6214
      %6217 = dma.vmem_to_hbm [thread:$0]  %s6215, 896, %s9, [#allocation4]
    $region77: #{tpu_custom_call.1} parent=1 // pred_fallthru
      _
    // Predicated region
    $region78: #{tpu_custom_call.1} parent=1 // pred_check
      _
    $region79: #{tpu_custom_call.1} parent=1 // pred_check_branch
      %6219 = sbr.rel (0) target = $region81
    $region80: #{tpu_custom_call.1} parent=1 // pred_region
      %6220 = dma.done [#allocation4], 896
    $region81: #{tpu_custom_call.1} parent=1 // pred_fallthru
      _
    %6221 = vsyncpa [#allocation3], 1
    %6222 = vsyncpa [#allocation6], 1
    %6223 = vsyncpa [#allocation9], 1
    %6224 = vsyncpa [#allocation12], 1
    %6225 = vsyncpa [#allocation15], 1
    %6226 = vsyncpa [#allocation4], 1

// kernel: tpu_custom_call.1
$region0: #{tpu_custom_call.1}
  #allocation0 [shape = 'u32[]', space=smem, size = 0x4, offset = 0x4, fixed_abs, tag = 'smem constant byte address 0x4 - core index']
  #allocation1 [shape = 'u32[144,128]{1,0:T(1,128)}', space=vmem, size = 0x12000, scoped, tag = 'internal scratch']
  %s0 = inlined_call_operand.hbm [shape: f32[8,64], index: 0, kind: input, shape index: {}]
  %s1 = inlined_call_operand.hbm [shape: bf16[64,256], index: 1, kind: input, shape index: {}]
  %s2 = inlined_call_operand.hbm [shape: f32[1,256], index: 2, kind: input, shape index: {}]
  %s3 = inlined_call_operand.hbm [shape: bf16[256,512], index: 3, kind: input, shape index: {}]
  %s4 = inlined_call_operand.hbm [shape: f32[1,512], index: 4, kind: input, shape index: {}]
  %s5 = inlined_call_operand.hbm [shape: bf16[512,1024], index: 5, kind: input, shape index: {}]
  %s6 = inlined_call_operand.hbm [shape: f32[1,1024], index: 6, kind: input, shape index: {}]
  %s7 = inlined_call_operand.hbm [shape: bf16[1024,896], index: 7, kind: input, shape index: {}]
  %s8 = inlined_call_operand.hbm [shape: f32[1,896], index: 8, kind: input, shape index: {}]
  %s9 = inlined_call_operand.hbm [shape: f32[8,896], index: 9, kind: output, shape index: {}]
  %s10 = sld [smem:[#allocation0]]
  $region82: #{tpu_custom_call.1} parent=0
    _
  %s12 = ssub.s32 1, %s10
  %s13 = scalar_select 0, %s12, %s10
  $region1: #{tpu_custom_call.1} parent=0
    #allocation2 [shape = 'u8[4096]{0}', space=vmem, size = 0x1000, scoped, tag = 'input window, operand 0, single buffered']
    #allocation3 [shape = 's32[1]{0}', space=sflag, size = 0x4, scoped, tag = 'scoped memory for tpu_custom_call.1']
    #allocation4 [shape = 's32[1]{0}', space=sflag, size = 0x4, scoped, tag = 'scoped memory for tpu_custom_call.1']
    #allocation5 [shape = 'u8[32768]{0}', space=vmem, size = 0x8000, scoped, tag = 'input window, operand 1, single buffered']
    #allocation6 [shape = 's32[1]{0}', space=sflag, size = 0x4, scoped, tag = 'scoped memory for tpu_custom_call.1']
    #allocation7 [shape = 'u8[1024]{0}', space=vmem, size = 0x400, scoped, tag = 'input window, operand 2, single buffered']
    #allocation8 [shape = 'u8[262144]{0}', space=vmem, size = 0x40000, scoped, tag = 'input window, operand 3, single buffered']
    #allocation9 [shape = 's32[1]{0}', space=sflag, size = 0x4, scoped, tag = 'scoped memory for tpu_custom_call.1']
    #allocation10 [shape = 'u8[2048]{0}', space=vmem, size = 0x800, scoped, tag = 'input window, operand 4, single buffered']
    #allocation11 [shape = 'u8[1048576]{0}', space=vmem, size = 0x100000, scoped, tag = 'input window, operand 5, single buffered']
    #allocation12 [shape = 's32[1]{0}', space=sflag, size = 0x4, scoped, tag = 'scoped memory for tpu_custom_call.1']
    #allocation13 [shape = 'u8[4096]{0}', space=vmem, size = 0x1000, scoped, tag = 'input window, operand 6, single buffered']
    #allocation14 [shape = 'u8[1835008]{0}', space=vmem, size = 0x1c0000, scoped, tag = 'input window, operand 7, single buffered']
    #allocation15 [shape = 's32[1]{0}', space=sflag, size = 0x4, scoped, tag = 'scoped memory for tpu_custom_call.1']
    #allocation16 [shape = 'u8[3584]{0}', space=vmem, size = 0x1000, scoped, tag = 'input window, operand 8, single buffered']
    #allocation17 [shape = 'u8[28672]{0}', space=vmem, size = 0x7000, scoped, tag = 'output window, operand 0, single buffered']
    %14 = vsyncpa [#allocation3], 0
    %15 = vsyncpa [#allocation6], 0
    %16 = vsyncpa [#allocation9], 0
    %17 = vsyncpa [#allocation12], 0
    %18 = vsyncpa [#allocation15], 0
    %19 = vsyncpa [#allocation4], 0
    // Predicated region
    $region2: #{tpu_custom_call.1} parent=1 // pred_check
      _
    $region3: #{tpu_custom_call.1} parent=1 // pred_check_branch
      %21 = sbr.rel (0) target = $region5
    $region4: #{tpu_custom_call.1} parent=1 // pred_region
      %s23 = ssub.s32 128, 128
      %24 = vsyncadd [#allocation3], %s23
      %s26 = sshll.u32 [#allocation2], 4
      %s27 = int_to_ptr.vmem [resolvable:$true] %s26
      %29 = dma.hbm_to_vmem [thread:$0]  %s0, 128, %s27, [#allocation3]
    $region5: #{tpu_custom_call.1} parent=1 // pred_fallthru
      _
    // Predicated region
    $region6: #{tpu_custom_call.1} parent=1 // pred_check
      _
    $region7: #{tpu_custom_call.1} parent=1 // pred_check_branch
      %31 = sbr.rel (0) target = $region9
    $region8: #{tpu_custom_call.1} parent=1 // pred_region
      %s33 = ssub.s32 1024, 1024
      %34 = vsyncadd [#allocation6], %s33
      %s35 = sshll.u32 [#allocation5], 4
      %s36 = int_to_ptr.vmem [resolvable:$true] %s35
      %41 = dma.hbm_to_vmem [thread:$0]  %s1, 1024, %s36, [#allocation6], 128, 128, 8
    $region9: #{tpu_custom_call.1} parent=1 // pred_fallthru
      _
    // Predicated region
    $region10: #{tpu_custom_call.1} parent=1 // pred_check
      _
    $region11: #{tpu_custom_call.1} parent=1 // pred_check_branch
      %43 = sbr.rel (0) target = $region13
    $region12: #{tpu_custom_call.1} parent=1 // pred_region
      %s45 = ssub.s32 32, 32
      %46 = vsyncadd [#allocation6], %s45
      %s48 = sshll.u32 [#allocation7], 4
      %s49 = int_to_ptr.vmem [resolvable:$true] %s48
      %51 = dma.hbm_to_vmem [thread:$0]  %s2, 32, %s49, [#allocation6]
    $region13: #{tpu_custom_call.1} parent=1 // pred_fallthru
      _
    // Predicated region
    $region14: #{tpu_custom_call.1} parent=1 // pred_check
      _
    $region15: #{tpu_custom_call.1} parent=1 // pred_check_branch
      %53 = sbr.rel (0) target = $region17
    $region16: #{tpu_custom_call.1} parent=1 // pred_region
      %s55 = ssub.s32 8192, 8192
      %56 = vsyncadd [#allocation9], %s55
      %s57 = sshll.u32 [#allocation8], 4
      %s58 = int_to_ptr.vmem [resolvable:$true] %s57
      %63 = dma.hbm_to_vmem [thread:$0]  %s3, 8192, %s58, [#allocation9], 256, 256, 16
    $region17: #{tpu_custom_call.1} parent=1 // pred_fallthru
      _
    // Predicated region
    $region18: #{tpu_custom_call.1} parent=1 // pred_check
      _
    $region19: #{tpu_custom_call.1} parent=1 // pred_check_branch
      %65 = sbr.rel (0) target = $region21
    $region20: #{tpu_custom_call.1} parent=1 // pred_region
      %s67 = ssub.s32 64, 64
      %68 = vsyncadd [#allocation9], %s67
      %s70 = sshll.u32 [#allocation10], 4
      %s71 = int_to_ptr.vmem [resolvable:$true] %s70
      %73 = dma.hbm_to_vmem [thread:$0]  %s4, 64, %s71, [#allocation9]
    $region21: #{tpu_custom_call.1} parent=1 // pred_fallthru
      _
    // Predicated region
    $region22: #{tpu_custom_call.1} parent=1 // pred_check
      _
    $region23: #{tpu_custom_call.1} parent=1 // pred_check_branch
      %75 = sbr.rel (0) target = $region25
    $region24: #{tpu_custom_call.1} parent=1 // pred_region
      %s77 = ssub.s32 32768, 32768
      %78 = vsyncadd [#allocation12], %s77
      %s79 = sshll.u32 [#allocation11], 4
      %s80 = int_to_ptr.vmem [resolvable:$true] %s79
      %85 = dma.hbm_to_vmem [thread:$0]  %s5, 32768, %s80, [#allocation12], 512, 512, 32
    $region25: #{tpu_custom_call.1} parent=1 // pred_fallthru
      _
    // Predicated region
    $region26: #{tpu_custom_call.1} parent=1 // pred_check
      _
    $region27: #{tpu_custom_call.1} parent=1 // pred_check_branch
      %87 = sbr.rel (0) target = $region29
    $region28: #{tpu_custom_call.1} parent=1 // pred_region
      %s89 = ssub.s32 128, 128
      %90 = vsyncadd [#allocation12], %s89
      %s92 = sshll.u32 [#allocation13], 4
      %s93 = int_to_ptr.vmem [resolvable:$true] %s92
      %95 = dma.hbm_to_vmem [thread:$0]  %s6, 128, %s93, [#allocation12]
    $region29: #{tpu_custom_call.1} parent=1 // pred_fallthru
      _
    // Predicated region
    $region30: #{tpu_custom_call.1} parent=1 // pred_check
      _
    $region31: #{tpu_custom_call.1} parent=1 // pred_check_branch
      %97 = sbr.rel (0) target = $region33
    $region32: #{tpu_custom_call.1} parent=1 // pred_region
      %s99 = ssub.s32 57344, 57344
      %100 = vsyncadd [#allocation15], %s99
      %s101 = sshll.u32 [#allocation14], 4
      %s102 = int_to_ptr.vmem [resolvable:$true] %s101
      %107 = dma.hbm_to_vmem [thread:$0]  %s7, 57344, %s102, [#allocation15], 448, 448, 28
    $region33: #{tpu_custom_call.1} parent=1 // pred_fallthru
      _
    // Predicated region
    $region34: #{tpu_custom_call.1} parent=1 // pred_check
      _
    $region35: #{tpu_custom_call.1} parent=1 // pred_check_branch
      %109 = sbr.rel (0) target = $region37
    $region36: #{tpu_custom_call.1} parent=1 // pred_region
      %s111 = ssub.s32 112, 112
      %112 = vsyncadd [#allocation15], %s111
      %s114 = sshll.u32 [#allocation16], 4
      %s115 = int_to_ptr.vmem [resolvable:$true] %s114
      %117 = dma.hbm_to_vmem [thread:$0]  %s8, 112, %s115, [#allocation15]
    $region37: #{tpu_custom_call.1} parent=1 // pred_fallthru
      _
    // Predicated region
    $region38: #{tpu_custom_call.1} parent=1 // pred_check
      _
    $region39: #{tpu_custom_call.1} parent=1 // pred_check_branch
      %119 = sbr.rel (0) target = $region41
    $region40: #{tpu_custom_call.1} parent=1 // pred_region
      %120 = dma.done [#allocation3], 128
    $region41: #{tpu_custom_call.1} parent=1 // pred_fallthru
      _
    // Predicated region
    $region42: #{tpu_custom_call.1} parent=1 // pred_check
      _
    $region43: #{tpu_custom_call.1} parent=1 // pred_check_branch
      %122 = sbr.rel (0) target = $region45
    $region44: #{tpu_custom_call.1} parent=1 // pred_region
      %123 = dma.done [#allocation6], 1024
    $region45: #{tpu_custom_call.1} parent=1 // pred_fallthru
      _
    // Predicated region
    $region46: #{tpu_custom_call.1} parent=1 // pred_check
      _
    $region47: #{tpu_custom_call.1} parent=1 // pred_check_branch
      %125 = sbr.rel (0) target = $region49
    $region48: #{tpu_custom_call.1} parent=1 // pred_region
      %126 = dma.done [#allocation6], 32
    $region49: #{tpu_custom_call.1} parent=1 // pred_fallthru
      _
    // Predicated region
    $region50: #{tpu_custom_call.1} parent=1 // pred_check
      _
    $region51: #{tpu_custom_call.1} parent=1 // pred_check_branch
      %128 = sbr.rel (0) target = $region53
    $region52: #{tpu_custom_call.1} parent=1 // pred_region
      %129 = dma.done [#allocation9], 8192
    $region53: #{tpu_custom_call.1} parent=1 // pred_fallthru
      _
    // Predicated region
    $region54: #{tpu_custom_call.1} parent=1 // pred_check
      _
    $region55: #{tpu_custom_call.1} parent=1 // pred_check_branch
      %131 = sbr.rel (0) target = $region57
    $region56: #{tpu_custom_call.1} parent=1 // pred_region
      %132 = dma.done [#allocation9], 64
    $region57: #{tpu_custom_call.1} parent=1 // pred_fallthru
      _
    // Predicated region
    $region58: #{tpu_custom_call.1} parent=1 // pred_check
      _
    $region59: #{tpu_custom_call.1} parent=1 // pred_check_branch
      %134 = sbr.rel (0) target = $region61
    $region60: #{tpu_custom_call.1} parent=1 // pred_region
      %135 = dma.done [#allocation12], 32768
    $region61: #{tpu_custom_call.1} parent=1 // pred_fallthru
      _
    // Predicated region
    $region62: #{tpu_custom_call.1} parent=1 // pred_check
      _
    $region63: #{tpu_custom_call.1} parent=1 // pred_check_branch
      %137 = sbr.rel (0) target = $region65
    $region64: #{tpu_custom_call.1} parent=1 // pred_region
      %138 = dma.done [#allocation12], 128
    $region65: #{tpu_custom_call.1} parent=1 // pred_fallthru
      _
    // Predicated region
    $region66: #{tpu_custom_call.1} parent=1 // pred_check
      _
    $region67: #{tpu_custom_call.1} parent=1 // pred_check_branch
      %140 = sbr.rel (0) target = $region69
    $region68: #{tpu_custom_call.1} parent=1 // pred_region
      %141 = dma.done [#allocation15], 57344
    $region69: #{tpu_custom_call.1} parent=1 // pred_fallthru
      _
    // Predicated region
    $region70: #{tpu_custom_call.1} parent=1 // pred_check
      _
    $region71: #{tpu_custom_call.1} parent=1 // pred_check_branch
      %143 = sbr.rel (0) target = $region73
    $region72: #{tpu_custom_call.1} parent=1 // pred_region
      %144 = dma.done [#allocation15], 112
    $region73: #{tpu_custom_call.1} parent=1 // pred_fallthru
      _
    %v146 = vld [vmem:[#allocation2] sm:$0xff]
    %v147 = vpack.c.bf16 %v146, %v146
    %v148 = vld [vmem:[#allocation5] sm:$0xff]
    %v149 = vld [vmem:[#allocation5 + $0x8] sm:$0xff]
    %v150 = vld [vmem:[#allocation5 + $0x10] sm:$0xff]
    %v151 = vld [vmem:[#allocation5 + $0x18] sm:$0xff]
    %v152 = vld [vmem:[#allocation5 + $0x20] sm:$0xff]
    %v153 = vld [vmem:[#allocation5 + $0x28] sm:$0xff]
    %v154 = vld [vmem:[#allocation5 + $0x30] sm:$0xff]
    %v155 = vld [vmem:[#allocation5 + $0x38] sm:$0xff]
    %v156 = vld [vmem:[#allocation7] sm:$0x3]
    %v158 = vlaneseq
    %v159 = vshrl.u32 %v158, 7
    %v160 = vsub.s32 0, %v159
    %v161 = vrot.slane %v156, %v160
    %v162 = vlaneseq
    %v163 = vshrl.u32 %v162, 7
    %v164 = vsub.s32 1, %v163
    %v165 = vrot.slane %v156, %v164
    %v176 = vunpack.c.l.b16 %v148
    %v177 = vunpack.c.h.b16 %v148
    %v178 = vunpack.c.l.b16 %v149
    %v179 = vunpack.c.h.b16 %v149
    %v180 = vunpack.c.l.b16 %v150
    %v181 = vunpack.c.h.b16 %v150
    %v182 = vunpack.c.l.b16 %v151
    %v183 = vunpack.c.h.b16 %v151
    %v184 = vunpack.c.l.b16 %v152
    %v185 = vunpack.c.h.b16 %v152
    %v186 = vunpack.c.l.b16 %v153
    %v187 = vunpack.c.h.b16 %v153
    %v188 = vunpack.c.l.b16 %v154
    %v189 = vunpack.c.h.b16 %v154
    %v190 = vunpack.c.l.b16 %v155
    %v191 = vunpack.c.h.b16 %v155
    %v192 = vpack.c.b16 %v178, %v176
    %v193 = vpack.c.b16 %v179, %v177
    %v194 = vpack.c.b16 %v182, %v180
    %v195 = vpack.c.b16 %v183, %v181
    %v196 = vpack.c.b16 %v186, %v184
    %v197 = vpack.c.b16 %v187, %v185
    %v198 = vpack.c.b16 %v190, %v188
    %v199 = vpack.c.b16 %v191, %v189
    %vm208 = vcmask 523264
    %v210 = vsel %vm208, %v147, 0
    %212 = vmatprep.subr.bf16.mxu0 %v193
    %213 = vmatpush1.bf16.msra.mxu0 %v192
    %214 = vmatprep.subr.bf16.mxu0 %v195
    %215 = vmatpush1.bf16.msra.mxu0 %v194
    %216 = vmatprep.subr.bf16.mxu0 %v197
    %217 = vmatpush1.bf16.msra.mxu0 %v196
    %218 = vmatprep.subr.bf16.mxu0 %v199
    %219 = vmatpush1.bf16.msra.mxu0 %v198
    %220 = vmatprep.subr.bf16.mxu0 0
    %221 = vmatpush1.bf16.msra.mxu0 0
    %222 = vmatprep.subr.bf16.mxu0 0
    %223 = vmatpush1.bf16.msra.mxu0 0
    %224 = vmatprep.subr.bf16.mxu0 0
    %225 = vmatpush1.bf16.msra.mxu0 0
    %226 = vmatprep.subr.bf16.mxu0 0
    %227 = vmatpush1.bf16.msra.mxu0 0
    %228 = vmatprep.subr.bf16.mxu0 0
    %229 = vmatpush1.bf16.msra.mxu0 0
    %230 = vmatprep.subr.bf16.mxu0 0
    %231 = vmatpush1.bf16.msra.mxu0 0
    %232 = vmatprep.subr.bf16.mxu0 0
    %233 = vmatpush1.bf16.msra.mxu0 0
    %234 = vmatprep.subr.bf16.mxu0 0
    %235 = vmatpush1.bf16.msra.mxu0 0
    %236 = vmatprep.subr.bf16.mxu0 0
    %237 = vmatpush1.bf16.msra.mxu0 0
    %238 = vmatprep.subr.bf16.mxu0 0
    %239 = vmatpush1.bf16.msra.mxu0 0
    %240 = vmatprep.subr.bf16.mxu0 0
    %241 = vmatpush1.bf16.msra.mxu0 0
    %242 = vmatprep.subr.bf16.mxu0 0
    %243 = vmatpush1.bf16.msra.mxu0 0
    %244 = vmatprep.mubr.bf16.mxu0 0
    %245 = vmatmul.mubr.bf16.gmra.mrb[0].mxu0 %v210
    %v246 = vpop.f32.mrb[0].mxu0
    %v247 = vadd.f32 %v161, %v246
    %v248 = vpop.f32.mrb[0].mxu0
    %v249 = vadd.f32 %v165, %v248
    %v250 = vpop.f32.mrb[0].mxu0
    %v251 = vpop.f32.mrb[0].mxu0
    %252 = vdwg.mxu0
    %v253 = vmul.f32 %v247, 0.1
    %v254 = vmul.f32 %v249, 0.1
    %v255 = vmax.f32 %v247, %v253
    %v256 = vmax.f32 %v249, %v254
    %v257 = vpack.c.bf16 %v255, %v255
    %v258 = vpack.c.bf16 %v256, %v256
    %v259 = vld [vmem:[#allocation8] sm:$0xff]
    %v260 = vld [vmem:[#allocation8 + $0x8] sm:$0xff]
    %v261 = vld [vmem:[#allocation8 + $0x10] sm:$0xff]
    %v262 = vld [vmem:[#allocation8 + $0x18] sm:$0xff]
    %v263 = vld [vmem:[#allocation8 + $0x20] sm:$0xff]
    %v264 = vld [vmem:[#allocation8 + $0x28] sm:$0xff]
    %v265 = vld [vmem:[#allocation8 + $0x30] sm:$0xff]
    %v266 = vld [vmem:[#allocation8 + $0x38] sm:$0xff]
    %v267 = vld [vmem:[#allocation8 + $0x40] sm:$0xff]
    %v268 = vld [vmem:[#allocation8 + $0x48] sm:$0xff]
    %v269 = vld [vmem:[#allocation8 + $0x50] sm:$0xff]
    %v270 = vld [vmem:[#allocation8 + $0x58] sm:$0xff]
    %v271 = vld [vmem:[#allocation8 + $0x60] sm:$0xff]
    %v272 = vld [vmem:[#allocation8 + $0x68] sm:$0xff]
    %v273 = vld [vmem:[#allocation8 + $0x70] sm:$0xff]
    %v274 = vld [vmem:[#allocation8 + $0x78] sm:$0xff]
    %v275 = vld [vmem:[#allocation8 + $0x80] sm:$0xff]
    %v276 = vld [vmem:[#allocation8 + $0x88] sm:$0xff]
    %v277 = vld [vmem:[#allocation8 + $0x90] sm:$0xff]
    %v278 = vld [vmem:[#allocation8 + $0x98] sm:$0xff]
    %v279 = vld [vmem:[#allocation8 + $0xa0] sm:$0xff]
    %v280 = vld [vmem:[#allocation8 + $0xa8] sm:$0xff]
    %v281 = vld [vmem:[#allocation8 + $0xb0] sm:$0xff]
    %v282 = vld [vmem:[#allocation8 + $0xb8] sm:$0xff]
    %v283 = vld [vmem:[#allocation8 + $0xc0] sm:$0xff]
    %v284 = vld [vmem:[#allocation8 + $0xc8] sm:$0xff]
    %v285 = vld [vmem:[#allocation8 + $0xd0] sm:$0xff]
    %v286 = vld [vmem:[#allocation8 + $0xd8] sm:$0xff]
    %v287 = vld [vmem:[#allocation8 + $0xe0] sm:$0xff]
    %v288 = vld [vmem:[#allocation8 + $0xe8] sm:$0xff]
    %v289 = vld [vmem:[#allocation8 + $0xf0] sm:$0xff]
    %v290 = vld [vmem:[#allocation8 + $0xf8] sm:$0xff]
    %v291 = vld [vmem:[#allocation8 + $0x100] sm:$0xff]
    %v292 = vld [vmem:[#allocation8 + $0x108] sm:$0xff]
    %v293 = vld [vmem:[#allocation8 + $0x110] sm:$0xff]
    %v294 = vld [vmem:[#allocation8 + $0x118] sm:$0xff]
    %v295 = vld [vmem:[#allocation8 + $0x120] sm:$0xff]
    %v296 = vld [vmem:[#allocation8 + $0x128] sm:$0xff]
    %v297 = vld [vmem:[#allocation8 + $0x130] sm:$0xff]
    %v298 = vld [vmem:[#allocation8 + $0x138] sm:$0xff]
    %v299 = vld [vmem:[#allocation8 + $0x140] sm:$0xff]
    %v300 = vld [vmem:[#allocation8 + $0x148] sm:$0xff]
    %v301 = vld [vmem:[#allocation8 + $0x150] sm:$0xff]
    %v302 = vld [vmem:[#allocation8 + $0x158] sm:$0xff]
    %v303 = vld [vmem:[#allocation8 + $0x160] sm:$0xff]
    %v304 = vld [vmem:[#allocation8 + $0x168] sm:$0xff]
    %v305 = vld [vmem:[#allocation8 + $0x170] sm:$0xff]
    %v306 = vld [vmem:[#allocation8 + $0x178] sm:$0xff]
    %v307 = vld [vmem:[#allocation8 + $0x180] sm:$0xff]
    %v308 = vld [vmem:[#allocation8 + $0x188] sm:$0xff]
    %v309 = vld [vmem:[#allocation8 + $0x190] sm:$0xff]
    %v310 = vld [vmem:[#allocation8 + $0x198] sm:$0xff]
    %v311 = vld [vmem:[#allocation8 + $0x1a0] sm:$0xff]
    %v312 = vld [vmem:[#allocation8 + $0x1a8] sm:$0xff]
    %v313 = vld [vmem:[#allocation8 + $0x1b0] sm:$0xff]
    %v314 = vld [vmem:[#allocation8 + $0x1b8] sm:$0xff]
    %v315 = vld [vmem:[#allocation8 + $0x1c0] sm:$0xff]
    %v316 = vld [vmem:[#allocation8 + $0x1c8] sm:$0xff]
    %v317 = vld [vmem:[#allocation8 + $0x1d0] sm:$0xff]
    %v318 = vld [vmem:[#allocation8 + $0x1d8] sm:$0xff]
    %v319 = vld [vmem:[#allocation8 + $0x1e0] sm:$0xff]
    %v320 = vld [vmem:[#allocation8 + $0x1e8] sm:$0xff]
    %v321 = vld [vmem:[#allocation8 + $0x1f0] sm:$0xff]
    %v322 = vld [vmem:[#allocation8 + $0x1f8] sm:$0xff]
    %v323 = vld [vmem:[#allocation10] sm:$0xf]
    %v325 = vlaneseq
    %v326 = vshrl.u32 %v325, 7
    %v327 = vsub.s32 0, %v326
    %v328 = vrot.slane %v323, %v327
    %v329 = vlaneseq
    %v330 = vshrl.u32 %v329, 7
    %v331 = vsub.s32 1, %v330
    %v332 = vrot.slane %v323, %v331
    %v333 = vlaneseq
    %v334 = vshrl.u32 %v333, 7
    %v335 = vsub.s32 2, %v334
    %v336 = vrot.slane %v323, %v335
    %v337 = vlaneseq
    %v338 = vshrl.u32 %v337, 7
    %v339 = vsub.s32 3, %v338
    %v340 = vrot.slane %v323, %v339
    %v409 = vunpack.c.l.b16 %v259
    %v410 = vunpack.c.h.b16 %v259
    %v411 = vunpack.c.l.b16 %v260
    %v412 = vunpack.c.h.b16 %v260
    %v413 = vunpack.c.l.b16 %v261
    %v414 = vunpack.c.h.b16 %v261
    %v415 = vunpack.c.l.b16 %v262
    %v416 = vunpack.c.h.b16 %v262
    %v417 = vunpack.c.l.b16 %v263
    %v418 = vunpack.c.h.b16 %v263
    %v419 = vunpack.c.l.b16 %v264
    %v420 = vunpack.c.h.b16 %v264
    %v421 = vunpack.c.l.b16 %v265
    %v422 = vunpack.c.h.b16 %v265
    %v423 = vunpack.c.l.b16 %v266
    %v424 = vunpack.c.h.b16 %v266
    %v425 = vunpack.c.l.b16 %v267
    %v426 = vunpack.c.h.b16 %v267
    %v427 = vunpack.c.l.b16 %v268
    %v428 = vunpack.c.h.b16 %v268
    %v429 = vunpack.c.l.b16 %v269
    %v430 = vunpack.c.h.b16 %v269
    %v431 = vunpack.c.l.b16 %v270
    %v432 = vunpack.c.h.b16 %v270
    %v433 = vunpack.c.l.b16 %v271
    %v434 = vunpack.c.h.b16 %v271
    %v435 = vunpack.c.l.b16 %v272
    %v436 = vunpack.c.h.b16 %v272
    %v437 = vunpack.c.l.b16 %v273
    %v438 = vunpack.c.h.b16 %v273
    %v439 = vunpack.c.l.b16 %v274
    %v440 = vunpack.c.h.b16 %v274
    %v441 = vunpack.c.l.b16 %v275
    %v442 = vunpack.c.h.b16 %v275
    %v443 = vunpack.c.l.b16 %v276
    %v444 = vunpack.c.h.b16 %v276
    %v445 = vunpack.c.l.b16 %v277
    %v446 = vunpack.c.h.b16 %v277
    %v447 = vunpack.c.l.b16 %v278
    %v448 = vunpack.c.h.b16 %v278
    %v449 = vunpack.c.l.b16 %v279
    %v450 = vunpack.c.h.b16 %v279
    %v451 = vunpack.c.l.b16 %v280
    %v452 = vunpack.c.h.b16 %v280
    %v453 = vunpack.c.l.b16 %v281
    %v454 = vunpack.c.h.b16 %v281
    %v455 = vunpack.c.l.b16 %v282
    %v456 = vunpack.c.h.b16 %v282
    %v457 = vunpack.c.l.b16 %v283
    %v458 = vunpack.c.h.b16 %v283
    %v459 = vunpack.c.l.b16 %v284
    %v460 = vunpack.c.h.b16 %v284
    %v461 = vunpack.c.l.b16 %v285
    %v462 = vunpack.c.h.b16 %v285
    %v463 = vunpack.c.l.b16 %v286
    %v464 = vunpack.c.h.b16 %v286
    %v465 = vunpack.c.l.b16 %v287
    %v466 = vunpack.c.h.b16 %v287
    %v467 = vunpack.c.l.b16 %v288
    %v468 = vunpack.c.h.b16 %v288
    %v469 = vunpack.c.l.b16 %v289
    %v470 = vunpack.c.h.b16 %v289
    %v471 = vunpack.c.l.b16 %v290
    %v472 = vunpack.c.h.b16 %v290
    %v473 = vunpack.c.l.b16 %v291
    %v474 = vunpack.c.h.b16 %v291
    %v475 = vunpack.c.l.b16 %v292
    %v476 = vunpack.c.h.b16 %v292
    %v477 = vunpack.c.l.b16 %v293
    %v478 = vunpack.c.h.b16 %v293
    %v479 = vunpack.c.l.b16 %v294
    %v480 = vunpack.c.h.b16 %v294
    %v481 = vunpack.c.l.b16 %v295
    %v482 = vunpack.c.h.b16 %v295
    %v483 = vunpack.c.l.b16 %v296
    %v484 = vunpack.c.h.b16 %v296
    %v485 = vunpack.c.l.b16 %v297
    %v486 = vunpack.c.h.b16 %v297
    %v487 = vunpack.c.l.b16 %v298
    %v488 = vunpack.c.h.b16 %v298
    %v489 = vunpack.c.l.b16 %v299
    %v490 = vunpack.c.h.b16 %v299
    %v491 = vunpack.c.l.b16 %v300
    %v492 = vunpack.c.h.b16 %v300
    %v493 = vunpack.c.l.b16 %v301
    %v494 = vunpack.c.h.b16 %v301
    %v495 = vunpack.c.l.b16 %v302
    %v496 = vunpack.c.h.b16 %v302
    %v497 = vunpack.c.l.b16 %v303
    %v498 = vunpack.c.h.b16 %v303
    %v499 = vunpack.c.l.b16 %v304
    %v500 = vunpack.c.h.b16 %v304
    %v501 = vunpack.c.l.b16 %v305
    %v502 = vunpack.c.h.b16 %v305
    %v503 = vunpack.c.l.b16 %v306
    %v504 = vunpack.c.h.b16 %v306
    %v505 = vunpack.c.l.b16 %v307
    %v506 = vunpack.c.h.b16 %v307
    %v507 = vunpack.c.l.b16 %v308
    %v508 = vunpack.c.h.b16 %v308
    %v509 = vunpack.c.l.b16 %v309
    %v510 = vunpack.c.h.b16 %v309
    %v511 = vunpack.c.l.b16 %v310
    %v512 = vunpack.c.h.b16 %v310
    %v513 = vunpack.c.l.b16 %v311
    %v514 = vunpack.c.h.b16 %v311
    %v515 = vunpack.c.l.b16 %v312
    %v516 = vunpack.c.h.b16 %v312
    %v517 = vunpack.c.l.b16 %v313
    %v518 = vunpack.c.h.b16 %v313
    %v519 = vunpack.c.l.b16 %v314
    %v520 = vunpack.c.h.b16 %v314
    %v521 = vunpack.c.l.b16 %v315
    %v522 = vunpack.c.h.b16 %v315
    %v523 = vunpack.c.l.b16 %v316
    %v524 = vunpack.c.h.b16 %v316
    %v525 = vunpack.c.l.b16 %v317
    %v526 = vunpack.c.h.b16 %v317
    %v527 = vunpack.c.l.b16 %v318
    %v528 = vunpack.c.h.b16 %v318
    %v529 = vunpack.c.l.b16 %v319
    %v530 = vunpack.c.h.b16 %v319
    %v531 = vunpack.c.l.b16 %v320
    %v532 = vunpack.c.h.b16 %v320
    %v533 = vunpack.c.l.b16 %v321
    %v534 = vunpack.c.h.b16 %v321
    %v535 = vunpack.c.l.b16 %v322
    %v536 = vunpack.c.h.b16 %v322
    %v537 = vpack.c.b16 %v413, %v409
    %v538 = vpack.c.b16 %v414, %v410
    %v539 = vpack.c.b16 %v415, %v411
    %v540 = vpack.c.b16 %v416, %v412
    %v541 = vpack.c.b16 %v421, %v417
    %v542 = vpack.c.b16 %v422, %v418
    %v543 = vpack.c.b16 %v423, %v419
    %v544 = vpack.c.b16 %v424, %v420
    %v545 = vpack.c.b16 %v429, %v425
    %v546 = vpack.c.b16 %v430, %v426
    %v547 = vpack.c.b16 %v431, %v427
    %v548 = vpack.c.b16 %v432, %v428
    %v549 = vpack.c.b16 %v437, %v433
    %v550 = vpack.c.b16 %v438, %v434
    %v551 = vpack.c.b16 %v439, %v435
    %v552 = vpack.c.b16 %v440, %v436
    %v553 = vpack.c.b16 %v445, %v441
    %v554 = vpack.c.b16 %v446, %v442
    %v555 = vpack.c.b16 %v447, %v443
    %v556 = vpack.c.b16 %v448, %v444
    %v557 = vpack.c.b16 %v453, %v449
    %v558 = vpack.c.b16 %v454, %v450
    %v559 = vpack.c.b16 %v455, %v451
    %v560 = vpack.c.b16 %v456, %v452
    %v561 = vpack.c.b16 %v461, %v457
    %v562 = vpack.c.b16 %v462, %v458
    %v563 = vpack.c.b16 %v463, %v459
    %v564 = vpack.c.b16 %v464, %v460
    %v565 = vpack.c.b16 %v469, %v465
    %v566 = vpack.c.b16 %v470, %v466
    %v567 = vpack.c.b16 %v471, %v467
    %v568 = vpack.c.b16 %v472, %v468
    %v569 = vpack.c.b16 %v477, %v473
    %v570 = vpack.c.b16 %v478, %v474
    %v571 = vpack.c.b16 %v479, %v475
    %v572 = vpack.c.b16 %v480, %v476
    %v573 = vpack.c.b16 %v485, %v481
    %v574 = vpack.c.b16 %v486, %v482
    %v575 = vpack.c.b16 %v487, %v483
    %v576 = vpack.c.b16 %v488, %v484
    %v577 = vpack.c.b16 %v493, %v489
    %v578 = vpack.c.b16 %v494, %v490
    %v579 = vpack.c.b16 %v495, %v491
    %v580 = vpack.c.b16 %v496, %v492
    %v581 = vpack.c.b16 %v501, %v497
    %v582 = vpack.c.b16 %v502, %v498
    %v583 = vpack.c.b16 %v503, %v499
    %v584 = vpack.c.b16 %v504, %v500
    %v585 = vpack.c.b16 %v509, %v505
    %v586 = vpack.c.b16 %v510, %v506
    %v587 = vpack.c.b16 %v511, %v507
    %v588 = vpack.c.b16 %v512, %v508
    %v589 = vpack.c.b16 %v517, %v513
    %v590 = vpack.c.b16 %v518, %v514
    %v591 = vpack.c.b16 %v519, %v515
    %v592 = vpack.c.b16 %v520, %v516
    %v593 = vpack.c.b16 %v525, %v521
    %v594 = vpack.c.b16 %v526, %v522
    %v595 = vpack.c.b16 %v527, %v523
    %v596 = vpack.c.b16 %v528, %v524
    %v597 = vpack.c.b16 %v533, %v529
    %v598 = vpack.c.b16 %v534, %v530
    %v599 = vpack.c.b16 %v535, %v531
    %v600 = vpack.c.b16 %v536, %v532
    %665 = vmatprep.subr.bf16.mxu0 %v538
    %666 = vmatpush1.bf16.msra.mxu0 %v537
    %667 = vmatprep.subr.bf16.mxu0 %v542
    %668 = vmatpush1.bf16.msra.mxu0 %v541
    %669 = vmatprep.subr.bf16.mxu0 %v546
    %670 = vmatpush1.bf16.msra.mxu0 %v545
    %671 = vmatprep.subr.bf16.mxu0 %v550
    %672 = vmatpush1.bf16.msra.mxu0 %v549
    %673 = vmatprep.subr.bf16.mxu0 %v554
    %674 = vmatpush1.bf16.msra.mxu0 %v553
    %675 = vmatprep.subr.bf16.mxu0 %v558
    %676 = vmatpush1.bf16.msra.mxu0 %v557
    %677 = vmatprep.subr.bf16.mxu0 %v562
    %678 = vmatpush1.bf16.msra.mxu0 %v561
    %679 = vmatprep.subr.bf16.mxu0 %v566
    %680 = vmatpush1.bf16.msra.mxu0 %v565
    %681 = vmatprep.subr.bf16.mxu0 %v570
    %682 = vmatpush1.bf16.msra.mxu0 %v569
    %683 = vmatprep.subr.bf16.mxu0 %v574
    %684 = vmatpush1.bf16.msra.mxu0 %v573
    %685 = vmatprep.subr.bf16.mxu0 %v578
    %686 = vmatpush1.bf16.msra.mxu0 %v577
    %687 = vmatprep.subr.bf16.mxu0 %v582
    %688 = vmatpush1.bf16.msra.mxu0 %v581
    %689 = vmatprep.subr.bf16.mxu0 %v586
    %690 = vmatpush1.bf16.msra.mxu0 %v585
    %691 = vmatprep.subr.bf16.mxu0 %v590
    %692 = vmatpush1.bf16.msra.mxu0 %v589
    %693 = vmatprep.subr.bf16.mxu0 %v594
    %694 = vmatpush1.bf16.msra.mxu0 %v593
    %695 = vmatprep.subr.bf16.mxu0 %v598
    %696 = vmatpush1.bf16.msra.mxu0 %v597
    %697 = vmatprep.mubr.bf16.mxu0 %v258
    %698 = vmatmul.mubr.bf16.gmra.mrb[0].mxu0 %v257
    %v699 = vpop.f32.mrb[0].mxu0
    %v700 = vadd.f32 %v328, %v699
    %v701 = vpop.f32.mrb[0].mxu0
    %v702 = vadd.f32 %v332, %v701
    %v703 = vpop.f32.mrb[0].mxu0
    %v704 = vpop.f32.mrb[0].mxu0
    %705 = vdwg.mxu0
    %706 = vmatprep.subr.bf16.mxu0 %v540
    %707 = vmatpush1.bf16.msra.mxu0 %v539
    %708 = vmatprep.subr.bf16.mxu0 %v544
    %709 = vmatpush1.bf16.msra.mxu0 %v543
    %710 = vmatprep.subr.bf16.mxu0 %v548
    %711 = vmatpush1.bf16.msra.mxu0 %v547
    %712 = vmatprep.subr.bf16.mxu0 %v552
    %713 = vmatpush1.bf16.msra.mxu0 %v551
    %714 = vmatprep.subr.bf16.mxu0 %v556
    %715 = vmatpush1.bf16.msra.mxu0 %v555
    %716 = vmatprep.subr.bf16.mxu0 %v560
    %717 = vmatpush1.bf16.msra.mxu0 %v559
    %718 = vmatprep.subr.bf16.mxu0 %v564
    %719 = vmatpush1.bf16.msra.mxu0 %v563
    %720 = vmatprep.subr.bf16.mxu0 %v568
    %721 = vmatpush1.bf16.msra.mxu0 %v567
    %722 = vmatprep.subr.bf16.mxu0 %v572
    %723 = vmatpush1.bf16.msra.mxu0 %v571
    %724 = vmatprep.subr.bf16.mxu0 %v576
    %725 = vmatpush1.bf16.msra.mxu0 %v575
    %726 = vmatprep.subr.bf16.mxu0 %v580
    %727 = vmatpush1.bf16.msra.mxu0 %v579
    %728 = vmatprep.subr.bf16.mxu0 %v584
    %729 = vmatpush1.bf16.msra.mxu0 %v583
    %730 = vmatprep.subr.bf16.mxu0 %v588
    %731 = vmatpush1.bf16.msra.mxu0 %v587
    %732 = vmatprep.subr.bf16.mxu0 %v592
    %733 = vmatpush1.bf16.msra.mxu0 %v591
    %734 = vmatprep.subr.bf16.mxu0 %v596
    %735 = vmatpush1.bf16.msra.mxu0 %v595
    %736 = vmatprep.subr.bf16.mxu0 %v600
    %737 = vmatpush1.bf16.msra.mxu0 %v599
    %738 = vmatprep.mubr.bf16.mxu0 %v258
    %739 = vmatmul.mubr.bf16.gmra.mrb[0].mxu0 %v257
    %v740 = vpop.f32.mrb[0].mxu0
    %v741 = vadd.f32 %v336, %v740
    %v742 = vpop.f32.mrb[0].mxu0
    %v743 = vadd.f32 %v340, %v742
    %v744 = vpop.f32.mrb[0].mxu0
    %v745 = vpop.f32.mrb[0].mxu0
    %746 = vdwg.mxu0
    %v747 = vmul.f32 %v700, 0.1
    %v748 = vmul.f32 %v702, 0.1
    %v749 = vmul.f32 %v741, 0.1
    %v750 = vmul.f32 %v743, 0.1
    %v751 = vmax.f32 %v700, %v747
    %v752 = vmax.f32 %v702, %v748
    %v753 = vmax.f32 %v741, %v749
    %v754 = vmax.f32 %v743, %v750
    %v755 = vpack.c.bf16 %v751, %v751
    %v756 = vpack.c.bf16 %v752, %v752
    %v757 = vpack.c.bf16 %v753, %v753
    %v758 = vpack.c.bf16 %v754, %v754
    %v759 = vld [vmem:[#allocation11] sm:$0xff]
    %v760 = vld [vmem:[#allocation11 + $0x8] sm:$0xff]
    %v761 = vld [vmem:[#allocation11 + $0x10] sm:$0xff]
    %v762 = vld [vmem:[#allocation11 + $0x18] sm:$0xff]
    %v763 = vld [vmem:[#allocation11 + $0x20] sm:$0xff]
    %v764 = vld [vmem:[#allocation11 + $0x28] sm:$0xff]
    %v765 = vld [vmem:[#allocation11 + $0x30] sm:$0xff]
    %v766 = vld [vmem:[#allocation11 + $0x38] sm:$0xff]
    %v767 = vld [vmem:[#allocation11 + $0x40] sm:$0xff]
    %v768 = vld [vmem:[#allocation11 + $0x48] sm:$0xff]
    %v769 = vld [vmem:[#allocation11 + $0x50] sm:$0xff]
    %v770 = vld [vmem:[#allocation11 + $0x58] sm:$0xff]
    %v771 = vld [vmem:[#allocation11 + $0x60] sm:$0xff]
    %v772 = vld [vmem:[#allocation11 + $0x68] sm:$0xff]
    %v773 = vld [vmem:[#allocation11 + $0x70] sm:$0xff]
    %v774 = vld [vmem:[#allocation11 + $0x78] sm:$0xff]
    %v775 = vld [vmem:[#allocation11 + $0x80] sm:$0xff]
    %v776 = vld [vmem:[#allocation11 + $0x88] sm:$0xff]
    %v777 = vld [vmem:[#allocation11 + $0x90] sm:$0xff]
    %v778 = vld [vmem:[#allocation11 + $0x98] sm:$0xff]
    %v779 = vld [vmem:[#allocation11 + $0xa0] sm:$0xff]
    %v780 = vld [vmem:[#allocation11 + $0xa8] sm:$0xff]
    %v781 = vld [vmem:[#allocation11 + $0xb0] sm:$0xff]
    %v782 = vld [vmem:[#allocation11 + $0xb8] sm:$0xff]
    %v783 = vld [vmem:[#allocation11 + $0xc0] sm:$0xff]
    %v784 = vld [vmem:[#allocation11 + $0xc8] sm:$0xff]
    %v785 = vld [vmem:[#allocation11 + $0xd0] sm:$0xff]
    %v786 = vld [vmem:[#allocation11 + $0xd8] sm:$0xff]
    %v787 = vld [vmem:[#allocation11 + $0xe0] sm:$0xff]
    %v788 = vld [vmem:[#allocation11 + $0xe8] sm:$0xff]
    %v789 = vld [vmem:[#allocation11 + $0xf0] sm:$0xff]
    %v790 = vld [vmem:[#allocation11 + $0xf8] sm:$0xff]
    %v791 = vld [vmem:[#allocation11 + $0x100] sm:$0xff]
    %v792 = vld [vmem:[#allocation11 + $0x108] sm:$0xff]
    %v793 = vld [vmem:[#allocation11 + $0x110] sm:$0xff]
    %v794 = vld [vmem:[#allocation11 + $0x118] sm:$0xff]
    %v795 = vld [vmem:[#allocation11 + $0x120] sm:$0xff]
    %v796 = vld [vmem:[#allocation11 + $0x128] sm:$0xff]
    %v797 = vld [vmem:[#allocation11 + $0x130] sm:$0xff]
    %v798 = vld [vmem:[#allocation11 + $0x138] sm:$0xff]
    %v799 = vld [vmem:[#allocation11 + $0x140] sm:$0xff]
    %v800 = vld [vmem:[#allocation11 + $0x148] sm:$0xff]
    %v801 = vld [vmem:[#allocation11 + $0x150] sm:$0xff]
    %v802 = vld [vmem:[#allocation11 + $0x158] sm:$0xff]
    %v803 = vld [vmem:[#allocation11 + $0x160] sm:$0xff]
    %v804 = vld [vmem:[#allocation11 + $0x168] sm:$0xff]
    %v805 = vld [vmem:[#allocation11 + $0x170] sm:$0xff]
    %v806 = vld [vmem:[#allocation11 + $0x178] sm:$0xff]
    %v807 = vld [vmem:[#allocation11 + $0x180] sm:$0xff]
    %v808 = vld [vmem:[#allocation11 + $0x188] sm:$0xff]
    %v809 = vld [vmem:[#allocation11 + $0x190] sm:$0xff]
    %v810 = vld [vmem:[#allocation11 + $0x198] sm:$0xff]
    %v811 = vld [vmem:[#allocation11 + $0x1a0] sm:$0xff]
    %v812 = vld [vmem:[#allocation11 + $0x1a8] sm:$0xff]
    %v813 = vld [vmem:[#allocation11 + $0x1b0] sm:$0xff]
    %v814 = vld [vmem:[#allocation11 + $0x1b8] sm:$0xff]
    %v815 = vld [vmem:[#allocation11 + $0x1c0] sm:$0xff]
    %v816 = vld [vmem:[#allocation11 + $0x1c8] sm:$0xff]
    %v817 = vld [vmem:[#allocation11 + $0x1d0] sm:$0xff]
    %v818 = vld [vmem:[#allocation11 + $0x1d8] sm:$0xff]
    %v819 = vld [vmem:[#allocation11 + $0x1e0] sm:$0xff]
    %v820 = vld [vmem:[#allocation11 + $0x1e8] sm:$0xff]
    %v821 = vld [vmem:[#allocation11 + $0x1f0] sm:$0xff]
    %v822 = vld [vmem:[#allocation11 + $0x1f8] sm:$0xff]
    %v823 = vld [vmem:[#allocation11 + $0x200] sm:$0xff]
    %v824 = vld [vmem:[#allocation11 + $0x208] sm:$0xff]
    %v825 = vld [vmem:[#allocation11 + $0x210] sm:$0xff]
    %v826 = vld [vmem:[#allocation11 + $0x218] sm:$0xff]
    %v827 = vld [vmem:[#allocation11 + $0x220] sm:$0xff]
    %v828 = vld [vmem:[#allocation11 + $0x228] sm:$0xff]
    %v829 = vld [vmem:[#allocation11 + $0x230] sm:$0xff]
    %v830 = vld [vmem:[#allocation11 + $0x238] sm:$0xff]
    %v831 = vld [vmem:[#allocation11 + $0x240] sm:$0xff]
    %v832 = vld [vmem:[#allocation11 + $0x248] sm:$0xff]
    %v833 = vld [vmem:[#allocation11 + $0x250] sm:$0xff]
    %v834 = vld [vmem:[#allocation11 + $0x258] sm:$0xff]
    %v835 = vld [vmem:[#allocation11 + $0x260] sm:$0xff]
    %v836 = vld [vmem:[#allocation11 + $0x268] sm:$0xff]
    %v837 = vld [vmem:[#allocation11 + $0x270] sm:$0xff]
    %v838 = vld [vmem:[#allocation11 + $0x278] sm:$0xff]
    %v839 = vld [vmem:[#allocation11 + $0x280] sm:$0xff]
    %v840 = vld [vmem:[#allocation11 + $0x288] sm:$0xff]
    %v841 = vld [vmem:[#allocation11 + $0x290] sm:$0xff]
    %v842 = vld [vmem:[#allocation11 + $0x298] sm:$0xff]
    %v843 = vld [vmem:[#allocation11 + $0x2a0] sm:$0xff]
    %v844 = vld [vmem:[#allocation11 + $0x2a8] sm:$0xff]
    %v845 = vld [vmem:[#allocation11 + $0x2b0] sm:$0xff]
    %v846 = vld [vmem:[#allocation11 + $0x2b8] sm:$0xff]
    %v847 = vld [vmem:[#allocation11 + $0x2c0] sm:$0xff]
    %v848 = vld [vmem:[#allocation11 + $0x2c8] sm:$0xff]
    %v849 = vld [vmem:[#allocation11 + $0x2d0] sm:$0xff]
    %v850 = vld [vmem:[#allocation11 + $0x2d8] sm:$0xff]
    %v851 = vld [vmem:[#allocation11 + $0x2e0] sm:$0xff]
    %v852 = vld [vmem:[#allocation11 + $0x2e8] sm:$0xff]
    %v853 = vld [vmem:[#allocation11 + $0x2f0] sm:$0xff]
    %v854 = vld [vmem:[#allocation11 + $0x2f8] sm:$0xff]
    %v855 = vld [vmem:[#allocation11 + $0x300] sm:$0xff]
    %v856 = vld [vmem:[#allocation11 + $0x308] sm:$0xff]
    %v857 = vld [vmem:[#allocation11 + $0x310] sm:$0xff]
    %v858 = vld [vmem:[#allocation11 + $0x318] sm:$0xff]
    %v859 = vld [vmem:[#allocation11 + $0x320] sm:$0xff]
    %v860 = vld [vmem:[#allocation11 + $0x328] sm:$0xff]
    %v861 = vld [vmem:[#allocation11 + $0x330] sm:$0xff]
    %v862 = vld [vmem:[#allocation11 + $0x338] sm:$0xff]
    %v863 = vld [vmem:[#allocation11 + $0x340] sm:$0xff]
    %v864 = vld [vmem:[#allocation11 + $0x348] sm:$0xff]
    %v865 = vld [vmem:[#allocation11 + $0x350] sm:$0xff]
    %v866 = vld [vmem:[#allocation11 + $0x358] sm:$0xff]
    %v867 = vld [vmem:[#allocation11 + $0x360] sm:$0xff]
    %v868 = vld [vmem:[#allocation11 + $0x368] sm:$0xff]
    %v869 = vld [vmem:[#allocation11 + $0x370] sm:$0xff]
    %v870 = vld [vmem:[#allocation11 + $0x378] sm:$0xff]
    %v871 = vld [vmem:[#allocation11 + $0x380] sm:$0xff]
    %v872 = vld [vmem:[#allocation11 + $0x388] sm:$0xff]
    %v873 = vld [vmem:[#allocation11 + $0x390] sm:$0xff]
    %v874 = vld [vmem:[#allocation11 + $0x398] sm:$0xff]
    %v875 = vld [vmem:[#allocation11 + $0x3a0] sm:$0xff]
    %v876 = vld [vmem:[#allocation11 + $0x3a8] sm:$0xff]
    %v877 = vld [vmem:[#allocation11 + $0x3b0] sm:$0xff]
    %v878 = vld [vmem:[#allocation11 + $0x3b8] sm:$0xff]
    %v879 = vld [vmem:[#allocation11 + $0x3c0] sm:$0xff]
    %v880 = vld [vmem:[#allocation11 + $0x3c8] sm:$0xff]
    %v881 = vld [vmem:[#allocation11 + $0x3d0] sm:$0xff]
    %v882 = vld [vmem:[#allocation11 + $0x3d8] sm:$0xff]
    %v883 = vld [vmem:[#allocation11 + $0x3e0] sm:$0xff]
    %v884 = vld [vmem:[#allocation11 + $0x3e8] sm:$0xff]
    %v885 = vld [vmem:[#allocation11 + $0x3f0] sm:$0xff]
    %v886 = vld [vmem:[#allocation11 + $0x3f8] sm:$0xff]
    %v887 = vld [vmem:[#allocation11 + $0x400] sm:$0xff]
    %v888 = vld [vmem:[#allocation11 + $0x408] sm:$0xff]
    %v889 = vld [vmem:[#allocation11 + $0x410] sm:$0xff]
    %v890 = vld [vmem:[#allocation11 + $0x418] sm:$0xff]
    %v891 = vld [vmem:[#allocation11 + $0x420] sm:$0xff]
    %v892 = vld [vmem:[#allocation11 + $0x428] sm:$0xff]
    %v893 = vld [vmem:[#allocation11 + $0x430] sm:$0xff]
    %v894 = vld [vmem:[#allocation11 + $0x438] sm:$0xff]
    %v895 = vld [vmem:[#allocation11 + $0x440] sm:$0xff]
    %v896 = vld [vmem:[#allocation11 + $0x448] sm:$0xff]
    %v897 = vld [vmem:[#allocation11 + $0x450] sm:$0xff]
    %v898 = vld [vmem:[#allocation11 + $0x458] sm:$0xff]
    %v899 = vld [vmem:[#allocation11 + $0x460] sm:$0xff]
    %v900 = vld [vmem:[#allocation11 + $0x468] sm:$0xff]
    %v901 = vld [vmem:[#allocation11 + $0x470] sm:$0xff]
    %v902 = vld [vmem:[#allocation11 + $0x478] sm:$0xff]
    %v903 = vld [vmem:[#allocation11 + $0x480] sm:$0xff]
    %v904 = vld [vmem:[#allocation11 + $0x488] sm:$0xff]
    %v905 = vld [vmem:[#allocation11 + $0x490] sm:$0xff]
    %v906 = vld [vmem:[#allocation11 + $0x498] sm:$0xff]
    %v907 = vld [vmem:[#allocation11 + $0x4a0] sm:$0xff]
    %v908 = vld [vmem:[#allocation11 + $0x4a8] sm:$0xff]
    %v909 = vld [vmem:[#allocation11 + $0x4b0] sm:$0xff]
    %v910 = vld [vmem:[#allocation11 + $0x4b8] sm:$0xff]
    %v911 = vld [vmem:[#allocation11 + $0x4c0] sm:$0xff]
    %v912 = vld [vmem:[#allocation11 + $0x4c8] sm:$0xff]
    %v913 = vld [vmem:[#allocation11 + $0x4d0] sm:$0xff]
    %v914 = vld [vmem:[#allocation11 + $0x4d8] sm:$0xff]
    %v915 = vld [vmem:[#allocation11 + $0x4e0] sm:$0xff]
    %v916 = vld [vmem:[#allocation11 + $0x4e8] sm:$0xff]
    %v917 = vld [vmem:[#allocation11 + $0x4f0] sm:$0xff]
    %v918 = vld [vmem:[#allocation11 + $0x4f8] sm:$0xff]
    %v919 = vld [vmem:[#allocation11 + $0x500] sm:$0xff]
    %v920 = vld [vmem:[#allocation11 + $0x508] sm:$0xff]
    %v921 = vld [vmem:[#allocation11 + $0x510] sm:$0xff]
    %v922 = vld [vmem:[#allocation11 + $0x518] sm:$0xff]
    %v923 = vld [vmem:[#allocation11 + $0x520] sm:$0xff]
    %v924 = vld [vmem:[#allocation11 + $0x528] sm:$0xff]
    %v925 = vld [vmem:[#allocation11 + $0x530] sm:$0xff]
    %v926 = vld [vmem:[#allocation11 + $0x538] sm:$0xff]
    %v927 = vld [vmem:[#allocation11 + $0x540] sm:$0xff]
    %v928 = vld [vmem:[#allocation11 + $0x548] sm:$0xff]
    %v929 = vld [vmem:[#allocation11 + $0x550] sm:$0xff]
    %v930 = vld [vmem:[#allocation11 + $0x558] sm:$0xff]
    %v931 = vld [vmem:[#allocation11 + $0x560] sm:$0xff]
    %v932 = vld [vmem:[#allocation11 + $0x568] sm:$0xff]
    %v933 = vld [vmem:[#allocation11 + $0x570] sm:$0xff]
    %v934 = vld [vmem:[#allocation11 + $0x578] sm:$0xff]
    %v935 = vld [vmem:[#allocation11 + $0x580] sm:$0xff]
    %v936 = vld [vmem:[#allocation11 + $0x588] sm:$0xff]
    %v937 = vld [vmem:[#allocation11 + $0x590] sm:$0xff]
    %v938 = vld [vmem:[#allocation11 + $0x598] sm:$0xff]
    %v939 = vld [vmem:[#allocation11 + $0x5a0] sm:$0xff]
    %v940 = vld [vmem:[#allocation11 + $0x5a8] sm:$0xff]
    %v941 = vld [vmem:[#allocation11 + $0x5b0] sm:$0xff]
    %v942 = vld [vmem:[#allocation11 + $0x5b8] sm:$0xff]
    %v943 = vld [vmem:[#allocation11 + $0x5c0] sm:$0xff]
    %v944 = vld [vmem:[#allocation11 + $0x5c8] sm:$0xff]
    %v945 = vld [vmem:[#allocation11 + $0x5d0] sm:$0xff]
    %v946 = vld [vmem:[#allocation11 + $0x5d8] sm:$0xff]
    %v947 = vld [vmem:[#allocation11 + $0x5e0] sm:$0xff]
    %v948 = vld [vmem:[#allocation11 + $0x5e8] sm:$0xff]
    %v949 = vld [vmem:[#allocation11 + $0x5f0] sm:$0xff]
    %v950 = vld [vmem:[#allocation11 + $0x5f8] sm:$0xff]
    %v951 = vld [vmem:[#allocation11 + $0x600] sm:$0xff]
    %v952 = vld [vmem:[#allocation11 + $0x608] sm:$0xff]
    %v953 = vld [vmem:[#allocation11 + $0x610] sm:$0xff]
    %v954 = vld [vmem:[#allocation11 + $0x618] sm:$0xff]
    %v955 = vld [vmem:[#allocation11 + $0x620] sm:$0xff]
    %v956 = vld [vmem:[#allocation11 + $0x628] sm:$0xff]
    %v957 = vld [vmem:[#allocation11 + $0x630] sm:$0xff]
    %v958 = vld [vmem:[#allocation11 + $0x638] sm:$0xff]
    %v959 = vld [vmem:[#allocation11 + $0x640] sm:$0xff]
    %v960 = vld [vmem:[#allocation11 + $0x648] sm:$0xff]
    %v961 = vld [vmem:[#allocation11 + $0x650] sm:$0xff]
    %v962 = vld [vmem:[#allocation11 + $0x658] sm:$0xff]
    %v963 = vld [vmem:[#allocation11 + $0x660] sm:$0xff]
    %v964 = vld [vmem:[#allocation11 + $0x668] sm:$0xff]
    %v965 = vld [vmem:[#allocation11 + $0x670] sm:$0xff]
    %v966 = vld [vmem:[#allocation11 + $0x678] sm:$0xff]
    %v967 = vld [vmem:[#allocation11 + $0x680] sm:$0xff]
    %v968 = vld [vmem:[#allocation11 + $0x688] sm:$0xff]
    %v969 = vld [vmem:[#allocation11 + $0x690] sm:$0xff]
    %v970 = vld [vmem:[#allocation11 + $0x698] sm:$0xff]
    %v971 = vld [vmem:[#allocation11 + $0x6a0] sm:$0xff]
    %v972 = vld [vmem:[#allocation11 + $0x6a8] sm:$0xff]
    %v973 = vld [vmem:[#allocation11 + $0x6b0] sm:$0xff]
    %v974 = vld [vmem:[#allocation11 + $0x6b8] sm:$0xff]
    %v975 = vld [vmem:[#allocation11 + $0x6c0] sm:$0xff]
    %v976 = vld [vmem:[#allocation11 + $0x6c8] sm:$0xff]
    %v977 = vld [vmem:[#allocation11 + $0x6d0] sm:$0xff]
    %v978 = vld [vmem:[#allocation11 + $0x6d8] sm:$0xff]
    %v979 = vld [vmem:[#allocation11 + $0x6e0] sm:$0xff]
    %v980 = vld [vmem:[#allocation11 + $0x6e8] sm:$0xff]
    %v981 = vld [vmem:[#allocation11 + $0x6f0] sm:$0xff]
    %v982 = vld [vmem:[#allocation11 + $0x6f8] sm:$0xff]
    %v983 = vld [vmem:[#allocation11 + $0x700] sm:$0xff]
    %v984 = vld [vmem:[#allocation11 + $0x708] sm:$0xff]
    %v985 = vld [vmem:[#allocation11 + $0x710] sm:$0xff]
    %v986 = vld [vmem:[#allocation11 + $0x718] sm:$0xff]
    %v987 = vld [vmem:[#allocation11 + $0x720] sm:$0xff]
    %v988 = vld [vmem:[#allocation11 + $0x728] sm:$0xff]
    %v989 = vld [vmem:[#allocation11 + $0x730] sm:$0xff]
    %v990 = vld [vmem:[#allocation11 + $0x738] sm:$0xff]
    %v991 = vld [vmem:[#allocation11 + $0x740] sm:$0xff]
    %v992 = vld [vmem:[#allocation11 + $0x748] sm:$0xff]
    %v993 = vld [vmem:[#allocation11 + $0x750] sm:$0xff]
    %v994 = vld [vmem:[#allocation11 + $0x758] sm:$0xff]
    %v995 = vld [vmem:[#allocation11 + $0x760] sm:$0xff]
    %v996 = vld [vmem:[#allocation11 + $0x768] sm:$0xff]
    %v997 = vld [vmem:[#allocation11 + $0x770] sm:$0xff]
    %v998 = vld [vmem:[#allocation11 + $0x778] sm:$0xff]
    %v999 = vld [vmem:[#allocation11 + $0x780] sm:$0xff]
    %v1000 = vld [vmem:[#allocation11 + $0x788] sm:$0xff]
    %v1001 = vld [vmem:[#allocation11 + $0x790] sm:$0xff]
    %v1002 = vld [vmem:[#allocation11 + $0x798] sm:$0xff]
    %v1003 = vld [vmem:[#allocation11 + $0x7a0] sm:$0xff]
    %v1004 = vld [vmem:[#allocation11 + $0x7a8] sm:$0xff]
    %v1005 = vld [vmem:[#allocation11 + $0x7b0] sm:$0xff]
    %v1006 = vld [vmem:[#allocation11 + $0x7b8] sm:$0xff]
    %v1007 = vld [vmem:[#allocation11 + $0x7c0] sm:$0xff]
    %v1008 = vld [vmem:[#allocation11 + $0x7c8] sm:$0xff]
    %v1009 = vld [vmem:[#allocation11 + $0x7d0] sm:$0xff]
    %v1010 = vld [vmem:[#allocation11 + $0x7d8] sm:$0xff]
    %v1011 = vld [vmem:[#allocation11 + $0x7e0] sm:$0xff]
    %v1012 = vld [vmem:[#allocation11 + $0x7e8] sm:$0xff]
    %v1013 = vld [vmem:[#allocation11 + $0x7f0] sm:$0xff]
    %v1014 = vld [vmem:[#allocation11 + $0x7f8] sm:$0xff]
    %v1015 = vld [vmem:[#allocation13] sm:$0xff]
    %v1017 = vlaneseq
    %v1018 = vshrl.u32 %v1017, 7
    %v1019 = vsub.s32 0, %v1018
    %v1020 = vrot.slane %v1015, %v1019
    %v1021 = vlaneseq
    %v1022 = vshrl.u32 %v1021, 7
    %v1023 = vsub.s32 1, %v1022
    %v1024 = vrot.slane %v1015, %v1023
    %v1025 = vlaneseq
    %v1026 = vshrl.u32 %v1025, 7
    %v1027 = vsub.s32 2, %v1026
    %v1028 = vrot.slane %v1015, %v1027
    %v1029 = vlaneseq
    %v1030 = vshrl.u32 %v1029, 7
    %v1031 = vsub.s32 3, %v1030
    %v1032 = vrot.slane %v1015, %v1031
    %v1033 = vlaneseq
    %v1034 = vshrl.u32 %v1033, 7
    %v1035 = vsub.s32 4, %v1034
    %v1036 = vrot.slane %v1015, %v1035
    %v1037 = vlaneseq
    %v1038 = vshrl.u32 %v1037, 7
    %v1039 = vsub.s32 5, %v1038
    %v1040 = vrot.slane %v1015, %v1039
    %v1041 = vlaneseq
    %v1042 = vshrl.u32 %v1041, 7
    %v1043 = vsub.s32 6, %v1042
    %v1044 = vrot.slane %v1015, %v1043
    %v1045 = vlaneseq
    %v1046 = vshrl.u32 %v1045, 7
    %v1047 = vsub.s32 7, %v1046
    %v1048 = vrot.slane %v1015, %v1047
    %v1313 = vunpack.c.l.b16 %v759
    %v1314 = vunpack.c.h.b16 %v759
    %v1315 = vunpack.c.l.b16 %v760
    %v1316 = vunpack.c.h.b16 %v760
    %v1317 = vunpack.c.l.b16 %v761
    %v1318 = vunpack.c.h.b16 %v761
    %v1319 = vunpack.c.l.b16 %v762
    %v1320 = vunpack.c.h.b16 %v762
    %v1321 = vunpack.c.l.b16 %v763
    %v1322 = vunpack.c.h.b16 %v763
    %v1323 = vunpack.c.l.b16 %v764
    %v1324 = vunpack.c.h.b16 %v764
    %v1325 = vunpack.c.l.b16 %v765
    %v1326 = vunpack.c.h.b16 %v765
    %v1327 = vunpack.c.l.b16 %v766
    %v1328 = vunpack.c.h.b16 %v766
    %v1329 = vunpack.c.l.b16 %v767
    %v1330 = vunpack.c.h.b16 %v767
    %v1331 = vunpack.c.l.b16 %v768
    %v1332 = vunpack.c.h.b16 %v768
    %v1333 = vunpack.c.l.b16 %v769
    %v1334 = vunpack.c.h.b16 %v769
    %v1335 = vunpack.c.l.b16 %v770
    %v1336 = vunpack.c.h.b16 %v770
    %v1337 = vunpack.c.l.b16 %v771
    %v1338 = vunpack.c.h.b16 %v771
    %v1339 = vunpack.c.l.b16 %v772
    %v1340 = vunpack.c.h.b16 %v772
    %v1341 = vunpack.c.l.b16 %v773
    %v1342 = vunpack.c.h.b16 %v773
    %v1343 = vunpack.c.l.b16 %v774
    %v1344 = vunpack.c.h.b16 %v774
    %v1345 = vunpack.c.l.b16 %v775
    %v1346 = vunpack.c.h.b16 %v775
    %v1347 = vunpack.c.l.b16 %v776
    %v1348 = vunpack.c.h.b16 %v776
    %v1349 = vunpack.c.l.b16 %v777
    %v1350 = vunpack.c.h.b16 %v777
    %v1351 = vunpack.c.l.b16 %v778
    %v1352 = vunpack.c.h.b16 %v778
    %v1353 = vunpack.c.l.b16 %v779
    %v1354 = vunpack.c.h.b16 %v779
    %v1355 = vunpack.c.l.b16 %v780
    %v1356 = vunpack.c.h.b16 %v780
    %v1357 = vunpack.c.l.b16 %v781
    %v1358 = vunpack.c.h.b16 %v781
    %v1359 = vunpack.c.l.b16 %v782
    %v1360 = vunpack.c.h.b16 %v782
    %v1361 = vunpack.c.l.b16 %v783
    %v1362 = vunpack.c.h.b16 %v783
    %v1363 = vunpack.c.l.b16 %v784
    %v1364 = vunpack.c.h.b16 %v784
    %v1365 = vunpack.c.l.b16 %v785
    %v1366 = vunpack.c.h.b16 %v785
    %v1367 = vunpack.c.l.b16 %v786
    %v1368 = vunpack.c.h.b16 %v786
    %v1369 = vunpack.c.l.b16 %v787
    %v1370 = vunpack.c.h.b16 %v787
    %v1371 = vunpack.c.l.b16 %v788
    %v1372 = vunpack.c.h.b16 %v788
    %v1373 = vunpack.c.l.b16 %v789
    %v1374 = vunpack.c.h.b16 %v789
    %v1375 = vunpack.c.l.b16 %v790
    %v1376 = vunpack.c.h.b16 %v790
    %v1377 = vunpack.c.l.b16 %v791
    %v1378 = vunpack.c.h.b16 %v791
    %v1379 = vunpack.c.l.b16 %v792
    %v1380 = vunpack.c.h.b16 %v792
    %v1381 = vunpack.c.l.b16 %v793
    %v1382 = vunpack.c.h.b16 %v793
    %v1383 = vunpack.c.l.b16 %v794
    %v1384 = vunpack.c.h.b16 %v794
    %v1385 = vunpack.c.l.b16 %v795
    %v1386 = vunpack.c.h.b16 %v795
    %v1387 = vunpack.c.l.b16 %v796
    %v1388 = vunpack.c.h.b16 %v796
    %v1389 = vunpack.c.l.b16 %v797
    %v1390 = vunpack.c.h.b16 %v797
    %v1391 = vunpack.c.l.b16 %v798
    %v1392 = vunpack.c.h.b16 %v798
    %v1393 = vunpack.c.l.b16 %v799
    %v1394 = vunpack.c.h.b16 %v799
    %v1395 = vunpack.c.l.b16 %v800
    %v1396 = vunpack.c.h.b16 %v800
    %v1397 = vunpack.c.l.b16 %v801
    %v1398 = vunpack.c.h.b16 %v801
    %v1399 = vunpack.c.l.b16 %v802
    %v1400 = vunpack.c.h.b16 %v802
    %v1401 = vunpack.c.l.b16 %v803
    %v1402 = vunpack.c.h.b16 %v803
    %v1403 = vunpack.c.l.b16 %v804
    %v1404 = vunpack.c.h.b16 %v804
    %v1405 = vunpack.c.l.b16 %v805
    %v1406 = vunpack.c.h.b16 %v805
    %v1407 = vunpack.c.l.b16 %v806
    %v1408 = vunpack.c.h.b16 %v806
    %v1409 = vunpack.c.l.b16 %v807
    %v1410 = vunpack.c.h.b16 %v807
    %v1411 = vunpack.c.l.b16 %v808
    %v1412 = vunpack.c.h.b16 %v808
    %v1413 = vunpack.c.l.b16 %v809
    %v1414 = vunpack.c.h.b16 %v809
    %v1415 = vunpack.c.l.b16 %v810
    %v1416 = vunpack.c.h.b16 %v810
    %v1417 = vunpack.c.l.b16 %v811
    %v1418 = vunpack.c.h.b16 %v811
    %v1419 = vunpack.c.l.b16 %v812
    %v1420 = vunpack.c.h.b16 %v812
    %v1421 = vunpack.c.l.b16 %v813
    %v1422 = vunpack.c.h.b16 %v813
    %v1423 = vunpack.c.l.b16 %v814
    %v1424 = vunpack.c.h.b16 %v814
    %v1425 = vunpack.c.l.b16 %v815
    %v1426 = vunpack.c.h.b16 %v815
    %v1427 = vunpack.c.l.b16 %v816
    %v1428 = vunpack.c.h.b16 %v816
    %v1429 = vunpack.c.l.b16 %v817
    %v1430 = vunpack.c.h.b16 %v817
    %v1431 = vunpack.c.l.b16 %v818
    %v1432 = vunpack.c.h.b16 %v818
    %v1433 = vunpack.c.l.b16 %v819
    %v1434 = vunpack.c.h.b16 %v819
    %v1435 = vunpack.c.l.b16 %v820
    %v1436 = vunpack.c.h.b16 %v820
    %v1437 = vunpack.c.l.b16 %v821
    %v1438 = vunpack.c.h.b16 %v821
    %v1439 = vunpack.c.l.b16 %v822
    %v1440 = vunpack.c.h.b16 %v822
    %v1441 = vunpack.c.l.b16 %v823
    %v1442 = vunpack.c.h.b16 %v823
    %v1443 = vunpack.c.l.b16 %v824
    %v1444 = vunpack.c.h.b16 %v824
    %v1445 = vunpack.c.l.b16 %v825
    %v1446 = vunpack.c.h.b16 %v825
    %v1447 = vunpack.c.l.b16 %v826
    %v1448 = vunpack.c.h.b16 %v826
    %v1449 = vunpack.c.l.b16 %v827
    %v1450 = vunpack.c.h.b16 %v827
    %v1451 = vunpack.c.l.b16 %v828
    %v1452 = vunpack.c.h.b16 %v828
    %v1453 = vunpack.c.l.b16 %v829
    %v1454 = vunpack.c.h.b16 %v829
    %v1455 = vunpack.c.l.b16 %v830
    %v1456 = vunpack.c.h.b16 %v830
    %v1457 = vunpack.c.l.b16 %v831
    %v1458 = vunpack.c.h.b16 %v831
    %v1459 = vunpack.c.l.b16 %v832
    %v1460 = vunpack.c.h.b16 %v832
    %v1461 = vunpack.c.l.b16 %v833
    %v1462 = vunpack.c.h.b16 %v833
    %v1463 = vunpack.c.l.b16 %v834
    %v1464 = vunpack.c.h.b16 %v834
    %v1465 = vunpack.c.l.b16 %v835
    %v1466 = vunpack.c.h.b16 %v835
    %v1467 = vunpack.c.l.b16 %v836
    %v1468 = vunpack.c.h.b16 %v836
    %v1469 = vunpack.c.l.b16 %v837
    %v1470 = vunpack.c.h.b16 %v837
    %v1471 = vunpack.c.l.b16 %v838
    %v1472 = vunpack.c.h.b16 %v838
    %v1473 = vunpack.c.l.b16 %v839
    %v1474 = vunpack.c.h.b16 %v839
    %v1475 = vunpack.c.l.b16 %v840
    %v1476 = vunpack.c.h.b16 %v840
    %v1477 = vunpack.c.l.b16 %v841
    %v1478 = vunpack.c.h.b16 %v841
    %v1479 = vunpack.c.l.b16 %v842
    %v1480 = vunpack.c.h.b16 %v842
    %v1481 = vunpack.c.l.b16 %v843
    %v1482 = vunpack.c.h.b16 %v843
    %v1483 = vunpack.c.l.b16 %v844
    %v1484 = vunpack.c.h.b16 %v844
    %v1485 = vunpack.c.l.b16 %v845
    %v1486 = vunpack.c.h.b16 %v845
    %v1487 = vunpack.c.l.b16 %v846
    %v1488 = vunpack.c.h.b16 %v846
    %v1489 = vunpack.c.l.b16 %v847
    %v1490 = vunpack.c.h.b16 %v847
    %v1491 = vunpack.c.l.b16 %v848
    %v1492 = vunpack.c.h.b16 %v848
    %v1493 = vunpack.c.l.b16 %v849
    %v1494 = vunpack.c.h.b16 %v849
    %v1495 = vunpack.c.l.b16 %v850
    %v1496 = vunpack.c.h.b16 %v850
    %v1497 = vunpack.c.l.b16 %v851
    %v1498 = vunpack.c.h.b16 %v851
    %v1499 = vunpack.c.l.b16 %v852
    %v1500 = vunpack.c.h.b16 %v852
    %v1501 = vunpack.c.l.b16 %v853
    %v1502 = vunpack.c.h.b16 %v853
    %v1503 = vunpack.c.l.b16 %v854
    %v1504 = vunpack.c.h.b16 %v854
    %v1505 = vunpack.c.l.b16 %v855
    %v1506 = vunpack.c.h.b16 %v855
    %v1507 = vunpack.c.l.b16 %v856
    %v1508 = vunpack.c.h.b16 %v856
    %v1509 = vunpack.c.l.b16 %v857
    %v1510 = vunpack.c.h.b16 %v857
    %v1511 = vunpack.c.l.b16 %v858
    %v1512 = vunpack.c.h.b16 %v858
    %v1513 = vunpack.c.l.b16 %v859
    %v1514 = vunpack.c.h.b16 %v859
    %v1515 = vunpack.c.l.b16 %v860
    %v1516 = vunpack.c.h.b16 %v860
    %v1517 = vunpack.c.l.b16 %v861
    %v1518 = vunpack.c.h.b16 %v861
    %v1519 = vunpack.c.l.b16 %v862
    %v1520 = vunpack.c.h.b16 %v862
    %v1521 = vunpack.c.l.b16 %v863
    %v1522 = vunpack.c.h.b16 %v863
    %v1523 = vunpack.c.l.b16 %v864
    %v1524 = vunpack.c.h.b16 %v864
    %v1525 = vunpack.c.l.b16 %v865
    %v1526 = vunpack.c.h.b16 %v865
    %v1527 = vunpack.c.l.b16 %v866
    %v1528 = vunpack.c.h.b16 %v866
    %v1529 = vunpack.c.l.b16 %v867
    %v1530 = vunpack.c.h.b16 %v867
    %v1531 = vunpack.c.l.b16 %v868
    %v1532 = vunpack.c.h.b16 %v868
    %v1533 = vunpack.c.l.b16 %v869
    %v1534 = vunpack.c.h.b16 %v869
    %v1535 = vunpack.c.l.b16 %v870
    %v1536 = vunpack.c.h.b16 %v870
    %v1537 = vunpack.c.l.b16 %v871
    %v1538 = vunpack.c.h.b16 %v871
    %v1539 = vunpack.c.l.b16 %v872
    %v1540 = vunpack.c.h.b16 %v872
    %v1541 = vunpack.c.l.b16 %v873
    %v1542 = vunpack.c.h.b16 %v873
    %v1543 = vunpack.c.l.b16 %v874
    %v1544 = vunpack.c.h.b16 %v874
    %v1545 = vunpack.c.l.b16 %v875
    %v1546 = vunpack.c.h.b16 %v875
    %v1547 = vunpack.c.l.b16 %v876
    %v1548 = vunpack.c.h.b16 %v876
    %v1549 = vunpack.c.l.b16 %v877
    %v1550 = vunpack.c.h.b16 %v877
    %v1551 = vunpack.c.l.b16 %v878
    %v1552 = vunpack.c.h.b16 %v878
    %v1553 = vunpack.c.l.b16 %v879
    %v1554 = vunpack.c.h.b16 %v879
    %v1555 = vunpack.c.l.b16 %v880
    %v1556 = vunpack.c.h.b16 %v880
    %v1557 = vunpack.c.l.b16 %v881
    %v1558 = vunpack.c.h.b16 %v881
    %v1559 = vunpack.c.l.b16 %v882
    %v1560 = vunpack.c.h.b16 %v882
    %v1561 = vunpack.c.l.b16 %v883
    %v1562 = vunpack.c.h.b16 %v883
    %v1563 = vunpack.c.l.b16 %v884
    %v1564 = vunpack.c.h.b16 %v884
    %v1565 = vunpack.c.l.b16 %v885
    %v1566 = vunpack.c.h.b16 %v885
    %v1567 = vunpack.c.l.b16 %v886
    %v1568 = vunpack.c.h.b16 %v886
    %v1569 = vunpack.c.l.b16 %v887
    %v1570 = vunpack.c.h.b16 %v887
    %v1571 = vunpack.c.l.b16 %v888
    %v1572 = vunpack.c.h.b16 %v888
    %v1573 = vunpack.c.l.b16 %v889
    %v1574 = vunpack.c.h.b16 %v889
    %v1575 = vunpack.c.l.b16 %v890
    %v1576 = vunpack.c.h.b16 %v890
    %v1577 = vunpack.c.l.b16 %v891
    %v1578 = vunpack.c.h.b16 %v891
    %v1579 = vunpack.c.l.b16 %v892
    %v1580 = vunpack.c.h.b16 %v892
    %v1581 = vunpack.c.l.b16 %v893
    %v1582 = vunpack.c.h.b16 %v893
    %v1583 = vunpack.c.l.b16 %v894
    %v1584 = vunpack.c.h.b16 %v894
    %v1585 = vunpack.c.l.b16 %v895
    %v1586 = vunpack.c.h.b16 %v895
    %v1587 = vunpack.c.l.b16 %v896
    %v1588 = vunpack.c.h.b16 %v896
    %v1589 = vunpack.c.l.b16 %v897
    %v1590 = vunpack.c.h.b16 %v897
    %v1591 = vunpack.c.l.b16 %v898
    %v1592 = vunpack.c.h.b16 %v898
    %v1593 = vunpack.c.l.b16 %v899
    %v1594 = vunpack.c.h.b16 %v899
    %v1595 = vunpack.c.l.b16 %v900
    %v1596 = vunpack.c.h.b16 %v900
    %v1597 = vunpack.c.l.b16 %v901
    %v1598 = vunpack.c.h.b16 %v901
    %v1599 = vunpack.c.l.b16 %v902
    %v1600 = vunpack.c.h.b16 %v902
    %v1601 = vunpack.c.l.b16 %v903
    %v1602 = vunpack.c.h.b16 %v903
    %v1603 = vunpack.c.l.b16 %v904
    %v1604 = vunpack.c.h.b16 %v904
    %v1605 = vunpack.c.l.b16 %v905
    %v1606 = vunpack.c.h.b16 %v905
    %v1607 = vunpack.c.l.b16 %v906
    %v1608 = vunpack.c.h.b16 %v906
    %v1609 = vunpack.c.l.b16 %v907
    %v1610 = vunpack.c.h.b16 %v907
    %v1611 = vunpack.c.l.b16 %v908
    %v1612 = vunpack.c.h.b16 %v908
    %v1613 = vunpack.c.l.b16 %v909
    %v1614 = vunpack.c.h.b16 %v909
    %v1615 = vunpack.c.l.b16 %v910
    %v1616 = vunpack.c.h.b16 %v910
    %v1617 = vunpack.c.l.b16 %v911
    %v1618 = vunpack.c.h.b16 %v911
    %v1619 = vunpack.c.l.b16 %v912
    %v1620 = vunpack.c.h.b16 %v912
    %v1621 = vunpack.c.l.b16 %v913
    %v1622 = vunpack.c.h.b16 %v913
    %v1623 = vunpack.c.l.b16 %v914
    %v1624 = vunpack.c.h.b16 %v914
    %v1625 = vunpack.c.l.b16 %v915
    %v1626 = vunpack.c.h.b16 %v915
    %v1627 = vunpack.c.l.b16 %v916
    %v1628 = vunpack.c.h.b16 %v916
    %v1629 = vunpack.c.l.b16 %v917
    %v1630 = vunpack.c.h.b16 %v917
    %v1631 = vunpack.c.l.b16 %v918
    %v1632 = vunpack.c.h.b16 %v918
    %v1633 = vunpack.c.l.b16 %v919
    %v1634 = vunpack.c.h.b16 %v919
    %v1635 = vunpack.c.l.b16 %v920
    %v1636 = vunpack.c.h.b16 %v920
    %v1637 = vunpack.c.l.b16 %v921
    %v1638 = vunpack.c.h.b16 %v921
    %v1639 = vunpack.c.l.b16 %v922
    %v1640 = vunpack.c.h.b16 %v922
    %v1641 = vunpack.c.l.b16 %v923
    %v1642 = vunpack.c.h.b16 %v923
    %v1643 = vunpack.c.l.b16 %v924
    %v1644 = vunpack.c.h.b16 %v924
    %v1645 = vunpack.c.l.b16 %v925
    %v1646 = vunpack.c.h.b16 %v925
    %v1647 = vunpack.c.l.b16 %v926
    %v1648 = vunpack.c.h.b16 %v926
    %v1649 = vunpack.c.l.b16 %v927
    %v1650 = vunpack.c.h.b16 %v927
    %v1651 = vunpack.c.l.b16 %v928
    %v1652 = vunpack.c.h.b16 %v928
    %v1653 = vunpack.c.l.b16 %v929
    %v1654 = vunpack.c.h.b16 %v929
    %v1655 = vunpack.c.l.b16 %v930
    %v1656 = vunpack.c.h.b16 %v930
    %v1657 = vunpack.c.l.b16 %v931
    %v1658 = vunpack.c.h.b16 %v931
    %v1659 = vunpack.c.l.b16 %v932
    %v1660 = vunpack.c.h.b16 %v932
    %v1661 = vunpack.c.l.b16 %v933
    %v1662 = vunpack.c.h.b16 %v933
    %v1663 = vunpack.c.l.b16 %v934
    %v1664 = vunpack.c.h.b16 %v934
    %v1665 = vunpack.c.l.b16 %v935
    %v1666 = vunpack.c.h.b16 %v935
    %v1667 = vunpack.c.l.b16 %v936
    %v1668 = vunpack.c.h.b16 %v936
    %v1669 = vunpack.c.l.b16 %v937
    %v1670 = vunpack.c.h.b16 %v937
    %v1671 = vunpack.c.l.b16 %v938
    %v1672 = vunpack.c.h.b16 %v938
    %v1673 = vunpack.c.l.b16 %v939
    %v1674 = vunpack.c.h.b16 %v939
    %v1675 = vunpack.c.l.b16 %v940
    %v1676 = vunpack.c.h.b16 %v940
    %v1677 = vunpack.c.l.b16 %v941
    %v1678 = vunpack.c.h.b16 %v941
    %v1679 = vunpack.c.l.b16 %v942
    %v1680 = vunpack.c.h.b16 %v942
    %v1681 = vunpack.c.l.b16 %v943
    %v1682 = vunpack.c.h.b16 %v943
    %v1683 = vunpack.c.l.b16 %v944
    %v1684 = vunpack.c.h.b16 %v944
    %v1685 = vunpack.c.l.b16 %v945
    %v1686 = vunpack.c.h.b16 %v945
    %v1687 = vunpack.c.l.b16 %v946
    %v1688 = vunpack.c.h.b16 %v946
    %v1689 = vunpack.c.l.b16 %v947
    %v1690 = vunpack.c.h.b16 %v947
    %v1691 = vunpack.c.l.b16 %v948
    %v1692 = vunpack.c.h.b16 %v948
    %v1693 = vunpack.c.l.b16 %v949
    %v1694 = vunpack.c.h.b16 %v949
    %v1695 = vunpack.c.l.b16 %v950
    %v1696 = vunpack.c.h.b16 %v950
    %v1697 = vunpack.c.l.b16 %v951
    %v1698 = vunpack.c.h.b16 %v951
    %v1699 = vunpack.c.l.b16 %v952
    %v1700 = vunpack.c.h.b16 %v952
    %v1701 = vunpack.c.l.b16 %v953
    %v1702 = vunpack.c.h.b16 %v953
    %v1703 = vunpack.c.l.b16 %v954
    %v1704 = vunpack.c.h.b16 %v954
    %v1705 = vunpack.c.l.b16 %v955
    %v1706 = vunpack.c.h.b16 %v955
    %v1707 = vunpack.c.l.b16 %v956
    %v1708 = vunpack.c.h.b16 %v956
    %v1709 = vunpack.c.l.b16 %v957
    %v1710 = vunpack.c.h.b16 %v957
    %v1711 = vunpack.c.l.b16 %v958
    %v1712 = vunpack.c.h.b16 %v958
    %v1713 = vunpack.c.l.b16 %v959
    %v1714 = vunpack.c.h.b16 %v959
    %v1715 = vunpack.c.l.b16 %v960
    %v1716 = vunpack.c.h.b16 %v960
    %v1717 = vunpack.c.l.b16 %v961
    %v1718 = vunpack.c.h.b16 %v961
    %v1719 = vunpack.c.l.b16 %v962
    %v1720 = vunpack.c.h.b16 %v962
    %v1721 = vunpack.c.l.b16 %v963
    %v1722 = vunpack.c.h.b16 %v963
    %v1723 = vunpack.c.l.b16 %v964
    %v1724 = vunpack.c.h.b16 %v964
    %v1725 = vunpack.c.l.b16 %v965
    %v1726 = vunpack.c.h.b16 %v965
    %v1727 = vunpack.c.l.b16 %v966
    %v1728 = vunpack.c.h.b16 %v966
    %v1729 = vunpack.c.l.b16 %v967
    %v1730 = vunpack.c.h.b16 %v967
    %v1731 = vunpack.c.l.b16 %v968
    %v1732 = vunpack.c.h.b16 %v968
    %v1733 = vunpack.c.l.b16 %v969
    %v1734 = vunpack.c.h.b16 %v969
    %v1735 = vunpack.c.l.b16 %v970
    %v1736 = vunpack.c.h.b16 %v970
    %v1737 = vunpack.c.l.b16 %v971
    %v1738 = vunpack.c.h.b16 %v971
    %v1739 = vunpack.c.l.b16 %v972
    %v1740 = vunpack.c.h.b16 %v972
    %v1741 = vunpack.c.l.b16 %v973
    %v1742 = vunpack.c.h.b16 %v973
    %v1743 = vunpack.c.l.b16 %v974
    %v1744 = vunpack.c.h.b16 %v974
    %v1745 = vunpack.c.l.b16 %v975
    %v1746 = vunpack.c.h.b16 %v975
    %v1747 = vunpack.c.l.b16 %v976
    %v1748 = vunpack.c.h.b16 %v976
    %v1749 = vunpack.c.l.b16 %v977
    %v1750 = vunpack.c.h.b16 %v977
    %v1751 = vunpack.c.l.b16 %v978
    %v1752 = vunpack.c.h.b16 %v978
    %v1753 = vunpack.c.l.b16 %v979
    %v1754 = vunpack.c.h.b16 %v979
    %v1755 = vunpack.c.l.b16 %v980
    %v1756 = vunpack.c.h.b16 %v980
    %v1757 = vunpack.c.l.b16 %v981
    %v1758 = vunpack.c.h.b16 %v981
    %v1759 = vunpack.c.l.b16 %v982
    %v1760 = vunpack.c.h.b16 %v982
    %v1761 = vunpack.c.l.b16 %v983
    %v1762 = vunpack.c.h.b16 %v983
    %v1763 = vunpack.c.l.b16 %v984
    %v1764 = vunpack.c.h.b16 %v984
    %v1765 = vunpack.c.l.b16 %v985
    %v1766 = vunpack.c.h.b16 %v985
    %v1767 = vunpack.c.l.b16 %v986
    %v1768 = vunpack.c.h.b16 %v986
    %v1769 = vunpack.c.l.b16 %v987
    %v1770 = vunpack.c.h.b16 %v987
    %v1771 = vunpack.c.l.b16 %v988
    %v1772 = vunpack.c.h.b16 %v988
    %v1773 = vunpack.c.l.b16 %v989
    %v1774 = vunpack.c.h.b16 %v989
    %v1775 = vunpack.c.l.b16 %v990
    %v1776 = vunpack.c.h.b16 %v990
    %v1777 = vunpack.c.l.b16 %v991
    %v1778 = vunpack.c.h.b16 %v991
    %v1779 = vunpack.c.l.b16 %v992
    %v1780 = vunpack.c.h.b16 %v992
    %v1781 = vunpack.c.l.b16 %v993
    %v1782 = vunpack.c.h.b16 %v993
    %v1783 = vunpack.c.l.b16 %v994
    %v1784 = vunpack.c.h.b16 %v994
    %v1785 = vunpack.c.l.b16 %v995
    %v1786 = vunpack.c.h.b16 %v995
    %v1787 = vunpack.c.l.b16 %v996
    %v1788 = vunpack.c.h.b16 %v996
    %v1789 = vunpack.c.l.b16 %v997
    %v1790 = vunpack.c.h.b16 %v997
    %v1791 = vunpack.c.l.b16 %v998
    %v1792 = vunpack.c.h.b16 %v998
    %v1793 = vunpack.c.l.b16 %v999
    %v1794 = vunpack.c.h.b16 %v999
    %v1795 = vunpack.c.l.b16 %v1000
    %v1796 = vunpack.c.h.b16 %v1000
    %v1797 = vunpack.c.l.b16 %v1001
    %v1798 = vunpack.c.h.b16 %v1001
    %v1799 = vunpack.c.l.b16 %v1002
    %v1800 = vunpack.c.h.b16 %v1002
    %v1801 = vunpack.c.l.b16 %v1003
    %v1802 = vunpack.c.h.b16 %v1003
    %v1803 = vunpack.c.l.b16 %v1004
    %v1804 = vunpack.c.h.b16 %v1004
    %v1805 = vunpack.c.l.b16 %v1005
    %v1806 = vunpack.c.h.b16 %v1005
    %v1807 = vunpack.c.l.b16 %v1006
    %v1808 = vunpack.c.h.b16 %v1006
    %v1809 = vunpack.c.l.b16 %v1007
    %v1810 = vunpack.c.h.b16 %v1007
    %v1811 = vunpack.c.l.b16 %v1008
    %v1812 = vunpack.c.h.b16 %v1008
    %v1813 = vunpack.c.l.b16 %v1009
    %v1814 = vunpack.c.h.b16 %v1009
    %v1815 = vunpack.c.l.b16 %v1010
    %v1816 = vunpack.c.h.b16 %v1010
    %v1817 = vunpack.c.l.b16 %v1011
    %v1818 = vunpack.c.h.b16 %v1011
    %v1819 = vunpack.c.l.b16 %v1012
    %v1820 = vunpack.c.h.b16 %v1012
    %v1821 = vunpack.c.l.b16 %v1013
    %v1822 = vunpack.c.h.b16 %v1013
    %v1823 = vunpack.c.l.b16 %v1014
    %v1824 = vunpack.c.h.b16 %v1014
    %v1825 = vpack.c.b16 %v1321, %v1313
    %v1826 = vpack.c.b16 %v1322, %v1314
    %v1827 = vpack.c.b16 %v1323, %v1315
    %v1828 = vpack.c.b16 %v1324, %v1316
    %v1829 = vpack.c.b16 %v1325, %v1317
    %v1830 = vpack.c.b16 %v1326, %v1318
    %v1831 = vpack.c.b16 %v1327, %v1319
    %v1832 = vpack.c.b16 %v1328, %v1320
    %v1833 = vpack.c.b16 %v1337, %v1329
    %v1834 = vpack.c.b16 %v1338, %v1330
    %v1835 = vpack.c.b16 %v1339, %v1331
    %v1836 = vpack.c.b16 %v1340, %v1332
    %v1837 = vpack.c.b16 %v1341, %v1333
    %v1838 = vpack.c.b16 %v1342, %v1334
    %v1839 = vpack.c.b16 %v1343, %v1335
    %v1840 = vpack.c.b16 %v1344, %v1336
    %v1841 = vpack.c.b16 %v1353, %v1345
    %v1842 = vpack.c.b16 %v1354, %v1346
    %v1843 = vpack.c.b16 %v1355, %v1347
    %v1844 = vpack.c.b16 %v1356, %v1348
    %v1845 = vpack.c.b16 %v1357, %v1349
    %v1846 = vpack.c.b16 %v1358, %v1350
    %v1847 = vpack.c.b16 %v1359, %v1351
    %v1848 = vpack.c.b16 %v1360, %v1352
    %v1849 = vpack.c.b16 %v1369, %v1361
    %v1850 = vpack.c.b16 %v1370, %v1362
    %v1851 = vpack.c.b16 %v1371, %v1363
    %v1852 = vpack.c.b16 %v1372, %v1364
    %v1853 = vpack.c.b16 %v1373, %v1365
    %v1854 = vpack.c.b16 %v1374, %v1366
    %v1855 = vpack.c.b16 %v1375, %v1367
    %v1856 = vpack.c.b16 %v1376, %v1368
    %v1857 = vpack.c.b16 %v1385, %v1377
    %v1858 = vpack.c.b16 %v1386, %v1378
    %v1859 = vpack.c.b16 %v1387, %v1379
    %v1860 = vpack.c.b16 %v1388, %v1380
    %v1861 = vpack.c.b16 %v1389, %v1381
    %v1862 = vpack.c.b16 %v1390, %v1382
    %v1863 = vpack.c.b16 %v1391, %v1383
    %v1864 = vpack.c.b16 %v1392, %v1384
    %v1865 = vpack.c.b16 %v1401, %v1393
    %v1866 = vpack.c.b16 %v1402, %v1394
    %v1867 = vpack.c.b16 %v1403, %v1395
    %v1868 = vpack.c.b16 %v1404, %v1396
    %v1869 = vpack.c.b16 %v1405, %v1397
    %v1870 = vpack.c.b16 %v1406, %v1398
    %v1871 = vpack.c.b16 %v1407, %v1399
    %v1872 = vpack.c.b16 %v1408, %v1400
    %v1873 = vpack.c.b16 %v1417, %v1409
    %v1874 = vpack.c.b16 %v1418, %v1410
    %v1875 = vpack.c.b16 %v1419, %v1411
    %v1876 = vpack.c.b16 %v1420, %v1412
    %v1877 = vpack.c.b16 %v1421, %v1413
    %v1878 = vpack.c.b16 %v1422, %v1414
    %v1879 = vpack.c.b16 %v1423, %v1415
    %v1880 = vpack.c.b16 %v1424, %v1416
    %v1881 = vpack.c.b16 %v1433, %v1425
    %v1882 = vpack.c.b16 %v1434, %v1426
    %v1883 = vpack.c.b16 %v1435, %v1427
    %v1884 = vpack.c.b16 %v1436, %v1428
    %v1885 = vpack.c.b16 %v1437, %v1429
    %v1886 = vpack.c.b16 %v1438, %v1430
    %v1887 = vpack.c.b16 %v1439, %v1431
    %v1888 = vpack.c.b16 %v1440, %v1432
    %v1889 = vpack.c.b16 %v1449, %v1441
    %v1890 = vpack.c.b16 %v1450, %v1442
    %v1891 = vpack.c.b16 %v1451, %v1443
    %v1892 = vpack.c.b16 %v1452, %v1444
    %v1893 = vpack.c.b16 %v1453, %v1445
    %v1894 = vpack.c.b16 %v1454, %v1446
    %v1895 = vpack.c.b16 %v1455, %v1447
    %v1896 = vpack.c.b16 %v1456, %v1448
    %v1897 = vpack.c.b16 %v1465, %v1457
    %v1898 = vpack.c.b16 %v1466, %v1458
    %v1899 = vpack.c.b16 %v1467, %v1459
    %v1900 = vpack.c.b16 %v1468, %v1460
    %v1901 = vpack.c.b16 %v1469, %v1461
    %v1902 = vpack.c.b16 %v1470, %v1462
    %v1903 = vpack.c.b16 %v1471, %v1463
    %v1904 = vpack.c.b16 %v1472, %v1464
    %v1905 = vpack.c.b16 %v1481, %v1473
    %v1906 = vpack.c.b16 %v1482, %v1474
    %v1907 = vpack.c.b16 %v1483, %v1475
    %v1908 = vpack.c.b16 %v1484, %v1476
    %v1909 = vpack.c.b16 %v1485, %v1477
    %v1910 = vpack.c.b16 %v1486, %v1478
    %v1911 = vpack.c.b16 %v1487, %v1479
    %v1912 = vpack.c.b16 %v1488, %v1480
    %v1913 = vpack.c.b16 %v1497, %v1489
    %v1914 = vpack.c.b16 %v1498, %v1490
    %v1915 = vpack.c.b16 %v1499, %v1491
    %v1916 = vpack.c.b16 %v1500, %v1492
    %v1917 = vpack.c.b16 %v1501, %v1493
    %v1918 = vpack.c.b16 %v1502, %v1494
    %v1919 = vpack.c.b16 %v1503, %v1495
    %v1920 = vpack.c.b16 %v1504, %v1496
    %v1921 = vpack.c.b16 %v1513, %v1505
    %v1922 = vpack.c.b16 %v1514, %v1506
    %v1923 = vpack.c.b16 %v1515, %v1507
    %v1924 = vpack.c.b16 %v1516, %v1508
    %v1925 = vpack.c.b16 %v1517, %v1509
    %v1926 = vpack.c.b16 %v1518, %v1510
    %v1927 = vpack.c.b16 %v1519, %v1511
    %v1928 = vpack.c.b16 %v1520, %v1512
    %v1929 = vpack.c.b16 %v1529, %v1521
    %v1930 = vpack.c.b16 %v1530, %v1522
    %v1931 = vpack.c.b16 %v1531, %v1523
    %v1932 = vpack.c.b16 %v1532, %v1524
    %v1933 = vpack.c.b16 %v1533, %v1525
    %v1934 = vpack.c.b16 %v1534, %v1526
    %v1935 = vpack.c.b16 %v1535, %v1527
    %v1936 = vpack.c.b16 %v1536, %v1528
    %v1937 = vpack.c.b16 %v1545, %v1537
    %v1938 = vpack.c.b16 %v1546, %v1538
    %v1939 = vpack.c.b16 %v1547, %v1539
    %v1940 = vpack.c.b16 %v1548, %v1540
    %v1941 = vpack.c.b16 %v1549, %v1541
    %v1942 = vpack.c.b16 %v1550, %v1542
    %v1943 = vpack.c.b16 %v1551, %v1543
    %v1944 = vpack.c.b16 %v1552, %v1544
    %v1945 = vpack.c.b16 %v1561, %v1553
    %v1946 = vpack.c.b16 %v1562, %v1554
    %v1947 = vpack.c.b16 %v1563, %v1555
    %v1948 = vpack.c.b16 %v1564, %v1556
    %v1949 = vpack.c.b16 %v1565, %v1557
    %v1950 = vpack.c.b16 %v1566, %v1558
    %v1951 = vpack.c.b16 %v1567, %v1559
    %v1952 = vpack.c.b16 %v1568, %v1560
    %v1953 = vpack.c.b16 %v1577, %v1569
    %v1954 = vpack.c.b16 %v1578, %v1570
    %v1955 = vpack.c.b16 %v1579, %v1571
    %v1956 = vpack.c.b16 %v1580, %v1572
    %v1957 = vpack.c.b16 %v1581, %v1573
    %v1958 = vpack.c.b16 %v1582, %v1574
    %v1959 = vpack.c.b16 %v1583, %v1575
    %v1960 = vpack.c.b16 %v1584, %v1576
    %v1961 = vpack.c.b16 %v1593, %v1585
    %v1962 = vpack.c.b16 %v1594, %v1586
    %v1963 = vpack.c.b16 %v1595, %v1587
    %v1964 = vpack.c.b16 %v1596, %v1588
    %v1965 = vpack.c.b16 %v1597, %v1589
    %v1966 = vpack.c.b16 %v1598, %v1590
    %v1967 = vpack.c.b16 %v1599, %v1591
    %v1968 = vpack.c.b16 %v1600, %v1592
    %v1969 = vpack.c.b16 %v1609, %v1601
    %v1970 = vpack.c.b16 %v1610, %v1602
    %v1971 = vpack.c.b16 %v1611, %v1603
    %v1972 = vpack.c.b16 %v1612, %v1604
    %v1973 = vpack.c.b16 %v1613, %v1605
    %v1974 = vpack.c.b16 %v1614, %v1606
    %v1975 = vpack.c.b16 %v1615, %v1607
    %v1976 = vpack.c.b16 %v1616, %v1608
    %v1977 = vpack.c.b16 %v1625, %v1617
    %v1978 = vpack.c.b16 %v1626, %v1618
    %v1979 = vpack.c.b16 %v1627, %v1619
    %v1980 = vpack.c.b16 %v1628, %v1620
    %v1981 = vpack.c.b16 %v1629, %v1621
    %v1982 = vpack.c.b16 %v1630, %v1622
    %v1983 = vpack.c.b16 %v1631, %v1623
    %v1984 = vpack.c.b16 %v1632, %v1624
    %v1985 = vpack.c.b16 %v1641, %v1633
    %v1986 = vpack.c.b16 %v1642, %v1634
    %v1987 = vpack.c.b16 %v1643, %v1635
    %v1988 = vpack.c.b16 %v1644, %v1636
    %v1989 = vpack.c.b16 %v1645, %v1637
    %v1990 = vpack.c.b16 %v1646, %v1638
    %v1991 = vpack.c.b16 %v1647, %v1639
    %v1992 = vpack.c.b16 %v1648, %v1640
    %v1993 = vpack.c.b16 %v1657, %v1649
    %v1994 = vpack.c.b16 %v1658, %v1650
    %v1995 = vpack.c.b16 %v1659, %v1651
    %v1996 = vpack.c.b16 %v1660, %v1652
    %v1997 = vpack.c.b16 %v1661, %v1653
    %v1998 = vpack.c.b16 %v1662, %v1654
    %v1999 = vpack.c.b16 %v1663, %v1655
    %v2000 = vpack.c.b16 %v1664, %v1656
    %v2001 = vpack.c.b16 %v1673, %v1665
    %v2002 = vpack.c.b16 %v1674, %v1666
    %v2003 = vpack.c.b16 %v1675, %v1667
    %v2004 = vpack.c.b16 %v1676, %v1668
    %v2005 = vpack.c.b16 %v1677, %v1669
    %v2006 = vpack.c.b16 %v1678, %v1670
    %v2007 = vpack.c.b16 %v1679, %v1671
    %v2008 = vpack.c.b16 %v1680, %v1672
    %v2009 = vpack.c.b16 %v1689, %v1681
    %v2010 = vpack.c.b16 %v1690, %v1682
    %v2011 = vpack.c.b16 %v1691, %v1683
    %v2012 = vpack.c.b16 %v1692, %v1684
    %v2013 = vpack.c.b16 %v1693, %v1685
    %v2014 = vpack.c.b16 %v1694, %v1686
    %v2015 = vpack.c.b16 %v1695, %v1687
    %v2016 = vpack.c.b16 %v1696, %v1688
    %v2017 = vpack.c.b16 %v1705, %v1697
    %v2018 = vpack.c.b16 %v1706, %v1698
    %v2019 = vpack.c.b16 %v1707, %v1699
    %v2020 = vpack.c.b16 %v1708, %v1700
    %v2021 = vpack.c.b16 %v1709, %v1701
    %v2022 = vpack.c.b16 %v1710, %v1702
    %v2023 = vpack.c.b16 %v1711, %v1703
    %v2024 = vpack.c.b16 %v1712, %v1704
    %v2025 = vpack.c.b16 %v1721, %v1713
    %v2026 = vpack.c.b16 %v1722, %v1714
    %v2027 = vpack.c.b16 %v1723, %v1715
    %v2028 = vpack.c.b16 %v1724, %v1716
    %v2029 = vpack.c.b16 %v1725, %v1717
    %v2030 = vpack.c.b16 %v1726, %v1718
    %v2031 = vpack.c.b16 %v1727, %v1719
    %v2032 = vpack.c.b16 %v1728, %v1720
    %v2033 = vpack.c.b16 %v1737, %v1729
    %v2034 = vpack.c.b16 %v1738, %v1730
    %v2035 = vpack.c.b16 %v1739, %v1731
    %v2036 = vpack.c.b16 %v1740, %v1732
    %v2037 = vpack.c.b16 %v1741, %v1733
    %v2038 = vpack.c.b16 %v1742, %v1734
    %v2039 = vpack.c.b16 %v1743, %v1735
    %v2040 = vpack.c.b16 %v1744, %v1736
    %v2041 = vpack.c.b16 %v1753, %v1745
    %v2042 = vpack.c.b16 %v1754, %v1746
    %v2043 = vpack.c.b16 %v1755, %v1747
    %v2044 = vpack.c.b16 %v1756, %v1748
    %v2045 = vpack.c.b16 %v1757, %v1749
    %v2046 = vpack.c.b16 %v1758, %v1750
    %v2047 = vpack.c.b16 %v1759, %v1751
    %v2048 = vpack.c.b16 %v1760, %v1752
    %v2049 = vpack.c.b16 %v1769, %v1761
    %v2050 = vpack.c.b16 %v1770, %v1762
    %v2051 = vpack.c.b16 %v1771, %v1763
    %v2052 = vpack.c.b16 %v1772, %v1764
    %v2053 = vpack.c.b16 %v1773, %v1765
    %v2054 = vpack.c.b16 %v1774, %v1766
    %v2055 = vpack.c.b16 %v1775, %v1767
    %v2056 = vpack.c.b16 %v1776, %v1768
    %v2057 = vpack.c.b16 %v1785, %v1777
    %v2058 = vpack.c.b16 %v1786, %v1778
    %v2059 = vpack.c.b16 %v1787, %v1779
    %v2060 = vpack.c.b16 %v1788, %v1780
    %v2061 = vpack.c.b16 %v1789, %v1781
    %v2062 = vpack.c.b16 %v1790, %v1782
    %v2063 = vpack.c.b16 %v1791, %v1783
    %v2064 = vpack.c.b16 %v1792, %v1784
    %v2065 = vpack.c.b16 %v1801, %v1793
    %v2066 = vpack.c.b16 %v1802, %v1794
    %v2067 = vpack.c.b16 %v1803, %v1795
    %v2068 = vpack.c.b16 %v1804, %v1796
    %v2069 = vpack.c.b16 %v1805, %v1797
    %v2070 = vpack.c.b16 %v1806, %v1798
    %v2071 = vpack.c.b16 %v1807, %v1799
    %v2072 = vpack.c.b16 %v1808, %v1800
    %v2073 = vpack.c.b16 %v1817, %v1809
    %v2074 = vpack.c.b16 %v1818, %v1810
    %v2075 = vpack.c.b16 %v1819, %v1811
    %v2076 = vpack.c.b16 %v1820, %v1812
    %v2077 = vpack.c.b16 %v1821, %v1813
    %v2078 = vpack.c.b16 %v1822, %v1814
    %v2079 = vpack.c.b16 %v1823, %v1815
    %v2080 = vpack.c.b16 %v1824, %v1816
    %2337 = vmatprep.subr.bf16.mxu0 %v1826
    %2338 = vmatpush1.bf16.msra.mxu0 %v1825
    %2339 = vmatprep.subr.bf16.mxu0 %v1834
    %2340 = vmatpush1.bf16.msra.mxu0 %v1833
    %2341 = vmatprep.subr.bf16.mxu0 %v1842
    %2342 = vmatpush1.bf16.msra.mxu0 %v1841
    %2343 = vmatprep.subr.bf16.mxu0 %v1850
    %2344 = vmatpush1.bf16.msra.mxu0 %v1849
    %2345 = vmatprep.subr.bf16.mxu0 %v1858
    %2346 = vmatpush1.bf16.msra.mxu0 %v1857
    %2347 = vmatprep.subr.bf16.mxu0 %v1866
    %2348 = vmatpush1.bf16.msra.mxu0 %v1865
    %2349 = vmatprep.subr.bf16.mxu0 %v1874
    %2350 = vmatpush1.bf16.msra.mxu0 %v1873
    %2351 = vmatprep.subr.bf16.mxu0 %v1882
    %2352 = vmatpush1.bf16.msra.mxu0 %v1881
    %2353 = vmatprep.subr.bf16.mxu0 %v1890
    %2354 = vmatpush1.bf16.msra.mxu0 %v1889
    %2355 = vmatprep.subr.bf16.mxu0 %v1898
    %2356 = vmatpush1.bf16.msra.mxu0 %v1897
    %2357 = vmatprep.subr.bf16.mxu0 %v1906
    %2358 = vmatpush1.bf16.msra.mxu0 %v1905
    %2359 = vmatprep.subr.bf16.mxu0 %v1914
    %2360 = vmatpush1.bf16.msra.mxu0 %v1913
    %2361 = vmatprep.subr.bf16.mxu0 %v1922
    %2362 = vmatpush1.bf16.msra.mxu0 %v1921
    %2363 = vmatprep.subr.bf16.mxu0 %v1930
    %2364 = vmatpush1.bf16.msra.mxu0 %v1929
    %2365 = vmatprep.subr.bf16.mxu0 %v1938
    %2366 = vmatpush1.bf16.msra.mxu0 %v1937
    %2367 = vmatprep.subr.bf16.mxu0 %v1946
    %2368 = vmatpush1.bf16.msra.mxu0 %v1945
    %2369 = vmatprep.mubr.bf16.mxu0 %v756
    %2370 = vmatmul.mubr.bf16.gmra.mrb[0].mxu0 %v755
    %v2371 = vpop.f32.mrb[0].mxu0
    %v2372 = vadd.f32 %v1020, %v2371
    %v2373 = vpop.f32.mrb[0].mxu0
    %v2374 = vadd.f32 %v1024, %v2373
    %v2375 = vpop.f32.mrb[0].mxu0
    %v2376 = vpop.f32.mrb[0].mxu0
    %2377 = vdwg.mxu0
    %2378 = vmatprep.subr.bf16.mxu0 %v1954
    %2379 = vmatpush1.bf16.msra.mxu0 %v1953
    %2380 = vmatprep.subr.bf16.mxu0 %v1962
    %2381 = vmatpush1.bf16.msra.mxu0 %v1961
    %2382 = vmatprep.subr.bf16.mxu0 %v1970
    %2383 = vmatpush1.bf16.msra.mxu0 %v1969
    %2384 = vmatprep.subr.bf16.mxu0 %v1978
    %2385 = vmatpush1.bf16.msra.mxu0 %v1977
    %2386 = vmatprep.subr.bf16.mxu0 %v1986
    %2387 = vmatpush1.bf16.msra.mxu0 %v1985
    %2388 = vmatprep.subr.bf16.mxu0 %v1994
    %2389 = vmatpush1.bf16.msra.mxu0 %v1993
    %2390 = vmatprep.subr.bf16.mxu0 %v2002
    %2391 = vmatpush1.bf16.msra.mxu0 %v2001
    %2392 = vmatprep.subr.bf16.mxu0 %v2010
    %2393 = vmatpush1.bf16.msra.mxu0 %v2009
    %2394 = vmatprep.subr.bf16.mxu0 %v2018
    %2395 = vmatpush1.bf16.msra.mxu0 %v2017
    %2396 = vmatprep.subr.bf16.mxu0 %v2026
    %2397 = vmatpush1.bf16.msra.mxu0 %v2025
    %2398 = vmatprep.subr.bf16.mxu0 %v2034
    %2399 = vmatpush1.bf16.msra.mxu0 %v2033
    %2400 = vmatprep.subr.bf16.mxu0 %v2042
    %2401 = vmatpush1.bf16.msra.mxu0 %v2041
    %2402 = vmatprep.subr.bf16.mxu0 %v2050
    %2403 = vmatpush1.bf16.msra.mxu0 %v2049
    %2404 = vmatprep.subr.bf16.mxu0 %v2058
    %2405 = vmatpush1.bf16.msra.mxu0 %v2057
    %2406 = vmatprep.subr.bf16.mxu0 %v2066
    %2407 = vmatpush1.bf16.msra.mxu0 %v2065
    %2408 = vmatprep.subr.bf16.mxu0 %v2074
    %2409 = vmatpush1.bf16.msra.mxu0 %v2073
    %2410 = vmatprep.mubr.bf16.mxu0 %v758
    %2411 = vmatmul.mubr.bf16.gmra.mrb[0].mxu0 %v757
    %v2412 = vpop.f32.mrb[0].mxu0
    %v2413 = vadd.f32 %v2372, %v2412
    %v2414 = vpop.f32.mrb[0].mxu0
    %v2415 = vadd.f32 %v2374, %v2414
    %v2416 = vpop.f32.mrb[0].mxu0
    %v2417 = vpop.f32.mrb[0].mxu0
    %2418 = vdwg.mxu0
    %2419 = vmatprep.subr.bf16.mxu0 %v1828
    %2420 = vmatpush1.bf16.msra.mxu0 %v1827
    %2421 = vmatprep.subr.bf16.mxu0 %v1836
    %2422 = vmatpush1.bf16.msra.mxu0 %v1835
    %2423 = vmatprep.subr.bf16.mxu0 %v1844
    %2424 = vmatpush1.bf16.msra.mxu0 %v1843
    %2425 = vmatprep.subr.bf16.mxu0 %v1852
    %2426 = vmatpush1.bf16.msra.mxu0 %v1851
    %2427 = vmatprep.subr.bf16.mxu0 %v1860
    %2428 = vmatpush1.bf16.msra.mxu0 %v1859
    %2429 = vmatprep.subr.bf16.mxu0 %v1868
    %2430 = vmatpush1.bf16.msra.mxu0 %v1867
    %2431 = vmatprep.subr.bf16.mxu0 %v1876
    %2432 = vmatpush1.bf16.msra.mxu0 %v1875
    %2433 = vmatprep.subr.bf16.mxu0 %v1884
    %2434 = vmatpush1.bf16.msra.mxu0 %v1883
    %2435 = vmatprep.subr.bf16.mxu0 %v1892
    %2436 = vmatpush1.bf16.msra.mxu0 %v1891
    %2437 = vmatprep.subr.bf16.mxu0 %v1900
    %2438 = vmatpush1.bf16.msra.mxu0 %v1899
    %2439 = vmatprep.subr.bf16.mxu0 %v1908
    %2440 = vmatpush1.bf16.msra.mxu0 %v1907
    %2441 = vmatprep.subr.bf16.mxu0 %v1916
    %2442 = vmatpush1.bf16.msra.mxu0 %v1915
    %2443 = vmatprep.subr.bf16.mxu0 %v1924
    %2444 = vmatpush1.bf16.msra.mxu0 %v1923
    %2445 = vmatprep.subr.bf16.mxu0 %v1932
    %2446 = vmatpush1.bf16.msra.mxu0 %v1931
    %2447 = vmatprep.subr.bf16.mxu0 %v1940
    %2448 = vmatpush1.bf16.msra.mxu0 %v1939
    %2449 = vmatprep.subr.bf16.mxu0 %v1948
    %2450 = vmatpush1.bf16.msra.mxu0 %v1947
    %2451 = vmatprep.mubr.bf16.mxu0 %v756
    %2452 = vmatmul.mubr.bf16.gmra.mrb[0].mxu0 %v755
    %v2453 = vpop.f32.mrb[0].mxu0
    %v2454 = vadd.f32 %v1028, %v2453
    %v2455 = vpop.f32.mrb[0].mxu0
    %v2456 = vadd.f32 %v1032, %v2455
    %v2457 = vpop.f32.mrb[0].mxu0
    %v2458 = vpop.f32.mrb[0].mxu0
    %2459 = vdwg.mxu0
    %2460 = vmatprep.subr.bf16.mxu0 %v1956
    %2461 = vmatpush1.bf16.msra.mxu0 %v1955
    %2462 = vmatprep.subr.bf16.mxu0 %v1964
    %2463 = vmatpush1.bf16.msra.mxu0 %v1963
    %2464 = vmatprep.subr.bf16.mxu0 %v1972
    %2465 = vmatpush1.bf16.msra.mxu0 %v1971
    %2466 = vmatprep.subr.bf16.mxu0 %v1980
    %2467 = vmatpush1.bf16.msra.mxu0 %v1979
    %2468 = vmatprep.subr.bf16.mxu0 %v1988
    %2469 = vmatpush1.bf16.msra.mxu0 %v1987
    %2470 = vmatprep.subr.bf16.mxu0 %v1996
    %2471 = vmatpush1.bf16.msra.mxu0 %v1995
    %2472 = vmatprep.subr.bf16.mxu0 %v2004
    %2473 = vmatpush1.bf16.msra.mxu0 %v2003
    %2474 = vmatprep.subr.bf16.mxu0 %v2012
    %2475 = vmatpush1.bf16.msra.mxu0 %v2011
    %2476 = vmatprep.subr.bf16.mxu0 %v2020
    %2477 = vmatpush1.bf16.msra.mxu0 %v2019
    %2478 = vmatprep.subr.bf16.mxu0 %v2028
    %2479 = vmatpush1.bf16.msra.mxu0 %v2027
    %2480 = vmatprep.subr.bf16.mxu0 %v2036
    %2481 = vmatpush1.bf16.msra.mxu0 %v2035
    %2482 = vmatprep.subr.bf16.mxu0 %v2044
    %2483 = vmatpush1.bf16.msra.mxu0 %v2043
    %2484 = vmatprep.subr.bf16.mxu0 %v2052
    %2485 = vmatpush1.bf16.msra.mxu0 %v2051
    %2486 = vmatprep.subr.bf16.mxu0 %v2060
    %2487 = vmatpush1.bf16.msra.mxu0 %v2059
    %2488 = vmatprep.subr.bf16.mxu0 %v2068
    %2489 = vmatpush1.bf16.msra.mxu0 %v2067
    %2490 = vmatprep.subr.bf16.mxu0 %v2076
    %2491 = vmatpush1.bf16.msra.mxu0 %v2075
    %2492 = vmatprep.mubr.bf16.mxu0 %v758
    %2493 = vmatmul.mubr.bf16.gmra.mrb[0].mxu0 %v757
    %v2494 = vpop.f32.mrb[0].mxu0
    %v2495 = vadd.f32 %v2454, %v2494
    %v2496 = vpop.f32.mrb[0].mxu0
    %v2497 = vadd.f32 %v2456, %v2496
    %v2498 = vpop.f32.mrb[0].mxu0
    %v2499 = vpop.f32.mrb[0].mxu0
    %2500 = vdwg.mxu0
    %2501 = vmatprep.subr.bf16.mxu0 %v1830
    %2502 = vmatpush1.bf16.msra.mxu0 %v1829
    %2503 = vmatprep.subr.bf16.mxu0 %v1838
    %2504 = vmatpush1.bf16.msra.mxu0 %v1837
    %2505 = vmatprep.subr.bf16.mxu0 %v1846
    %2506 = vmatpush1.bf16.msra.mxu0 %v1845
    %2507 = vmatprep.subr.bf16.mxu0 %v1854
    %2508 = vmatpush1.bf16.msra.mxu0 %v1853
    %2509 = vmatprep.subr.bf16.mxu0 %v1862
    %2510 = vmatpush1.bf16.msra.mxu0 %v1861
    %2511 = vmatprep.subr.bf16.mxu0 %v1870
    %2512 = vmatpush1.bf16.msra.mxu0 %v1869
    %2513 = vmatprep.subr.bf16.mxu0 %v1878
    %2514 = vmatpush1.bf16.msra.mxu0 %v1877
    %2515 = vmatprep.subr.bf16.mxu0 %v1886
    %2516 = vmatpush1.bf16.msra.mxu0 %v1885
    %2517 = vmatprep.subr.bf16.mxu0 %v1894
    %2518 = vmatpush1.bf16.msra.mxu0 %v1893
    %2519 = vmatprep.subr.bf16.mxu0 %v1902
    %2520 = vmatpush1.bf16.msra.mxu0 %v1901
    %2521 = vmatprep.subr.bf16.mxu0 %v1910
    %2522 = vmatpush1.bf16.msra.mxu0 %v1909
    %2523 = vmatprep.subr.bf16.mxu0 %v1918
    %2524 = vmatpush1.bf16.msra.mxu0 %v1917
    %2525 = vmatprep.subr.bf16.mxu0 %v1926
    %2526 = vmatpush1.bf16.msra.mxu0 %v1925
    %2527 = vmatprep.subr.bf16.mxu0 %v1934
    %2528 = vmatpush1.bf16.msra.mxu0 %v1933
    %2529 = vmatprep.subr.bf16.mxu0 %v1942
    %2530 = vmatpush1.bf16.msra.mxu0 %v1941
    %2531 = vmatprep.subr.bf16.mxu0 %v1950
    %2532 = vmatpush1.bf16.msra.mxu0 %v1949
    %2533 = vmatprep.mubr.bf16.mxu0 %v756
    %2534 = vmatmul.mubr.bf16.gmra.mrb[0].mxu0 %v755
    %v2535 = vpop.f32.mrb[0].mxu0
    %v2536 = vadd.f32 %v1036, %v2535
    %v2537 = vpop.f32.mrb[0].mxu0
    %v2538 = vadd.f32 %v1040, %v2537
    %v2539 = vpop.f32.mrb[0].mxu0
    %v2540 = vpop.f32.mrb[0].mxu0
    %2541 = vdwg.mxu0
    %2542 = vmatprep.subr.bf16.mxu0 %v1958
    %2543 = vmatpush1.bf16.msra.mxu0 %v1957
    %2544 = vmatprep.subr.bf16.mxu0 %v1966
    %2545 = vmatpush1.bf16.msra.mxu0 %v1965
    %2546 = vmatprep.subr.bf16.mxu0 %v1974
    %2547 = vmatpush1.bf16.msra.mxu0 %v1973
    %2548 = vmatprep.subr.bf16.mxu0 %v1982
    %2549 = vmatpush1.bf16.msra.mxu0 %v1981
    %2550 = vmatprep.subr.bf16.mxu0 %v1990
    %2551 = vmatpush1.bf16.msra.mxu0 %v1989
    %2552 = vmatprep.subr.bf16.mxu0 %v1998
    %2553 = vmatpush1.bf16.msra.mxu0 %v1997
    %2554 = vmatprep.subr.bf16.mxu0 %v2006
    %2555 = vmatpush1.bf16.msra.mxu0 %v2005
    %2556 = vmatprep.subr.bf16.mxu0 %v2014
    %2557 = vmatpush1.bf16.msra.mxu0 %v2013
    %2558 = vmatprep.subr.bf16.mxu0 %v2022
    %2559 = vmatpush1.bf16.msra.mxu0 %v2021
    %2560 = vmatprep.subr.bf16.mxu0 %v2030
    %2561 = vmatpush1.bf16.msra.mxu0 %v2029
    %2562 = vmatprep.subr.bf16.mxu0 %v2038
    %2563 = vmatpush1.bf16.msra.mxu0 %v2037
    %2564 = vmatprep.subr.bf16.mxu0 %v2046
    %2565 = vmatpush1.bf16.msra.mxu0 %v2045
    %2566 = vmatprep.subr.bf16.mxu0 %v2054
    %2567 = vmatpush1.bf16.msra.mxu0 %v2053
    %2568 = vmatprep.subr.bf16.mxu0 %v2062
    %2569 = vmatpush1.bf16.msra.mxu0 %v2061
    %2570 = vmatprep.subr.bf16.mxu0 %v2070
    %2571 = vmatpush1.bf16.msra.mxu0 %v2069
    %2572 = vmatprep.subr.bf16.mxu0 %v2078
    %2573 = vmatpush1.bf16.msra.mxu0 %v2077
    %2574 = vmatprep.mubr.bf16.mxu0 %v758
    %2575 = vmatmul.mubr.bf16.gmra.mrb[0].mxu0 %v757
    %v2576 = vpop.f32.mrb[0].mxu0
    %v2577 = vadd.f32 %v2536, %v2576
    %v2578 = vpop.f32.mrb[0].mxu0
    %v2579 = vadd.f32 %v2538, %v2578
    %v2580 = vpop.f32.mrb[0].mxu0
    %v2581 = vpop.f32.mrb[0].mxu0
    %2582 = vdwg.mxu0
    %2583 = vmatprep.subr.bf16.mxu0 %v1832
    %2584 = vmatpush1.bf16.msra.mxu0 %v1831
    %2585 = vmatprep.subr.bf16.mxu0 %v1840
    %2586 = vmatpush1.bf16.msra.mxu0 %v1839
    %2587 = vmatprep.subr.bf16.mxu0 %v1848
    %2588 = vmatpush1.bf16.msra.mxu0 %v1847
    %2589 = vmatprep.subr.bf16.mxu0 %v1856
    %2590 = vmatpush1.bf16.msra.mxu0 %v1855
    %2591 = vmatprep.subr.bf16.mxu0 %v1864
    %2592 = vmatpush1.bf16.msra.mxu0 %v1863
    %2593 = vmatprep.subr.bf16.mxu0 %v1872
    %2594 = vmatpush1.bf16.msra.mxu0 %v1871
    %2595 = vmatprep.subr.bf16.mxu0 %v1880
    %2596 = vmatpush1.bf16.msra.mxu0 %v1879
    %2597 = vmatprep.subr.bf16.mxu0 %v1888
    %2598 = vmatpush1.bf16.msra.mxu0 %v1887
    %2599 = vmatprep.subr.bf16.mxu0 %v1896
    %2600 = vmatpush1.bf16.msra.mxu0 %v1895
    %2601 = vmatprep.subr.bf16.mxu0 %v1904
    %2602 = vmatpush1.bf16.msra.mxu0 %v1903
    %2603 = vmatprep.subr.bf16.mxu0 %v1912
    %2604 = vmatpush1.bf16.msra.mxu0 %v1911
    %2605 = vmatprep.subr.bf16.mxu0 %v1920
    %2606 = vmatpush1.bf16.msra.mxu0 %v1919
    %2607 = vmatprep.subr.bf16.mxu0 %v1928
    %2608 = vmatpush1.bf16.msra.mxu0 %v1927
    %2609 = vmatprep.subr.bf16.mxu0 %v1936
    %2610 = vmatpush1.bf16.msra.mxu0 %v1935
    %2611 = vmatprep.subr.bf16.mxu0 %v1944
    %2612 = vmatpush1.bf16.msra.mxu0 %v1943
    %2613 = vmatprep.subr.bf16.mxu0 %v1952
    %2614 = vmatpush1.bf16.msra.mxu0 %v1951
    %2615 = vmatprep.mubr.bf16.mxu0 %v756
    %2616 = vmatmul.mubr.bf16.gmra.mrb[0].mxu0 %v755
    %v2617 = vpop.f32.mrb[0].mxu0
    %v2618 = vadd.f32 %v1044, %v2617
    %v2619 = vpop.f32.mrb[0].mxu0
    %v2620 = vadd.f32 %v1048, %v2619
    %v2621 = vpop.f32.mrb[0].mxu0
    %v2622 = vpop.f32.mrb[0].mxu0
    %2623 = vdwg.mxu0
    %2624 = vmatprep.subr.bf16.mxu0 %v1960
    %2625 = vmatpush1.bf16.msra.mxu0 %v1959
    %2626 = vmatprep.subr.bf16.mxu0 %v1968
    %2627 = vmatpush1.bf16.msra.mxu0 %v1967
    %2628 = vmatprep.subr.bf16.mxu0 %v1976
    %2629 = vmatpush1.bf16.msra.mxu0 %v1975
    %2630 = vmatprep.subr.bf16.mxu0 %v1984
    %2631 = vmatpush1.bf16.msra.mxu0 %v1983
    %2632 = vmatprep.subr.bf16.mxu0 %v1992
    %2633 = vmatpush1.bf16.msra.mxu0 %v1991
    %2634 = vmatprep.subr.bf16.mxu0 %v2000
    %2635 = vmatpush1.bf16.msra.mxu0 %v1999
    %2636 = vmatprep.subr.bf16.mxu0 %v2008
    %2637 = vmatpush1.bf16.msra.mxu0 %v2007
    %2638 = vmatprep.subr.bf16.mxu0 %v2016
    %2639 = vmatpush1.bf16.msra.mxu0 %v2015
    %2640 = vmatprep.subr.bf16.mxu0 %v2024
    %2641 = vmatpush1.bf16.msra.mxu0 %v2023
    %2642 = vmatprep.subr.bf16.mxu0 %v2032
    %2643 = vmatpush1.bf16.msra.mxu0 %v2031
    %2644 = vmatprep.subr.bf16.mxu0 %v2040
    %2645 = vmatpush1.bf16.msra.mxu0 %v2039
    %2646 = vmatprep.subr.bf16.mxu0 %v2048
    %2647 = vmatpush1.bf16.msra.mxu0 %v2047
    %2648 = vmatprep.subr.bf16.mxu0 %v2056
    %2649 = vmatpush1.bf16.msra.mxu0 %v2055
    %2650 = vmatprep.subr.bf16.mxu0 %v2064
    %2651 = vmatpush1.bf16.msra.mxu0 %v2063
    %2652 = vmatprep.subr.bf16.mxu0 %v2072
    %2653 = vmatpush1.bf16.msra.mxu0 %v2071
    %2654 = vmatprep.subr.bf16.mxu0 %v2080
    %2655 = vmatpush1.bf16.msra.mxu0 %v2079
    %2656 = vmatprep.mubr.bf16.mxu0 %v758
    %2657 = vmatmul.mubr.bf16.gmra.mrb[0].mxu0 %v757
    %v2658 = vpop.f32.mrb[0].mxu0
    %v2659 = vadd.f32 %v2618, %v2658
    %v2660 = vpop.f32.mrb[0].mxu0
    %v2661 = vadd.f32 %v2620, %v2660
    %v2662 = vpop.f32.mrb[0].mxu0
    %v2663 = vpop.f32.mrb[0].mxu0
    %2664 = vdwg.mxu0
    %v2665 = vmul.f32 %v2413, 0.1
    %v2666 = vmul.f32 %v2415, 0.1
    %v2667 = vmul.f32 %v2495, 0.1
    %v2668 = vmul.f32 %v2497, 0.1
    %v2669 = vmul.f32 %v2577, 0.1
    %v2670 = vmul.f32 %v2579, 0.1
    %v2671 = vmul.f32 %v2659, 0.1
    %v2672 = vmul.f32 %v2661, 0.1
    %v2673 = vmax.f32 %v2413, %v2665
    %v2674 = vmax.f32 %v2415, %v2666
    %v2675 = vmax.f32 %v2495, %v2667
    %v2676 = vmax.f32 %v2497, %v2668
    %v2677 = vmax.f32 %v2577, %v2669
    %v2678 = vmax.f32 %v2579, %v2670
    %v2679 = vmax.f32 %v2659, %v2671
    %v2680 = vmax.f32 %v2661, %v2672
    %v2681 = vpack.c.bf16 %v2673, %v2673
    %v2682 = vpack.c.bf16 %v2674, %v2674
    %v2683 = vpack.c.bf16 %v2675, %v2675
    %v2684 = vpack.c.bf16 %v2676, %v2676
    %v2685 = vpack.c.bf16 %v2677, %v2677
    %v2686 = vpack.c.bf16 %v2678, %v2678
    %v2687 = vpack.c.bf16 %v2679, %v2679
    %v2688 = vpack.c.bf16 %v2680, %v2680
    %v2689 = vld [vmem:[#allocation14] sm:$0xff]
    %v2690 = vld [vmem:[#allocation14 + $0x8] sm:$0xff]
    %v2691 = vld [vmem:[#allocation14 + $0x10] sm:$0xff]
    %v2692 = vld [vmem:[#allocation14 + $0x18] sm:$0xf]
    %v2693 = vld [vmem:[#allocation14 + $0x1c] sm:$0xff]
    %v2694 = vld [vmem:[#allocation14 + $0x24] sm:$0xff]
    %v2695 = vld [vmem:[#allocation14 + $0x2c] sm:$0xff]
    %v2696 = vld [vmem:[#allocation14 + $0x34] sm:$0xf]
    %v2697 = vld [vmem:[#allocation14 + $0x38] sm:$0xff]
    %v2698 = vld [vmem:[#allocation14 + $0x40] sm:$0xff]
    %v2699 = vld [vmem:[#allocation14 + $0x48] sm:$0xff]
    %v2700 = vld [vmem:[#allocation14 + $0x50] sm:$0xf]
    %v2701 = vld [vmem:[#allocation14 + $0x54] sm:$0xff]
    %v2702 = vld [vmem:[#allocation14 + $0x5c] sm:$0xff]
    %v2703 = vld [vmem:[#allocation14 + $0x64] sm:$0xff]
    %v2704 = vld [vmem:[#allocation14 + $0x6c] sm:$0xf]
    %v2705 = vld [vmem:[#allocation14 + $0x70] sm:$0xff]
    %v2706 = vld [vmem:[#allocation14 + $0x78] sm:$0xff]
    %v2707 = vld [vmem:[#allocation14 + $0x80] sm:$0xff]
    %v2708 = vld [vmem:[#allocation14 + $0x88] sm:$0xf]
    %v2709 = vld [vmem:[#allocation14 + $0x8c] sm:$0xff]
    %v2710 = vld [vmem:[#allocation14 + $0x94] sm:$0xff]
    %v2711 = vld [vmem:[#allocation14 + $0x9c] sm:$0xff]
    %v2712 = vld [vmem:[#allocation14 + $0xa4] sm:$0xf]
    %v2713 = vld [vmem:[#allocation14 + $0xa8] sm:$0xff]
    %v2714 = vld [vmem:[#allocation14 + $0xb0] sm:$0xff]
    %v2715 = vld [vmem:[#allocation14 + $0xb8] sm:$0xff]
    %v2716 = vld [vmem:[#allocation14 + $0xc0] sm:$0xf]
    %v2717 = vld [vmem:[#allocation14 + $0xc4] sm:$0xff]
    %v2718 = vld [vmem:[#allocation14 + $0xcc] sm:$0xff]
    %v2719 = vld [vmem:[#allocation14 + $0xd4] sm:$0xff]
    %v2720 = vld [vmem:[#allocation14 + $0xdc] sm:$0xf]
    %v2721 = vld [vmem:[#allocation14 + $0xe0] sm:$0xff]
    %v2722 = vld [vmem:[#allocation14 + $0xe8] sm:$0xff]
    %v2723 = vld [vmem:[#allocation14 + $0xf0] sm:$0xff]
    %v2724 = vld [vmem:[#allocation14 + $0xf8] sm:$0xf]
    %v2725 = vld [vmem:[#allocation14 + $0xfc] sm:$0xff]
    %v2726 = vld [vmem:[#allocation14 + $0x104] sm:$0xff]
    %v2727 = vld [vmem:[#allocation14 + $0x10c] sm:$0xff]
    %v2728 = vld [vmem:[#allocation14 + $0x114] sm:$0xf]
    %v2729 = vld [vmem:[#allocation14 + $0x118] sm:$0xff]
    %v2730 = vld [vmem:[#allocation14 + $0x120] sm:$0xff]
    %v2731 = vld [vmem:[#allocation14 + $0x128] sm:$0xff]
    %v2732 = vld [vmem:[#allocation14 + $0x130] sm:$0xf]
    %v2733 = vld [vmem:[#allocation14 + $0x134] sm:$0xff]
    %v2734 = vld [vmem:[#allocation14 + $0x13c] sm:$0xff]
    %v2735 = vld [vmem:[#allocation14 + $0x144] sm:$0xff]
    %v2736 = vld [vmem:[#allocation14 + $0x14c] sm:$0xf]
    %v2737 = vld [vmem:[#allocation14 + $0x150] sm:$0xff]
    %v2738 = vld [vmem:[#allocation14 + $0x158] sm:$0xff]
    %v2739 = vld [vmem:[#allocation14 + $0x160] sm:$0xff]
    %v2740 = vld [vmem:[#allocation14 + $0x168] sm:$0xf]
    %v2741 = vld [vmem:[#allocation14 + $0x16c] sm:$0xff]
    %v2742 = vld [vmem:[#allocation14 + $0x174] sm:$0xff]
    %v2743 = vld [vmem:[#allocation14 + $0x17c] sm:$0xff]
    %v2744 = vld [vmem:[#allocation14 + $0x184] sm:$0xf]
    %v2745 = vld [vmem:[#allocation14 + $0x188] sm:$0xff]
    %v2746 = vld [vmem:[#allocation14 + $0x190] sm:$0xff]
    %v2747 = vld [vmem:[#allocation14 + $0x198] sm:$0xff]
    %v2748 = vld [vmem:[#allocation14 + $0x1a0] sm:$0xf]
    %v2749 = vld [vmem:[#allocation14 + $0x1a4] sm:$0xff]
    %v2750 = vld [vmem:[#allocation14 + $0x1ac] sm:$0xff]
    %v2751 = vld [vmem:[#allocation14 + $0x1b4] sm:$0xff]
    %v2752 = vld [vmem:[#allocation14 + $0x1bc] sm:$0xf]
    %v2753 = vld [vmem:[#allocation14 + $0x1c0] sm:$0xff]
    %v2754 = vld [vmem:[#allocation14 + $0x1c8] sm:$0xff]
    %v2755 = vld [vmem:[#allocation14 + $0x1d0] sm:$0xff]
    %v2756 = vld [vmem:[#allocation14 + $0x1d8] sm:$0xf]
    %v2757 = vld [vmem:[#allocation14 + $0x1dc] sm:$0xff]
    %v2758 = vld [vmem:[#allocation14 + $0x1e4] sm:$0xff]
    %v2759 = vld [vmem:[#allocation14 + $0x1ec] sm:$0xff]
    %v2760 = vld [vmem:[#allocation14 + $0x1f4] sm:$0xf]
    %v2761 = vld [vmem:[#allocation14 + $0x1f8] sm:$0xff]
    %v2762 = vld [vmem:[#allocation14 + $0x200] sm:$0xff]
    %v2763 = vld [vmem:[#allocation14 + $0x208] sm:$0xff]
    %v2764 = vld [vmem:[#allocation14 + $0x210] sm:$0xf]
    %v2765 = vld [vmem:[#allocation14 + $0x214] sm:$0xff]
    %v2766 = vld [vmem:[#allocation14 + $0x21c] sm:$0xff]
    %v2767 = vld [vmem:[#allocation14 + $0x224] sm:$0xff]
    %v2768 = vld [vmem:[#allocation14 + $0x22c] sm:$0xf]
    %v2769 = vld [vmem:[#allocation14 + $0x230] sm:$0xff]
    %v2770 = vld [vmem:[#allocation14 + $0x238] sm:$0xff]
    %v2771 = vld [vmem:[#allocation14 + $0x240] sm:$0xff]
    %v2772 = vld [vmem:[#allocation14 + $0x248] sm:$0xf]
    %v2773 = vld [vmem:[#allocation14 + $0x24c] sm:$0xff]
    %v2774 = vld [vmem:[#allocation14 + $0x254] sm:$0xff]
    %v2775 = vld [vmem:[#allocation14 + $0x25c] sm:$0xff]
    %v2776 = vld [vmem:[#allocation14 + $0x264] sm:$0xf]
    %v2777 = vld [vmem:[#allocation14 + $0x268] sm:$0xff]
    %v2778 = vld [vmem:[#allocation14 + $0x270] sm:$0xff]
    %v2779 = vld [vmem:[#allocation14 + $0x278] sm:$0xff]
    %v2780 = vld [vmem:[#allocation14 + $0x280] sm:$0xf]
    %v2781 = vld [vmem:[#allocation14 + $0x284] sm:$0xff]
    %v2782 = vld [vmem:[#allocation14 + $0x28c] sm:$0xff]
    %v2783 = vld [vmem:[#allocation14 + $0x294] sm:$0xff]
    %v2784 = vld [vmem:[#allocation14 + $0x29c] sm:$0xf]
    %v2785 = vld [vmem:[#allocation14 + $0x2a0] sm:$0xff]
    %v2786 = vld [vmem:[#allocation14 + $0x2a8] sm:$0xff]
    %v2787 = vld [vmem:[#allocation14 + $0x2b0] sm:$0xff]
    %v2788 = vld [vmem:[#allocation14 + $0x2b8] sm:$0xf]
    %v2789 = vld [vmem:[#allocation14 + $0x2bc] sm:$0xff]
    %v2790 = vld [vmem:[#allocation14 + $0x2c4] sm:$0xff]
    %v2791 = vld [vmem:[#allocation14 + $0x2cc] sm:$0xff]
    %v2792 = vld [vmem:[#allocation14 + $0x2d4] sm:$0xf]
    %v2793 = vld [vmem:[#allocation14 + $0x2d8] sm:$0xff]
    %v2794 = vld [vmem:[#allocation14 + $0x2e0] sm:$0xff]
    %v2795 = vld [vmem:[#allocation14 + $0x2e8] sm:$0xff]
    %v2796 = vld [vmem:[#allocation14 + $0x2f0] sm:$0xf]
    %v2797 = vld [vmem:[#allocation14 + $0x2f4] sm:$0xff]
    %v2798 = vld [vmem:[#allocation14 + $0x2fc] sm:$0xff]
    %v2799 = vld [vmem:[#allocation14 + $0x304] sm:$0xff]
    %v2800 = vld [vmem:[#allocation14 + $0x30c] sm:$0xf]
    %v2801 = vld [vmem:[#allocation14 + $0x310] sm:$0xff]
    %v2802 = vld [vmem:[#allocation14 + $0x318] sm:$0xff]
    %v2803 = vld [vmem:[#allocation14 + $0x320] sm:$0xff]
    %v2804 = vld [vmem:[#allocation14 + $0x328] sm:$0xf]
    %v2805 = vld [vmem:[#allocation14 + $0x32c] sm:$0xff]
    %v2806 = vld [vmem:[#allocation14 + $0x334] sm:$0xff]
    %v2807 = vld [vmem:[#allocation14 + $0x33c] sm:$0xff]
    %v2808 = vld [vmem:[#allocation14 + $0x344] sm:$0xf]
    %v2809 = vld [vmem:[#allocation14 + $0x348] sm:$0xff]
    %v2810 = vld [vmem:[#allocation14 + $0x350] sm:$0xff]
    %v2811 = vld [vmem:[#allocation14 + $0x358] sm:$0xff]
    %v2812 = vld [vmem:[#allocation14 + $0x360] sm:$0xf]
    %v2813 = vld [vmem:[#allocation14 + $0x364] sm:$0xff]
    %v2814 = vld [vmem:[#allocation14 + $0x36c] sm:$0xff]
    %v2815 = vld [vmem:[#allocation14 + $0x374] sm:$0xff]
    %v2816 = vld [vmem:[#allocation14 + $0x37c] sm:$0xf]
    %v2817 = vld [vmem:[#allocation14 + $0x380] sm:$0xff]
    %v2818 = vld [vmem:[#allocation14 + $0x388] sm:$0xff]
    %v2819 = vld [vmem:[#allocation14 + $0x390] sm:$0xff]
    %v2820 = vld [vmem:[#allocation14 + $0x398] sm:$0xf]
    %v2821 = vld [vmem:[#allocation14 + $0x39c] sm:$0xff]
    %v2822 = vld [vmem:[#allocation14 + $0x3a4] sm:$0xff]
    %v2823 = vld [vmem:[#allocation14 + $0x3ac] sm:$0xff]
    %v2824 = vld [vmem:[#allocation14 + $0x3b4] sm:$0xf]
    %v2825 = vld [vmem:[#allocation14 + $0x3b8] sm:$0xff]
    %v2826 = vld [vmem:[#allocation14 + $0x3c0] sm:$0xff]
    %v2827 = vld [vmem:[#allocation14 + $0x3c8] sm:$0xff]
    %v2828 = vld [vmem:[#allocation14 + $0x3d0] sm:$0xf]
    %v2829 = vld [vmem:[#allocation14 + $0x3d4] sm:$0xff]
    %v2830 = vld [vmem:[#allocation14 + $0x3dc] sm:$0xff]
    %v2831 = vld [vmem:[#allocation14 + $0x3e4] sm:$0xff]
    %v2832 = vld [vmem:[#allocation14 + $0x3ec] sm:$0xf]
    %v2833 = vld [vmem:[#allocation14 + $0x3f0] sm:$0xff]
    %v2834 = vld [vmem:[#allocation14 + $0x3f8] sm:$0xff]
    %v2835 = vld [vmem:[#allocation14 + $0x400] sm:$0xff]
    %v2836 = vld [vmem:[#allocation14 + $0x408] sm:$0xf]
    %v2837 = vld [vmem:[#allocation14 + $0x40c] sm:$0xff]
    %v2838 = vld [vmem:[#allocation14 + $0x414] sm:$0xff]
    %v2839 = vld [vmem:[#allocation14 + $0x41c] sm:$0xff]
    %v2840 = vld [vmem:[#allocation14 + $0x424] sm:$0xf]
    %v2841 = vld [vmem:[#allocation14 + $0x428] sm:$0xff]
    %v2842 = vld [vmem:[#allocation14 + $0x430] sm:$0xff]
    %v2843 = vld [vmem:[#allocation14 + $0x438] sm:$0xff]
    %v2844 = vld [vmem:[#allocation14 + $0x440] sm:$0xf]
    %v2845 = vld [vmem:[#allocation14 + $0x444] sm:$0xff]
    %v2846 = vld [vmem:[#allocation14 + $0x44c] sm:$0xff]
    %v2847 = vld [vmem:[#allocation14 + $0x454] sm:$0xff]
    %v2848 = vld [vmem:[#allocation14 + $0x45c] sm:$0xf]
    %v2849 = vld [vmem:[#allocation14 + $0x460] sm:$0xff]
    %v2850 = vld [vmem:[#allocation14 + $0x468] sm:$0xff]
    %v2851 = vld [vmem:[#allocation14 + $0x470] sm:$0xff]
    %v2852 = vld [vmem:[#allocation14 + $0x478] sm:$0xf]
    %v2853 = vld [vmem:[#allocation14 + $0x47c] sm:$0xff]
    %v2854 = vld [vmem:[#allocation14 + $0x484] sm:$0xff]
    %v2855 = vld [vmem:[#allocation14 + $0x48c] sm:$0xff]
    %v2856 = vld [vmem:[#allocation14 + $0x494] sm:$0xf]
    %v2857 = vld [vmem:[#allocation14 + $0x498] sm:$0xff]
    %v2858 = vld [vmem:[#allocation14 + $0x4a0] sm:$0xff]
    %v2859 = vld [vmem:[#allocation14 + $0x4a8] sm:$0xff]
    %v2860 = vld [vmem:[#allocation14 + $0x4b0] sm:$0xf]
    %v2861 = vld [vmem:[#allocation14 + $0x4b4] sm:$0xff]
    %v2862 = vld [vmem:[#allocation14 + $0x4bc] sm:$0xff]
    %v2863 = vld [vmem:[#allocation14 + $0x4c4] sm:$0xff]
    %v2864 = vld [vmem:[#allocation14 + $0x4cc] sm:$0xf]
    %v2865 = vld [vmem:[#allocation14 + $0x4d0] sm:$0xff]
    %v2866 = vld [vmem:[#allocation14 + $0x4d8] sm:$0xff]
    %v2867 = vld [vmem:[#allocation14 + $0x4e0] sm:$0xff]
    %v2868 = vld [vmem:[#allocation14 + $0x4e8] sm:$0xf]
    %v2869 = vld [vmem:[#allocation14 + $0x4ec] sm:$0xff]
    %v2870 = vld [vmem:[#allocation14 + $0x4f4] sm:$0xff]
    %v2871 = vld [vmem:[#allocation14 + $0x4fc] sm:$0xff]
    %v2872 = vld [vmem:[#allocation14 + $0x504] sm:$0xf]
    %v2873 = vld [vmem:[#allocation14 + $0x508] sm:$0xff]
    %v2874 = vld [vmem:[#allocation14 + $0x510] sm:$0xff]
    %v2875 = vld [vmem:[#allocation14 + $0x518] sm:$0xff]
    %v2876 = vld [vmem:[#allocation14 + $0x520] sm:$0xf]
    %v2877 = vld [vmem:[#allocation14 + $0x524] sm:$0xff]
    %v2878 = vld [vmem:[#allocation14 + $0x52c] sm:$0xff]
    %v2879 = vld [vmem:[#allocation14 + $0x534] sm:$0xff]
    %v2880 = vld [vmem:[#allocation14 + $0x53c] sm:$0xf]
    %v2881 = vld [vmem:[#allocation14 + $0x540] sm:$0xff]
    %v2882 = vld [vmem:[#allocation14 + $0x548] sm:$0xff]
    %v2883 = vld [vmem:[#allocation14 + $0x550] sm:$0xff]
    %v2884 = vld [vmem:[#allocation14 + $0x558] sm:$0xf]
    %v2885 = vld [vmem:[#allocation14 + $0x55c] sm:$0xff]
    %v2886 = vld [vmem:[#allocation14 + $0x564] sm:$0xff]
    %v2887 = vld [vmem:[#allocation14 + $0x56c] sm:$0xff]
    %v2888 = vld [vmem:[#allocation14 + $0x574] sm:$0xf]
    %v2889 = vld [vmem:[#allocation14 + $0x578] sm:$0xff]
    %v2890 = vld [vmem:[#allocation14 + $0x580] sm:$0xff]
    %v2891 = vld [vmem:[#allocation14 + $0x588] sm:$0xff]
    %v2892 = vld [vmem:[#allocation14 + $0x590] sm:$0xf]
    %v2893 = vld [vmem:[#allocation14 + $0x594] sm:$0xff]
    %v2894 = vld [vmem:[#allocation14 + $0x59c] sm:$0xff]
    %v2895 = vld [vmem:[#allocation14 + $0x5a4] sm:$0xff]
    %v2896 = vld [vmem:[#allocation14 + $0x5ac] sm:$0xf]
    %v2897 = vld [vmem:[#allocation14 + $0x5b0] sm:$0xff]
    %v2898 = vld [vmem:[#allocation14 + $0x5b8] sm:$0xff]
    %v2899 = vld [vmem:[#allocation14 + $0x5c0] sm:$0xff]
    %v2900 = vld [vmem:[#allocation14 + $0x5c8] sm:$0xf]
    %v2901 = vld [vmem:[#allocation14 + $0x5cc] sm:$0xff]
    %v2902 = vld [vmem:[#allocation14 + $0x5d4] sm:$0xff]
    %v2903 = vld [vmem:[#allocation14 + $0x5dc] sm:$0xff]
    %v2904 = vld [vmem:[#allocation14 + $0x5e4] sm:$0xf]
    %v2905 = vld [vmem:[#allocation14 + $0x5e8] sm:$0xff]
    %v2906 = vld [vmem:[#allocation14 + $0x5f0] sm:$0xff]
    %v2907 = vld [vmem:[#allocation14 + $0x5f8] sm:$0xff]
    %v2908 = vld [vmem:[#allocation14 + $0x600] sm:$0xf]
    %v2909 = vld [vmem:[#allocation14 + $0x604] sm:$0xff]
    %v2910 = vld [vmem:[#allocation14 + $0x60c] sm:$0xff]
    %v2911 = vld [vmem:[#allocation14 + $0x614] sm:$0xff]
    %v2912 = vld [vmem:[#allocation14 + $0x61c] sm:$0xf]
    %v2913 = vld [vmem:[#allocation14 + $0x620] sm:$0xff]
    %v2914 = vld [vmem:[#allocation14 + $0x628] sm:$0xff]
    %v2915 = vld [vmem:[#allocation14 + $0x630] sm:$0xff]
    %v2916 = vld [vmem:[#allocation14 + $0x638] sm:$0xf]
    %v2917 = vld [vmem:[#allocation14 + $0x63c] sm:$0xff]
    %v2918 = vld [vmem:[#allocation14 + $0x644] sm:$0xff]
    %v2919 = vld [vmem:[#allocation14 + $0x64c] sm:$0xff]
    %v2920 = vld [vmem:[#allocation14 + $0x654] sm:$0xf]
    %v2921 = vld [vmem:[#allocation14 + $0x658] sm:$0xff]
    %v2922 = vld [vmem:[#allocation14 + $0x660] sm:$0xff]
    %v2923 = vld [vmem:[#allocation14 + $0x668] sm:$0xff]
    %v2924 = vld [vmem:[#allocation14 + $0x670] sm:$0xf]
    %v2925 = vld [vmem:[#allocation14 + $0x674] sm:$0xff]
    %v2926 = vld [vmem:[#allocation14 + $0x67c] sm:$0xff]
    %v2927 = vld [vmem:[#allocation14 + $0x684] sm:$0xff]
    %v2928 = vld [vmem:[#allocation14 + $0x68c] sm:$0xf]
    %v2929 = vld [vmem:[#allocation14 + $0x690] sm:$0xff]
    %v2930 = vld [vmem:[#allocation14 + $0x698] sm:$0xff]
    %v2931 = vld [vmem:[#allocation14 + $0x6a0] sm:$0xff]
    %v2932 = vld [vmem:[#allocation14 + $0x6a8] sm:$0xf]
    %v2933 = vld [vmem:[#allocation14 + $0x6ac] sm:$0xff]
    %v2934 = vld [vmem:[#allocation14 + $0x6b4] sm:$0xff]
    %v2935 = vld [vmem:[#allocation14 + $0x6bc] sm:$0xff]
    %v2936 = vld [vmem:[#allocation14 + $0x6c4] sm:$0xf]
    %v2937 = vld [vmem:[#allocation14 + $0x6c8] sm:$0xff]
    %v2938 = vld [vmem:[#allocation14 + $0x6d0] sm:$0xff]
    %v2939 = vld [vmem:[#allocation14 + $0x6d8] sm:$0xff]
    %v2940 = vld [vmem:[#allocation14 + $0x6e0] sm:$0xf]
    %v2941 = vld [vmem:[#allocation14 + $0x6e4] sm:$0xff]
    %v2942 = vld [vmem:[#allocation14 + $0x6ec] sm:$0xff]
    %v2943 = vld [vmem:[#allocation14 + $0x6f4] sm:$0xff]
    %v2944 = vld [vmem:[#allocation14 + $0x6fc] sm:$0xf]
    %v2945 = vld [vmem:[#allocation14 + $0x700] sm:$0xff]
    %v2946 = vld [vmem:[#allocation14 + $0x708] sm:$0xff]
    %v2947 = vld [vmem:[#allocation14 + $0x710] sm:$0xff]
    %v2948 = vld [vmem:[#allocation14 + $0x718] sm:$0xf]
    %v2949 = vld [vmem:[#allocation14 + $0x71c] sm:$0xff]
    %v2950 = vld [vmem:[#allocation14 + $0x724] sm:$0xff]
    %v2951 = vld [vmem:[#allocation14 + $0x72c] sm:$0xff]
    %v2952 = vld [vmem:[#allocation14 + $0x734] sm:$0xf]
    %v2953 = vld [vmem:[#allocation14 + $0x738] sm:$0xff]
    %v2954 = vld [vmem:[#allocation14 + $0x740] sm:$0xff]
    %v2955 = vld [vmem:[#allocation14 + $0x748] sm:$0xff]
    %v2956 = vld [vmem:[#allocation14 + $0x750] sm:$0xf]
    %v2957 = vld [vmem:[#allocation14 + $0x754] sm:$0xff]
    %v2958 = vld [vmem:[#allocation14 + $0x75c] sm:$0xff]
    %v2959 = vld [vmem:[#allocation14 + $0x764] sm:$0xff]
    %v2960 = vld [vmem:[#allocation14 + $0x76c] sm:$0xf]
    %v2961 = vld [vmem:[#allocation14 + $0x770] sm:$0xff]
    %v2962 = vld [vmem:[#allocation14 + $0x778] sm:$0xff]
    %v2963 = vld [vmem:[#allocation14 + $0x780] sm:$0xff]
    %v2964 = vld [vmem:[#allocation14 + $0x788] sm:$0xf]
    %v2965 = vld [vmem:[#allocation14 + $0x78c] sm:$0xff]
    %v2966 = vld [vmem:[#allocation14 + $0x794] sm:$0xff]
    %v2967 = vld [vmem:[#allocation14 + $0x79c] sm:$0xff]
    %v2968 = vld [vmem:[#allocation14 + $0x7a4] sm:$0xf]
    %v2969 = vld [vmem:[#allocation14 + $0x7a8] sm:$0xff]
    %v2970 = vld [vmem:[#allocation14 + $0x7b0] sm:$0xff]
    %v2971 = vld [vmem:[#allocation14 + $0x7b8] sm:$0xff]
    %v2972 = vld [vmem:[#allocation14 + $0x7c0] sm:$0xf]
    %v2973 = vld [vmem:[#allocation14 + $0x7c4] sm:$0xff]
    %v2974 = vld [vmem:[#allocation14 + $0x7cc] sm:$0xff]
    %v2975 = vld [vmem:[#allocation14 + $0x7d4] sm:$0xff]
    %v2976 = vld [vmem:[#allocation14 + $0x7dc] sm:$0xf]
    %v2977 = vld [vmem:[#allocation14 + $0x7e0] sm:$0xff]
    %v2978 = vld [vmem:[#allocation14 + $0x7e8] sm:$0xff]
    %v2979 = vld [vmem:[#allocation14 + $0x7f0] sm:$0xff]
    %v2980 = vld [vmem:[#allocation14 + $0x7f8] sm:$0xf]
    %v2981 = vld [vmem:[#allocation14 + $0x7fc] sm:$0xff]
    %v2982 = vld [vmem:[#allocation14 + $0x804] sm:$0xff]
    %v2983 = vld [vmem:[#allocation14 + $0x80c] sm:$0xff]
    %v2984 = vld [vmem:[#allocation14 + $0x814] sm:$0xf]
    %v2985 = vld [vmem:[#allocation14 + $0x818] sm:$0xff]
    %v2986 = vld [vmem:[#allocation14 + $0x820] sm:$0xff]
    %v2987 = vld [vmem:[#allocation14 + $0x828] sm:$0xff]
    %v2988 = vld [vmem:[#allocation14 + $0x830] sm:$0xf]
    %v2989 = vld [vmem:[#allocation14 + $0x834] sm:$0xff]
    %v2990 = vld [vmem:[#allocation14 + $0x83c] sm:$0xff]
    %v2991 = vld [vmem:[#allocation14 + $0x844] sm:$0xff]
    %v2992 = vld [vmem:[#allocation14 + $0x84c] sm:$0xf]
    %v2993 = vld [vmem:[#allocation14 + $0x850] sm:$0xff]
    %v2994 = vld [vmem:[#allocation14 + $0x858] sm:$0xff]
    %v2995 = vld [vmem:[#allocation14 + $0x860] sm:$0xff]
    %v2996 = vld [vmem:[#allocation14 + $0x868] sm:$0xf]
    %v2997 = vld [vmem:[#allocation14 + $0x86c] sm:$0xff]
    %v2998 = vld [vmem:[#allocation14 + $0x874] sm:$0xff]
    %v2999 = vld [vmem:[#allocation14 + $0x87c] sm:$0xff]
    %v3000 = vld [vmem:[#allocation14 + $0x884] sm:$0xf]
    %v3001 = vld [vmem:[#allocation14 + $0x888] sm:$0xff]
    %v3002 = vld [vmem:[#allocation14 + $0x890] sm:$0xff]
    %v3003 = vld [vmem:[#allocation14 + $0x898] sm:$0xff]
    %v3004 = vld [vmem:[#allocation14 + $0x8a0] sm:$0xf]
    %v3005 = vld [vmem:[#allocation14 + $0x8a4] sm:$0xff]
    %v3006 = vld [vmem:[#allocation14 + $0x8ac] sm:$0xff]
    %v3007 = vld [vmem:[#allocation14 + $0x8b4] sm:$0xff]
    %v3008 = vld [vmem:[#allocation14 + $0x8bc] sm:$0xf]
    %v3009 = vld [vmem:[#allocation14 + $0x8c0] sm:$0xff]
    %v3010 = vld [vmem:[#allocation14 + $0x8c8] sm:$0xff]
    %v3011 = vld [vmem:[#allocation14 + $0x8d0] sm:$0xff]
    %v3012 = vld [vmem:[#allocation14 + $0x8d8] sm:$0xf]
    %v3013 = vld [vmem:[#allocation14 + $0x8dc] sm:$0xff]
    %v3014 = vld [vmem:[#allocation14 + $0x8e4] sm:$0xff]
    %v3015 = vld [vmem:[#allocation14 + $0x8ec] sm:$0xff]
    %v3016 = vld [vmem:[#allocation14 + $0x8f4] sm:$0xf]
    %v3017 = vld [vmem:[#allocation14 + $0x8f8] sm:$0xff]
    %v3018 = vld [vmem:[#allocation14 + $0x900] sm:$0xff]
    %v3019 = vld [vmem:[#allocation14 + $0x908] sm:$0xff]
    %v3020 = vld [vmem:[#allocation14 + $0x910] sm:$0xf]
    %v3021 = vld [vmem:[#allocation14 + $0x914] sm:$0xff]
    %v3022 = vld [vmem:[#allocation14 + $0x91c] sm:$0xff]
    %v3023 = vld [vmem:[#allocation14 + $0x924] sm:$0xff]
    %v3024 = vld [vmem:[#allocation14 + $0x92c] sm:$0xf]
    %v3025 = vld [vmem:[#allocation14 + $0x930] sm:$0xff]
    %v3026 = vld [vmem:[#allocation14 + $0x938] sm:$0xff]
    %v3027 = vld [vmem:[#allocation14 + $0x940] sm:$0xff]
    %v3028 = vld [vmem:[#allocation14 + $0x948] sm:$0xf]
    %v3029 = vld [vmem:[#allocation14 + $0x94c] sm:$0xff]
    %v3030 = vld [vmem:[#allocation14 + $0x954] sm:$0xff]
    %v3031 = vld [vmem:[#allocation14 + $0x95c] sm:$0xff]
    %v3032 = vld [vmem:[#allocation14 + $0x964] sm:$0xf]
    %v3033 = vld [vmem:[#allocation14 + $0x968] sm:$0xff]
    %v3034 = vld [vmem:[#allocation14 + $0x970] sm:$0xff]
    %v3035 = vld [vmem:[#allocation14 + $0x978] sm:$0xff]
    %v3036 = vld [vmem:[#allocation14 + $0x980] sm:$0xf]
    %v3037 = vld [vmem:[#allocation14 + $0x984] sm:$0xff]
    %v3038 = vld [vmem:[#allocation14 + $0x98c] sm:$0xff]
    %v3039 = vld [vmem:[#allocation14 + $0x994] sm:$0xff]
    %v3040 = vld [vmem:[#allocation14 + $0x99c] sm:$0xf]
    %v3041 = vld [vmem:[#allocation14 + $0x9a0] sm:$0xff]
    %v3042 = vld [vmem:[#allocation14 + $0x9a8] sm:$0xff]
    %v3043 = vld [vmem:[#allocation14 + $0x9b0] sm:$0xff]
    %v3044 = vld [vmem:[#allocation14 + $0x9b8] sm:$0xf]
    %v3045 = vld [vmem:[#allocation14 + $0x9bc] sm:$0xff]
    %v3046 = vld [vmem:[#allocation14 + $0x9c4] sm:$0xff]
    %v3047 = vld [vmem:[#allocation14 + $0x9cc] sm:$0xff]
    %v3048 = vld [vmem:[#allocation14 + $0x9d4] sm:$0xf]
    %v3049 = vld [vmem:[#allocation14 + $0x9d8] sm:$0xff]
    %v3050 = vld [vmem:[#allocation14 + $0x9e0] sm:$0xff]
    %v3051 = vld [vmem:[#allocation14 + $0x9e8] sm:$0xff]
    %v3052 = vld [vmem:[#allocation14 + $0x9f0] sm:$0xf]
    %v3053 = vld [vmem:[#allocation14 + $0x9f4] sm:$0xff]
    %v3054 = vld [vmem:[#allocation14 + $0x9fc] sm:$0xff]
    %v3055 = vld [vmem:[#allocation14 + $0xa04] sm:$0xff]
    %v3056 = vld [vmem:[#allocation14 + $0xa0c] sm:$0xf]
    %v3057 = vld [vmem:[#allocation14 + $0xa10] sm:$0xff]
    %v3058 = vld [vmem:[#allocation14 + $0xa18] sm:$0xff]
    %v3059 = vld [vmem:[#allocation14 + $0xa20] sm:$0xff]
    %v3060 = vld [vmem:[#allocation14 + $0xa28] sm:$0xf]
    %v3061 = vld [vmem:[#allocation14 + $0xa2c] sm:$0xff]
    %v3062 = vld [vmem:[#allocation14 + $0xa34] sm:$0xff]
    %v3063 = vld [vmem:[#allocation14 + $0xa3c] sm:$0xff]
    %v3064 = vld [vmem:[#allocation14 + $0xa44] sm:$0xf]
    %v3065 = vld [vmem:[#allocation14 + $0xa48] sm:$0xff]
    %v3066 = vld [vmem:[#allocation14 + $0xa50] sm:$0xff]
    %v3067 = vld [vmem:[#allocation14 + $0xa58] sm:$0xff]
    %v3068 = vld [vmem:[#allocation14 + $0xa60] sm:$0xf]
    %v3069 = vld [vmem:[#allocation14 + $0xa64] sm:$0xff]
    %v3070 = vld [vmem:[#allocation14 + $0xa6c] sm:$0xff]
    %v3071 = vld [vmem:[#allocation14 + $0xa74] sm:$0xff]
    %v3072 = vld [vmem:[#allocation14 + $0xa7c] sm:$0xf]
    %v3073 = vld [vmem:[#allocation14 + $0xa80] sm:$0xff]
    %v3074 = vld [vmem:[#allocation14 + $0xa88] sm:$0xff]
    %v3075 = vld [vmem:[#allocation14 + $0xa90] sm:$0xff]
    %v3076 = vld [vmem:[#allocation14 + $0xa98] sm:$0xf]
    %v3077 = vld [vmem:[#allocation14 + $0xa9c] sm:$0xff]
    %v3078 = vld [vmem:[#allocation14 + $0xaa4] sm:$0xff]
    %v3079 = vld [vmem:[#allocation14 + $0xaac] sm:$0xff]
    %v3080 = vld [vmem:[#allocation14 + $0xab4] sm:$0xf]
    %v3081 = vld [vmem:[#allocation14 + $0xab8] sm:$0xff]
    %v3082 = vld [vmem:[#allocation14 + $0xac0] sm:$0xff]
    %v3083 = vld [vmem:[#allocation14 + $0xac8] sm:$0xff]
    %v3084 = vld [vmem:[#allocation14 + $0xad0] sm:$0xf]
    %v3085 = vld [vmem:[#allocation14 + $0xad4] sm:$0xff]
    %v3086 = vld [vmem:[#allocation14 + $0xadc] sm:$0xff]
    %v3087 = vld [vmem:[#allocation14 + $0xae4] sm:$0xff]
    %v3088 = vld [vmem:[#allocation14 + $0xaec] sm:$0xf]
    %v3089 = vld [vmem:[#allocation14 + $0xaf0] sm:$0xff]
    %v3090 = vld [vmem:[#allocation14 + $0xaf8] sm:$0xff]
    %v3091 = vld [vmem:[#allocation14 + $0xb00] sm:$0xff]
    %v3092 = vld [vmem:[#allocation14 + $0xb08] sm:$0xf]
    %v3093 = vld [vmem:[#allocation14 + $0xb0c] sm:$0xff]
    %v3094 = vld [vmem:[#allocation14 + $0xb14] sm:$0xff]
    %v3095 = vld [vmem:[#allocation14 + $0xb1c] sm:$0xff]
    %v3096 = vld [vmem:[#allocation14 + $0xb24] sm:$0xf]
    %v3097 = vld [vmem:[#allocation14 + $0xb28] sm:$0xff]
    %v3098 = vld [vmem:[#allocation14 + $0xb30] sm:$0xff]
    %v3099 = vld [vmem:[#allocation14 + $0xb38] sm:$0xff]
    %v3100 = vld [vmem:[#allocation14 + $0xb40] sm:$0xf]
    %v3101 = vld [vmem:[#allocation14 + $0xb44] sm:$0xff]
    %v3102 = vld [vmem:[#allocation14 + $0xb4c] sm:$0xff]
    %v3103 = vld [vmem:[#allocation14 + $0xb54] sm:$0xff]
    %v3104 = vld [vmem:[#allocation14 + $0xb5c] sm:$0xf]
    %v3105 = vld [vmem:[#allocation14 + $0xb60] sm:$0xff]
    %v3106 = vld [vmem:[#allocation14 + $0xb68] sm:$0xff]
    %v3107 = vld [vmem:[#allocation14 + $0xb70] sm:$0xff]
    %v3108 = vld [vmem:[#allocation14 + $0xb78] sm:$0xf]
    %v3109 = vld [vmem:[#allocation14 + $0xb7c] sm:$0xff]
    %v3110 = vld [vmem:[#allocation14 + $0xb84] sm:$0xff]
    %v3111 = vld [vmem:[#allocation14 + $0xb8c] sm:$0xff]
    %v3112 = vld [vmem:[#allocation14 + $0xb94] sm:$0xf]
    %v3113 = vld [vmem:[#allocation14 + $0xb98] sm:$0xff]
    %v3114 = vld [vmem:[#allocation14 + $0xba0] sm:$0xff]
    %v3115 = vld [vmem:[#allocation14 + $0xba8] sm:$0xff]
    %v3116 = vld [vmem:[#allocation14 + $0xbb0] sm:$0xf]
    %v3117 = vld [vmem:[#allocation14 + $0xbb4] sm:$0xff]
    %v3118 = vld [vmem:[#allocation14 + $0xbbc] sm:$0xff]
    %v3119 = vld [vmem:[#allocation14 + $0xbc4] sm:$0xff]
    %v3120 = vld [vmem:[#allocation14 + $0xbcc] sm:$0xf]
    %v3121 = vld [vmem:[#allocation14 + $0xbd0] sm:$0xff]
    %v3122 = vld [vmem:[#allocation14 + $0xbd8] sm:$0xff]
    %v3123 = vld [vmem:[#allocation14 + $0xbe0] sm:$0xff]
    %v3124 = vld [vmem:[#allocation14 + $0xbe8] sm:$0xf]
    %v3125 = vld [vmem:[#allocation14 + $0xbec] sm:$0xff]
    %v3126 = vld [vmem:[#allocation14 + $0xbf4] sm:$0xff]
    %v3127 = vld [vmem:[#allocation14 + $0xbfc] sm:$0xff]
    %v3128 = vld [vmem:[#allocation14 + $0xc04] sm:$0xf]
    %v3129 = vld [vmem:[#allocation14 + $0xc08] sm:$0xff]
    %v3130 = vld [vmem:[#allocation14 + $0xc10] sm:$0xff]
    %v3131 = vld [vmem:[#allocation14 + $0xc18] sm:$0xff]
    %v3132 = vld [vmem:[#allocation14 + $0xc20] sm:$0xf]
    %v3133 = vld [vmem:[#allocation14 + $0xc24] sm:$0xff]
    %v3134 = vld [vmem:[#allocation14 + $0xc2c] sm:$0xff]
    %v3135 = vld [vmem:[#allocation14 + $0xc34] sm:$0xff]
    %v3136 = vld [vmem:[#allocation14 + $0xc3c] sm:$0xf]
    %v3137 = vld [vmem:[#allocation14 + $0xc40] sm:$0xff]
    %v3138 = vld [vmem:[#allocation14 + $0xc48] sm:$0xff]
    %v3139 = vld [vmem:[#allocation14 + $0xc50] sm:$0xff]
    %v3140 = vld [vmem:[#allocation14 + $0xc58] sm:$0xf]
    %v3141 = vld [vmem:[#allocation14 + $0xc5c] sm:$0xff]
    %v3142 = vld [vmem:[#allocation14 + $0xc64] sm:$0xff]
    %v3143 = vld [vmem:[#allocation14 + $0xc6c] sm:$0xff]
    %v3144 = vld [vmem:[#allocation14 + $0xc74] sm:$0xf]
    %v3145 = vld [vmem:[#allocation14 + $0xc78] sm:$0xff]
    %v3146 = vld [vmem:[#allocation14 + $0xc80] sm:$0xff]
    %v3147 = vld [vmem:[#allocation14 + $0xc88] sm:$0xff]
    %v3148 = vld [vmem:[#allocation14 + $0xc90] sm:$0xf]
    %v3149 = vld [vmem:[#allocation14 + $0xc94] sm:$0xff]
    %v3150 = vld [vmem:[#allocation14 + $0xc9c] sm:$0xff]
    %v3151 = vld [vmem:[#allocation14 + $0xca4] sm:$0xff]
    %v3152 = vld [vmem:[#allocation14 + $0xcac] sm:$0xf]
    %v3153 = vld [vmem:[#allocation14 + $0xcb0] sm:$0xff]
    %v3154 = vld [vmem:[#allocation14 + $0xcb8] sm:$0xff]
    %v3155 = vld [vmem:[#allocation14 + $0xcc0] sm:$0xff]
    %v3156 = vld [vmem:[#allocation14 + $0xcc8] sm:$0xf]
    %v3157 = vld [vmem:[#allocation14 + $0xccc] sm:$0xff]
    %v3158 = vld [vmem:[#allocation14 + $0xcd4] sm:$0xff]
    %v3159 = vld [vmem:[#allocation14 + $0xcdc] sm:$0xff]
    %v3160 = vld [vmem:[#allocation14 + $0xce4] sm:$0xf]
    %v3161 = vld [vmem:[#allocation14 + $0xce8] sm:$0xff]
    %v3162 = vld [vmem:[#allocation14 + $0xcf0] sm:$0xff]
    %v3163 = vld [vmem:[#allocation14 + $0xcf8] sm:$0xff]
    %v3164 = vld [vmem:[#allocation14 + $0xd00] sm:$0xf]
    %v3165 = vld [vmem:[#allocation14 + $0xd04] sm:$0xff]
    %v3166 = vld [vmem:[#allocation14 + $0xd0c] sm:$0xff]
    %v3167 = vld [vmem:[#allocation14 + $0xd14] sm:$0xff]
    %v3168 = vld [vmem:[#allocation14 + $0xd1c] sm:$0xf]
    %v3169 = vld [vmem:[#allocation14 + $0xd20] sm:$0xff]
    %v3170 = vld [vmem:[#allocation14 + $0xd28] sm:$0xff]
    %v3171 = vld [vmem:[#allocation14 + $0xd30] sm:$0xff]
    %v3172 = vld [vmem:[#allocation14 + $0xd38] sm:$0xf]
    %v3173 = vld [vmem:[#allocation14 + $0xd3c] sm:$0xff]
    %v3174 = vld [vmem:[#allocation14 + $0xd44] sm:$0xff]
    %v3175 = vld [vmem:[#allocation14 + $0xd4c] sm:$0xff]
    %v3176 = vld [vmem:[#allocation14 + $0xd54] sm:$0xf]
    %v3177 = vld [vmem:[#allocation14 + $0xd58] sm:$0xff]
    %v3178 = vld [vmem:[#allocation14 + $0xd60] sm:$0xff]
    %v3179 = vld [vmem:[#allocation14 + $0xd68] sm:$0xff]
    %v3180 = vld [vmem:[#allocation14 + $0xd70] sm:$0xf]
    %v3181 = vld [vmem:[#allocation14 + $0xd74] sm:$0xff]
    %v3182 = vld [vmem:[#allocation14 + $0xd7c] sm:$0xff]
    %v3183 = vld [vmem:[#allocation14 + $0xd84] sm:$0xff]
    %v3184 = vld [vmem:[#allocation14 + $0xd8c] sm:$0xf]
    %v3185 = vld [vmem:[#allocation14 + $0xd90] sm:$0xff]
    %v3186 = vld [vmem:[#allocation14 + $0xd98] sm:$0xff]
    %v3187 = vld [vmem:[#allocation14 + $0xda0] sm:$0xff]
    %v3188 = vld [vmem:[#allocation14 + $0xda8] sm:$0xf]
    %v3189 = vld [vmem:[#allocation14 + $0xdac] sm:$0xff]
    %v3190 = vld [vmem:[#allocation14 + $0xdb4] sm:$0xff]
    %v3191 = vld [vmem:[#allocation14 + $0xdbc] sm:$0xff]
    %v3192 = vld [vmem:[#allocation14 + $0xdc4] sm:$0xf]
    %v3193 = vld [vmem:[#allocation14 + $0xdc8] sm:$0xff]
    %v3194 = vld [vmem:[#allocation14 + $0xdd0] sm:$0xff]
    %v3195 = vld [vmem:[#allocation14 + $0xdd8] sm:$0xff]
    %v3196 = vld [vmem:[#allocation14 + $0xde0] sm:$0xf]
    %v3197 = vld [vmem:[#allocation14 + $0xde4] sm:$0xff]
    %v3198 = vld [vmem:[#allocation14 + $0xdec] sm:$0xff]
    %v3199 = vld [vmem:[#allocation14 + $0xdf4] sm:$0xff]
    %v3200 = vld [vmem:[#allocation14 + $0xdfc] sm:$0xf]
    %v3201 = vld [vmem:[#allocation16] sm:$0xff]
    %v3203 = vlaneseq
    %v3204 = vshrl.u32 %v3203, 7
    %v3205 = vsub.s32 0, %v3204
    %v3206 = vrot.slane %v3201, %v3205
    %v3207 = vlaneseq
    %v3208 = vshrl.u32 %v3207, 7
    %v3209 = vsub.s32 1, %v3208
    %v3210 = vrot.slane %v3201, %v3209
    %v3211 = vlaneseq
    %v3212 = vshrl.u32 %v3211, 7
    %v3213 = vsub.s32 2, %v3212
    %v3214 = vrot.slane %v3201, %v3213
    %v3215 = vlaneseq
    %v3216 = vshrl.u32 %v3215, 7
    %v3217 = vsub.s32 3, %v3216
    %v3218 = vrot.slane %v3201, %v3217
    %v3219 = vlaneseq
    %v3220 = vshrl.u32 %v3219, 7
    %v3221 = vsub.s32 4, %v3220
    %v3222 = vrot.slane %v3201, %v3221
    %v3223 = vlaneseq
    %v3224 = vshrl.u32 %v3223, 7
    %v3225 = vsub.s32 5, %v3224
    %v3226 = vrot.slane %v3201, %v3225
    %v3227 = vlaneseq
    %v3228 = vshrl.u32 %v3227, 7
    %v3229 = vsub.s32 6, %v3228
    %v3230 = vrot.slane %v3201, %v3229
    %v3750 = vunpack.c.l.b16 %v2689
    %v3751 = vunpack.c.h.b16 %v2689
    %v3752 = vunpack.c.l.b16 %v2690
    %v3753 = vunpack.c.h.b16 %v2690
    %v3754 = vunpack.c.l.b16 %v2691
    %v3755 = vunpack.c.h.b16 %v2691
    %v3756 = vunpack.c.l.b16 %v2692
    %v3757 = vunpack.c.l.b16 %v2693
    %v3758 = vunpack.c.h.b16 %v2693
    %v3759 = vunpack.c.l.b16 %v2694
    %v3760 = vunpack.c.h.b16 %v2694
    %v3761 = vunpack.c.l.b16 %v2695
    %v3762 = vunpack.c.h.b16 %v2695
    %v3763 = vunpack.c.l.b16 %v2696
    %v3764 = vunpack.c.l.b16 %v2697
    %v3765 = vunpack.c.h.b16 %v2697
    %v3766 = vunpack.c.l.b16 %v2698
    %v3767 = vunpack.c.h.b16 %v2698
    %v3768 = vunpack.c.l.b16 %v2699
    %v3769 = vunpack.c.h.b16 %v2699
    %v3770 = vunpack.c.l.b16 %v2700
    %v3771 = vunpack.c.l.b16 %v2701
    %v3772 = vunpack.c.h.b16 %v2701
    %v3773 = vunpack.c.l.b16 %v2702
    %v3774 = vunpack.c.h.b16 %v2702
    %v3775 = vunpack.c.l.b16 %v2703
    %v3776 = vunpack.c.h.b16 %v2703
    %v3777 = vunpack.c.l.b16 %v2704
    %v3778 = vunpack.c.l.b16 %v2705
    %v3779 = vunpack.c.h.b16 %v2705
    %v3780 = vunpack.c.l.b16 %v2706
    %v3781 = vunpack.c.h.b16 %v2706
    %v3782 = vunpack.c.l.b16 %v2707
    %v3783 = vunpack.c.h.b16 %v2707
    %v3784 = vunpack.c.l.b16 %v2708
    %v3785 = vunpack.c.l.b16 %v2709
    %v3786 = vunpack.c.h.b16 %v2709
    %v3787 = vunpack.c.l.b16 %v2710
    %v3788 = vunpack.c.h.b16 %v2710
    %v3789 = vunpack.c.l.b16 %v2711
    %v3790 = vunpack.c.h.b16 %v2711
    %v3791 = vunpack.c.l.b16 %v2712
    %v3792 = vunpack.c.l.b16 %v2713
    %v3793 = vunpack.c.h.b16 %v2713
    %v3794 = vunpack.c.l.b16 %v2714
    %v3795 = vunpack.c.h.b16 %v2714
    %v3796 = vunpack.c.l.b16 %v2715
    %v3797 = vunpack.c.h.b16 %v2715
    %v3798 = vunpack.c.l.b16 %v2716
    %v3799 = vunpack.c.l.b16 %v2717
    %v3800 = vunpack.c.h.b16 %v2717
    %v3801 = vunpack.c.l.b16 %v2718
    %v3802 = vunpack.c.h.b16 %v2718
    %v3803 = vunpack.c.l.b16 %v2719
    %v3804 = vunpack.c.h.b16 %v2719
    %v3805 = vunpack.c.l.b16 %v2720
    %v3806 = vunpack.c.l.b16 %v2721
    %v3807 = vunpack.c.h.b16 %v2721
    %v3808 = vunpack.c.l.b16 %v2722
    %v3809 = vunpack.c.h.b16 %v2722
    %v3810 = vunpack.c.l.b16 %v2723
    %v3811 = vunpack.c.h.b16 %v2723
    %v3812 = vunpack.c.l.b16 %v2724
    %v3813 = vunpack.c.l.b16 %v2725
    %v3814 = vunpack.c.h.b16 %v2725
    %v3815 = vunpack.c.l.b16 %v2726
    %v3816 = vunpack.c.h.b16 %v2726
    %v3817 = vunpack.c.l.b16 %v2727
    %v3818 = vunpack.c.h.b16 %v2727
    %v3819 = vunpack.c.l.b16 %v2728
    %v3820 = vunpack.c.l.b16 %v2729
    %v3821 = vunpack.c.h.b16 %v2729
    %v3822 = vunpack.c.l.b16 %v2730
    %v3823 = vunpack.c.h.b16 %v2730
    %v3824 = vunpack.c.l.b16 %v2731
    %v3825 = vunpack.c.h.b16 %v2731
    %v3826 = vunpack.c.l.b16 %v2732
    %v3827 = vunpack.c.l.b16 %v2733
    %v3828 = vunpack.c.h.b16 %v2733
    %v3829 = vunpack.c.l.b16 %v2734
    %v3830 = vunpack.c.h.b16 %v2734
    %v3831 = vunpack.c.l.b16 %v2735
    %v3832 = vunpack.c.h.b16 %v2735
    %v3833 = vunpack.c.l.b16 %v2736
    %v3834 = vunpack.c.l.b16 %v2737
    %v3835 = vunpack.c.h.b16 %v2737
    %v3836 = vunpack.c.l.b16 %v2738
    %v3837 = vunpack.c.h.b16 %v2738
    %v3838 = vunpack.c.l.b16 %v2739
    %v3839 = vunpack.c.h.b16 %v2739
    %v3840 = vunpack.c.l.b16 %v2740
    %v3841 = vunpack.c.l.b16 %v2741
    %v3842 = vunpack.c.h.b16 %v2741
    %v3843 = vunpack.c.l.b16 %v2742
    %v3844 = vunpack.c.h.b16 %v2742
    %v3845 = vunpack.c.l.b16 %v2743
    %v3846 = vunpack.c.h.b16 %v2743
    %v3847 = vunpack.c.l.b16 %v2744
    %v3848 = vunpack.c.l.b16 %v2745
    %v3849 = vunpack.c.h.b16 %v2745
    %v3850 = vunpack.c.l.b16 %v2746
    %v3851 = vunpack.c.h.b16 %v2746
    %v3852 = vunpack.c.l.b16 %v2747
    %v3853 = vunpack.c.h.b16 %v2747
    %v3854 = vunpack.c.l.b16 %v2748
    %v3855 = vunpack.c.l.b16 %v2749
    %v3856 = vunpack.c.h.b16 %v2749
    %v3857 = vunpack.c.l.b16 %v2750
    %v3858 = vunpack.c.h.b16 %v2750
    %v3859 = vunpack.c.l.b16 %v2751
    %v3860 = vunpack.c.h.b16 %v2751
    %v3861 = vunpack.c.l.b16 %v2752
    %v3862 = vunpack.c.l.b16 %v2753
    %v3863 = vunpack.c.h.b16 %v2753
    %v3864 = vunpack.c.l.b16 %v2754
    %v3865 = vunpack.c.h.b16 %v2754
    %v3866 = vunpack.c.l.b16 %v2755
    %v3867 = vunpack.c.h.b16 %v2755
    %v3868 = vunpack.c.l.b16 %v2756
    %v3869 = vunpack.c.l.b16 %v2757
    %v3870 = vunpack.c.h.b16 %v2757
    %v3871 = vunpack.c.l.b16 %v2758
    %v3872 = vunpack.c.h.b16 %v2758
    %v3873 = vunpack.c.l.b16 %v2759
    %v3874 = vunpack.c.h.b16 %v2759
    %v3875 = vunpack.c.l.b16 %v2760
    %v3876 = vunpack.c.l.b16 %v2761
    %v3877 = vunpack.c.h.b16 %v2761
    %v3878 = vunpack.c.l.b16 %v2762
    %v3879 = vunpack.c.h.b16 %v2762
    %v3880 = vunpack.c.l.b16 %v2763
    %v3881 = vunpack.c.h.b16 %v2763
    %v3882 = vunpack.c.l.b16 %v2764
    %v3883 = vunpack.c.l.b16 %v2765
    %v3884 = vunpack.c.h.b16 %v2765
    %v3885 = vunpack.c.l.b16 %v2766
    %v3886 = vunpack.c.h.b16 %v2766
    %v3887 = vunpack.c.l.b16 %v2767
    %v3888 = vunpack.c.h.b16 %v2767
    %v3889 = vunpack.c.l.b16 %v2768
    %v3890 = vunpack.c.l.b16 %v2769
    %v3891 = vunpack.c.h.b16 %v2769
    %v3892 = vunpack.c.l.b16 %v2770
    %v3893 = vunpack.c.h.b16 %v2770
    %v3894 = vunpack.c.l.b16 %v2771
    %v3895 = vunpack.c.h.b16 %v2771
    %v3896 = vunpack.c.l.b16 %v2772
    %v3897 = vunpack.c.l.b16 %v2773
    %v3898 = vunpack.c.h.b16 %v2773
    %v3899 = vunpack.c.l.b16 %v2774
    %v3900 = vunpack.c.h.b16 %v2774
    %v3901 = vunpack.c.l.b16 %v2775
    %v3902 = vunpack.c.h.b16 %v2775
    %v3903 = vunpack.c.l.b16 %v2776
    %v3904 = vunpack.c.l.b16 %v2777
    %v3905 = vunpack.c.h.b16 %v2777
    %v3906 = vunpack.c.l.b16 %v2778
    %v3907 = vunpack.c.h.b16 %v2778
    %v3908 = vunpack.c.l.b16 %v2779
    %v3909 = vunpack.c.h.b16 %v2779
    %v3910 = vunpack.c.l.b16 %v2780
    %v3911 = vunpack.c.l.b16 %v2781
    %v3912 = vunpack.c.h.b16 %v2781
    %v3913 = vunpack.c.l.b16 %v2782
    %v3914 = vunpack.c.h.b16 %v2782
    %v3915 = vunpack.c.l.b16 %v2783
    %v3916 = vunpack.c.h.b16 %v2783
    %v3917 = vunpack.c.l.b16 %v2784
    %v3918 = vunpack.c.l.b16 %v2785
    %v3919 = vunpack.c.h.b16 %v2785
    %v3920 = vunpack.c.l.b16 %v2786
    %v3921 = vunpack.c.h.b16 %v2786
    %v3922 = vunpack.c.l.b16 %v2787
    %v3923 = vunpack.c.h.b16 %v2787
    %v3924 = vunpack.c.l.b16 %v2788
    %v3925 = vunpack.c.l.b16 %v2789
    %v3926 = vunpack.c.h.b16 %v2789
    %v3927 = vunpack.c.l.b16 %v2790
    %v3928 = vunpack.c.h.b16 %v2790
    %v3929 = vunpack.c.l.b16 %v2791
    %v3930 = vunpack.c.h.b16 %v2791
    %v3931 = vunpack.c.l.b16 %v2792
    %v3932 = vunpack.c.l.b16 %v2793
    %v3933 = vunpack.c.h.b16 %v2793
    %v3934 = vunpack.c.l.b16 %v2794
    %v3935 = vunpack.c.h.b16 %v2794
    %v3936 = vunpack.c.l.b16 %v2795
    %v3937 = vunpack.c.h.b16 %v2795
    %v3938 = vunpack.c.l.b16 %v2796
    %v3939 = vunpack.c.l.b16 %v2797
    %v3940 = vunpack.c.h.b16 %v2797
    %v3941 = vunpack.c.l.b16 %v2798
    %v3942 = vunpack.c.h.b16 %v2798
    %v3943 = vunpack.c.l.b16 %v2799
    %v3944 = vunpack.c.h.b16 %v2799
    %v3945 = vunpack.c.l.b16 %v2800
    %v3946 = vunpack.c.l.b16 %v2801
    %v3947 = vunpack.c.h.b16 %v2801
    %v3948 = vunpack.c.l.b16 %v2802
    %v3949 = vunpack.c.h.b16 %v2802
    %v3950 = vunpack.c.l.b16 %v2803
    %v3951 = vunpack.c.h.b16 %v2803
    %v3952 = vunpack.c.l.b16 %v2804
    %v3953 = vunpack.c.l.b16 %v2805
    %v3954 = vunpack.c.h.b16 %v2805
    %v3955 = vunpack.c.l.b16 %v2806
    %v3956 = vunpack.c.h.b16 %v2806
    %v3957 = vunpack.c.l.b16 %v2807
    %v3958 = vunpack.c.h.b16 %v2807
    %v3959 = vunpack.c.l.b16 %v2808
    %v3960 = vunpack.c.l.b16 %v2809
    %v3961 = vunpack.c.h.b16 %v2809
    %v3962 = vunpack.c.l.b16 %v2810
    %v3963 = vunpack.c.h.b16 %v2810
    %v3964 = vunpack.c.l.b16 %v2811
    %v3965 = vunpack.c.h.b16 %v2811
    %v3966 = vunpack.c.l.b16 %v2812
    %v3967 = vunpack.c.l.b16 %v2813
    %v3968 = vunpack.c.h.b16 %v2813
    %v3969 = vunpack.c.l.b16 %v2814
    %v3970 = vunpack.c.h.b16 %v2814
    %v3971 = vunpack.c.l.b16 %v2815
    %v3972 = vunpack.c.h.b16 %v2815
    %v3973 = vunpack.c.l.b16 %v2816
    %v3974 = vunpack.c.l.b16 %v2817
    %v3975 = vunpack.c.h.b16 %v2817
    %v3976 = vunpack.c.l.b16 %v2818
    %v3977 = vunpack.c.h.b16 %v2818
    %v3978 = vunpack.c.l.b16 %v2819
    %v3979 = vunpack.c.h.b16 %v2819
    %v3980 = vunpack.c.l.b16 %v2820
    %v3981 = vunpack.c.l.b16 %v2821
    %v3982 = vunpack.c.h.b16 %v2821
    %v3983 = vunpack.c.l.b16 %v2822
    %v3984 = vunpack.c.h.b16 %v2822
    %v3985 = vunpack.c.l.b16 %v2823
    %v3986 = vunpack.c.h.b16 %v2823
    %v3987 = vunpack.c.l.b16 %v2824
    %v3988 = vunpack.c.l.b16 %v2825
    %v3989 = vunpack.c.h.b16 %v2825
    %v3990 = vunpack.c.l.b16 %v2826
    %v3991 = vunpack.c.h.b16 %v2826
    %v3992 = vunpack.c.l.b16 %v2827
    %v3993 = vunpack.c.h.b16 %v2827
    %v3994 = vunpack.c.l.b16 %v2828
    %v3995 = vunpack.c.l.b16 %v2829
    %v3996 = vunpack.c.h.b16 %v2829
    %v3997 = vunpack.c.l.b16 %v2830
    %v3998 = vunpack.c.h.b16 %v2830
    %v3999 = vunpack.c.l.b16 %v2831
    %v4000 = vunpack.c.h.b16 %v2831
    %v4001 = vunpack.c.l.b16 %v2832
    %v4002 = vunpack.c.l.b16 %v2833
    %v4003 = vunpack.c.h.b16 %v2833
    %v4004 = vunpack.c.l.b16 %v2834
    %v4005 = vunpack.c.h.b16 %v2834
    %v4006 = vunpack.c.l.b16 %v2835
    %v4007 = vunpack.c.h.b16 %v2835
    %v4008 = vunpack.c.l.b16 %v2836
    %v4009 = vunpack.c.l.b16 %v2837
    %v4010 = vunpack.c.h.b16 %v2837
    %v4011 = vunpack.c.l.b16 %v2838
    %v4012 = vunpack.c.h.b16 %v2838
    %v4013 = vunpack.c.l.b16 %v2839
    %v4014 = vunpack.c.h.b16 %v2839
    %v4015 = vunpack.c.l.b16 %v2840
    %v4016 = vunpack.c.l.b16 %v2841
    %v4017 = vunpack.c.h.b16 %v2841
    %v4018 = vunpack.c.l.b16 %v2842
    %v4019 = vunpack.c.h.b16 %v2842
    %v4020 = vunpack.c.l.b16 %v2843
    %v4021 = vunpack.c.h.b16 %v2843
    %v4022 = vunpack.c.l.b16 %v2844
    %v4023 = vunpack.c.l.b16 %v2845
    %v4024 = vunpack.c.h.b16 %v2845
    %v4025 = vunpack.c.l.b16 %v2846
    %v4026 = vunpack.c.h.b16 %v2846
    %v4027 = vunpack.c.l.b16 %v2847
    %v4028 = vunpack.c.h.b16 %v2847
    %v4029 = vunpack.c.l.b16 %v2848
    %v4030 = vunpack.c.l.b16 %v2849
    %v4031 = vunpack.c.h.b16 %v2849
    %v4032 = vunpack.c.l.b16 %v2850
    %v4033 = vunpack.c.h.b16 %v2850
    %v4034 = vunpack.c.l.b16 %v2851
    %v4035 = vunpack.c.h.b16 %v2851
    %v4036 = vunpack.c.l.b16 %v2852
    %v4037 = vunpack.c.l.b16 %v2853
    %v4038 = vunpack.c.h.b16 %v2853
    %v4039 = vunpack.c.l.b16 %v2854
    %v4040 = vunpack.c.h.b16 %v2854
    %v4041 = vunpack.c.l.b16 %v2855
    %v4042 = vunpack.c.h.b16 %v2855
    %v4043 = vunpack.c.l.b16 %v2856
    %v4044 = vunpack.c.l.b16 %v2857
    %v4045 = vunpack.c.h.b16 %v2857
    %v4046 = vunpack.c.l.b16 %v2858
    %v4047 = vunpack.c.h.b16 %v2858
    %v4048 = vunpack.c.l.b16 %v2859
    %v4049 = vunpack.c.h.b16 %v2859
    %v4050 = vunpack.c.l.b16 %v2860
    %v4051 = vunpack.c.l.b16 %v2861
    %v4052 = vunpack.c.h.b16 %v2861
    %v4053 = vunpack.c.l.b16 %v2862
    %v4054 = vunpack.c.h.b16 %v2862
    %v4055 = vunpack.c.l.b16 %v2863
    %v4056 = vunpack.c.h.b16 %v2863
    %v4057 = vunpack.c.l.b16 %v2864
    %v4058 = vunpack.c.l.b16 %v2865
    %v4059 = vunpack.c.h.b16 %v2865
    %v4060 = vunpack.c.l.b16 %v2866
    %v4061 = vunpack.c.h.b16 %v2866
    %v4062 = vunpack.c.l.b16 %v2867
    %v4063 = vunpack.c.h.b16 %v2867
    %v4064 = vunpack.c.l.b16 %v2868
    %v4065 = vunpack.c.l.b16 %v2869
    %v4066 = vunpack.c.h.b16 %v2869
    %v4067 = vunpack.c.l.b16 %v2870
    %v4068 = vunpack.c.h.b16 %v2870
    %v4069 = vunpack.c.l.b16 %v2871
    %v4070 = vunpack.c.h.b16 %v2871
    %v4071 = vunpack.c.l.b16 %v2872
    %v4072 = vunpack.c.l.b16 %v2873
    %v4073 = vunpack.c.h.b16 %v2873
    %v4074 = vunpack.c.l.b16 %v2874
    %v4075 = vunpack.c.h.b16 %v2874
    %v4076 = vunpack.c.l.b16 %v2875
    %v4077 = vunpack.c.h.b16 %v2875
    %v4078 = vunpack.c.l.b16 %v2876
    %v4079 = vunpack.c.l.b16 %v2877
    %v4080 = vunpack.c.h.b16 %v2877
    %v4081 = vunpack.c.l.b16 %v2878
    %v4082 = vunpack.c.h.b16 %v2878
    %v4083 = vunpack.c.l.b16 %v2879
    %v4084 = vunpack.c.h.b16 %v2879
    %v4085 = vunpack.c.l.b16 %v2880
    %v4086 = vunpack.c.l.b16 %v2881
    %v4087 = vunpack.c.h.b16 %v2881
    %v4088 = vunpack.c.l.b16 %v2882
    %v4089 = vunpack.c.h.b16 %v2882
    %v4090 = vunpack.c.l.b16 %v2883
    %v4091 = vunpack.c.h.b16 %v2883
    %v4092 = vunpack.c.l.b16 %v2884
    %v4093 = vunpack.c.l.b16 %v2885
    %v4094 = vunpack.c.h.b16 %v2885
    %v4095 = vunpack.c.l.b16 %v2886
    %v4096 = vunpack.c.h.b16 %v2886
    %v4097 = vunpack.c.l.b16 %v2887
    %v4098 = vunpack.c.h.b16 %v2887
    %v4099 = vunpack.c.l.b16 %v2888
    %v4100 = vunpack.c.l.b16 %v2889
    %v4101 = vunpack.c.h.b16 %v2889
    %v4102 = vunpack.c.l.b16 %v2890
    %v4103 = vunpack.c.h.b16 %v2890
    %v4104 = vunpack.c.l.b16 %v2891
    %v4105 = vunpack.c.h.b16 %v2891
    %v4106 = vunpack.c.l.b16 %v2892
    %v4107 = vunpack.c.l.b16 %v2893
    %v4108 = vunpack.c.h.b16 %v2893
    %v4109 = vunpack.c.l.b16 %v2894
    %v4110 = vunpack.c.h.b16 %v2894
    %v4111 = vunpack.c.l.b16 %v2895
    %v4112 = vunpack.c.h.b16 %v2895
    %v4113 = vunpack.c.l.b16 %v2896
    %v4114 = vunpack.c.l.b16 %v2897
    %v4115 = vunpack.c.h.b16 %v2897
    %v4116 = vunpack.c.l.b16 %v2898
    %v4117 = vunpack.c.h.b16 %v2898
    %v4118 = vunpack.c.l.b16 %v2899
    %v4119 = vunpack.c.h.b16 %v2899
    %v4120 = vunpack.c.l.b16 %v2900
    %v4121 = vunpack.c.l.b16 %v2901
    %v4122 = vunpack.c.h.b16 %v2901
    %v4123 = vunpack.c.l.b16 %v2902
    %v4124 = vunpack.c.h.b16 %v2902
    %v4125 = vunpack.c.l.b16 %v2903
    %v4126 = vunpack.c.h.b16 %v2903
    %v4127 = vunpack.c.l.b16 %v2904
    %v4128 = vunpack.c.l.b16 %v2905
    %v4129 = vunpack.c.h.b16 %v2905
    %v4130 = vunpack.c.l.b16 %v2906
    %v4131 = vunpack.c.h.b16 %v2906
    %v4132 = vunpack.c.l.b16 %v2907
    %v4133 = vunpack.c.h.b16 %v2907
    %v4134 = vunpack.c.l.b16 %v2908
    %v4135 = vunpack.c.l.b16 %v2909
    %v4136 = vunpack.c.h.b16 %v2909
    %v4137 = vunpack.c.l.b16 %v2910
    %v4138 = vunpack.c.h.b16 %v2910
    %v4139 = vunpack.c.l.b16 %v2911
    %v4140 = vunpack.c.h.b16 %v2911
    %v4141 = vunpack.c.l.b16 %v2912
    %v4142 = vunpack.c.l.b16 %v2913
    %v4143 = vunpack.c.h.b16 %v2913
    %v4144 = vunpack.c.l.b16 %v2914
    %v4145 = vunpack.c.h.b16 %v2914
    %v4146 = vunpack.c.l.b16 %v2915
    %v4147 = vunpack.c.h.b16 %v2915
    %v4148 = vunpack.c.l.b16 %v2916
    %v4149 = vunpack.c.l.b16 %v2917
    %v4150 = vunpack.c.h.b16 %v2917
    %v4151 = vunpack.c.l.b16 %v2918
    %v4152 = vunpack.c.h.b16 %v2918
    %v4153 = vunpack.c.l.b16 %v2919
    %v4154 = vunpack.c.h.b16 %v2919
    %v4155 = vunpack.c.l.b16 %v2920
    %v4156 = vunpack.c.l.b16 %v2921
    %v4157 = vunpack.c.h.b16 %v2921
    %v4158 = vunpack.c.l.b16 %v2922
    %v4159 = vunpack.c.h.b16 %v2922
    %v4160 = vunpack.c.l.b16 %v2923
    %v4161 = vunpack.c.h.b16 %v2923
    %v4162 = vunpack.c.l.b16 %v2924
    %v4163 = vunpack.c.l.b16 %v2925
    %v4164 = vunpack.c.h.b16 %v2925
    %v4165 = vunpack.c.l.b16 %v2926
    %v4166 = vunpack.c.h.b16 %v2926
    %v4167 = vunpack.c.l.b16 %v2927
    %v4168 = vunpack.c.h.b16 %v2927
    %v4169 = vunpack.c.l.b16 %v2928
    %v4170 = vunpack.c.l.b16 %v2929
    %v4171 = vunpack.c.h.b16 %v2929
    %v4172 = vunpack.c.l.b16 %v2930
    %v4173 = vunpack.c.h.b16 %v2930
    %v4174 = vunpack.c.l.b16 %v2931
    %v4175 = vunpack.c.h.b16 %v2931
    %v4176 = vunpack.c.l.b16 %v2932
    %v4177 = vunpack.c.l.b16 %v2933
    %v4178 = vunpack.c.h.b16 %v2933
    %v4179 = vunpack.c.l.b16 %v2934
    %v4180 = vunpack.c.h.b16 %v2934
    %v4181 = vunpack.c.l.b16 %v2935
    %v4182 = vunpack.c.h.b16 %v2935
    %v4183 = vunpack.c.l.b16 %v2936
    %v4184 = vunpack.c.l.b16 %v2937
    %v4185 = vunpack.c.h.b16 %v2937
    %v4186 = vunpack.c.l.b16 %v2938
    %v4187 = vunpack.c.h.b16 %v2938
    %v4188 = vunpack.c.l.b16 %v2939
    %v4189 = vunpack.c.h.b16 %v2939
    %v4190 = vunpack.c.l.b16 %v2940
    %v4191 = vunpack.c.l.b16 %v2941
    %v4192 = vunpack.c.h.b16 %v2941
    %v4193 = vunpack.c.l.b16 %v2942
    %v4194 = vunpack.c.h.b16 %v2942
    %v4195 = vunpack.c.l.b16 %v2943
    %v4196 = vunpack.c.h.b16 %v2943
    %v4197 = vunpack.c.l.b16 %v2944
    %v4198 = vunpack.c.l.b16 %v2945
    %v4199 = vunpack.c.h.b16 %v2945
    %v4200 = vunpack.c.l.b16 %v2946
    %v4201 = vunpack.c.h.b16 %v2946
    %v4202 = vunpack.c.l.b16 %v2947
    %v4203 = vunpack.c.h.b16 %v2947
    %v4204 = vunpack.c.l.b16 %v2948
    %v4205 = vunpack.c.l.b16 %v2949
    %v4206 = vunpack.c.h.b16 %v2949
    %v4207 = vunpack.c.l.b16 %v2950
    %v4208 = vunpack.c.h.b16 %v2950
    %v4209 = vunpack.c.l.b16 %v2951
    %v4210 = vunpack.c.h.b16 %v2951
    %v4211 = vunpack.c.l.b16 %v2952
    %v4212 = vunpack.c.l.b16 %v2953
    %v4213 = vunpack.c.h.b16 %v2953
    %v4214 = vunpack.c.l.b16 %v2954
    %v4215 = vunpack.c.h.b16 %v2954
    %v4216 = vunpack.c.l.b16 %v2955
    %v4217 = vunpack.c.h.b16 %v2955
    %v4218 = vunpack.c.l.b16 %v2956
    %v4219 = vunpack.c.l.b16 %v2957
    %v4220 = vunpack.c.h.b16 %v2957
    %v4221 = vunpack.c.l.b16 %v2958
    %v4222 = vunpack.c.h.b16 %v2958
    %v4223 = vunpack.c.l.b16 %v2959
    %v4224 = vunpack.c.h.b16 %v2959
    %v4225 = vunpack.c.l.b16 %v2960
    %v4226 = vunpack.c.l.b16 %v2961
    %v4227 = vunpack.c.h.b16 %v2961
    %v4228 = vunpack.c.l.b16 %v2962
    %v4229 = vunpack.c.h.b16 %v2962
    %v4230 = vunpack.c.l.b16 %v2963
    %v4231 = vunpack.c.h.b16 %v2963
    %v4232 = vunpack.c.l.b16 %v2964
    %v4233 = vunpack.c.l.b16 %v2965
    %v4234 = vunpack.c.h.b16 %v2965
    %v4235 = vunpack.c.l.b16 %v2966
    %v4236 = vunpack.c.h.b16 %v2966
    %v4237 = vunpack.c.l.b16 %v2967
    %v4238 = vunpack.c.h.b16 %v2967
    %v4239 = vunpack.c.l.b16 %v2968
    %v4240 = vunpack.c.l.b16 %v2969
    %v4241 = vunpack.c.h.b16 %v2969
    %v4242 = vunpack.c.l.b16 %v2970
    %v4243 = vunpack.c.h.b16 %v2970
    %v4244 = vunpack.c.l.b16 %v2971
    %v4245 = vunpack.c.h.b16 %v2971
    %v4246 = vunpack.c.l.b16 %v2972
    %v4247 = vunpack.c.l.b16 %v2973
    %v4248 = vunpack.c.h.b16 %v2973
    %v4249 = vunpack.c.l.b16 %v2974
    %v4250 = vunpack.c.h.b16 %v2974
    %v4251 = vunpack.c.l.b16 %v2975
    %v4252 = vunpack.c.h.b16 %v2975
    %v4253 = vunpack.c.l.b16 %v2976
    %v4254 = vunpack.c.l.b16 %v2977
    %v4255 = vunpack.c.h.b16 %v2977
    %v4256 = vunpack.c.l.b16 %v2978
    %v4257 = vunpack.c.h.b16 %v2978
    %v4258 = vunpack.c.l.b16 %v2979
    %v4259 = vunpack.c.h.b16 %v2979
    %v4260 = vunpack.c.l.b16 %v2980
    %v4261 = vunpack.c.l.b16 %v2981
    %v4262 = vunpack.c.h.b16 %v2981
    %v4263 = vunpack.c.l.b16 %v2982
    %v4264 = vunpack.c.h.b16 %v2982
    %v4265 = vunpack.c.l.b16 %v2983
    %v4266 = vunpack.c.h.b16 %v2983
    %v4267 = vunpack.c.l.b16 %v2984
    %v4268 = vunpack.c.l.b16 %v2985
    %v4269 = vunpack.c.h.b16 %v2985
    %v4270 = vunpack.c.l.b16 %v2986
    %v4271 = vunpack.c.h.b16 %v2986
    %v4272 = vunpack.c.l.b16 %v2987
    %v4273 = vunpack.c.h.b16 %v2987
    %v4274 = vunpack.c.l.b16 %v2988
    %v4275 = vunpack.c.l.b16 %v2989
    %v4276 = vunpack.c.h.b16 %v2989
    %v4277 = vunpack.c.l.b16 %v2990
    %v4278 = vunpack.c.h.b16 %v2990
    %v4279 = vunpack.c.l.b16 %v2991
    %v4280 = vunpack.c.h.b16 %v2991
    %v4281 = vunpack.c.l.b16 %v2992
    %v4282 = vunpack.c.l.b16 %v2993
    %v4283 = vunpack.c.h.b16 %v2993
    %v4284 = vunpack.c.l.b16 %v2994
    %v4285 = vunpack.c.h.b16 %v2994
    %v4286 = vunpack.c.l.b16 %v2995
    %v4287 = vunpack.c.h.b16 %v2995
    %v4288 = vunpack.c.l.b16 %v2996
    %v4289 = vunpack.c.l.b16 %v2997
    %v4290 = vunpack.c.h.b16 %v2997
    %v4291 = vunpack.c.l.b16 %v2998
    %v4292 = vunpack.c.h.b16 %v2998
    %v4293 = vunpack.c.l.b16 %v2999
    %v4294 = vunpack.c.h.b16 %v2999
    %v4295 = vunpack.c.l.b16 %v3000
    %v4296 = vunpack.c.l.b16 %v3001
    %v4297 = vunpack.c.h.b16 %v3001
    %v4298 = vunpack.c.l.b16 %v3002
    %v4299 = vunpack.c.h.b16 %v3002
    %v4300 = vunpack.c.l.b16 %v3003
    %v4301 = vunpack.c.h.b16 %v3003
    %v4302 = vunpack.c.l.b16 %v3004
    %v4303 = vunpack.c.l.b16 %v3005
    %v4304 = vunpack.c.h.b16 %v3005
    %v4305 = vunpack.c.l.b16 %v3006
    %v4306 = vunpack.c.h.b16 %v3006
    %v4307 = vunpack.c.l.b16 %v3007
    %v4308 = vunpack.c.h.b16 %v3007
    %v4309 = vunpack.c.l.b16 %v3008
    %v4310 = vunpack.c.l.b16 %v3009
    %v4311 = vunpack.c.h.b16 %v3009
    %v4312 = vunpack.c.l.b16 %v3010
    %v4313 = vunpack.c.h.b16 %v3010
    %v4314 = vunpack.c.l.b16 %v3011
    %v4315 = vunpack.c.h.b16 %v3011
    %v4316 = vunpack.c.l.b16 %v3012
    %v4317 = vunpack.c.l.b16 %v3013
    %v4318 = vunpack.c.h.b16 %v3013
    %v4319 = vunpack.c.l.b16 %v3014
    %v4320 = vunpack.c.h.b16 %v3014
    %v4321 = vunpack.c.l.b16 %v3015
    %v4322 = vunpack.c.h.b16 %v3015
    %v4323 = vunpack.c.l.b16 %v3016
    %v4324 = vunpack.c.l.b16 %v3017
    %v4325 = vunpack.c.h.b16 %v3017
    %v4326 = vunpack.c.l.b16 %v3018
    %v4327 = vunpack.c.h.b16 %v3018
    %v4328 = vunpack.c.l.b16 %v3019
    %v4329 = vunpack.c.h.b16 %v3019
    %v4330 = vunpack.c.l.b16 %v3020
    %v4331 = vunpack.c.l.b16 %v3021
    %v4332 = vunpack.c.h.b16 %v3021
    %v4333 = vunpack.c.l.b16 %v3022
    %v4334 = vunpack.c.h.b16 %v3022
    %v4335 = vunpack.c.l.b16 %v3023
    %v4336 = vunpack.c.h.b16 %v3023
    %v4337 = vunpack.c.l.b16 %v3024
    %v4338 = vunpack.c.l.b16 %v3025
    %v4339 = vunpack.c.h.b16 %v3025
    %v4340 = vunpack.c.l.b16 %v3026
    %v4341 = vunpack.c.h.b16 %v3026
    %v4342 = vunpack.c.l.b16 %v3027
    %v4343 = vunpack.c.h.b16 %v3027
    %v4344 = vunpack.c.l.b16 %v3028
    %v4345 = vunpack.c.l.b16 %v3029
    %v4346 = vunpack.c.h.b16 %v3029
    %v4347 = vunpack.c.l.b16 %v3030
    %v4348 = vunpack.c.h.b16 %v3030
    %v4349 = vunpack.c.l.b16 %v3031
    %v4350 = vunpack.c.h.b16 %v3031
    %v4351 = vunpack.c.l.b16 %v3032
    %v4352 = vunpack.c.l.b16 %v3033
    %v4353 = vunpack.c.h.b16 %v3033
    %v4354 = vunpack.c.l.b16 %v3034
    %v4355 = vunpack.c.h.b16 %v3034
    %v4356 = vunpack.c.l.b16 %v3035
    %v4357 = vunpack.c.h.b16 %v3035
    %v4358 = vunpack.c.l.b16 %v3036
    %v4359 = vunpack.c.l.b16 %v3037
    %v4360 = vunpack.c.h.b16 %v3037
    %v4361 = vunpack.c.l.b16 %v3038
    %v4362 = vunpack.c.h.b16 %v3038
    %v4363 = vunpack.c.l.b16 %v3039
    %v4364 = vunpack.c.h.b16 %v3039
    %v4365 = vunpack.c.l.b16 %v3040
    %v4366 = vunpack.c.l.b16 %v3041
    %v4367 = vunpack.c.h.b16 %v3041
    %v4368 = vunpack.c.l.b16 %v3042
    %v4369 = vunpack.c.h.b16 %v3042
    %v4370 = vunpack.c.l.b16 %v3043
    %v4371 = vunpack.c.h.b16 %v3043
    %v4372 = vunpack.c.l.b16 %v3044
    %v4373 = vunpack.c.l.b16 %v3045
    %v4374 = vunpack.c.h.b16 %v3045
    %v4375 = vunpack.c.l.b16 %v3046
    %v4376 = vunpack.c.h.b16 %v3046
    %v4377 = vunpack.c.l.b16 %v3047
    %v4378 = vunpack.c.h.b16 %v3047
    %v4379 = vunpack.c.l.b16 %v3048
    %v4380 = vunpack.c.l.b16 %v3049
    %v4381 = vunpack.c.h.b16 %v3049
    %v4382 = vunpack.c.l.b16 %v3050
    %v4383 = vunpack.c.h.b16 %v3050
    %v4384 = vunpack.c.l.b16 %v3051
    %v4385 = vunpack.c.h.b16 %v3051
    %v4386 = vunpack.c.l.b16 %v3052
    %v4387 = vunpack.c.l.b16 %v3053
    %v4388 = vunpack.c.h.b16 %v3053
    %v4389 = vunpack.c.l.b16 %v3054
    %v4390 = vunpack.c.h.b16 %v3054
    %v4391 = vunpack.c.l.b16 %v3055
    %v4392 = vunpack.c.h.b16 %v3055
    %v4393 = vunpack.c.l.b16 %v3056
    %v4394 = vunpack.c.l.b16 %v3057
    %v4395 = vunpack.c.h.b16 %v3057
    %v4396 = vunpack.c.l.b16 %v3058
    %v4397 = vunpack.c.h.b16 %v3058
    %v4398 = vunpack.c.l.b16 %v3059
    %v4399 = vunpack.c.h.b16 %v3059
    %v4400 = vunpack.c.l.b16 %v3060
    %v4401 = vunpack.c.l.b16 %v3061
    %v4402 = vunpack.c.h.b16 %v3061
    %v4403 = vunpack.c.l.b16 %v3062
    %v4404 = vunpack.c.h.b16 %v3062
    %v4405 = vunpack.c.l.b16 %v3063
    %v4406 = vunpack.c.h.b16 %v3063
    %v4407 = vunpack.c.l.b16 %v3064
    %v4408 = vunpack.c.l.b16 %v3065
    %v4409 = vunpack.c.h.b16 %v3065
    %v4410 = vunpack.c.l.b16 %v3066
    %v4411 = vunpack.c.h.b16 %v3066
    %v4412 = vunpack.c.l.b16 %v3067
    %v4413 = vunpack.c.h.b16 %v3067
    %v4414 = vunpack.c.l.b16 %v3068
    %v4415 = vunpack.c.l.b16 %v3069
    %v4416 = vunpack.c.h.b16 %v3069
    %v4417 = vunpack.c.l.b16 %v3070
    %v4418 = vunpack.c.h.b16 %v3070
    %v4419 = vunpack.c.l.b16 %v3071
    %v4420 = vunpack.c.h.b16 %v3071
    %v4421 = vunpack.c.l.b16 %v3072
    %v4422 = vunpack.c.l.b16 %v3073
    %v4423 = vunpack.c.h.b16 %v3073
    %v4424 = vunpack.c.l.b16 %v3074
    %v4425 = vunpack.c.h.b16 %v3074
    %v4426 = vunpack.c.l.b16 %v3075
    %v4427 = vunpack.c.h.b16 %v3075
    %v4428 = vunpack.c.l.b16 %v3076
    %v4429 = vunpack.c.l.b16 %v3077
    %v4430 = vunpack.c.h.b16 %v3077
    %v4431 = vunpack.c.l.b16 %v3078
    %v4432 = vunpack.c.h.b16 %v3078
    %v4433 = vunpack.c.l.b16 %v3079
    %v4434 = vunpack.c.h.b16 %v3079
    %v4435 = vunpack.c.l.b16 %v3080
    %v4436 = vunpack.c.l.b16 %v3081
    %v4437 = vunpack.c.h.b16 %v3081
    %v4438 = vunpack.c.l.b16 %v3082
    %v4439 = vunpack.c.h.b16 %v3082
    %v4440 = vunpack.c.l.b16 %v3083
    %v4441 = vunpack.c.h.b16 %v3083
    %v4442 = vunpack.c.l.b16 %v3084
    %v4443 = vunpack.c.l.b16 %v3085
    %v4444 = vunpack.c.h.b16 %v3085
    %v4445 = vunpack.c.l.b16 %v3086
    %v4446 = vunpack.c.h.b16 %v3086
    %v4447 = vunpack.c.l.b16 %v3087
    %v4448 = vunpack.c.h.b16 %v3087
    %v4449 = vunpack.c.l.b16 %v3088
    %v4450 = vunpack.c.l.b16 %v3089
    %v4451 = vunpack.c.h.b16 %v3089
    %v4452 = vunpack.c.l.b16 %v3090
    %v4453 = vunpack.c.h.b16 %v3090
    %v4454 = vunpack.c.l.b16 %v3091
    %v4455 = vunpack.c.h.b16 %v3091
    %v4456 = vunpack.c.l.b16 %v3092
    %v4457 = vunpack.c.l.b16 %v3093
    %v4458 = vunpack.c.h.b16 %v3093
    %v4459 = vunpack.c.l.b16 %v3094
    %v4460 = vunpack.c.h.b16 %v3094
    %v4461 = vunpack.c.l.b16 %v3095
    %v4462 = vunpack.c.h.b16 %v3095
    %v4463 = vunpack.c.l.b16 %v3096
    %v4464 = vunpack.c.l.b16 %v3097
    %v4465 = vunpack.c.h.b16 %v3097
    %v4466 = vunpack.c.l.b16 %v3098
    %v4467 = vunpack.c.h.b16 %v3098
    %v4468 = vunpack.c.l.b16 %v3099
    %v4469 = vunpack.c.h.b16 %v3099
    %v4470 = vunpack.c.l.b16 %v3100
    %v4471 = vunpack.c.l.b16 %v3101
    %v4472 = vunpack.c.h.b16 %v3101
    %v4473 = vunpack.c.l.b16 %v3102
    %v4474 = vunpack.c.h.b16 %v3102
    %v4475 = vunpack.c.l.b16 %v3103
    %v4476 = vunpack.c.h.b16 %v3103
    %v4477 = vunpack.c.l.b16 %v3104
    %v4478 = vunpack.c.l.b16 %v3105
    %v4479 = vunpack.c.h.b16 %v3105
    %v4480 = vunpack.c.l.b16 %v3106
    %v4481 = vunpack.c.h.b16 %v3106
    %v4482 = vunpack.c.l.b16 %v3107
    %v4483 = vunpack.c.h.b16 %v3107
    %v4484 = vunpack.c.l.b16 %v3108
    %v4485 = vunpack.c.l.b16 %v3109
    %v4486 = vunpack.c.h.b16 %v3109
    %v4487 = vunpack.c.l.b16 %v3110
    %v4488 = vunpack.c.h.b16 %v3110
    %v4489 = vunpack.c.l.b16 %v3111
    %v4490 = vunpack.c.h.b16 %v3111
    %v4491 = vunpack.c.l.b16 %v3112
    %v4492 = vunpack.c.l.b16 %v3113
    %v4493 = vunpack.c.h.b16 %v3113
    %v4494 = vunpack.c.l.b16 %v3114
    %v4495 = vunpack.c.h.b16 %v3114
    %v4496 = vunpack.c.l.b16 %v3115
    %v4497 = vunpack.c.h.b16 %v3115
    %v4498 = vunpack.c.l.b16 %v3116
    %v4499 = vunpack.c.l.b16 %v3117
    %v4500 = vunpack.c.h.b16 %v3117
    %v4501 = vunpack.c.l.b16 %v3118
    %v4502 = vunpack.c.h.b16 %v3118
    %v4503 = vunpack.c.l.b16 %v3119
    %v4504 = vunpack.c.h.b16 %v3119
    %v4505 = vunpack.c.l.b16 %v3120
    %v4506 = vunpack.c.l.b16 %v3121
    %v4507 = vunpack.c.h.b16 %v3121
    %v4508 = vunpack.c.l.b16 %v3122
    %v4509 = vunpack.c.h.b16 %v3122
    %v4510 = vunpack.c.l.b16 %v3123
    %v4511 = vunpack.c.h.b16 %v3123
    %v4512 = vunpack.c.l.b16 %v3124
    %v4513 = vunpack.c.l.b16 %v3125
    %v4514 = vunpack.c.h.b16 %v3125
    %v4515 = vunpack.c.l.b16 %v3126
    %v4516 = vunpack.c.h.b16 %v3126
    %v4517 = vunpack.c.l.b16 %v3127
    %v4518 = vunpack.c.h.b16 %v3127
    %v4519 = vunpack.c.l.b16 %v3128
    %v4520 = vunpack.c.l.b16 %v3129
    %v4521 = vunpack.c.h.b16 %v3129
    %v4522 = vunpack.c.l.b16 %v3130
    %v4523 = vunpack.c.h.b16 %v3130
    %v4524 = vunpack.c.l.b16 %v3131
    %v4525 = vunpack.c.h.b16 %v3131
    %v4526 = vunpack.c.l.b16 %v3132
    %v4527 = vunpack.c.l.b16 %v3133
    %v4528 = vunpack.c.h.b16 %v3133
    %v4529 = vunpack.c.l.b16 %v3134
    %v4530 = vunpack.c.h.b16 %v3134
    %v4531 = vunpack.c.l.b16 %v3135
    %v4532 = vunpack.c.h.b16 %v3135
    %v4533 = vunpack.c.l.b16 %v3136
    %v4534 = vunpack.c.l.b16 %v3137
    %v4535 = vunpack.c.h.b16 %v3137
    %v4536 = vunpack.c.l.b16 %v3138
    %v4537 = vunpack.c.h.b16 %v3138
    %v4538 = vunpack.c.l.b16 %v3139
    %v4539 = vunpack.c.h.b16 %v3139
    %v4540 = vunpack.c.l.b16 %v3140
    %v4541 = vunpack.c.l.b16 %v3141
    %v4542 = vunpack.c.h.b16 %v3141
    %v4543 = vunpack.c.l.b16 %v3142
    %v4544 = vunpack.c.h.b16 %v3142
    %v4545 = vunpack.c.l.b16 %v3143
    %v4546 = vunpack.c.h.b16 %v3143
    %v4547 = vunpack.c.l.b16 %v3144
    %v4548 = vunpack.c.l.b16 %v3145
    %v4549 = vunpack.c.h.b16 %v3145
    %v4550 = vunpack.c.l.b16 %v3146
    %v4551 = vunpack.c.h.b16 %v3146
    %v4552 = vunpack.c.l.b16 %v3147
    %v4553 = vunpack.c.h.b16 %v3147
    %v4554 = vunpack.c.l.b16 %v3148
    %v4555 = vunpack.c.l.b16 %v3149
    %v4556 = vunpack.c.h.b16 %v3149
    %v4557 = vunpack.c.l.b16 %v3150
    %v4558 = vunpack.c.h.b16 %v3150
    %v4559 = vunpack.c.l.b16 %v3151
    %v4560 = vunpack.c.h.b16 %v3151
    %v4561 = vunpack.c.l.b16 %v3152
    %v4562 = vunpack.c.l.b16 %v3153
    %v4563 = vunpack.c.h.b16 %v3153
    %v4564 = vunpack.c.l.b16 %v3154
    %v4565 = vunpack.c.h.b16 %v3154
    %v4566 = vunpack.c.l.b16 %v3155
    %v4567 = vunpack.c.h.b16 %v3155
    %v4568 = vunpack.c.l.b16 %v3156
    %v4569 = vunpack.c.l.b16 %v3157
    %v4570 = vunpack.c.h.b16 %v3157
    %v4571 = vunpack.c.l.b16 %v3158
    %v4572 = vunpack.c.h.b16 %v3158
    %v4573 = vunpack.c.l.b16 %v3159
    %v4574 = vunpack.c.h.b16 %v3159
    %v4575 = vunpack.c.l.b16 %v3160
    %v4576 = vunpack.c.l.b16 %v3161
    %v4577 = vunpack.c.h.b16 %v3161
    %v4578 = vunpack.c.l.b16 %v3162
    %v4579 = vunpack.c.h.b16 %v3162
    %v4580 = vunpack.c.l.b16 %v3163
    %v4581 = vunpack.c.h.b16 %v3163
    %v4582 = vunpack.c.l.b16 %v3164
    %v4583 = vunpack.c.l.b16 %v3165
    %v4584 = vunpack.c.h.b16 %v3165
    %v4585 = vunpack.c.l.b16 %v3166
    %v4586 = vunpack.c.h.b16 %v3166
    %v4587 = vunpack.c.l.b16 %v3167
    %v4588 = vunpack.c.h.b16 %v3167
    %v4589 = vunpack.c.l.b16 %v3168
    %v4590 = vunpack.c.l.b16 %v3169
    %v4591 = vunpack.c.h.b16 %v3169
    %v4592 = vunpack.c.l.b16 %v3170
    %v4593 = vunpack.c.h.b16 %v3170
    %v4594 = vunpack.c.l.b16 %v3171
    %v4595 = vunpack.c.h.b16 %v3171
    %v4596 = vunpack.c.l.b16 %v3172
    %v4597 = vunpack.c.l.b16 %v3173
    %v4598 = vunpack.c.h.b16 %v3173
    %v4599 = vunpack.c.l.b16 %v3174
    %v4600 = vunpack.c.h.b16 %v3174
    %v4601 = vunpack.c.l.b16 %v3175
    %v4602 = vunpack.c.h.b16 %v3175
    %v4603 = vunpack.c.l.b16 %v3176
    %v4604 = vunpack.c.l.b16 %v3177
    %v4605 = vunpack.c.h.b16 %v3177
    %v4606 = vunpack.c.l.b16 %v3178
    %v4607 = vunpack.c.h.b16 %v3178
    %v4608 = vunpack.c.l.b16 %v3179
    %v4609 = vunpack.c.h.b16 %v3179
    %v4610 = vunpack.c.l.b16 %v3180
    %v4611 = vunpack.c.l.b16 %v3181
    %v4612 = vunpack.c.h.b16 %v3181
    %v4613 = vunpack.c.l.b16 %v3182
    %v4614 = vunpack.c.h.b16 %v3182
    %v4615 = vunpack.c.l.b16 %v3183
    %v4616 = vunpack.c.h.b16 %v3183
    %v4617 = vunpack.c.l.b16 %v3184
    %v4618 = vunpack.c.l.b16 %v3185
    %v4619 = vunpack.c.h.b16 %v3185
    %v4620 = vunpack.c.l.b16 %v3186
    %v4621 = vunpack.c.h.b16 %v3186
    %v4622 = vunpack.c.l.b16 %v3187
    %v4623 = vunpack.c.h.b16 %v3187
    %v4624 = vunpack.c.l.b16 %v3188
    %v4625 = vunpack.c.l.b16 %v3189
    %v4626 = vunpack.c.h.b16 %v3189
    %v4627 = vunpack.c.l.b16 %v3190
    %v4628 = vunpack.c.h.b16 %v3190
    %v4629 = vunpack.c.l.b16 %v3191
    %v4630 = vunpack.c.h.b16 %v3191
    %v4631 = vunpack.c.l.b16 %v3192
    %v4632 = vunpack.c.l.b16 %v3193
    %v4633 = vunpack.c.h.b16 %v3193
    %v4634 = vunpack.c.l.b16 %v3194
    %v4635 = vunpack.c.h.b16 %v3194
    %v4636 = vunpack.c.l.b16 %v3195
    %v4637 = vunpack.c.h.b16 %v3195
    %v4638 = vunpack.c.l.b16 %v3196
    %v4639 = vunpack.c.l.b16 %v3197
    %v4640 = vunpack.c.h.b16 %v3197
    %v4641 = vunpack.c.l.b16 %v3198
    %v4642 = vunpack.c.h.b16 %v3198
    %v4643 = vunpack.c.l.b16 %v3199
    %v4644 = vunpack.c.h.b16 %v3199
    %v4645 = vunpack.c.l.b16 %v3200
    %v4646 = vpack.c.b16 %v3757, %v3750
    %v4647 = vpack.c.b16 %v3758, %v3751
    %v4648 = vpack.c.b16 %v3759, %v3752
    %v4649 = vpack.c.b16 %v3760, %v3753
    %v4650 = vpack.c.b16 %v3761, %v3754
    %v4651 = vpack.c.b16 %v3762, %v3755
    %v4652 = vpack.c.b16 %v3763, %v3756
    %v4653 = vpack.c.b16 %v3771, %v3764
    %v4654 = vpack.c.b16 %v3772, %v3765
    %v4655 = vpack.c.b16 %v3773, %v3766
    %v4656 = vpack.c.b16 %v3774, %v3767
    %v4657 = vpack.c.b16 %v3775, %v3768
    %v4658 = vpack.c.b16 %v3776, %v3769
    %v4659 = vpack.c.b16 %v3777, %v3770
    %v4660 = vpack.c.b16 %v3785, %v3778
    %v4661 = vpack.c.b16 %v3786, %v3779
    %v4662 = vpack.c.b16 %v3787, %v3780
    %v4663 = vpack.c.b16 %v3788, %v3781
    %v4664 = vpack.c.b16 %v3789, %v3782
    %v4665 = vpack.c.b16 %v3790, %v3783
    %v4666 = vpack.c.b16 %v3791, %v3784
    %v4667 = vpack.c.b16 %v3799, %v3792
    %v4668 = vpack.c.b16 %v3800, %v3793
    %v4669 = vpack.c.b16 %v3801, %v3794
    %v4670 = vpack.c.b16 %v3802, %v3795
    %v4671 = vpack.c.b16 %v3803, %v3796
    %v4672 = vpack.c.b16 %v3804, %v3797
    %v4673 = vpack.c.b16 %v3805, %v3798
    %v4674 = vpack.c.b16 %v3813, %v3806
    %v4675 = vpack.c.b16 %v3814, %v3807
    %v4676 = vpack.c.b16 %v3815, %v3808
    %v4677 = vpack.c.b16 %v3816, %v3809
    %v4678 = vpack.c.b16 %v3817, %v3810
    %v4679 = vpack.c.b16 %v3818, %v3811
    %v4680 = vpack.c.b16 %v3819, %v3812
    %v4681 = vpack.c.b16 %v3827, %v3820
    %v4682 = vpack.c.b16 %v3828, %v3821
    %v4683 = vpack.c.b16 %v3829, %v3822
    %v4684 = vpack.c.b16 %v3830, %v3823
    %v4685 = vpack.c.b16 %v3831, %v3824
    %v4686 = vpack.c.b16 %v3832, %v3825
    %v4687 = vpack.c.b16 %v3833, %v3826
    %v4688 = vpack.c.b16 %v3841, %v3834
    %v4689 = vpack.c.b16 %v3842, %v3835
    %v4690 = vpack.c.b16 %v3843, %v3836
    %v4691 = vpack.c.b16 %v3844, %v3837
    %v4692 = vpack.c.b16 %v3845, %v3838
    %v4693 = vpack.c.b16 %v3846, %v3839
    %v4694 = vpack.c.b16 %v3847, %v3840
    %v4695 = vpack.c.b16 %v3855, %v3848
    %v4696 = vpack.c.b16 %v3856, %v3849
    %v4697 = vpack.c.b16 %v3857, %v3850
    %v4698 = vpack.c.b16 %v3858, %v3851
    %v4699 = vpack.c.b16 %v3859, %v3852
    %v4700 = vpack.c.b16 %v3860, %v3853
    %v4701 = vpack.c.b16 %v3861, %v3854
    %v4702 = vpack.c.b16 %v3869, %v3862
    %v4703 = vpack.c.b16 %v3870, %v3863
    %v4704 = vpack.c.b16 %v3871, %v3864
    %v4705 = vpack.c.b16 %v3872, %v3865
    %v4706 = vpack.c.b16 %v3873, %v3866
    %v4707 = vpack.c.b16 %v3874, %v3867
    %v4708 = vpack.c.b16 %v3875, %v3868
    %v4709 = vpack.c.b16 %v3883, %v3876
    %v4710 = vpack.c.b16 %v3884, %v3877
    %v4711 = vpack.c.b16 %v3885, %v3878
    %v4712 = vpack.c.b16 %v3886, %v3879
    %v4713 = vpack.c.b16 %v3887, %v3880
    %v4714 = vpack.c.b16 %v3888, %v3881
    %v4715 = vpack.c.b16 %v3889, %v3882
    %v4716 = vpack.c.b16 %v3897, %v3890
    %v4717 = vpack.c.b16 %v3898, %v3891
    %v4718 = vpack.c.b16 %v3899, %v3892
    %v4719 = vpack.c.b16 %v3900, %v3893
    %v4720 = vpack.c.b16 %v3901, %v3894
    %v4721 = vpack.c.b16 %v3902, %v3895
    %v4722 = vpack.c.b16 %v3903, %v3896
    %v4723 = vpack.c.b16 %v3911, %v3904
    %v4724 = vpack.c.b16 %v3912, %v3905
    %v4725 = vpack.c.b16 %v3913, %v3906
    %v4726 = vpack.c.b16 %v3914, %v3907
    %v4727 = vpack.c.b16 %v3915, %v3908
    %v4728 = vpack.c.b16 %v3916, %v3909
    %v4729 = vpack.c.b16 %v3917, %v3910
    %v4730 = vpack.c.b16 %v3925, %v3918
    %v4731 = vpack.c.b16 %v3926, %v3919
    %v4732 = vpack.c.b16 %v3927, %v3920
    %v4733 = vpack.c.b16 %v3928, %v3921
    %v4734 = vpack.c.b16 %v3929, %v3922
    %v4735 = vpack.c.b16 %v3930, %v3923
    %v4736 = vpack.c.b16 %v3931, %v3924
    %v4737 = vpack.c.b16 %v3939, %v3932
    %v4738 = vpack.c.b16 %v3940, %v3933
    %v4739 = vpack.c.b16 %v3941, %v3934
    %v4740 = vpack.c.b16 %v3942, %v3935
    %v4741 = vpack.c.b16 %v3943, %v3936
    %v4742 = vpack.c.b16 %v3944, %v3937
    %v4743 = vpack.c.b16 %v3945, %v3938
    %v4744 = vpack.c.b16 %v3953, %v3946
    %v4745 = vpack.c.b16 %v3954, %v3947
    %v4746 = vpack.c.b16 %v3955, %v3948
    %v4747 = vpack.c.b16 %v3956, %v3949
    %v4748 = vpack.c.b16 %v3957, %v3950
    %v4749 = vpack.c.b16 %v3958, %v3951
    %v4750 = vpack.c.b16 %v3959, %v3952
    %v4751 = vpack.c.b16 %v3967, %v3960
    %v4752 = vpack.c.b16 %v3968, %v3961
    %v4753 = vpack.c.b16 %v3969, %v3962
    %v4754 = vpack.c.b16 %v3970, %v3963
    %v4755 = vpack.c.b16 %v3971, %v3964
    %v4756 = vpack.c.b16 %v3972, %v3965
    %v4757 = vpack.c.b16 %v3973, %v3966
    %v4758 = vpack.c.b16 %v3981, %v3974
    %v4759 = vpack.c.b16 %v3982, %v3975
    %v4760 = vpack.c.b16 %v3983, %v3976
    %v4761 = vpack.c.b16 %v3984, %v3977
    %v4762 = vpack.c.b16 %v3985, %v3978
    %v4763 = vpack.c.b16 %v3986, %v3979
    %v4764 = vpack.c.b16 %v3987, %v3980
    %v4765 = vpack.c.b16 %v3995, %v3988
    %v4766 = vpack.c.b16 %v3996, %v3989
    %v4767 = vpack.c.b16 %v3997, %v3990
    %v4768 = vpack.c.b16 %v3998, %v3991
    %v4769 = vpack.c.b16 %v3999, %v3992
    %v4770 = vpack.c.b16 %v4000, %v3993
    %v4771 = vpack.c.b16 %v4001, %v3994
    %v4772 = vpack.c.b16 %v4009, %v4002
    %v4773 = vpack.c.b16 %v4010, %v4003
    %v4774 = vpack.c.b16 %v4011, %v4004
    %v4775 = vpack.c.b16 %v4012, %v4005
    %v4776 = vpack.c.b16 %v4013, %v4006
    %v4777 = vpack.c.b16 %v4014, %v4007
    %v4778 = vpack.c.b16 %v4015, %v4008
    %v4779 = vpack.c.b16 %v4023, %v4016
    %v4780 = vpack.c.b16 %v4024, %v4017
    %v4781 = vpack.c.b16 %v4025, %v4018
    %v4782 = vpack.c.b16 %v4026, %v4019
    %v4783 = vpack.c.b16 %v4027, %v4020
    %v4784 = vpack.c.b16 %v4028, %v4021
    %v4785 = vpack.c.b16 %v4029, %v4022
    %v4786 = vpack.c.b16 %v4037, %v4030
    %v4787 = vpack.c.b16 %v4038, %v4031
    %v4788 = vpack.c.b16 %v4039, %v4032
    %v4789 = vpack.c.b16 %v4040, %v4033
    %v4790 = vpack.c.b16 %v4041, %v4034
    %v4791 = vpack.c.b16 %v4042, %v4035
    %v4792 = vpack.c.b16 %v4043, %v4036
    %v4793 = vpack.c.b16 %v4051, %v4044
    %v4794 = vpack.c.b16 %v4052, %v4045
    %v4795 = vpack.c.b16 %v4053, %v4046
    %v4796 = vpack.c.b16 %v4054, %v4047
    %v4797 = vpack.c.b16 %v4055, %v4048
    %v4798 = vpack.c.b16 %v4056, %v4049
    %v4799 = vpack.c.b16 %v4057, %v4050
    %v4800 = vpack.c.b16 %v4065, %v4058
    %v4801 = vpack.c.b16 %v4066, %v4059
    %v4802 = vpack.c.b16 %v4067, %v4060
    %v4803 = vpack.c.b16 %v4068, %v4061
    %v4804 = vpack.c.b16 %v4069, %v4062
    %v4805 = vpack.c.b16 %v4070, %v4063
    %v4806 = vpack.c.b16 %v4071, %v4064
    %v4807 = vpack.c.b16 %v4079, %v4072
    %v4808 = vpack.c.b16 %v4080, %v4073
    %v4809 = vpack.c.b16 %v4081, %v4074
    %v4810 = vpack.c.b16 %v4082, %v4075
    %v4811 = vpack.c.b16 %v4083, %v4076
    %v4812 = vpack.c.b16 %v4084, %v4077
    %v4813 = vpack.c.b16 %v4085, %v4078
    %v4814 = vpack.c.b16 %v4093, %v4086
    %v4815 = vpack.c.b16 %v4094, %v4087
    %v4816 = vpack.c.b16 %v4095, %v4088
    %v4817 = vpack.c.b16 %v4096, %v4089
    %v4818 = vpack.c.b16 %v4097, %v4090
    %v4819 = vpack.c.b16 %v4098, %v4091
    %v4820 = vpack.c.b16 %v4099, %v4092
    %v4821 = vpack.c.b16 %v4107, %v4100
    %v4822 = vpack.c.b16 %v4108, %v4101
    %v4823 = vpack.c.b16 %v4109, %v4102
    %v4824 = vpack.c.b16 %v4110, %v4103
    %v4825 = vpack.c.b16 %v4111, %v4104
    %v4826 = vpack.c.b16 %v4112, %v4105
    %v4827 = vpack.c.b16 %v4113, %v4106
    %v4828 = vpack.c.b16 %v4121, %v4114
    %v4829 = vpack.c.b16 %v4122, %v4115
    %v4830 = vpack.c.b16 %v4123, %v4116
    %v4831 = vpack.c.b16 %v4124, %v4117
    %v4832 = vpack.c.b16 %v4125, %v4118
    %v4833 = vpack.c.b16 %v4126, %v4119
    %v4834 = vpack.c.b16 %v4127, %v4120
    %v4835 = vpack.c.b16 %v4135, %v4128
    %v4836 = vpack.c.b16 %v4136, %v4129
    %v4837 = vpack.c.b16 %v4137, %v4130
    %v4838 = vpack.c.b16 %v4138, %v4131
    %v4839 = vpack.c.b16 %v4139, %v4132
    %v4840 = vpack.c.b16 %v4140, %v4133
    %v4841 = vpack.c.b16 %v4141, %v4134
    %v4842 = vpack.c.b16 %v4149, %v4142
    %v4843 = vpack.c.b16 %v4150, %v4143
    %v4844 = vpack.c.b16 %v4151, %v4144
    %v4845 = vpack.c.b16 %v4152, %v4145
    %v4846 = vpack.c.b16 %v4153, %v4146
    %v4847 = vpack.c.b16 %v4154, %v4147
    %v4848 = vpack.c.b16 %v4155, %v4148
    %v4849 = vpack.c.b16 %v4163, %v4156
    %v4850 = vpack.c.b16 %v4164, %v4157
    %v4851 = vpack.c.b16 %v4165, %v4158
    %v4852 = vpack.c.b16 %v4166, %v4159
    %v4853 = vpack.c.b16 %v4167, %v4160
    %v4854 = vpack.c.b16 %v4168, %v4161
    %v4855 = vpack.c.b16 %v4169, %v4162
    %v4856 = vpack.c.b16 %v4177, %v4170
    %v4857 = vpack.c.b16 %v4178, %v4171
    %v4858 = vpack.c.b16 %v4179, %v4172
    %v4859 = vpack.c.b16 %v4180, %v4173
    %v4860 = vpack.c.b16 %v4181, %v4174
    %v4861 = vpack.c.b16 %v4182, %v4175
    %v4862 = vpack.c.b16 %v4183, %v4176
    %v4863 = vpack.c.b16 %v4191, %v4184
    %v4864 = vpack.c.b16 %v4192, %v4185
    %v4865 = vpack.c.b16 %v4193, %v4186
    %v4866 = vpack.c.b16 %v4194, %v4187
    %v4867 = vpack.c.b16 %v4195, %v4188
    %v4868 = vpack.c.b16 %v4196, %v4189
    %v4869 = vpack.c.b16 %v4197, %v4190
    %v4870 = vpack.c.b16 %v4205, %v4198
    %v4871 = vpack.c.b16 %v4206, %v4199
    %v4872 = vpack.c.b16 %v4207, %v4200
    %v4873 = vpack.c.b16 %v4208, %v4201
    %v4874 = vpack.c.b16 %v4209, %v4202
    %v4875 = vpack.c.b16 %v4210, %v4203
    %v4876 = vpack.c.b16 %v4211, %v4204
    %v4877 = vpack.c.b16 %v4219, %v4212
    %v4878 = vpack.c.b16 %v4220, %v4213
    %v4879 = vpack.c.b16 %v4221, %v4214
    %v4880 = vpack.c.b16 %v4222, %v4215
    %v4881 = vpack.c.b16 %v4223, %v4216
    %v4882 = vpack.c.b16 %v4224, %v4217
    %v4883 = vpack.c.b16 %v4225, %v4218
    %v4884 = vpack.c.b16 %v4233, %v4226
    %v4885 = vpack.c.b16 %v4234, %v4227
    %v4886 = vpack.c.b16 %v4235, %v4228
    %v4887 = vpack.c.b16 %v4236, %v4229
    %v4888 = vpack.c.b16 %v4237, %v4230
    %v4889 = vpack.c.b16 %v4238, %v4231
    %v4890 = vpack.c.b16 %v4239, %v4232
    %v4891 = vpack.c.b16 %v4247, %v4240
    %v4892 = vpack.c.b16 %v4248, %v4241
    %v4893 = vpack.c.b16 %v4249, %v4242
    %v4894 = vpack.c.b16 %v4250, %v4243
    %v4895 = vpack.c.b16 %v4251, %v4244
    %v4896 = vpack.c.b16 %v4252, %v4245
    %v4897 = vpack.c.b16 %v4253, %v4246
    %v4898 = vpack.c.b16 %v4261, %v4254
    %v4899 = vpack.c.b16 %v4262, %v4255
    %v4900 = vpack.c.b16 %v4263, %v4256
    %v4901 = vpack.c.b16 %v4264, %v4257
    %v4902 = vpack.c.b16 %v4265, %v4258
    %v4903 = vpack.c.b16 %v4266, %v4259
    %v4904 = vpack.c.b16 %v4267, %v4260
    %v4905 = vpack.c.b16 %v4275, %v4268
    %v4906 = vpack.c.b16 %v4276, %v4269
    %v4907 = vpack.c.b16 %v4277, %v4270
    %v4908 = vpack.c.b16 %v4278, %v4271
    %v4909 = vpack.c.b16 %v4279, %v4272
    %v4910 = vpack.c.b16 %v4280, %v4273
    %v4911 = vpack.c.b16 %v4281, %v4274
    %v4912 = vpack.c.b16 %v4289, %v4282
    %v4913 = vpack.c.b16 %v4290, %v4283
    %v4914 = vpack.c.b16 %v4291, %v4284
    %v4915 = vpack.c.b16 %v4292, %v4285
    %v4916 = vpack.c.b16 %v4293, %v4286
    %v4917 = vpack.c.b16 %v4294, %v4287
    %v4918 = vpack.c.b16 %v4295, %v4288
    %v4919 = vpack.c.b16 %v4303, %v4296
    %v4920 = vpack.c.b16 %v4304, %v4297
    %v4921 = vpack.c.b16 %v4305, %v4298
    %v4922 = vpack.c.b16 %v4306, %v4299
    %v4923 = vpack.c.b16 %v4307, %v4300
    %v4924 = vpack.c.b16 %v4308, %v4301
    %v4925 = vpack.c.b16 %v4309, %v4302
    %v4926 = vpack.c.b16 %v4317, %v4310
    %v4927 = vpack.c.b16 %v4318, %v4311
    %v4928 = vpack.c.b16 %v4319, %v4312
    %v4929 = vpack.c.b16 %v4320, %v4313
    %v4930 = vpack.c.b16 %v4321, %v4314
    %v4931 = vpack.c.b16 %v4322, %v4315
    %v4932 = vpack.c.b16 %v4323, %v4316
    %v4933 = vpack.c.b16 %v4331, %v4324
    %v4934 = vpack.c.b16 %v4332, %v4325
    %v4935 = vpack.c.b16 %v4333, %v4326
    %v4936 = vpack.c.b16 %v4334, %v4327
    %v4937 = vpack.c.b16 %v4335, %v4328
    %v4938 = vpack.c.b16 %v4336, %v4329
    %v4939 = vpack.c.b16 %v4337, %v4330
    %v4940 = vpack.c.b16 %v4345, %v4338
    %v4941 = vpack.c.b16 %v4346, %v4339
    %v4942 = vpack.c.b16 %v4347, %v4340
    %v4943 = vpack.c.b16 %v4348, %v4341
    %v4944 = vpack.c.b16 %v4349, %v4342
    %v4945 = vpack.c.b16 %v4350, %v4343
    %v4946 = vpack.c.b16 %v4351, %v4344
    %v4947 = vpack.c.b16 %v4359, %v4352
    %v4948 = vpack.c.b16 %v4360, %v4353
    %v4949 = vpack.c.b16 %v4361, %v4354
    %v4950 = vpack.c.b16 %v4362, %v4355
    %v4951 = vpack.c.b16 %v4363, %v4356
    %v4952 = vpack.c.b16 %v4364, %v4357
    %v4953 = vpack.c.b16 %v4365, %v4358
    %v4954 = vpack.c.b16 %v4373, %v4366
    %v4955 = vpack.c.b16 %v4374, %v4367
    %v4956 = vpack.c.b16 %v4375, %v4368
    %v4957 = vpack.c.b16 %v4376, %v4369
    %v4958 = vpack.c.b16 %v4377, %v4370
    %v4959 = vpack.c.b16 %v4378, %v4371
    %v4960 = vpack.c.b16 %v4379, %v4372
    %v4961 = vpack.c.b16 %v4387, %v4380
    %v4962 = vpack.c.b16 %v4388, %v4381
    %v4963 = vpack.c.b16 %v4389, %v4382
    %v4964 = vpack.c.b16 %v4390, %v4383
    %v4965 = vpack.c.b16 %v4391, %v4384
    %v4966 = vpack.c.b16 %v4392, %v4385
    %v4967 = vpack.c.b16 %v4393, %v4386
    %v4968 = vpack.c.b16 %v4401, %v4394
    %v4969 = vpack.c.b16 %v4402, %v4395
    %v4970 = vpack.c.b16 %v4403, %v4396
    %v4971 = vpack.c.b16 %v4404, %v4397
    %v4972 = vpack.c.b16 %v4405, %v4398
    %v4973 = vpack.c.b16 %v4406, %v4399
    %v4974 = vpack.c.b16 %v4407, %v4400
    %v4975 = vpack.c.b16 %v4415, %v4408
    %v4976 = vpack.c.b16 %v4416, %v4409
    %v4977 = vpack.c.b16 %v4417, %v4410
    %v4978 = vpack.c.b16 %v4418, %v4411
    %v4979 = vpack.c.b16 %v4419, %v4412
    %v4980 = vpack.c.b16 %v4420, %v4413
    %v4981 = vpack.c.b16 %v4421, %v4414
    %v4982 = vpack.c.b16 %v4429, %v4422
    %v4983 = vpack.c.b16 %v4430, %v4423
    %v4984 = vpack.c.b16 %v4431, %v4424
    %v4985 = vpack.c.b16 %v4432, %v4425
    %v4986 = vpack.c.b16 %v4433, %v4426
    %v4987 = vpack.c.b16 %v4434, %v4427
    %v4988 = vpack.c.b16 %v4435, %v4428
    %v4989 = vpack.c.b16 %v4443, %v4436
    %v4990 = vpack.c.b16 %v4444, %v4437
    %v4991 = vpack.c.b16 %v4445, %v4438
    %v4992 = vpack.c.b16 %v4446, %v4439
    %v4993 = vpack.c.b16 %v4447, %v4440
    %v4994 = vpack.c.b16 %v4448, %v4441
    %v4995 = vpack.c.b16 %v4449, %v4442
    %v4996 = vpack.c.b16 %v4457, %v4450
    %v4997 = vpack.c.b16 %v4458, %v4451
    %v4998 = vpack.c.b16 %v4459, %v4452
    %v4999 = vpack.c.b16 %v4460, %v4453
    %v5000 = vpack.c.b16 %v4461, %v4454
    %v5001 = vpack.c.b16 %v4462, %v4455
    %v5002 = vpack.c.b16 %v4463, %v4456
    %v5003 = vpack.c.b16 %v4471, %v4464
    %v5004 = vpack.c.b16 %v4472, %v4465
    %v5005 = vpack.c.b16 %v4473, %v4466
    %v5006 = vpack.c.b16 %v4474, %v4467
    %v5007 = vpack.c.b16 %v4475, %v4468
    %v5008 = vpack.c.b16 %v4476, %v4469
    %v5009 = vpack.c.b16 %v4477, %v4470
    %v5010 = vpack.c.b16 %v4485, %v4478
    %v5011 = vpack.c.b16 %v4486, %v4479
    %v5012 = vpack.c.b16 %v4487, %v4480
    %v5013 = vpack.c.b16 %v4488, %v4481
    %v5014 = vpack.c.b16 %v4489, %v4482
    %v5015 = vpack.c.b16 %v4490, %v4483
    %v5016 = vpack.c.b16 %v4491, %v4484
    %v5017 = vpack.c.b16 %v4499, %v4492
    %v5018 = vpack.c.b16 %v4500, %v4493
    %v5019 = vpack.c.b16 %v4501, %v4494
    %v5020 = vpack.c.b16 %v4502, %v4495
    %v5021 = vpack.c.b16 %v4503, %v4496
    %v5022 = vpack.c.b16 %v4504, %v4497
    %v5023 = vpack.c.b16 %v4505, %v4498
    %v5024 = vpack.c.b16 %v4513, %v4506
    %v5025 = vpack.c.b16 %v4514, %v4507
    %v5026 = vpack.c.b16 %v4515, %v4508
    %v5027 = vpack.c.b16 %v4516, %v4509
    %v5028 = vpack.c.b16 %v4517, %v4510
    %v5029 = vpack.c.b16 %v4518, %v4511
    %v5030 = vpack.c.b16 %v4519, %v4512
    %v5031 = vpack.c.b16 %v4527, %v4520
    %v5032 = vpack.c.b16 %v4528, %v4521
    %v5033 = vpack.c.b16 %v4529, %v4522
    %v5034 = vpack.c.b16 %v4530, %v4523
    %v5035 = vpack.c.b16 %v4531, %v4524
    %v5036 = vpack.c.b16 %v4532, %v4525
    %v5037 = vpack.c.b16 %v4533, %v4526
    %v5038 = vpack.c.b16 %v4541, %v4534
    %v5039 = vpack.c.b16 %v4542, %v4535
    %v5040 = vpack.c.b16 %v4543, %v4536
    %v5041 = vpack.c.b16 %v4544, %v4537
    %v5042 = vpack.c.b16 %v4545, %v4538
    %v5043 = vpack.c.b16 %v4546, %v4539
    %v5044 = vpack.c.b16 %v4547, %v4540
    %v5045 = vpack.c.b16 %v4555, %v4548
    %v5046 = vpack.c.b16 %v4556, %v4549
    %v5047 = vpack.c.b16 %v4557, %v4550
    %v5048 = vpack.c.b16 %v4558, %v4551
    %v5049 = vpack.c.b16 %v4559, %v4552
    %v5050 = vpack.c.b16 %v4560, %v4553
    %v5051 = vpack.c.b16 %v4561, %v4554
    %v5052 = vpack.c.b16 %v4569, %v4562
    %v5053 = vpack.c.b16 %v4570, %v4563
    %v5054 = vpack.c.b16 %v4571, %v4564
    %v5055 = vpack.c.b16 %v4572, %v4565
    %v5056 = vpack.c.b16 %v4573, %v4566
    %v5057 = vpack.c.b16 %v4574, %v4567
    %v5058 = vpack.c.b16 %v4575, %v4568
    %v5059 = vpack.c.b16 %v4583, %v4576
    %v5060 = vpack.c.b16 %v4584, %v4577
    %v5061 = vpack.c.b16 %v4585, %v4578
    %v5062 = vpack.c.b16 %v4586, %v4579
    %v5063 = vpack.c.b16 %v4587, %v4580
    %v5064 = vpack.c.b16 %v4588, %v4581
    %v5065 = vpack.c.b16 %v4589, %v4582
    %v5066 = vpack.c.b16 %v4597, %v4590
    %v5067 = vpack.c.b16 %v4598, %v4591
    %v5068 = vpack.c.b16 %v4599, %v4592
    %v5069 = vpack.c.b16 %v4600, %v4593
    %v5070 = vpack.c.b16 %v4601, %v4594
    %v5071 = vpack.c.b16 %v4602, %v4595
    %v5072 = vpack.c.b16 %v4603, %v4596
    %v5073 = vpack.c.b16 %v4611, %v4604
    %v5074 = vpack.c.b16 %v4612, %v4605
    %v5075 = vpack.c.b16 %v4613, %v4606
    %v5076 = vpack.c.b16 %v4614, %v4607
    %v5077 = vpack.c.b16 %v4615, %v4608
    %v5078 = vpack.c.b16 %v4616, %v4609
    %v5079 = vpack.c.b16 %v4617, %v4610
    %v5080 = vpack.c.b16 %v4625, %v4618
    %v5081 = vpack.c.b16 %v4626, %v4619
    %v5082 = vpack.c.b16 %v4627, %v4620
    %v5083 = vpack.c.b16 %v4628, %v4621
    %v5084 = vpack.c.b16 %v4629, %v4622
    %v5085 = vpack.c.b16 %v4630, %v4623
    %v5086 = vpack.c.b16 %v4631, %v4624
    %v5087 = vpack.c.b16 %v4639, %v4632
    %v5088 = vpack.c.b16 %v4640, %v4633
    %v5089 = vpack.c.b16 %v4641, %v4634
    %v5090 = vpack.c.b16 %v4642, %v4635
    %v5091 = vpack.c.b16 %v4643, %v4636
    %v5092 = vpack.c.b16 %v4644, %v4637
    %v5093 = vpack.c.b16 %v4645, %v4638
    %5542 = vmatprep.subr.bf16.mxu0 %v4647
    %5543 = vmatpush1.bf16.msra.mxu0 %v4646
    %5544 = vmatprep.subr.bf16.mxu0 %v4654
    %5545 = vmatpush1.bf16.msra.mxu0 %v4653
    %5546 = vmatprep.subr.bf16.mxu0 %v4661
    %5547 = vmatpush1.bf16.msra.mxu0 %v4660
    %5548 = vmatprep.subr.bf16.mxu0 %v4668
    %5549 = vmatpush1.bf16.msra.mxu0 %v4667
    %5550 = vmatprep.subr.bf16.mxu0 %v4675
    %5551 = vmatpush1.bf16.msra.mxu0 %v4674
    %5552 = vmatprep.subr.bf16.mxu0 %v4682
    %5553 = vmatpush1.bf16.msra.mxu0 %v4681
    %5554 = vmatprep.subr.bf16.mxu0 %v4689
    %5555 = vmatpush1.bf16.msra.mxu0 %v4688
    %5556 = vmatprep.subr.bf16.mxu0 %v4696
    %5557 = vmatpush1.bf16.msra.mxu0 %v4695
    %5558 = vmatprep.subr.bf16.mxu0 %v4703
    %5559 = vmatpush1.bf16.msra.mxu0 %v4702
    %5560 = vmatprep.subr.bf16.mxu0 %v4710
    %5561 = vmatpush1.bf16.msra.mxu0 %v4709
    %5562 = vmatprep.subr.bf16.mxu0 %v4717
    %5563 = vmatpush1.bf16.msra.mxu0 %v4716
    %5564 = vmatprep.subr.bf16.mxu0 %v4724
    %5565 = vmatpush1.bf16.msra.mxu0 %v4723
    %5566 = vmatprep.subr.bf16.mxu0 %v4731
    %5567 = vmatpush1.bf16.msra.mxu0 %v4730
    %5568 = vmatprep.subr.bf16.mxu0 %v4738
    %5569 = vmatpush1.bf16.msra.mxu0 %v4737
    %5570 = vmatprep.subr.bf16.mxu0 %v4745
    %5571 = vmatpush1.bf16.msra.mxu0 %v4744
    %5572 = vmatprep.subr.bf16.mxu0 %v4752
    %5573 = vmatpush1.bf16.msra.mxu0 %v4751
    %5574 = vmatprep.mubr.bf16.mxu0 %v2682
    %5575 = vmatmul.mubr.bf16.gmra.mrb[0].mxu0 %v2681
    %v5576 = vpop.f32.mrb[0].mxu0
    %v5577 = vadd.f32 %v3206, %v5576
    %v5578 = vpop.f32.mrb[0].mxu0
    %v5579 = vadd.f32 %v3210, %v5578
    %v5580 = vpop.f32.mrb[0].mxu0
    %v5581 = vpop.f32.mrb[0].mxu0
    %5582 = vdwg.mxu0
    %5583 = vmatprep.subr.bf16.mxu0 %v4759
    %5584 = vmatpush1.bf16.msra.mxu0 %v4758
    %5585 = vmatprep.subr.bf16.mxu0 %v4766
    %5586 = vmatpush1.bf16.msra.mxu0 %v4765
    %5587 = vmatprep.subr.bf16.mxu0 %v4773
    %5588 = vmatpush1.bf16.msra.mxu0 %v4772
    %5589 = vmatprep.subr.bf16.mxu0 %v4780
    %5590 = vmatpush1.bf16.msra.mxu0 %v4779
    %5591 = vmatprep.subr.bf16.mxu0 %v4787
    %5592 = vmatpush1.bf16.msra.mxu0 %v4786
    %5593 = vmatprep.subr.bf16.mxu0 %v4794
    %5594 = vmatpush1.bf16.msra.mxu0 %v4793
    %5595 = vmatprep.subr.bf16.mxu0 %v4801
    %5596 = vmatpush1.bf16.msra.mxu0 %v4800
    %5597 = vmatprep.subr.bf16.mxu0 %v4808
    %5598 = vmatpush1.bf16.msra.mxu0 %v4807
    %5599 = vmatprep.subr.bf16.mxu0 %v4815
    %5600 = vmatpush1.bf16.msra.mxu0 %v4814
    %5601 = vmatprep.subr.bf16.mxu0 %v4822
    %5602 = vmatpush1.bf16.msra.mxu0 %v4821
    %5603 = vmatprep.subr.bf16.mxu0 %v4829
    %5604 = vmatpush1.bf16.msra.mxu0 %v4828
    %5605 = vmatprep.subr.bf16.mxu0 %v4836
    %5606 = vmatpush1.bf16.msra.mxu0 %v4835
    %5607 = vmatprep.subr.bf16.mxu0 %v4843
    %5608 = vmatpush1.bf16.msra.mxu0 %v4842
    %5609 = vmatprep.subr.bf16.mxu0 %v4850
    %5610 = vmatpush1.bf16.msra.mxu0 %v4849
    %5611 = vmatprep.subr.bf16.mxu0 %v4857
    %5612 = vmatpush1.bf16.msra.mxu0 %v4856
    %5613 = vmatprep.subr.bf16.mxu0 %v4864
    %5614 = vmatpush1.bf16.msra.mxu0 %v4863
    %5615 = vmatprep.mubr.bf16.mxu0 %v2684
    %5616 = vmatmul.mubr.bf16.gmra.mrb[0].mxu0 %v2683
    %v5617 = vpop.f32.mrb[0].mxu0
    %v5618 = vadd.f32 %v5577, %v5617
    %v5619 = vpop.f32.mrb[0].mxu0
    %v5620 = vadd.f32 %v5579, %v5619
    %v5621 = vpop.f32.mrb[0].mxu0
    %v5622 = vpop.f32.mrb[0].mxu0
    %5623 = vdwg.mxu0
    %5624 = vmatprep.subr.bf16.mxu0 %v4871
    %5625 = vmatpush1.bf16.msra.mxu0 %v4870
    %5626 = vmatprep.subr.bf16.mxu0 %v4878
    %5627 = vmatpush1.bf16.msra.mxu0 %v4877
    %5628 = vmatprep.subr.bf16.mxu0 %v4885
    %5629 = vmatpush1.bf16.msra.mxu0 %v4884
    %5630 = vmatprep.subr.bf16.mxu0 %v4892
    %5631 = vmatpush1.bf16.msra.mxu0 %v4891
    %5632 = vmatprep.subr.bf16.mxu0 %v4899
    %5633 = vmatpush1.bf16.msra.mxu0 %v4898
    %5634 = vmatprep.subr.bf16.mxu0 %v4906
    %5635 = vmatpush1.bf16.msra.mxu0 %v4905
    %5636 = vmatprep.subr.bf16.mxu0 %v4913
    %5637 = vmatpush1.bf16.msra.mxu0 %v4912
    %5638 = vmatprep.subr.bf16.mxu0 %v4920
    %5639 = vmatpush1.bf16.msra.mxu0 %v4919
    %5640 = vmatprep.subr.bf16.mxu0 %v4927
    %5641 = vmatpush1.bf16.msra.mxu0 %v4926
    %5642 = vmatprep.subr.bf16.mxu0 %v4934
    %5643 = vmatpush1.bf16.msra.mxu0 %v4933
    %5644 = vmatprep.subr.bf16.mxu0 %v4941
    %5645 = vmatpush1.bf16.msra.mxu0 %v4940
    %5646 = vmatprep.subr.bf16.mxu0 %v4948
    %5647 = vmatpush1.bf16.msra.mxu0 %v4947
    %5648 = vmatprep.subr.bf16.mxu0 %v4955
    %5649 = vmatpush1.bf16.msra.mxu0 %v4954
    %5650 = vmatprep.subr.bf16.mxu0 %v4962
    %5651 = vmatpush1.bf16.msra.mxu0 %v4961
    %5652 = vmatprep.subr.bf16.mxu0 %v4969
    %5653 = vmatpush1.bf16.msra.mxu0 %v4968
    %5654 = vmatprep.subr.bf16.mxu0 %v4976
    %5655 = vmatpush1.bf16.msra.mxu0 %v4975
    %5656 = vmatprep.mubr.bf16.mxu0 %v2686
    %5657 = vmatmul.mubr.bf16.gmra.mrb[0].mxu0 %v2685
    %v5658 = vpop.f32.mrb[0].mxu0
    %v5659 = vadd.f32 %v5618, %v5658
    %v5660 = vpop.f32.mrb[0].mxu0
    %v5661 = vadd.f32 %v5620, %v5660
    %v5662 = vpop.f32.mrb[0].mxu0
    %v5663 = vpop.f32.mrb[0].mxu0
    %5664 = vdwg.mxu0
    %5665 = vmatprep.subr.bf16.mxu0 %v4983
    %5666 = vmatpush1.bf16.msra.mxu0 %v4982
    %5667 = vmatprep.subr.bf16.mxu0 %v4990
    %5668 = vmatpush1.bf16.msra.mxu0 %v4989
    %5669 = vmatprep.subr.bf16.mxu0 %v4997
    %5670 = vmatpush1.bf16.msra.mxu0 %v4996
    %5671 = vmatprep.subr.bf16.mxu0 %v5004
    %5672 = vmatpush1.bf16.msra.mxu0 %v5003
    %5673 = vmatprep.subr.bf16.mxu0 %v5011
    %5674 = vmatpush1.bf16.msra.mxu0 %v5010
    %5675 = vmatprep.subr.bf16.mxu0 %v5018
    %5676 = vmatpush1.bf16.msra.mxu0 %v5017
    %5677 = vmatprep.subr.bf16.mxu0 %v5025
    %5678 = vmatpush1.bf16.msra.mxu0 %v5024
    %5679 = vmatprep.subr.bf16.mxu0 %v5032
    %5680 = vmatpush1.bf16.msra.mxu0 %v5031
    %5681 = vmatprep.subr.bf16.mxu0 %v5039
    %5682 = vmatpush1.bf16.msra.mxu0 %v5038
    %5683 = vmatprep.subr.bf16.mxu0 %v5046
    %5684 = vmatpush1.bf16.msra.mxu0 %v5045
    %5685 = vmatprep.subr.bf16.mxu0 %v5053
    %5686 = vmatpush1.bf16.msra.mxu0 %v5052
    %5687 = vmatprep.subr.bf16.mxu0 %v5060
    %5688 = vmatpush1.bf16.msra.mxu0 %v5059
    %5689 = vmatprep.subr.bf16.mxu0 %v5067
    %5690 = vmatpush1.bf16.msra.mxu0 %v5066
    %5691 = vmatprep.subr.bf16.mxu0 %v5074
    %5692 = vmatpush1.bf16.msra.mxu0 %v5073
    %5693 = vmatprep.subr.bf16.mxu0 %v5081
    %5694 = vmatpush1.bf16.msra.mxu0 %v5080
    %5695 = vmatprep.subr.bf16.mxu0 %v5088
    %5696 = vmatpush1.bf16.msra.mxu0 %v5087
    %5697 = vmatprep.mubr.bf16.mxu0 %v2688
    %5698 = vmatmul.mubr.bf16.gmra.mrb[0].mxu0 %v2687
    %v5699 = vpop.f32.mrb[0].mxu0
    %v5700 = vadd.f32 %v5659, %v5699
    %v5701 = vpop.f32.mrb[0].mxu0
    %v5702 = vadd.f32 %v5661, %v5701
    %v5703 = vpop.f32.mrb[0].mxu0
    %v5704 = vpop.f32.mrb[0].mxu0
    %5705 = vdwg.mxu0
    %5706 = vmatprep.subr.bf16.mxu0 %v4649
    %5707 = vmatpush1.bf16.msra.mxu0 %v4648
    %5708 = vmatprep.subr.bf16.mxu0 %v4656
    %5709 = vmatpush1.bf16.msra.mxu0 %v4655
    %5710 = vmatprep.subr.bf16.mxu0 %v4663
    %5711 = vmatpush1.bf16.msra.mxu0 %v4662
    %5712 = vmatprep.subr.bf16.mxu0 %v4670
    %5713 = vmatpush1.bf16.msra.mxu0 %v4669
    %5714 = vmatprep.subr.bf16.mxu0 %v4677
    %5715 = vmatpush1.bf16.msra.mxu0 %v4676
    %5716 = vmatprep.subr.bf16.mxu0 %v4684
    %5717 = vmatpush1.bf16.msra.mxu0 %v4683
    %5718 = vmatprep.subr.bf16.mxu0 %v4691
    %5719 = vmatpush1.bf16.msra.mxu0 %v4690
    %5720 = vmatprep.subr.bf16.mxu0 %v4698
    %5721 = vmatpush1.bf16.msra.mxu0 %v4697
    %5722 = vmatprep.subr.bf16.mxu0 %v4705
    %5723 = vmatpush1.bf16.msra.mxu0 %v4704
    %5724 = vmatprep.subr.bf16.mxu0 %v4712
    %5725 = vmatpush1.bf16.msra.mxu0 %v4711
    %5726 = vmatprep.subr.bf16.mxu0 %v4719
    %5727 = vmatpush1.bf16.msra.mxu0 %v4718
    %5728 = vmatprep.subr.bf16.mxu0 %v4726
    %5729 = vmatpush1.bf16.msra.mxu0 %v4725
    %5730 = vmatprep.subr.bf16.mxu0 %v4733
    %5731 = vmatpush1.bf16.msra.mxu0 %v4732
    %5732 = vmatprep.subr.bf16.mxu0 %v4740
    %5733 = vmatpush1.bf16.msra.mxu0 %v4739
    %5734 = vmatprep.subr.bf16.mxu0 %v4747
    %5735 = vmatpush1.bf16.msra.mxu0 %v4746
    %5736 = vmatprep.subr.bf16.mxu0 %v4754
    %5737 = vmatpush1.bf16.msra.mxu0 %v4753
    %5738 = vmatprep.mubr.bf16.mxu0 %v2682
    %5739 = vmatmul.mubr.bf16.gmra.mrb[0].mxu0 %v2681
    %v5740 = vpop.f32.mrb[0].mxu0
    %v5741 = vadd.f32 %v3214, %v5740
    %v5742 = vpop.f32.mrb[0].mxu0
    %v5743 = vadd.f32 %v3218, %v5742
    %v5744 = vpop.f32.mrb[0].mxu0
    %v5745 = vpop.f32.mrb[0].mxu0
    %5746 = vdwg.mxu0
    %5747 = vmatprep.subr.bf16.mxu0 %v4761
    %5748 = vmatpush1.bf16.msra.mxu0 %v4760
    %5749 = vmatprep.subr.bf16.mxu0 %v4768
    %5750 = vmatpush1.bf16.msra.mxu0 %v4767
    %5751 = vmatprep.subr.bf16.mxu0 %v4775
    %5752 = vmatpush1.bf16.msra.mxu0 %v4774
    %5753 = vmatprep.subr.bf16.mxu0 %v4782
    %5754 = vmatpush1.bf16.msra.mxu0 %v4781
    %5755 = vmatprep.subr.bf16.mxu0 %v4789
    %5756 = vmatpush1.bf16.msra.mxu0 %v4788
    %5757 = vmatprep.subr.bf16.mxu0 %v4796
    %5758 = vmatpush1.bf16.msra.mxu0 %v4795
    %5759 = vmatprep.subr.bf16.mxu0 %v4803
    %5760 = vmatpush1.bf16.msra.mxu0 %v4802
    %5761 = vmatprep.subr.bf16.mxu0 %v4810
    %5762 = vmatpush1.bf16.msra.mxu0 %v4809
    %5763 = vmatprep.subr.bf16.mxu0 %v4817
    %5764 = vmatpush1.bf16.msra.mxu0 %v4816
    %5765 = vmatprep.subr.bf16.mxu0 %v4824
    %5766 = vmatpush1.bf16.msra.mxu0 %v4823
    %5767 = vmatprep.subr.bf16.mxu0 %v4831
    %5768 = vmatpush1.bf16.msra.mxu0 %v4830
    %5769 = vmatprep.subr.bf16.mxu0 %v4838
    %5770 = vmatpush1.bf16.msra.mxu0 %v4837
    %5771 = vmatprep.subr.bf16.mxu0 %v4845
    %5772 = vmatpush1.bf16.msra.mxu0 %v4844
    %5773 = vmatprep.subr.bf16.mxu0 %v4852
    %5774 = vmatpush1.bf16.msra.mxu0 %v4851
    %5775 = vmatprep.subr.bf16.mxu0 %v4859
    %5776 = vmatpush1.bf16.msra.mxu0 %v4858
    %5777 = vmatprep.subr.bf16.mxu0 %v4866
    %5778 = vmatpush1.bf16.msra.mxu0 %v4865
    %5779 = vmatprep.mubr.bf16.mxu0 %v2684
    %5780 = vmatmul.mubr.bf16.gmra.mrb[0].mxu0 %v2683
    %v5781 = vpop.f32.mrb[0].mxu0
    %v5782 = vadd.f32 %v5741, %v5781
    %v5783 = vpop.f32.mrb[0].mxu0
    %v5784 = vadd.f32 %v5743, %v5783
    %v5785 = vpop.f32.mrb[0].mxu0
    %v5786 = vpop.f32.mrb[0].mxu0
    %5787 = vdwg.mxu0
    %5788 = vmatprep.subr.bf16.mxu0 %v4873
    %5789 = vmatpush1.bf16.msra.mxu0 %v4872
    %5790 = vmatprep.subr.bf16.mxu0 %v4880
    %5791 = vmatpush1.bf16.msra.mxu0 %v4879
    %5792 = vmatprep.subr.bf16.mxu0 %v4887
    %5793 = vmatpush1.bf16.msra.mxu0 %v4886
    %5794 = vmatprep.subr.bf16.mxu0 %v4894
    %5795 = vmatpush1.bf16.msra.mxu0 %v4893
    %5796 = vmatprep.subr.bf16.mxu0 %v4901
    %5797 = vmatpush1.bf16.msra.mxu0 %v4900
    %5798 = vmatprep.subr.bf16.mxu0 %v4908
    %5799 = vmatpush1.bf16.msra.mxu0 %v4907
    %5800 = vmatprep.subr.bf16.mxu0 %v4915
    %5801 = vmatpush1.bf16.msra.mxu0 %v4914
    %5802 = vmatprep.subr.bf16.mxu0 %v4922
    %5803 = vmatpush1.bf16.msra.mxu0 %v4921
    %5804 = vmatprep.subr.bf16.mxu0 %v4929
    %5805 = vmatpush1.bf16.msra.mxu0 %v4928
    %5806 = vmatprep.subr.bf16.mxu0 %v4936
    %5807 = vmatpush1.bf16.msra.mxu0 %v4935
    %5808 = vmatprep.subr.bf16.mxu0 %v4943
    %5809 = vmatpush1.bf16.msra.mxu0 %v4942
    %5810 = vmatprep.subr.bf16.mxu0 %v4950
    %5811 = vmatpush1.bf16.msra.mxu0 %v4949
    %5812 = vmatprep.subr.bf16.mxu0 %v4957
    %5813 = vmatpush1.bf16.msra.mxu0 %v4956
    %5814 = vmatprep.subr.bf16.mxu0 %v4964
    %5815 = vmatpush1.bf16.msra.mxu0 %v4963
    %5816 = vmatprep.subr.bf16.mxu0 %v4971
    %5817 = vmatpush1.bf16.msra.mxu0 %v4970
    %5818 = vmatprep.subr.bf16.mxu0 %v4978
    %5819 = vmatpush1.bf16.msra.mxu0 %v4977
    %5820 = vmatprep.mubr.bf16.mxu0 %v2686
    %5821 = vmatmul.mubr.bf16.gmra.mrb[0].mxu0 %v2685
    %v5822 = vpop.f32.mrb[0].mxu0
    %v5823 = vadd.f32 %v5782, %v5822
    %v5824 = vpop.f32.mrb[0].mxu0
    %v5825 = vadd.f32 %v5784, %v5824
    %v5826 = vpop.f32.mrb[0].mxu0
    %v5827 = vpop.f32.mrb[0].mxu0
    %5828 = vdwg.mxu0
    %5829 = vmatprep.subr.bf16.mxu0 %v4985
    %5830 = vmatpush1.bf16.msra.mxu0 %v4984
    %5831 = vmatprep.subr.bf16.mxu0 %v4992
    %5832 = vmatpush1.bf16.msra.mxu0 %v4991
    %5833 = vmatprep.subr.bf16.mxu0 %v4999
    %5834 = vmatpush1.bf16.msra.mxu0 %v4998
    %5835 = vmatprep.subr.bf16.mxu0 %v5006
    %5836 = vmatpush1.bf16.msra.mxu0 %v5005
    %5837 = vmatprep.subr.bf16.mxu0 %v5013
    %5838 = vmatpush1.bf16.msra.mxu0 %v5012
    %5839 = vmatprep.subr.bf16.mxu0 %v5020
    %5840 = vmatpush1.bf16.msra.mxu0 %v5019
    %5841 = vmatprep.subr.bf16.mxu0 %v5027
    %5842 = vmatpush1.bf16.msra.mxu0 %v5026
    %5843 = vmatprep.subr.bf16.mxu0 %v5034
    %5844 = vmatpush1.bf16.msra.mxu0 %v5033
    %5845 = vmatprep.subr.bf16.mxu0 %v5041
    %5846 = vmatpush1.bf16.msra.mxu0 %v5040
    %5847 = vmatprep.subr.bf16.mxu0 %v5048
    %5848 = vmatpush1.bf16.msra.mxu0 %v5047
    %5849 = vmatprep.subr.bf16.mxu0 %v5055
    %5850 = vmatpush1.bf16.msra.mxu0 %v5054
    %5851 = vmatprep.subr.bf16.mxu0 %v5062
    %5852 = vmatpush1.bf16.msra.mxu0 %v5061
    %5853 = vmatprep.subr.bf16.mxu0 %v5069
    %5854 = vmatpush1.bf16.msra.mxu0 %v5068
    %5855 = vmatprep.subr.bf16.mxu0 %v5076
    %5856 = vmatpush1.bf16.msra.mxu0 %v5075
    %5857 = vmatprep.subr.bf16.mxu0 %v5083
    %5858 = vmatpush1.bf16.msra.mxu0 %v5082
    %5859 = vmatprep.subr.bf16.mxu0 %v5090
    %5860 = vmatpush1.bf16.msra.mxu0 %v5089
    %5861 = vmatprep.mubr.bf16.mxu0 %v2688
    %5862 = vmatmul.mubr.bf16.gmra.mrb[0].mxu0 %v2687
    %v5863 = vpop.f32.mrb[0].mxu0
    %v5864 = vadd.f32 %v5823, %v5863
    %v5865 = vpop.f32.mrb[0].mxu0
    %v5866 = vadd.f32 %v5825, %v5865
    %v5867 = vpop.f32.mrb[0].mxu0
    %v5868 = vpop.f32.mrb[0].mxu0
    %5869 = vdwg.mxu0
    %5870 = vmatprep.subr.bf16.mxu0 %v4651
    %5871 = vmatpush1.bf16.msra.mxu0 %v4650
    %5872 = vmatprep.subr.bf16.mxu0 %v4658
    %5873 = vmatpush1.bf16.msra.mxu0 %v4657
    %5874 = vmatprep.subr.bf16.mxu0 %v4665
    %5875 = vmatpush1.bf16.msra.mxu0 %v4664
    %5876 = vmatprep.subr.bf16.mxu0 %v4672
    %5877 = vmatpush1.bf16.msra.mxu0 %v4671
    %5878 = vmatprep.subr.bf16.mxu0 %v4679
    %5879 = vmatpush1.bf16.msra.mxu0 %v4678
    %5880 = vmatprep.subr.bf16.mxu0 %v4686
    %5881 = vmatpush1.bf16.msra.mxu0 %v4685
    %5882 = vmatprep.subr.bf16.mxu0 %v4693
    %5883 = vmatpush1.bf16.msra.mxu0 %v4692
    %5884 = vmatprep.subr.bf16.mxu0 %v4700
    %5885 = vmatpush1.bf16.msra.mxu0 %v4699
    %5886 = vmatprep.subr.bf16.mxu0 %v4707
    %5887 = vmatpush1.bf16.msra.mxu0 %v4706
    %5888 = vmatprep.subr.bf16.mxu0 %v4714
    %5889 = vmatpush1.bf16.msra.mxu0 %v4713
    %5890 = vmatprep.subr.bf16.mxu0 %v4721
    %5891 = vmatpush1.bf16.msra.mxu0 %v4720
    %5892 = vmatprep.subr.bf16.mxu0 %v4728
    %5893 = vmatpush1.bf16.msra.mxu0 %v4727
    %5894 = vmatprep.subr.bf16.mxu0 %v4735
    %5895 = vmatpush1.bf16.msra.mxu0 %v4734
    %5896 = vmatprep.subr.bf16.mxu0 %v4742
    %5897 = vmatpush1.bf16.msra.mxu0 %v4741
    %5898 = vmatprep.subr.bf16.mxu0 %v4749
    %5899 = vmatpush1.bf16.msra.mxu0 %v4748
    %5900 = vmatprep.subr.bf16.mxu0 %v4756
    %5901 = vmatpush1.bf16.msra.mxu0 %v4755
    %5902 = vmatprep.mubr.bf16.mxu0 %v2682
    %5903 = vmatmul.mubr.bf16.gmra.mrb[0].mxu0 %v2681
    %v5904 = vpop.f32.mrb[0].mxu0
    %v5905 = vadd.f32 %v3222, %v5904
    %v5906 = vpop.f32.mrb[0].mxu0
    %v5907 = vadd.f32 %v3226, %v5906
    %v5908 = vpop.f32.mrb[0].mxu0
    %v5909 = vpop.f32.mrb[0].mxu0
    %5910 = vdwg.mxu0
    %5911 = vmatprep.subr.bf16.mxu0 %v4763
    %5912 = vmatpush1.bf16.msra.mxu0 %v4762
    %5913 = vmatprep.subr.bf16.mxu0 %v4770
    %5914 = vmatpush1.bf16.msra.mxu0 %v4769
    %5915 = vmatprep.subr.bf16.mxu0 %v4777
    %5916 = vmatpush1.bf16.msra.mxu0 %v4776
    %5917 = vmatprep.subr.bf16.mxu0 %v4784
    %5918 = vmatpush1.bf16.msra.mxu0 %v4783
    %5919 = vmatprep.subr.bf16.mxu0 %v4791
    %5920 = vmatpush1.bf16.msra.mxu0 %v4790
    %5921 = vmatprep.subr.bf16.mxu0 %v4798
    %5922 = vmatpush1.bf16.msra.mxu0 %v4797
    %5923 = vmatprep.subr.bf16.mxu0 %v4805
    %5924 = vmatpush1.bf16.msra.mxu0 %v4804
    %5925 = vmatprep.subr.bf16.mxu0 %v4812
    %5926 = vmatpush1.bf16.msra.mxu0 %v4811
    %5927 = vmatprep.subr.bf16.mxu0 %v4819
    %5928 = vmatpush1.bf16.msra.mxu0 %v4818
    %5929 = vmatprep.subr.bf16.mxu0 %v4826
    %5930 = vmatpush1.bf16.msra.mxu0 %v4825
    %5931 = vmatprep.subr.bf16.mxu0 %v4833
    %5932 = vmatpush1.bf16.msra.mxu0 %v4832
    %5933 = vmatprep.subr.bf16.mxu0 %v4840
    %5934 = vmatpush1.bf16.msra.mxu0 %v4839
    %5935 = vmatprep.subr.bf16.mxu0 %v4847
    %5936 = vmatpush1.bf16.msra.mxu0 %v4846
    %5937 = vmatprep.subr.bf16.mxu0 %v4854
    %5938 = vmatpush1.bf16.msra.mxu0 %v4853
    %5939 = vmatprep.subr.bf16.mxu0 %v4861
    %5940 = vmatpush1.bf16.msra.mxu0 %v4860
    %5941 = vmatprep.subr.bf16.mxu0 %v4868
    %5942 = vmatpush1.bf16.msra.mxu0 %v4867
    %5943 = vmatprep.mubr.bf16.mxu0 %v2684
    %5944 = vmatmul.mubr.bf16.gmra.mrb[0].mxu0 %v2683
    %v5945 = vpop.f32.mrb[0].mxu0
    %v5946 = vadd.f32 %v5905, %v5945
    %v5947 = vpop.f32.mrb[0].mxu0
    %v5948 = vadd.f32 %v5907, %v5947
    %v5949 = vpop.f32.mrb[0].mxu0
    %v5950 = vpop.f32.mrb[0].mxu0
    %5951 = vdwg.mxu0
    %5952 = vmatprep.subr.bf16.mxu0 %v4875
    %5953 = vmatpush1.bf16.msra.mxu0 %v4874
    %5954 = vmatprep.subr.bf16.mxu0 %v4882
    %5955 = vmatpush1.bf16.msra.mxu0 %v4881
    %5956 = vmatprep.subr.bf16.mxu0 %v4889
    %5957 = vmatpush1.bf16.msra.mxu0 %v4888
    %5958 = vmatprep.subr.bf16.mxu0 %v4896
    %5959 = vmatpush1.bf16.msra.mxu0 %v4895
    %5960 = vmatprep.subr.bf16.mxu0 %v4903
    %5961 = vmatpush1.bf16.msra.mxu0 %v4902
    %5962 = vmatprep.subr.bf16.mxu0 %v4910
    %5963 = vmatpush1.bf16.msra.mxu0 %v4909
    %5964 = vmatprep.subr.bf16.mxu0 %v4917
    %5965 = vmatpush1.bf16.msra.mxu0 %v4916
    %5966 = vmatprep.subr.bf16.mxu0 %v4924
    %5967 = vmatpush1.bf16.msra.mxu0 %v4923
    %5968 = vmatprep.subr.bf16.mxu0 %v4931
    %5969 = vmatpush1.bf16.msra.mxu0 %v4930
    %5970 = vmatprep.subr.bf16.mxu0 %v4938
    %5971 = vmatpush1.bf16.msra.mxu0 %v4937
    %5972 = vmatprep.subr.bf16.mxu0 %v4945
    %5973 = vmatpush1.bf16.msra.mxu0 %v4944
    %5974 = vmatprep.subr.bf16.mxu0 %v4952
    %5975 = vmatpush1.bf16.msra.mxu0 %v4951
    %5976 = vmatprep.subr.bf16.mxu0 %v4959
    %5977 = vmatpush1.bf16.msra.mxu0 %v4958
    %5978 = vmatprep.subr.bf16.mxu0 %v4966
    %5979 = vmatpush1.bf16.msra.mxu0 %v4965
    %5980 = vmatprep.subr.bf16.mxu0 %v4973
    %5981 = vmatpush1.bf16.msra.mxu0 %v4972
    %5982 = vmatprep.subr.bf16.mxu0 %v4980
    %5983 = vmatpush1.bf16.msra.mxu0 %v4979
    %5984 = vmatprep.mubr.bf16.mxu0 %v2686
    %5985 = vmatmul.mubr.bf16.gmra.mrb[0].mxu0 %v2685
    %v5986 = vpop.f32.mrb[0].mxu0
    %v5987 = vadd.f32 %v5946, %v5986
    %v5988 = vpop.f32.mrb[0].mxu0
    %v5989 = vadd.f32 %v5948, %v5988
    %v5990 = vpop.f32.mrb[0].mxu0
    %v5991 = vpop.f32.mrb[0].mxu0
    %5992 = vdwg.mxu0
    %5993 = vmatprep.subr.bf16.mxu0 %v4987
    %5994 = vmatpush1.bf16.msra.mxu0 %v4986
    %5995 = vmatprep.subr.bf16.mxu0 %v4994
    %5996 = vmatpush1.bf16.msra.mxu0 %v4993
    %5997 = vmatprep.subr.bf16.mxu0 %v5001
    %5998 = vmatpush1.bf16.msra.mxu0 %v5000
    %5999 = vmatprep.subr.bf16.mxu0 %v5008
    %6000 = vmatpush1.bf16.msra.mxu0 %v5007
    %6001 = vmatprep.subr.bf16.mxu0 %v5015
    %6002 = vmatpush1.bf16.msra.mxu0 %v5014
    %6003 = vmatprep.subr.bf16.mxu0 %v5022
    %6004 = vmatpush1.bf16.msra.mxu0 %v5021
    %6005 = vmatprep.subr.bf16.mxu0 %v5029
    %6006 = vmatpush1.bf16.msra.mxu0 %v5028
    %6007 = vmatprep.subr.bf16.mxu0 %v5036
    %6008 = vmatpush1.bf16.msra.mxu0 %v5035
    %6009 = vmatprep.subr.bf16.mxu0 %v5043
    %6010 = vmatpush1.bf16.msra.mxu0 %v5042
    %6011 = vmatprep.subr.bf16.mxu0 %v5050
    %6012 = vmatpush1.bf16.msra.mxu0 %v5049
    %6013 = vmatprep.subr.bf16.mxu0 %v5057
    %6014 = vmatpush1.bf16.msra.mxu0 %v5056
    %6015 = vmatprep.subr.bf16.mxu0 %v5064
    %6016 = vmatpush1.bf16.msra.mxu0 %v5063
    %6017 = vmatprep.subr.bf16.mxu0 %v5071
    %6018 = vmatpush1.bf16.msra.mxu0 %v5070
    %6019 = vmatprep.subr.bf16.mxu0 %v5078
    %6020 = vmatpush1.bf16.msra.mxu0 %v5077
    %6021 = vmatprep.subr.bf16.mxu0 %v5085
    %6022 = vmatpush1.bf16.msra.mxu0 %v5084
    %6023 = vmatprep.subr.bf16.mxu0 %v5092
    %6024 = vmatpush1.bf16.msra.mxu0 %v5091
    %6025 = vmatprep.mubr.bf16.mxu0 %v2688
    %6026 = vmatmul.mubr.bf16.gmra.mrb[0].mxu0 %v2687
    %v6027 = vpop.f32.mrb[0].mxu0
    %v6028 = vadd.f32 %v5987, %v6027
    %v6029 = vpop.f32.mrb[0].mxu0
    %v6030 = vadd.f32 %v5989, %v6029
    %v6031 = vpop.f32.mrb[0].mxu0
    %v6032 = vpop.f32.mrb[0].mxu0
    %6033 = vdwg.mxu0
    %6034 = vmatprep.subr.bf16.mxu0 0
    %6035 = vmatpush1.bf16.msra.mxu0 %v4652
    %6036 = vmatprep.subr.bf16.mxu0 0
    %6037 = vmatpush1.bf16.msra.mxu0 %v4659
    %6038 = vmatprep.subr.bf16.mxu0 0
    %6039 = vmatpush1.bf16.msra.mxu0 %v4666
    %6040 = vmatprep.subr.bf16.mxu0 0
    %6041 = vmatpush1.bf16.msra.mxu0 %v4673
    %6042 = vmatprep.subr.bf16.mxu0 0
    %6043 = vmatpush1.bf16.msra.mxu0 %v4680
    %6044 = vmatprep.subr.bf16.mxu0 0
    %6045 = vmatpush1.bf16.msra.mxu0 %v4687
    %6046 = vmatprep.subr.bf16.mxu0 0
    %6047 = vmatpush1.bf16.msra.mxu0 %v4694
    %6048 = vmatprep.subr.bf16.mxu0 0
    %6049 = vmatpush1.bf16.msra.mxu0 %v4701
    %6050 = vmatprep.subr.bf16.mxu0 0
    %6051 = vmatpush1.bf16.msra.mxu0 %v4708
    %6052 = vmatprep.subr.bf16.mxu0 0
    %6053 = vmatpush1.bf16.msra.mxu0 %v4715
    %6054 = vmatprep.subr.bf16.mxu0 0
    %6055 = vmatpush1.bf16.msra.mxu0 %v4722
    %6056 = vmatprep.subr.bf16.mxu0 0
    %6057 = vmatpush1.bf16.msra.mxu0 %v4729
    %6058 = vmatprep.subr.bf16.mxu0 0
    %6059 = vmatpush1.bf16.msra.mxu0 %v4736
    %6060 = vmatprep.subr.bf16.mxu0 0
    %6061 = vmatpush1.bf16.msra.mxu0 %v4743
    %6062 = vmatprep.subr.bf16.mxu0 0
    %6063 = vmatpush1.bf16.msra.mxu0 %v4750
    %6064 = vmatprep.subr.bf16.mxu0 0
    %6065 = vmatpush1.bf16.msra.mxu0 %v4757
    %6066 = vmatprep.mubr.bf16.mxu0 %v2682
    %6067 = vmatmul.mubr.bf16.gmra.mrb[0].mxu0 %v2681
    %v6068 = vpop.f32.mrb[0].mxu0
    %v6069 = vadd.f32 %v3230, %v6068
    %v6070 = vpop.f32.mrb[0].mxu0
    %v6071 = vpop.f32.mrb[0].mxu0
    %v6072 = vpop.f32.mrb[0].mxu0
    %6073 = vdwg.mxu0
    %6074 = vmatprep.subr.bf16.mxu0 0
    %6075 = vmatpush1.bf16.msra.mxu0 %v4764
    %6076 = vmatprep.subr.bf16.mxu0 0
    %6077 = vmatpush1.bf16.msra.mxu0 %v4771
    %6078 = vmatprep.subr.bf16.mxu0 0
    %6079 = vmatpush1.bf16.msra.mxu0 %v4778
    %6080 = vmatprep.subr.bf16.mxu0 0
    %6081 = vmatpush1.bf16.msra.mxu0 %v4785
    %6082 = vmatprep.subr.bf16.mxu0 0
    %6083 = vmatpush1.bf16.msra.mxu0 %v4792
    %6084 = vmatprep.subr.bf16.mxu0 0
    %6085 = vmatpush1.bf16.msra.mxu0 %v4799
    %6086 = vmatprep.subr.bf16.mxu0 0
    %6087 = vmatpush1.bf16.msra.mxu0 %v4806
    %6088 = vmatprep.subr.bf16.mxu0 0
    %6089 = vmatpush1.bf16.msra.mxu0 %v4813
    %6090 = vmatprep.subr.bf16.mxu0 0
    %6091 = vmatpush1.bf16.msra.mxu0 %v4820
    %6092 = vmatprep.subr.bf16.mxu0 0
    %6093 = vmatpush1.bf16.msra.mxu0 %v4827
    %6094 = vmatprep.subr.bf16.mxu0 0
    %6095 = vmatpush1.bf16.msra.mxu0 %v4834
    %6096 = vmatprep.subr.bf16.mxu0 0
    %6097 = vmatpush1.bf16.msra.mxu0 %v4841
    %6098 = vmatprep.subr.bf16.mxu0 0
    %6099 = vmatpush1.bf16.msra.mxu0 %v4848
    %6100 = vmatprep.subr.bf16.mxu0 0
    %6101 = vmatpush1.bf16.msra.mxu0 %v4855
    %6102 = vmatprep.subr.bf16.mxu0 0
    %6103 = vmatpush1.bf16.msra.mxu0 %v4862
    %6104 = vmatprep.subr.bf16.mxu0 0
    %6105 = vmatpush1.bf16.msra.mxu0 %v4869
    %6106 = vmatprep.mubr.bf16.mxu0 %v2684
    %6107 = vmatmul.mubr.bf16.gmra.mrb[0].mxu0 %v2683
    %v6108 = vpop.f32.mrb[0].mxu0
    %v6109 = vadd.f32 %v6069, %v6108
    %v6110 = vpop.f32.mrb[0].mxu0
    %v6111 = vpop.f32.mrb[0].mxu0
    %v6112 = vpop.f32.mrb[0].mxu0
    %6113 = vdwg.mxu0
    %6114 = vmatprep.subr.bf16.mxu0 0
    %6115 = vmatpush1.bf16.msra.mxu0 %v4876
    %6116 = vmatprep.subr.bf16.mxu0 0
    %6117 = vmatpush1.bf16.msra.mxu0 %v4883
    %6118 = vmatprep.subr.bf16.mxu0 0
    %6119 = vmatpush1.bf16.msra.mxu0 %v4890
    %6120 = vmatprep.subr.bf16.mxu0 0
    %6121 = vmatpush1.bf16.msra.mxu0 %v4897
    %6122 = vmatprep.subr.bf16.mxu0 0
    %6123 = vmatpush1.bf16.msra.mxu0 %v4904
    %6124 = vmatprep.subr.bf16.mxu0 0
    %6125 = vmatpush1.bf16.msra.mxu0 %v4911
    %6126 = vmatprep.subr.bf16.mxu0 0
    %6127 = vmatpush1.bf16.msra.mxu0 %v4918
    %6128 = vmatprep.subr.bf16.mxu0 0
    %6129 = vmatpush1.bf16.msra.mxu0 %v4925
    %6130 = vmatprep.subr.bf16.mxu0 0
    %6131 = vmatpush1.bf16.msra.mxu0 %v4932
    %6132 = vmatprep.subr.bf16.mxu0 0
    %6133 = vmatpush1.bf16.msra.mxu0 %v4939
    %6134 = vmatprep.subr.bf16.mxu0 0
    %6135 = vmatpush1.bf16.msra.mxu0 %v4946
    %6136 = vmatprep.subr.bf16.mxu0 0
    %6137 = vmatpush1.bf16.msra.mxu0 %v4953
    %6138 = vmatprep.subr.bf16.mxu0 0
    %6139 = vmatpush1.bf16.msra.mxu0 %v4960
    %6140 = vmatprep.subr.bf16.mxu0 0
    %6141 = vmatpush1.bf16.msra.mxu0 %v4967
    %6142 = vmatprep.subr.bf16.mxu0 0
    %6143 = vmatpush1.bf16.msra.mxu0 %v4974
    %6144 = vmatprep.subr.bf16.mxu0 0
    %6145 = vmatpush1.bf16.msra.mxu0 %v4981
    %6146 = vmatprep.mubr.bf16.mxu0 %v2686
    %6147 = vmatmul.mubr.bf16.gmra.mrb[0].mxu0 %v2685
    %v6148 = vpop.f32.mrb[0].mxu0
    %v6149 = vadd.f32 %v6109, %v6148
    %v6150 = vpop.f32.mrb[0].mxu0
    %v6151 = vpop.f32.mrb[0].mxu0
    %v6152 = vpop.f32.mrb[0].mxu0
    %6153 = vdwg.mxu0
    %6154 = vmatprep.subr.bf16.mxu0 0
    %6155 = vmatpush1.bf16.msra.mxu0 %v4988
    %6156 = vmatprep.subr.bf16.mxu0 0
    %6157 = vmatpush1.bf16.msra.mxu0 %v4995
    %6158 = vmatprep.subr.bf16.mxu0 0
    %6159 = vmatpush1.bf16.msra.mxu0 %v5002
    %6160 = vmatprep.subr.bf16.mxu0 0
    %6161 = vmatpush1.bf16.msra.mxu0 %v5009
    %6162 = vmatprep.subr.bf16.mxu0 0
    %6163 = vmatpush1.bf16.msra.mxu0 %v5016
    %6164 = vmatprep.subr.bf16.mxu0 0
    %6165 = vmatpush1.bf16.msra.mxu0 %v5023
    %6166 = vmatprep.subr.bf16.mxu0 0
    %6167 = vmatpush1.bf16.msra.mxu0 %v5030
    %6168 = vmatprep.subr.bf16.mxu0 0
    %6169 = vmatpush1.bf16.msra.mxu0 %v5037
    %6170 = vmatprep.subr.bf16.mxu0 0
    %6171 = vmatpush1.bf16.msra.mxu0 %v5044
    %6172 = vmatprep.subr.bf16.mxu0 0
    %6173 = vmatpush1.bf16.msra.mxu0 %v5051
    %6174 = vmatprep.subr.bf16.mxu0 0
    %6175 = vmatpush1.bf16.msra.mxu0 %v5058
    %6176 = vmatprep.subr.bf16.mxu0 0
    %6177 = vmatpush1.bf16.msra.mxu0 %v5065
    %6178 = vmatprep.subr.bf16.mxu0 0
    %6179 = vmatpush1.bf16.msra.mxu0 %v5072
    %6180 = vmatprep.subr.bf16.mxu0 0
    %6181 = vmatpush1.bf16.msra.mxu0 %v5079
    %6182 = vmatprep.subr.bf16.mxu0 0
    %6183 = vmatpush1.bf16.msra.mxu0 %v5086
    %6184 = vmatprep.subr.bf16.mxu0 0
    %6185 = vmatpush1.bf16.msra.mxu0 %v5093
    %6186 = vmatprep.mubr.bf16.mxu0 %v2688
    %6187 = vmatmul.mubr.bf16.gmra.mrb[0].mxu0 %v2687
    %v6188 = vpop.f32.mrb[0].mxu0
    %v6189 = vadd.f32 %v6149, %v6188
    %v6190 = vpop.f32.mrb[0].mxu0
    %v6191 = vpop.f32.mrb[0].mxu0
    %v6192 = vpop.f32.mrb[0].mxu0
    %6193 = vdwg.mxu0
    %v6194 = vtanh.pop %v5700
    %v6195 = vtanh.pop %v5702
    %v6196 = vtanh.pop %v5864
    %v6197 = vtanh.pop %v5866
    %v6198 = vtanh.pop %v6028
    %v6199 = vtanh.pop %v6030
    %v6200 = vtanh.pop %v6189
    %6201 = vst [vmem:[#allocation17] sm:$0xff] %v6194
    %6202 = vst [vmem:[#allocation17 + $0x8] sm:$0xff] %v6195
    %6203 = vst [vmem:[#allocation17 + $0x10] sm:$0xff] %v6196
    %6204 = vst [vmem:[#allocation17 + $0x18] sm:$0xff] %v6197
    %6205 = vst [vmem:[#allocation17 + $0x20] sm:$0xff] %v6198
    %6206 = vst [vmem:[#allocation17 + $0x28] sm:$0xff] %v6199
    %6207 = vst [vmem:[#allocation17 + $0x30] sm:$0xff] %v6200
    // Predicated region
    $region74: #{tpu_custom_call.1} parent=1 // pred_check
      _
    $region75: #{tpu_custom_call.1} parent=1 // pred_check_branch
      %6209 = sbr.rel (0) target = $region77
    $region76: #{tpu_custom_call.1} parent=1 // pred_region
      %s6211 = ssub.s32 896, 896
      %6212 = vsyncadd [#allocation4], %s6211
      %s6214 = sshll.u32 [#allocation17], 4
      %s6215 = int_to_ptr.vmem [resolvable:$true] %s6214
      %6217 = dma.vmem_to_hbm [thread:$0]  %s6215, 896, %s9, [#allocation4]
    $region77: #{tpu_custom_call.1} parent=1 // pred_fallthru
      _
    // Predicated region
    $region78: #{tpu_custom_call.1} parent=1 // pred_check
      _
    $region79: #{tpu_custom_call.1} parent=1 // pred_check_branch
      %6219 = sbr.rel (0) target = $region81
    $region80: #{tpu_custom_call.1} parent=1 // pred_region
      %6220 = dma.done [#allocation4], 896
    $region81: #{tpu_custom_call.1} parent=1 // pred_fallthru
      _
    %6221 = vsyncpa [#allocation3], 1
    %6222 = vsyncpa [#allocation6], 1
    %6223 = vsyncpa [#allocation9], 1
    %6224 = vsyncpa [#allocation12], 1
    %6225 = vsyncpa [#allocation15], 1
    %6226 = vsyncpa [#allocation4], 1

</llo_original>
